<compile_context>
chip_gen: v6e
topology: v6e:2x2x1
jax: 0.10.0
libtpu: 0.0.40
codegen_flags: <defaults>
</compile_context>

<pallas_src>
import functools

import jax
import jax.numpy as jnp
from jax.experimental import pallas as pl
from jax.experimental.pallas import tpu as pltpu


def _fill_halo(ref, pad, value):
    """Write only the `pad`-wide halo of a (Hp, Wp, C) scratch ref."""
    Hp, Wp, C = ref.shape
    row = jnp.full((pad, Wp, C), value, ref.dtype)
    col = jnp.full((Hp, pad, C), value, ref.dtype)
    ref[0:pad, :, :] = row
    ref[Hp - pad:Hp, :, :] = row
    ref[:, 0:pad, :] = col
    ref[:, Wp - pad:Wp, :] = col


# ----------------------------------------------------------------------------
# Fused Inception kernel (one grid step = one image, NHWC, channels on lanes)
# ----------------------------------------------------------------------------
def _inception_kernel(x_ref, wA_ref, sA_ref, w2_ref, s2_ref, w3_ref, s3_ref,
                      w4_ref, s4_ref, o_ref, p3_ref, p5_ref, pool_ref,
                      *, o1, o21, o22, o31, o32, o4):
    _, H, W, Cin = x_ref.shape
    x = x_ref[0]                                       # (H, W, Cin), bf16
    x2d = x.reshape(H * W, Cin)

    # ---- fused 1x1 convs (branch1, branch2a, branch3a); BN folded into w ----
    actA = jnp.dot(x2d, wA_ref[...], preferred_element_type=jnp.float32)
    actA = jnp.maximum(actA + sA_ref[...], 0.0)        # (H*W, o1+o21+o31) f32

    y1 = actA[:, :o1]                                  # branch1 output (f32)
    a2 = actA[:, o1:o1 + o21].reshape(H, W, o21)       # branch2 reduced act
    a3 = actA[:, o1 + o21:].reshape(H, W, o31)         # branch3 reduced act

    # ---- branch2: 3x3 conv (pad=1) as ONE stacked-K matmul over an im2col
    #      slab built from the zero-halo VMEM scratch (K = 9*o21) ----
    _fill_halo(p3_ref, 1, 0.0)                         # interior rewritten below
    p3_ref[1:1 + H, 1:1 + W, :] = a2
    slab2 = jnp.concatenate(
        [p3_ref[dh:dh + H, dw:dw + W, :] for dh in range(3) for dw in range(3)],
        axis=-1).reshape(H * W, 9 * o21)
    y2 = jnp.dot(slab2.astype(jnp.bfloat16), w2_ref[...],
                 preferred_element_type=jnp.float32)
    y2 = jnp.maximum(y2 + s2_ref[...], 0.0)

    # ---- branch3: 5x5 conv (pad=2), same single-matmul scheme (K = 25*o31) --
    _fill_halo(p5_ref, 2, 0.0)
    p5_ref[2:2 + H, 2:2 + W, :] = a3
    slab3 = jnp.concatenate(
        [p5_ref[dh:dh + H, dw:dw + W, :] for dh in range(5) for dw in range(5)],
        axis=-1).reshape(H * W, 25 * o31)
    y3 = jnp.dot(slab3.astype(jnp.bfloat16), w3_ref[...],
                 preferred_element_type=jnp.float32)
    y3 = jnp.maximum(y3 + s3_ref[...], 0.0)

    # ---- branch4: separable 3x3 max-pool (stride 1, pad 1, -inf halo)
    #      fused with the following 1x1 conv ----
    _fill_halo(pool_ref, 1, -jnp.inf)
    pool_ref[1:1 + H, 1:1 + W, :] = x.astype(jnp.float32)
    r = jnp.maximum(jnp.maximum(pool_ref[:, 0:W, :], pool_ref[:, 1:1 + W, :]),
                    pool_ref[:, 2:2 + W, :])           # (H+2, W, Cin) row max
    pooled = jnp.maximum(jnp.maximum(r[0:H], r[1:1 + H]), r[2:2 + H])
    y4 = jnp.dot(pooled.reshape(H * W, Cin).astype(jnp.bfloat16), w4_ref[...],
                 preferred_element_type=jnp.float32)
    y4 = jnp.maximum(y4 + s4_ref[...], 0.0)

    # ---- single lane-dense store of the concatenated output ----
    y = jnp.concatenate([y1, y2, y3, y4], axis=-1)     # (H*W, ctot) f32
    o_ref[0] = y.reshape(H, W, o1 + o22 + o32 + o4)


def inception_forward(x_nchw, params):
    o1, o21, o22, o31, o32, o4 = params["splits"]
    ctot = o1 + o22 + o32 + o4
    cmid = o1 + o21 + o31

    x = jnp.transpose(x_nchw, (0, 2, 3, 1)).astype(jnp.bfloat16)  # NCHW->NHWC
    N, H, W, Cin = x.shape

    kernel = functools.partial(_inception_kernel, o1=o1, o21=o21, o22=o22,
                               o31=o31, o32=o32, o4=o4)

    out_nhwc = pl.pallas_call(
        kernel,
        out_shape=jax.ShapeDtypeStruct((N, H, W, ctot), jnp.float32),
        grid=(N,),
        in_specs=[
            pl.BlockSpec((1, H, W, Cin), lambda n: (n, 0, 0, 0)),   # x
            pl.BlockSpec((Cin, cmid), lambda n: (0, 0)),            # fused 1x1 w
            pl.BlockSpec((1, cmid), lambda n: (0, 0)),              # fused shift
            pl.BlockSpec((9 * o21, o22), lambda n: (0, 0)),         # 3x3 stacked
            pl.BlockSpec((1, o22), lambda n: (0, 0)),
            pl.BlockSpec((25 * o31, o32), lambda n: (0, 0)),        # 5x5 stacked
            pl.BlockSpec((1, o32), lambda n: (0, 0)),
            pl.BlockSpec((Cin, o4), lambda n: (0, 0)),              # branch4 1x1
            pl.BlockSpec((1, o4), lambda n: (0, 0)),
        ],
        out_specs=pl.BlockSpec((1, H, W, ctot), lambda n: (n, 0, 0, 0)),
        scratch_shapes=[
            pltpu.VMEM((H + 2, W + 2, o21), jnp.float32),   # zero-halo b2 act
            pltpu.VMEM((H + 4, W + 4, o31), jnp.float32),   # zero-halo b3 act
            pltpu.VMEM((H + 2, W + 2, Cin), jnp.float32),   # -inf-halo pool in
        ],
        compiler_params=pltpu.CompilerParams(
            dimension_semantics=("parallel",),
        ),
    )(x, params["wA"], params["sA"], params["w2b"], params["s2b"],
      params["w3b"], params["s3b"], params["w4"], params["s4"])

    return jnp.transpose(out_nhwc, (0, 3, 1, 2))               # NHWC -> NCHW


# ----------------------------------------------------------------------------
# Parameter prep: synthetic Conv2d + BatchNorm2d params, BN folded into weights
# ----------------------------------------------------------------------------
def _conv_bn_folded(key, cin, cout, k):
    k1, k2, k3, k4, k5, k6 = jax.random.split(key, 6)
    fan_in = cin * k * k
    bound = 1.0 / (fan_in ** 0.5)
    w = jax.random.uniform(k1, (cout, cin, k, k), jnp.float32, -bound, bound)
    b = jax.random.uniform(k2, (cout,), jnp.float32, -bound, bound)
    gamma = jax.random.uniform(k3, (cout,), jnp.float32, 0.5, 1.5)
    beta = jax.random.normal(k4, (cout,), jnp.float32) * 0.1
    mean = jax.random.normal(k5, (cout,), jnp.float32) * 0.1
    var = jax.random.uniform(k6, (cout,), jnp.float32, 0.5, 1.5)
    scale = gamma / jnp.sqrt(var + 1e-5)
    shift = beta + scale * (b - mean)
    # (Cout,Cin,kh,kw) -> HWIO (kh,kw,Cin,Cout); fold BN scale into the weight.
    w_hwio = jnp.transpose(w, (2, 3, 1, 0)) * scale
    return w_hwio, shift


def make_params(key, cin, o1, o21, o22, o31, o32, o4):
    keys = jax.random.split(key, 6)
    w1, s1 = _conv_bn_folded(keys[0], cin, o1, 1)
    w2a, s2a = _conv_bn_folded(keys[1], cin, o21, 1)
    w2b, s2b = _conv_bn_folded(keys[2], o21, o22, 3)
    w3a, s3a = _conv_bn_folded(keys[3], cin, o31, 1)
    w3b, s3b = _conv_bn_folded(keys[4], o31, o32, 5)
    w4, s4 = _conv_bn_folded(keys[5], cin, o4, 1)

    # Fuse the three 1x1 convs that share the block input (b1, b2a, b3a).
    wA = jnp.concatenate([w1.reshape(cin, o1), w2a.reshape(cin, o21),
                          w3a.reshape(cin, o31)], axis=-1)
    sA = jnp.concatenate([s1, s2a, s3a])

    return dict(
        wA=wA.astype(jnp.bfloat16),
        sA=sA[None, :].astype(jnp.float32),
        # Stacked-K layouts: (kh, kw, cin) flattened into the K axis, matching
        # the tap ordering of the in-kernel im2col slab.
        w2b=w2b.reshape(9 * o21, o22).astype(jnp.bfloat16),
        s2b=s2b[None, :].astype(jnp.float32),
        w3b=w3b.reshape(25 * o31, o32).astype(jnp.bfloat16),
        s3b=s3b[None, :].astype(jnp.float32),
        w4=w4.reshape(cin, o4).astype(jnp.bfloat16),
        s4=s4[None, :].astype(jnp.float32),
        splits=(o1, o21, o22, o31, o32, o4),
    )


# ----------------------------------------------------------------------------
# Pure-JAX reference (same folded params / bf16-cast inputs, f32 intermediates)
# ----------------------------------------------------------------------------
def reference_forward(x_nchw, params):
    o1, o21, o22, o31, o32, o4 = params["splits"]
    x = jnp.transpose(x_nchw, (0, 2, 3, 1)).astype(jnp.bfloat16).astype(jnp.float32)
    N, H, W, cin = x.shape
    dn = ("NHWC", "HWIO", "NHWC")

    actA = jnp.maximum(
        x.reshape(-1, cin) @ params["wA"].astype(jnp.float32) + params["sA"], 0.0
    ).reshape(N, H, W, -1)
    y1 = actA[..., :o1]
    a2 = actA[..., o1:o1 + o21]
    a3 = actA[..., o1 + o21:]

    y2 = jax.lax.conv_general_dilated(
        a2, params["w2b"].astype(jnp.float32).reshape(3, 3, o21, o22),
        (1, 1), ((1, 1), (1, 1)), dimension_numbers=dn)
    y2 = jnp.maximum(y2 + params["s2b"], 0.0)

    y3 = jax.lax.conv_general_dilated(
        a3, params["w3b"].astype(jnp.float32).reshape(5, 5, o31, o32),
        (1, 1), ((2, 2), (2, 2)), dimension_numbers=dn)
    y3 = jnp.maximum(y3 + params["s3b"], 0.0)

    pooled = jax.lax.reduce_window(
        x, -jnp.inf, jax.lax.max, (1, 3, 3, 1), (1, 1, 1, 1),
        ((0, 0), (1, 1), (1, 1), (0, 0)))
    y4 = jnp.maximum(
        pooled.reshape(-1, cin) @ params["w4"].astype(jnp.float32) + params["s4"],
        0.0).reshape(N, H, W, o4)

    y = jnp.concatenate([y1, y2, y3, y4], axis=-1)
    return jnp.transpose(y, (0, 3, 1, 2))


# ----------------------------------------------------------------------------
if __name__ == "__main__":
    key = jax.random.PRNGKey(0)
    N, Cin, H, W = 2, 4, 16, 16
    o1, o21, o22, o31, o32, o4 = 8, 4, 8, 4, 8, 8

    kp, kx = jax.random.split(key)
    params = make_params(kp, Cin, o1, o21, o22, o31, o32, o4)
    x = jax.random.normal(kx, (N, Cin, H, W), dtype=jnp.float32)

    out = inception_forward(x, params)
    jax.block_until_ready(out)

    assert out.shape == (N, o1 + o22 + o32 + o4, H, W), out.shape
    assert out.dtype == jnp.float32

    # Sanity check against a pure-JAX reference. Loose tolerance: the kernel
    # feeds the 3x3 / 5x5 / pooled intermediates to the MXU in bf16.
    ref = reference_forward(x, params)
    err = float(jnp.max(jnp.abs(out - ref)))
    assert err < 0.25, f"max abs error {err}"

    print("KERNEL_OK")
</pallas_src>

<mosaic_0001>
module attributes {stable_mosaic.version = 11 : i64} {
  func.func @_inception_kernel(%arg0: i32, %arg1: memref<1x16x16x4xbf16, #tpu.memory_space<vmem>>, %arg2: memref<4x16xbf16, #tpu.memory_space<vmem>>, %arg3: memref<1x16xf32, #tpu.memory_space<vmem>>, %arg4: memref<36x8xbf16, #tpu.memory_space<vmem>>, %arg5: memref<1x8xf32, #tpu.memory_space<vmem>>, %arg6: memref<100x8xbf16, #tpu.memory_space<vmem>>, %arg7: memref<1x8xf32, #tpu.memory_space<vmem>>, %arg8: memref<4x8xbf16, #tpu.memory_space<vmem>>, %arg9: memref<1x8xf32, #tpu.memory_space<vmem>>, %arg10: memref<1x16x16x32xf32, #tpu.memory_space<vmem>>, %arg11: memref<18x18x4xf32, #tpu.memory_space<vmem>>, %arg12: memref<20x20x4xf32, #tpu.memory_space<vmem>>, %arg13: memref<18x18x4xf32, #tpu.memory_space<vmem>>) attributes {dimension_semantics = [#tpu.dimension_semantics<parallel>], iteration_bounds = array<i64: 2>, scalar_prefetch = 0 : i64, scratch_operands = 3 : i64, tpu.core_type = #tpu.core_type<tc>, window_params = [{transform_indices = @transform_0, window_bounds = array<i64: 1, 16, 16, 4>}, {pipeline_mode = #tpu.pipeline_mode<synchronous>, transform_indices = @transform_1, window_bounds = array<i64: 4, 16>}, {pipeline_mode = #tpu.pipeline_mode<synchronous>, transform_indices = @transform_2, window_bounds = array<i64: 1, 16>}, {pipeline_mode = #tpu.pipeline_mode<synchronous>, transform_indices = @transform_3, window_bounds = array<i64: 36, 8>}, {pipeline_mode = #tpu.pipeline_mode<synchronous>, transform_indices = @transform_4, window_bounds = array<i64: 1, 8>}, {pipeline_mode = #tpu.pipeline_mode<synchronous>, transform_indices = @transform_5, window_bounds = array<i64: 100, 8>}, {pipeline_mode = #tpu.pipeline_mode<synchronous>, transform_indices = @transform_6, window_bounds = array<i64: 1, 8>}, {pipeline_mode = #tpu.pipeline_mode<synchronous>, transform_indices = @transform_7, window_bounds = array<i64: 4, 8>}, {pipeline_mode = #tpu.pipeline_mode<synchronous>, transform_indices = @transform_8, window_bounds = array<i64: 1, 8>}, {transform_indices = @transform_9, window_bounds = array<i64: 1, 16, 16, 32>}]} {
    %c0 = arith.constant 0 : index
    %c0_0 = arith.constant 0 : index
    %c0_1 = arith.constant 0 : index
    %c0_2 = arith.constant 0 : index
    %0 = vector.load %arg1[%c0, %c0_0, %c0_1, %c0_2] : memref<1x16x16x4xbf16, #tpu.memory_space<vmem>>, vector<1x16x16x4xbf16>
    %1 = vector.shape_cast %0 : vector<1x16x16x4xbf16> to vector<16x16x4xbf16>
    %2 = vector.shape_cast %1 : vector<16x16x4xbf16> to vector<256x4xbf16>
    %c0_3 = arith.constant 0 : index
    %c0_4 = arith.constant 0 : index
    %3 = vector.load %arg2[%c0_3, %c0_4] : memref<4x16xbf16, #tpu.memory_space<vmem>>, vector<4x16xbf16>
    %cst = arith.constant dense<0.000000e+00> : vector<256x16xf32>
    %4 = tpu.matmul %2, %3, %cst {dimension_numbers = #tpu.dot_dimension_numbers<[1], [0], [0], [1], [0, 0, 1, 1], [], []>} : vector<256x4xbf16>, vector<4x16xbf16>, vector<256x16xf32> -> vector<256x16xf32>
    %c0_5 = arith.constant 0 : index
    %c0_6 = arith.constant 0 : index
    %5 = vector.load %arg3[%c0_5, %c0_6] : memref<1x16xf32, #tpu.memory_space<vmem>>, vector<1x16xf32>
    %6 = vector.broadcast %5 : vector<1x16xf32> to vector<256x16xf32>
    %7 = arith.addf %4, %6 : vector<256x16xf32>
    %cst_7 = arith.constant 0.000000e+00 : f32
    %8 = vector.broadcast %cst_7 : f32 to vector<256x16xf32>
    %9 = arith.maximumf %7, %8 : vector<256x16xf32>
    %10 = vector.extract_strided_slice %9 {offsets = [0, 0], sizes = [256, 8], strides = [1, 1]} : vector<256x16xf32> to vector<256x8xf32>
    %11 = vector.extract_strided_slice %9 {offsets = [0, 8], sizes = [256, 4], strides = [1, 1]} : vector<256x16xf32> to vector<256x4xf32>
    %12 = vector.shape_cast %11 : vector<256x4xf32> to vector<16x16x4xf32>
    %13 = vector.extract_strided_slice %9 {offsets = [0, 12], sizes = [256, 4], strides = [1, 1]} : vector<256x16xf32> to vector<256x4xf32>
    %14 = vector.shape_cast %13 : vector<256x4xf32> to vector<16x16x4xf32>
    %cst_8 = arith.constant 0.000000e+00 : f32
    %15 = vector.broadcast %cst_8 : f32 to vector<1x18x4xf32>
    %cst_9 = arith.constant 0.000000e+00 : f32
    %16 = vector.broadcast %cst_9 : f32 to vector<18x1x4xf32>
    %c0_10 = arith.constant 0 : index
    %c0_11 = arith.constant 0 : index
    %c0_12 = arith.constant 0 : index
    %17 = vector.load %arg11[%c0_10, %c0_11, %c0_12] : memref<18x18x4xf32, #tpu.memory_space<vmem>>, vector<1x18x4xf32>
    tpu.vector_store %arg11[%c0_10, %c0_11, %c0_12], %15 {strides = array<i32>} : memref<18x18x4xf32, #tpu.memory_space<vmem>>, vector<1x18x4xf32>,
    %c17 = arith.constant 17 : index
    %c0_13 = arith.constant 0 : index
    %c0_14 = arith.constant 0 : index
    %18 = vector.load %arg11[%c17, %c0_13, %c0_14] : memref<18x18x4xf32, #tpu.memory_space<vmem>>, vector<1x18x4xf32>
    tpu.vector_store %arg11[%c17, %c0_13, %c0_14], %15 {strides = array<i32>} : memref<18x18x4xf32, #tpu.memory_space<vmem>>, vector<1x18x4xf32>,
    %c0_15 = arith.constant 0 : index
    %c0_16 = arith.constant 0 : index
    %c0_17 = arith.constant 0 : index
    %19 = vector.load %arg11[%c0_15, %c0_16, %c0_17] : memref<18x18x4xf32, #tpu.memory_space<vmem>>, vector<18x1x4xf32>
    tpu.vector_store %arg11[%c0_15, %c0_16, %c0_17], %16 {strides = array<i32>} : memref<18x18x4xf32, #tpu.memory_space<vmem>>, vector<18x1x4xf32>,
    %c0_18 = arith.constant 0 : index
    %c17_19 = arith.constant 17 : index
    %c0_20 = arith.constant 0 : index
    %20 = vector.load %arg11[%c0_18, %c17_19, %c0_20] : memref<18x18x4xf32, #tpu.memory_space<vmem>>, vector<18x1x4xf32>
    tpu.vector_store %arg11[%c0_18, %c17_19, %c0_20], %16 {strides = array<i32>} : memref<18x18x4xf32, #tpu.memory_space<vmem>>, vector<18x1x4xf32>,
    %c1 = arith.constant 1 : index
    %c1_21 = arith.constant 1 : index
    %c0_22 = arith.constant 0 : index
    %21 = vector.load %arg11[%c1, %c1_21, %c0_22] : memref<18x18x4xf32, #tpu.memory_space<vmem>>, vector<16x16x4xf32>
    tpu.vector_store %arg11[%c1, %c1_21, %c0_22], %12 {strides = array<i32>} : memref<18x18x4xf32, #tpu.memory_space<vmem>>, vector<16x16x4xf32>,
    %c0_23 = arith.constant 0 : index
    %c0_24 = arith.constant 0 : index
    %c0_25 = arith.constant 0 : index
    %22 = vector.load %arg11[%c0_23, %c0_24, %c0_25] : memref<18x18x4xf32, #tpu.memory_space<vmem>>, vector<16x16x4xf32>
    %c0_26 = arith.constant 0 : index
    %c1_27 = arith.constant 1 : index
    %c0_28 = arith.constant 0 : index
    %23 = vector.load %arg11[%c0_26, %c1_27, %c0_28] : memref<18x18x4xf32, #tpu.memory_space<vmem>>, vector<16x16x4xf32>
    %c0_29 = arith.constant 0 : index
    %c2 = arith.constant 2 : index
    %c0_30 = arith.constant 0 : index
    %24 = vector.load %arg11[%c0_29, %c2, %c0_30] : memref<18x18x4xf32, #tpu.memory_space<vmem>>, vector<16x16x4xf32>
    %c1_31 = arith.constant 1 : index
    %c0_32 = arith.constant 0 : index
    %c0_33 = arith.constant 0 : index
    %25 = vector.load %arg11[%c1_31, %c0_32, %c0_33] : memref<18x18x4xf32, #tpu.memory_space<vmem>>, vector<16x16x4xf32>
    %c1_34 = arith.constant 1 : index
    %c1_35 = arith.constant 1 : index
    %c0_36 = arith.constant 0 : index
    %26 = vector.load %arg11[%c1_34, %c1_35, %c0_36] : memref<18x18x4xf32, #tpu.memory_space<vmem>>, vector<16x16x4xf32>
    %c1_37 = arith.constant 1 : index
    %c2_38 = arith.constant 2 : index
    %c0_39 = arith.constant 0 : index
    %27 = vector.load %arg11[%c1_37, %c2_38, %c0_39] : memref<18x18x4xf32, #tpu.memory_space<vmem>>, vector<16x16x4xf32>
    %c2_40 = arith.constant 2 : index
    %c0_41 = arith.constant 0 : index
    %c0_42 = arith.constant 0 : index
    %28 = vector.load %arg11[%c2_40, %c0_41, %c0_42] : memref<18x18x4xf32, #tpu.memory_space<vmem>>, vector<16x16x4xf32>
    %c2_43 = arith.constant 2 : index
    %c1_44 = arith.constant 1 : index
    %c0_45 = arith.constant 0 : index
    %29 = vector.load %arg11[%c2_43, %c1_44, %c0_45] : memref<18x18x4xf32, #tpu.memory_space<vmem>>, vector<16x16x4xf32>
    %c2_46 = arith.constant 2 : index
    %c2_47 = arith.constant 2 : index
    %c0_48 = arith.constant 0 : index
    %30 = vector.load %arg11[%c2_46, %c2_47, %c0_48] : memref<18x18x4xf32, #tpu.memory_space<vmem>>, vector<16x16x4xf32>
    %31 = tpu.concatenate %22, %23, %24, %25, %26, %27, %28, %29, %30 in 2 : vector<16x16x4xf32>, vector<16x16x4xf32>, vector<16x16x4xf32>, vector<16x16x4xf32>, vector<16x16x4xf32>, vector<16x16x4xf32>, vector<16x16x4xf32>, vector<16x16x4xf32>, vector<16x16x4xf32> -> vector<16x16x36xf32>
    %32 = vector.shape_cast %31 : vector<16x16x36xf32> to vector<256x36xf32>
    %33 = arith.truncf %32 : vector<256x36xf32> to vector<256x36xbf16>
    %c0_49 = arith.constant 0 : index
    %c0_50 = arith.constant 0 : index
    %34 = vector.load %arg4[%c0_49, %c0_50] : memref<36x8xbf16, #tpu.memory_space<vmem>>, vector<36x8xbf16>
    %cst_51 = arith.constant dense<0.000000e+00> : vector<256x8xf32>
    %35 = tpu.matmul %33, %34, %cst_51 {dimension_numbers = #tpu.dot_dimension_numbers<[1], [0], [0], [1], [0, 0, 1, 1], [], []>} : vector<256x36xbf16>, vector<36x8xbf16>, vector<256x8xf32> -> vector<256x8xf32>
    %c0_52 = arith.constant 0 : index
    %c0_53 = arith.constant 0 : index
    %36 = vector.load %arg5[%c0_52, %c0_53] : memref<1x8xf32, #tpu.memory_space<vmem>>, vector<1x8xf32>
    %37 = vector.broadcast %36 : vector<1x8xf32> to vector<256x8xf32>
    %38 = arith.addf %35, %37 : vector<256x8xf32>
    %cst_54 = arith.constant 0.000000e+00 : f32
    %39 = vector.broadcast %cst_54 : f32 to vector<256x8xf32>
    %40 = arith.maximumf %38, %39 : vector<256x8xf32>
    %cst_55 = arith.constant 0.000000e+00 : f32
    %41 = vector.broadcast %cst_55 : f32 to vector<2x20x4xf32>
    %cst_56 = arith.constant 0.000000e+00 : f32
    %42 = vector.broadcast %cst_56 : f32 to vector<20x2x4xf32>
    %c0_57 = arith.constant 0 : index
    %c0_58 = arith.constant 0 : index
    %c0_59 = arith.constant 0 : index
    %43 = vector.load %arg12[%c0_57, %c0_58, %c0_59] : memref<20x20x4xf32, #tpu.memory_space<vmem>>, vector<2x20x4xf32>
    tpu.vector_store %arg12[%c0_57, %c0_58, %c0_59], %41 {strides = array<i32>} : memref<20x20x4xf32, #tpu.memory_space<vmem>>, vector<2x20x4xf32>,
    %c18 = arith.constant 18 : index
    %c0_60 = arith.constant 0 : index
    %c0_61 = arith.constant 0 : index
    %44 = vector.load %arg12[%c18, %c0_60, %c0_61] : memref<20x20x4xf32, #tpu.memory_space<vmem>>, vector<2x20x4xf32>
    tpu.vector_store %arg12[%c18, %c0_60, %c0_61], %41 {strides = array<i32>} : memref<20x20x4xf32, #tpu.memory_space<vmem>>, vector<2x20x4xf32>,
    %c0_62 = arith.constant 0 : index
    %c0_63 = arith.constant 0 : index
    %c0_64 = arith.constant 0 : index
    %45 = vector.load %arg12[%c0_62, %c0_63, %c0_64] : memref<20x20x4xf32, #tpu.memory_space<vmem>>, vector<20x2x4xf32>
    tpu.vector_store %arg12[%c0_62, %c0_63, %c0_64], %42 {strides = array<i32>} : memref<20x20x4xf32, #tpu.memory_space<vmem>>, vector<20x2x4xf32>,
    %c0_65 = arith.constant 0 : index
    %c18_66 = arith.constant 18 : index
    %c0_67 = arith.constant 0 : index
    %46 = vector.load %arg12[%c0_65, %c18_66, %c0_67] : memref<20x20x4xf32, #tpu.memory_space<vmem>>, vector<20x2x4xf32>
    tpu.vector_store %arg12[%c0_65, %c18_66, %c0_67], %42 {strides = array<i32>} : memref<20x20x4xf32, #tpu.memory_space<vmem>>, vector<20x2x4xf32>,
    %c2_68 = arith.constant 2 : index
    %c2_69 = arith.constant 2 : index
    %c0_70 = arith.constant 0 : index
    %47 = vector.load %arg12[%c2_68, %c2_69, %c0_70] : memref<20x20x4xf32, #tpu.memory_space<vmem>>, vector<16x16x4xf32>
    tpu.vector_store %arg12[%c2_68, %c2_69, %c0_70], %14 {strides = array<i32>} : memref<20x20x4xf32, #tpu.memory_space<vmem>>, vector<16x16x4xf32>,
    %c0_71 = arith.constant 0 : index
    %c0_72 = arith.constant 0 : index
    %c0_73 = arith.constant 0 : index
    %48 = vector.load %arg12[%c0_71, %c0_72, %c0_73] : memref<20x20x4xf32, #tpu.memory_space<vmem>>, vector<16x16x4xf32>
    %c0_74 = arith.constant 0 : index
    %c1_75 = arith.constant 1 : index
    %c0_76 = arith.constant 0 : index
    %49 = vector.load %arg12[%c0_74, %c1_75, %c0_76] : memref<20x20x4xf32, #tpu.memory_space<vmem>>, vector<16x16x4xf32>
    %c0_77 = arith.constant 0 : index
    %c2_78 = arith.constant 2 : index
    %c0_79 = arith.constant 0 : index
    %50 = vector.load %arg12[%c0_77, %c2_78, %c0_79] : memref<20x20x4xf32, #tpu.memory_space<vmem>>, vector<16x16x4xf32>
    %c0_80 = arith.constant 0 : index
    %c3 = arith.constant 3 : index
    %c0_81 = arith.constant 0 : index
    %51 = vector.load %arg12[%c0_80, %c3, %c0_81] : memref<20x20x4xf32, #tpu.memory_space<vmem>>, vector<16x16x4xf32>
    %c0_82 = arith.constant 0 : index
    %c4 = arith.constant 4 : index
    %c0_83 = arith.constant 0 : index
    %52 = vector.load %arg12[%c0_82, %c4, %c0_83] : memref<20x20x4xf32, #tpu.memory_space<vmem>>, vector<16x16x4xf32>
    %c1_84 = arith.constant 1 : index
    %c0_85 = arith.constant 0 : index
    %c0_86 = arith.constant 0 : index
    %53 = vector.load %arg12[%c1_84, %c0_85, %c0_86] : memref<20x20x4xf32, #tpu.memory_space<vmem>>, vector<16x16x4xf32>
    %c1_87 = arith.constant 1 : index
    %c1_88 = arith.constant 1 : index
    %c0_89 = arith.constant 0 : index
    %54 = vector.load %arg12[%c1_87, %c1_88, %c0_89] : memref<20x20x4xf32, #tpu.memory_space<vmem>>, vector<16x16x4xf32>
    %c1_90 = arith.constant 1 : index
    %c2_91 = arith.constant 2 : index
    %c0_92 = arith.constant 0 : index
    %55 = vector.load %arg12[%c1_90, %c2_91, %c0_92] : memref<20x20x4xf32, #tpu.memory_space<vmem>>, vector<16x16x4xf32>
    %c1_93 = arith.constant 1 : index
    %c3_94 = arith.constant 3 : index
    %c0_95 = arith.constant 0 : index
    %56 = vector.load %arg12[%c1_93, %c3_94, %c0_95] : memref<20x20x4xf32, #tpu.memory_space<vmem>>, vector<16x16x4xf32>
    %c1_96 = arith.constant 1 : index
    %c4_97 = arith.constant 4 : index
    %c0_98 = arith.constant 0 : index
    %57 = vector.load %arg12[%c1_96, %c4_97, %c0_98] : memref<20x20x4xf32, #tpu.memory_space<vmem>>, vector<16x16x4xf32>
    %c2_99 = arith.constant 2 : index
    %c0_100 = arith.constant 0 : index
    %c0_101 = arith.constant 0 : index
    %58 = vector.load %arg12[%c2_99, %c0_100, %c0_101] : memref<20x20x4xf32, #tpu.memory_space<vmem>>, vector<16x16x4xf32>
    %c2_102 = arith.constant 2 : index
    %c1_103 = arith.constant 1 : index
    %c0_104 = arith.constant 0 : index
    %59 = vector.load %arg12[%c2_102, %c1_103, %c0_104] : memref<20x20x4xf32, #tpu.memory_space<vmem>>, vector<16x16x4xf32>
    %c2_105 = arith.constant 2 : index
    %c2_106 = arith.constant 2 : index
    %c0_107 = arith.constant 0 : index
    %60 = vector.load %arg12[%c2_105, %c2_106, %c0_107] : memref<20x20x4xf32, #tpu.memory_space<vmem>>, vector<16x16x4xf32>
    %c2_108 = arith.constant 2 : index
    %c3_109 = arith.constant 3 : index
    %c0_110 = arith.constant 0 : index
    %61 = vector.load %arg12[%c2_108, %c3_109, %c0_110] : memref<20x20x4xf32, #tpu.memory_space<vmem>>, vector<16x16x4xf32>
    %c2_111 = arith.constant 2 : index
    %c4_112 = arith.constant 4 : index
    %c0_113 = arith.constant 0 : index
    %62 = vector.load %arg12[%c2_111, %c4_112, %c0_113] : memref<20x20x4xf32, #tpu.memory_space<vmem>>, vector<16x16x4xf32>
    %c3_114 = arith.constant 3 : index
    %c0_115 = arith.constant 0 : index
    %c0_116 = arith.constant 0 : index
    %63 = vector.load %arg12[%c3_114, %c0_115, %c0_116] : memref<20x20x4xf32, #tpu.memory_space<vmem>>, vector<16x16x4xf32>
    %c3_117 = arith.constant 3 : index
    %c1_118 = arith.constant 1 : index
    %c0_119 = arith.constant 0 : index
    %64 = vector.load %arg12[%c3_117, %c1_118, %c0_119] : memref<20x20x4xf32, #tpu.memory_space<vmem>>, vector<16x16x4xf32>
    %c3_120 = arith.constant 3 : index
    %c2_121 = arith.constant 2 : index
    %c0_122 = arith.constant 0 : index
    %65 = vector.load %arg12[%c3_120, %c2_121, %c0_122] : memref<20x20x4xf32, #tpu.memory_space<vmem>>, vector<16x16x4xf32>
    %c3_123 = arith.constant 3 : index
    %c3_124 = arith.constant 3 : index
    %c0_125 = arith.constant 0 : index
    %66 = vector.load %arg12[%c3_123, %c3_124, %c0_125] : memref<20x20x4xf32, #tpu.memory_space<vmem>>, vector<16x16x4xf32>
    %c3_126 = arith.constant 3 : index
    %c4_127 = arith.constant 4 : index
    %c0_128 = arith.constant 0 : index
    %67 = vector.load %arg12[%c3_126, %c4_127, %c0_128] : memref<20x20x4xf32, #tpu.memory_space<vmem>>, vector<16x16x4xf32>
    %c4_129 = arith.constant 4 : index
    %c0_130 = arith.constant 0 : index
    %c0_131 = arith.constant 0 : index
    %68 = vector.load %arg12[%c4_129, %c0_130, %c0_131] : memref<20x20x4xf32, #tpu.memory_space<vmem>>, vector<16x16x4xf32>
    %c4_132 = arith.constant 4 : index
    %c1_133 = arith.constant 1 : index
    %c0_134 = arith.constant 0 : index
    %69 = vector.load %arg12[%c4_132, %c1_133, %c0_134] : memref<20x20x4xf32, #tpu.memory_space<vmem>>, vector<16x16x4xf32>
    %c4_135 = arith.constant 4 : index
    %c2_136 = arith.constant 2 : index
    %c0_137 = arith.constant 0 : index
    %70 = vector.load %arg12[%c4_135, %c2_136, %c0_137] : memref<20x20x4xf32, #tpu.memory_space<vmem>>, vector<16x16x4xf32>
    %c4_138 = arith.constant 4 : index
    %c3_139 = arith.constant 3 : index
    %c0_140 = arith.constant 0 : index
    %71 = vector.load %arg12[%c4_138, %c3_139, %c0_140] : memref<20x20x4xf32, #tpu.memory_space<vmem>>, vector<16x16x4xf32>
    %c4_141 = arith.constant 4 : index
    %c4_142 = arith.constant 4 : index
    %c0_143 = arith.constant 0 : index
    %72 = vector.load %arg12[%c4_141, %c4_142, %c0_143] : memref<20x20x4xf32, #tpu.memory_space<vmem>>, vector<16x16x4xf32>
    %73 = tpu.concatenate %48, %49, %50, %51, %52, %53, %54, %55, %56, %57, %58, %59, %60, %61, %62, %63 in 2 : vector<16x16x4xf32>, vector<16x16x4xf32>, vector<16x16x4xf32>, vector<16x16x4xf32>, vector<16x16x4xf32>, vector<16x16x4xf32>, vector<16x16x4xf32>, vector<16x16x4xf32>, vector<16x16x4xf32>, vector<16x16x4xf32>, vector<16x16x4xf32>, vector<16x16x4xf32>, vector<16x16x4xf32>, vector<16x16x4xf32>, vector<16x16x4xf32>, vector<16x16x4xf32> -> vector<16x16x64xf32>
    %74 = tpu.concatenate %64, %65, %66, %67, %68, %69, %70, %71, %72 in 2 : vector<16x16x4xf32>, vector<16x16x4xf32>, vector<16x16x4xf32>, vector<16x16x4xf32>, vector<16x16x4xf32>, vector<16x16x4xf32>, vector<16x16x4xf32>, vector<16x16x4xf32>, vector<16x16x4xf32> -> vector<16x16x36xf32>
    %75 = tpu.concatenate %73, %74 in 2 : vector<16x16x64xf32>, vector<16x16x36xf32> -> vector<16x16x100xf32>
    %76 = vector.shape_cast %75 : vector<16x16x100xf32> to vector<256x100xf32>
    %77 = arith.truncf %76 : vector<256x100xf32> to vector<256x100xbf16>
    %c0_144 = arith.constant 0 : index
    %c0_145 = arith.constant 0 : index
    %78 = vector.load %arg6[%c0_144, %c0_145] : memref<100x8xbf16, #tpu.memory_space<vmem>>, vector<100x8xbf16>
    %cst_146 = arith.constant dense<0.000000e+00> : vector<256x8xf32>
    %79 = tpu.matmul %77, %78, %cst_146 {dimension_numbers = #tpu.dot_dimension_numbers<[1], [0], [0], [1], [0, 0, 1, 1], [], []>} : vector<256x100xbf16>, vector<100x8xbf16>, vector<256x8xf32> -> vector<256x8xf32>
    %c0_147 = arith.constant 0 : index
    %c0_148 = arith.constant 0 : index
    %80 = vector.load %arg7[%c0_147, %c0_148] : memref<1x8xf32, #tpu.memory_space<vmem>>, vector<1x8xf32>
    %81 = vector.broadcast %80 : vector<1x8xf32> to vector<256x8xf32>
    %82 = arith.addf %79, %81 : vector<256x8xf32>
    %cst_149 = arith.constant 0.000000e+00 : f32
    %83 = vector.broadcast %cst_149 : f32 to vector<256x8xf32>
    %84 = arith.maximumf %82, %83 : vector<256x8xf32>
    %cst_150 = arith.constant 0xFF800000 : f32
    %85 = vector.broadcast %cst_150 : f32 to vector<1x18x4xf32>
    %cst_151 = arith.constant 0xFF800000 : f32
    %86 = vector.broadcast %cst_151 : f32 to vector<18x1x4xf32>
    %c0_152 = arith.constant 0 : index
    %c0_153 = arith.constant 0 : index
    %c0_154 = arith.constant 0 : index
    %87 = vector.load %arg13[%c0_152, %c0_153, %c0_154] : memref<18x18x4xf32, #tpu.memory_space<vmem>>, vector<1x18x4xf32>
    tpu.vector_store %arg13[%c0_152, %c0_153, %c0_154], %85 {strides = array<i32>} : memref<18x18x4xf32, #tpu.memory_space<vmem>>, vector<1x18x4xf32>,
    %c17_155 = arith.constant 17 : index
    %c0_156 = arith.constant 0 : index
    %c0_157 = arith.constant 0 : index
    %88 = vector.load %arg13[%c17_155, %c0_156, %c0_157] : memref<18x18x4xf32, #tpu.memory_space<vmem>>, vector<1x18x4xf32>
    tpu.vector_store %arg13[%c17_155, %c0_156, %c0_157], %85 {strides = array<i32>} : memref<18x18x4xf32, #tpu.memory_space<vmem>>, vector<1x18x4xf32>,
    %c0_158 = arith.constant 0 : index
    %c0_159 = arith.constant 0 : index
    %c0_160 = arith.constant 0 : index
    %89 = vector.load %arg13[%c0_158, %c0_159, %c0_160] : memref<18x18x4xf32, #tpu.memory_space<vmem>>, vector<18x1x4xf32>
    tpu.vector_store %arg13[%c0_158, %c0_159, %c0_160], %86 {strides = array<i32>} : memref<18x18x4xf32, #tpu.memory_space<vmem>>, vector<18x1x4xf32>,
    %c0_161 = arith.constant 0 : index
    %c17_162 = arith.constant 17 : index
    %c0_163 = arith.constant 0 : index
    %90 = vector.load %arg13[%c0_161, %c17_162, %c0_163] : memref<18x18x4xf32, #tpu.memory_space<vmem>>, vector<18x1x4xf32>
    tpu.vector_store %arg13[%c0_161, %c17_162, %c0_163], %86 {strides = array<i32>} : memref<18x18x4xf32, #tpu.memory_space<vmem>>, vector<18x1x4xf32>,
    %91 = arith.extf %1 : vector<16x16x4xbf16> to vector<16x16x4xf32>
    %c1_164 = arith.constant 1 : index
    %c1_165 = arith.constant 1 : index
    %c0_166 = arith.constant 0 : index
    %92 = vector.load %arg13[%c1_164, %c1_165, %c0_166] : memref<18x18x4xf32, #tpu.memory_space<vmem>>, vector<16x16x4xf32>
    tpu.vector_store %arg13[%c1_164, %c1_165, %c0_166], %91 {strides = array<i32>} : memref<18x18x4xf32, #tpu.memory_space<vmem>>, vector<16x16x4xf32>,
    %c0_167 = arith.constant 0 : index
    %c0_168 = arith.constant 0 : index
    %c0_169 = arith.constant 0 : index
    %93 = vector.load %arg13[%c0_167, %c0_168, %c0_169] : memref<18x18x4xf32, #tpu.memory_space<vmem>>, vector<18x16x4xf32>
    %c0_170 = arith.constant 0 : index
    %c1_171 = arith.constant 1 : index
    %c0_172 = arith.constant 0 : index
    %94 = vector.load %arg13[%c0_170, %c1_171, %c0_172] : memref<18x18x4xf32, #tpu.memory_space<vmem>>, vector<18x16x4xf32>
    %95 = arith.maximumf %93, %94 : vector<18x16x4xf32>
    %c0_173 = arith.constant 0 : index
    %c2_174 = arith.constant 2 : index
    %c0_175 = arith.constant 0 : index
    %96 = vector.load %arg13[%c0_173, %c2_174, %c0_175] : memref<18x18x4xf32, #tpu.memory_space<vmem>>, vector<18x16x4xf32>
    %97 = arith.maximumf %95, %96 : vector<18x16x4xf32>
    %98 = vector.extract_strided_slice %97 {offsets = [0, 0, 0], sizes = [16, 16, 4], strides = [1, 1, 1]} : vector<18x16x4xf32> to vector<16x16x4xf32>
    %99 = vector.extract_strided_slice %97 {offsets = [1, 0, 0], sizes = [16, 16, 4], strides = [1, 1, 1]} : vector<18x16x4xf32> to vector<16x16x4xf32>
    %100 = arith.maximumf %98, %99 : vector<16x16x4xf32>
    %101 = vector.extract_strided_slice %97 {offsets = [2, 0, 0], sizes = [16, 16, 4], strides = [1, 1, 1]} : vector<18x16x4xf32> to vector<16x16x4xf32>
    %102 = arith.maximumf %100, %101 : vector<16x16x4xf32>
    %103 = vector.shape_cast %102 : vector<16x16x4xf32> to vector<256x4xf32>
    %104 = arith.truncf %103 : vector<256x4xf32> to vector<256x4xbf16>
    %c0_176 = arith.constant 0 : index
    %c0_177 = arith.constant 0 : index
    %105 = vector.load %arg8[%c0_176, %c0_177] : memref<4x8xbf16, #tpu.memory_space<vmem>>, vector<4x8xbf16>
    %cst_178 = arith.constant dense<0.000000e+00> : vector<256x8xf32>
    %106 = tpu.matmul %104, %105, %cst_178 {dimension_numbers = #tpu.dot_dimension_numbers<[1], [0], [0], [1], [0, 0, 1, 1], [], []>} : vector<256x4xbf16>, vector<4x8xbf16>, vector<256x8xf32> -> vector<256x8xf32>
    %c0_179 = arith.constant 0 : index
    %c0_180 = arith.constant 0 : index
    %107 = vector.load %arg9[%c0_179, %c0_180] : memref<1x8xf32, #tpu.memory_space<vmem>>, vector<1x8xf32>
    %108 = vector.broadcast %107 : vector<1x8xf32> to vector<256x8xf32>
    %109 = arith.addf %106, %108 : vector<256x8xf32>
    %cst_181 = arith.constant 0.000000e+00 : f32
    %110 = vector.broadcast %cst_181 : f32 to vector<256x8xf32>
    %111 = arith.maximumf %109, %110 : vector<256x8xf32>
    %112 = tpu.concatenate %10, %40, %84, %111 in 1 : vector<256x8xf32>, vector<256x8xf32>, vector<256x8xf32>, vector<256x8xf32> -> vector<256x32xf32>
    %113 = vector.shape_cast %112 : vector<256x32xf32> to vector<16x16x32xf32>
    %c0_182 = arith.constant 0 : index
    %c0_183 = arith.constant 0 : index
    %c0_184 = arith.constant 0 : index
    %c0_185 = arith.constant 0 : index
    %114 = vector.load %arg10[%c0_182, %c0_183, %c0_184, %c0_185] : memref<1x16x16x32xf32, #tpu.memory_space<vmem>>, vector<1x16x16x32xf32>
    %115 = vector.shape_cast %114 : vector<1x16x16x32xf32> to vector<16x16x32xf32>
    %116 = vector.shape_cast %113 : vector<16x16x32xf32> to vector<1x16x16x32xf32>
    tpu.vector_store %arg10[%c0_182, %c0_183, %c0_184, %c0_185], %116 {strides = array<i32>} : memref<1x16x16x32xf32, #tpu.memory_space<vmem>>, vector<1x16x16x32xf32>,
    return
  }
  func.func @transform_0(%arg0: i32) -> (i32, i32, i32, i32) {
    %c0_i32 = arith.constant 0 : i32
    %c0_i32_0 = arith.constant 0 : i32
    %c0_i32_1 = arith.constant 0 : i32
    %c0_i32_2 = arith.constant 0 : i32
    return %arg0, %c0_i32, %c0_i32_0, %c0_i32_1 : i32, i32, i32, i32
  }
  func.func @transform_1(%arg0: i32) -> (i32, i32) {
    %c0_i32 = arith.constant 0 : i32
    %c0_i32_0 = arith.constant 0 : i32
    %c0_i32_1 = arith.constant 0 : i32
    return %c0_i32, %c0_i32_0 : i32, i32
  }
  func.func @transform_2(%arg0: i32) -> (i32, i32) {
    %c0_i32 = arith.constant 0 : i32
    %c0_i32_0 = arith.constant 0 : i32
    %c0_i32_1 = arith.constant 0 : i32
    return %c0_i32, %c0_i32_0 : i32, i32
  }
  func.func @transform_3(%arg0: i32) -> (i32, i32) {
    %c0_i32 = arith.constant 0 : i32
    %c0_i32_0 = arith.constant 0 : i32
    %c0_i32_1 = arith.constant 0 : i32
    return %c0_i32, %c0_i32_0 : i32, i32
  }
  func.func @transform_4(%arg0: i32) -> (i32, i32) {
    %c0_i32 = arith.constant 0 : i32
    %c0_i32_0 = arith.constant 0 : i32
    %c0_i32_1 = arith.constant 0 : i32
    return %c0_i32, %c0_i32_0 : i32, i32
  }
  func.func @transform_5(%arg0: i32) -> (i32, i32) {
    %c0_i32 = arith.constant 0 : i32
    %c0_i32_0 = arith.constant 0 : i32
    %c0_i32_1 = arith.constant 0 : i32
    return %c0_i32, %c0_i32_0 : i32, i32
  }
  func.func @transform_6(%arg0: i32) -> (i32, i32) {
    %c0_i32 = arith.constant 0 : i32
    %c0_i32_0 = arith.constant 0 : i32
    %c0_i32_1 = arith.constant 0 : i32
    return %c0_i32, %c0_i32_0 : i32, i32
  }
  func.func @transform_7(%arg0: i32) -> (i32, i32) {
    %c0_i32 = arith.constant 0 : i32
    %c0_i32_0 = arith.constant 0 : i32
    %c0_i32_1 = arith.constant 0 : i32
    return %c0_i32, %c0_i32_0 : i32, i32
  }
  func.func @transform_8(%arg0: i32) -> (i32, i32) {
    %c0_i32 = arith.constant 0 : i32
    %c0_i32_0 = arith.constant 0 : i32
    %c0_i32_1 = arith.constant 0 : i32
    return %c0_i32, %c0_i32_0 : i32, i32
  }
  func.func @transform_9(%arg0: i32) -> (i32, i32, i32, i32) {
    %c0_i32 = arith.constant 0 : i32
    %c0_i32_0 = arith.constant 0 : i32
    %c0_i32_1 = arith.constant 0 : i32
    %c0_i32_2 = arith.constant 0 : i32
    return %arg0, %c0_i32, %c0_i32_0, %c0_i32_1 : i32, i32, i32, i32
  }
}

</mosaic_0001>

<llo_original>
// kernel: tpu_custom_call.1
$region0: #{tpu_custom_call.1}
  #allocation0 [shape = 'u32[]', space=smem, size = 0x4, offset = 0x4, fixed_abs, tag = 'smem constant byte address 0x4 - core index']
  #allocation1 [shape = 'u32[144,128]{1,0:T(1,128)}', space=vmem, size = 0x12000, scoped, tag = 'internal scratch']
  #allocation2 [shape = 'f32[18,18,4]{2,1,0:T(8,128)}', space=vmem, size = 0x36000, scoped, tag = 'scratch operand']
  #allocation3 [shape = 'f32[20,20,4]{2,1,0:T(8,128)}', space=vmem, size = 0x3c000, scoped, tag = 'scratch operand']
  #allocation4 [shape = 'f32[18,18,4]{2,1,0:T(8,128)}', space=vmem, size = 0x36000, scoped, tag = 'scratch operand']
  %s0 = inlined_call_operand.vmem [shape: bf16[2,16,16,4], index: 0, kind: input, shape index: {}]
  %s1 = inlined_call_operand.vmem [shape: bf16[4,16], index: 1, kind: input, shape index: {}]
  %s2 = inlined_call_operand.vmem [shape: f32[1,16], index: 2, kind: input, shape index: {}]
  %s3 = inlined_call_operand.vmem [shape: bf16[36,8], index: 3, kind: input, shape index: {}]
  %s4 = inlined_call_operand.vmem [shape: f32[1,8], index: 4, kind: input, shape index: {}]
  %s5 = inlined_call_operand.vmem [shape: bf16[100,8], index: 5, kind: input, shape index: {}]
  %s6 = inlined_call_operand.vmem [shape: f32[1,8], index: 6, kind: input, shape index: {}]
  %s7 = inlined_call_operand.vmem [shape: bf16[4,8], index: 7, kind: input, shape index: {}]
  %s8 = inlined_call_operand.vmem [shape: f32[1,8], index: 8, kind: input, shape index: {}]
  %s9 = inlined_call_operand.hbm [shape: f32[2,16,16,32], index: 9, kind: output, shape index: {}]
  %s10 = sld [smem:[#allocation0]]
  $region69: #{tpu_custom_call.1} parent=0
    _
  %s12 = ssub.s32 1, %s10
  %s13 = scalar_select 0, %s12, %s10
  $region1: #{tpu_custom_call.1} parent=0
    #allocation5 [shape = 'u8[262144]{0}', space=vmem, size = 0x40000, scoped, tag = 'output window, operand 0']
    #allocation6 [shape = 's32[2]{0}', space=sflag, size = 0x8, scoped, tag = 'scoped memory for tpu_custom_call.1']
    %14 = vsyncpa [#allocation6], 0
    %s15 = scalar_lea.sflag [#allocation6], 1
    %16 = vsyncpa %s15, 0
    loop: start=0, step=1, limit=4
    $region2: #{tpu_custom_call.1} parent=1 // loop_pre_header
      _
    $region3: #{tpu_custom_call.1} parent=1 // loop_header
      %s18 = sphi 0, %s22
      %p19 = scmp.ge.s32.totalorder %s18, 4
      %s28 = sphi 0, %s30
      %s31 = sphi 0, %s28
      %s32 = sphi 0, %s31
      %s48 = sphi 0, %s32
      %s52 = sphi 0, %s52
      %s54 = sphi 0, %s52
      %s55 = sphi 0, %s54
      %s69 = sphi 0, %s55
      %s73 = sphi 0, %s73
      %s75 = sphi 0, %s73
      %s76 = sphi 0, %s75
      %s90 = sphi 0, %s76
      %s94 = sphi 0, %s94
      %s96 = sphi 0, %s94
      %s97 = sphi 0, %s96
      %s111 = sphi 0, %s97
      %s115 = sphi 0, %s115
      %s117 = sphi 0, %s115
      %s118 = sphi 0, %s117
      %s132 = sphi 0, %s118
      %s136 = sphi 0, %s136
      %s138 = sphi 0, %s136
      %s139 = sphi 0, %s138
      %s153 = sphi 0, %s139
      %s157 = sphi 0, %s157
      %s159 = sphi 0, %s157
      %s160 = sphi 0, %s159
      %s174 = sphi 0, %s160
      %s178 = sphi 0, %s178
      %s180 = sphi 0, %s178
      %s181 = sphi 0, %s180
      %s195 = sphi 0, %s181
      %s199 = sphi 0, %s199
      %s201 = sphi 0, %s199
      %s202 = sphi 0, %s201
      %s216 = sphi 0, %s202
      %s222 = sphi 0, %s224
      %s225 = sphi 0, %s222
      %s226 = sphi 0, %s225
      %s242 = sphi 0, %s226
    $region4: #{tpu_custom_call.1} parent=1 // loop_header_branch
      %21 = sbr.rel (%p19) target = $region8
    $region5: #{tpu_custom_call.1} parent=1 // loop_body
      %s23 = ssub.s32 %s18, 1
      %s24 = ssub.s32 %s18, 2
      %s25 = sadd.s32 %s18, 1
      %s26 = ssub.s32 %s18, %s25
      %p27 = scmp.eq.s32.totalorder %s26, 0
      %s29 = sadd.s32 %s28, 1
      %s30 = scalar_select %p27, %s28, %s29
      %p33 = pneg %p27
      %p34 = scmp.eq.s32.totalorder %s18, 1
      %p35 = por %p33, %p34
      %p36 = scmp.ne.s32.totalorder %s28, %s31
      %p37 = scmp.eq.s32.totalorder %s18, 0
      %p38 = por %p36, %p37
      %p39 = scmp.ne.s32.totalorder %s28, %s31
      %p40 = scmp.eq.s32.totalorder %s23, 1
      %p41 = por %p39, %p40
      %p42 = scmp.ne.s32.totalorder %s31, %s32
      %p43 = scmp.eq.s32.totalorder %s23, 0
      %p44 = por %p42, %p43
      %p45 = scmp.ne.s32.totalorder %s31, %s32
      %p46 = scmp.eq.s32.totalorder %s24, 1
      %p47 = por %p45, %p46
      %p49 = scmp.ne.s32.totalorder %s32, %s48
      %p50 = scmp.eq.s32.totalorder %s24, 0
      %p51 = por %p49, %p50
      %s53 = sadd.s32 %s52, 1
      %p56 = scmp.eq.s32.totalorder %s18, 1
      %p57 = scmp.ne.s32.totalorder %s52, %s54
      %p58 = scmp.eq.s32.totalorder %s18, 0
      %p59 = por %p57, %p58
      %p60 = scmp.ne.s32.totalorder %s52, %s54
      %p61 = scmp.eq.s32.totalorder %s23, 1
      %p62 = por %p60, %p61
      %p63 = scmp.ne.s32.totalorder %s54, %s55
      %p64 = scmp.eq.s32.totalorder %s23, 0
      %p65 = por %p63, %p64
      %p66 = scmp.ne.s32.totalorder %s54, %s55
      %p67 = scmp.eq.s32.totalorder %s24, 1
      %p68 = por %p66, %p67
      %p70 = scmp.ne.s32.totalorder %s55, %s69
      %p71 = scmp.eq.s32.totalorder %s24, 0
      %p72 = por %p70, %p71
      %s74 = sadd.s32 %s73, 1
      %p77 = scmp.eq.s32.totalorder %s18, 1
      %p78 = scmp.ne.s32.totalorder %s73, %s75
      %p79 = scmp.eq.s32.totalorder %s18, 0
      %p80 = por %p78, %p79
      %p81 = scmp.ne.s32.totalorder %s73, %s75
      %p82 = scmp.eq.s32.totalorder %s23, 1
      %p83 = por %p81, %p82
      %p84 = scmp.ne.s32.totalorder %s75, %s76
      %p85 = scmp.eq.s32.totalorder %s23, 0
      %p86 = por %p84, %p85
      %p87 = scmp.ne.s32.totalorder %s75, %s76
      %p88 = scmp.eq.s32.totalorder %s24, 1
      %p89 = por %p87, %p88
      %p91 = scmp.ne.s32.totalorder %s76, %s90
      %p92 = scmp.eq.s32.totalorder %s24, 0
      %p93 = por %p91, %p92
      %s95 = sadd.s32 %s94, 1
      %p98 = scmp.eq.s32.totalorder %s18, 1
      %p99 = scmp.ne.s32.totalorder %s94, %s96
      %p100 = scmp.eq.s32.totalorder %s18, 0
      %p101 = por %p99, %p100
      %p102 = scmp.ne.s32.totalorder %s94, %s96
      %p103 = scmp.eq.s32.totalorder %s23, 1
      %p104 = por %p102, %p103
      %p105 = scmp.ne.s32.totalorder %s96, %s97
      %p106 = scmp.eq.s32.totalorder %s23, 0
      %p107 = por %p105, %p106
      %p108 = scmp.ne.s32.totalorder %s96, %s97
      %p109 = scmp.eq.s32.totalorder %s24, 1
      %p110 = por %p108, %p109
      %p112 = scmp.ne.s32.totalorder %s97, %s111
      %p113 = scmp.eq.s32.totalorder %s24, 0
      %p114 = por %p112, %p113
      %s116 = sadd.s32 %s115, 1
      %p119 = scmp.eq.s32.totalorder %s18, 1
      %p120 = scmp.ne.s32.totalorder %s115, %s117
      %p121 = scmp.eq.s32.totalorder %s18, 0
      %p122 = por %p120, %p121
      %p123 = scmp.ne.s32.totalorder %s115, %s117
      %p124 = scmp.eq.s32.totalorder %s23, 1
      %p125 = por %p123, %p124
      %p126 = scmp.ne.s32.totalorder %s117, %s118
      %p127 = scmp.eq.s32.totalorder %s23, 0
      %p128 = por %p126, %p127
      %p129 = scmp.ne.s32.totalorder %s117, %s118
      %p130 = scmp.eq.s32.totalorder %s24, 1
      %p131 = por %p129, %p130
      %p133 = scmp.ne.s32.totalorder %s118, %s132
      %p134 = scmp.eq.s32.totalorder %s24, 0
      %p135 = por %p133, %p134
      %s137 = sadd.s32 %s136, 1
      %p140 = scmp.eq.s32.totalorder %s18, 1
      %p141 = scmp.ne.s32.totalorder %s136, %s138
      %p142 = scmp.eq.s32.totalorder %s18, 0
      %p143 = por %p141, %p142
      %p144 = scmp.ne.s32.totalorder %s136, %s138
      %p145 = scmp.eq.s32.totalorder %s23, 1
      %p146 = por %p144, %p145
      %p147 = scmp.ne.s32.totalorder %s138, %s139
      %p148 = scmp.eq.s32.totalorder %s23, 0
      %p149 = por %p147, %p148
      %p150 = scmp.ne.s32.totalorder %s138, %s139
      %p151 = scmp.eq.s32.totalorder %s24, 1
      %p152 = por %p150, %p151
      %p154 = scmp.ne.s32.totalorder %s139, %s153
      %p155 = scmp.eq.s32.totalorder %s24, 0
      %p156 = por %p154, %p155
      %s158 = sadd.s32 %s157, 1
      %p161 = scmp.eq.s32.totalorder %s18, 1
      %p162 = scmp.ne.s32.totalorder %s157, %s159
      %p163 = scmp.eq.s32.totalorder %s18, 0
      %p164 = por %p162, %p163
      %p165 = scmp.ne.s32.totalorder %s157, %s159
      %p166 = scmp.eq.s32.totalorder %s23, 1
      %p167 = por %p165, %p166
      %p168 = scmp.ne.s32.totalorder %s159, %s160
      %p169 = scmp.eq.s32.totalorder %s23, 0
      %p170 = por %p168, %p169
      %p171 = scmp.ne.s32.totalorder %s159, %s160
      %p172 = scmp.eq.s32.totalorder %s24, 1
      %p173 = por %p171, %p172
      %p175 = scmp.ne.s32.totalorder %s160, %s174
      %p176 = scmp.eq.s32.totalorder %s24, 0
      %p177 = por %p175, %p176
      %s179 = sadd.s32 %s178, 1
      %p182 = scmp.eq.s32.totalorder %s18, 1
      %p183 = scmp.ne.s32.totalorder %s178, %s180
      %p184 = scmp.eq.s32.totalorder %s18, 0
      %p185 = por %p183, %p184
      %p186 = scmp.ne.s32.totalorder %s178, %s180
      %p187 = scmp.eq.s32.totalorder %s23, 1
      %p188 = por %p186, %p187
      %p189 = scmp.ne.s32.totalorder %s180, %s181
      %p190 = scmp.eq.s32.totalorder %s23, 0
      %p191 = por %p189, %p190
      %p192 = scmp.ne.s32.totalorder %s180, %s181
      %p193 = scmp.eq.s32.totalorder %s24, 1
      %p194 = por %p192, %p193
      %p196 = scmp.ne.s32.totalorder %s181, %s195
      %p197 = scmp.eq.s32.totalorder %s24, 0
      %p198 = por %p196, %p197
      %s200 = sadd.s32 %s199, 1
      %p203 = scmp.eq.s32.totalorder %s18, 1
      %p204 = scmp.ne.s32.totalorder %s199, %s201
      %p205 = scmp.eq.s32.totalorder %s18, 0
      %p206 = por %p204, %p205
      %p207 = scmp.ne.s32.totalorder %s199, %s201
      %p208 = scmp.eq.s32.totalorder %s23, 1
      %p209 = por %p207, %p208
      %p210 = scmp.ne.s32.totalorder %s201, %s202
      %p211 = scmp.eq.s32.totalorder %s23, 0
      %p212 = por %p210, %p211
      %p213 = scmp.ne.s32.totalorder %s201, %s202
      %p214 = scmp.eq.s32.totalorder %s24, 1
      %p215 = por %p213, %p214
      %p217 = scmp.ne.s32.totalorder %s202, %s216
      %p218 = scmp.eq.s32.totalorder %s24, 0
      %p219 = por %p217, %p218
      %s220 = ssub.s32 %s18, %s25
      %p221 = scmp.eq.s32.totalorder %s220, 0
      %s223 = sadd.s32 %s222, 1
      %s224 = scalar_select %p221, %s222, %s223
      %p227 = pneg %p221
      %p228 = scmp.eq.s32.totalorder %s18, 1
      %p229 = por %p227, %p228
      %p230 = scmp.ne.s32.totalorder %s222, %s225
      %p231 = scmp.eq.s32.totalorder %s18, 0
      %p232 = por %p230, %p231
      %p233 = scmp.ne.s32.totalorder %s222, %s225
      %p234 = scmp.eq.s32.totalorder %s23, 1
      %p235 = por %p233, %p234
      %p236 = scmp.ne.s32.totalorder %s225, %s226
      %p237 = scmp.eq.s32.totalorder %s23, 0
      %p238 = por %p236, %p237
      %p239 = scmp.ne.s32.totalorder %s225, %s226
      %p240 = scmp.eq.s32.totalorder %s24, 1
      %p241 = por %p239, %p240
      %p243 = scmp.ne.s32.totalorder %s226, %s242
      %p244 = scmp.eq.s32.totalorder %s24, 0
      %p245 = por %p243, %p244
      %p246 = scmp.le.s32.totalorder 1, %s18
      %p247 = scmp.lt.s32.totalorder %s18, 3
      %p248 = pnand %p246, %p247
      %p249 = pneg %p248
      // Predicated region
      $region9: #{tpu_custom_call.1} parent=5 // pred_check
        _
      $region10: #{tpu_custom_call.1} parent=5 // pred_check_branch
        %251 = sbr.rel (%p248) target = $region12
      $region11: #{tpu_custom_call.1} parent=5 // pred_region
        %s252 = ssub.s32 %s18, 1
        // Predicated region
        $region13: #{tpu_custom_call.1} parent=11 // pred_check
          %p253 = pneg %p65
        $region14: #{tpu_custom_call.1} parent=11 // pred_check_branch
          %255 = sbr.rel (%p253) target = $region16
        $region15: #{tpu_custom_call.1} parent=11 // pred_region
          _
        $region16: #{tpu_custom_call.1} parent=11 // pred_fallthru
          _
        // Predicated region
        $region17: #{tpu_custom_call.1} parent=11 // pred_check
          %p256 = pneg %p86
        $region18: #{tpu_custom_call.1} parent=11 // pred_check_branch
          %258 = sbr.rel (%p256) target = $region20
        $region19: #{tpu_custom_call.1} parent=11 // pred_region
          _
        $region20: #{tpu_custom_call.1} parent=11 // pred_fallthru
          _
        // Predicated region
        $region21: #{tpu_custom_call.1} parent=11 // pred_check
          %p259 = pneg %p107
        $region22: #{tpu_custom_call.1} parent=11 // pred_check_branch
          %261 = sbr.rel (%p259) target = $region24
        $region23: #{tpu_custom_call.1} parent=11 // pred_region
          _
        $region24: #{tpu_custom_call.1} parent=11 // pred_fallthru
          _
        // Predicated region
        $region25: #{tpu_custom_call.1} parent=11 // pred_check
          %p262 = pneg %p128
        $region26: #{tpu_custom_call.1} parent=11 // pred_check_branch
          %264 = sbr.rel (%p262) target = $region28
        $region27: #{tpu_custom_call.1} parent=11 // pred_region
          _
        $region28: #{tpu_custom_call.1} parent=11 // pred_fallthru
          _
        // Predicated region
        $region29: #{tpu_custom_call.1} parent=11 // pred_check
          %p265 = pneg %p149
        $region30: #{tpu_custom_call.1} parent=11 // pred_check_branch
          %267 = sbr.rel (%p265) target = $region32
        $region31: #{tpu_custom_call.1} parent=11 // pred_region
          _
        $region32: #{tpu_custom_call.1} parent=11 // pred_fallthru
          _
        // Predicated region
        $region33: #{tpu_custom_call.1} parent=11 // pred_check
          %p268 = pneg %p170
        $region34: #{tpu_custom_call.1} parent=11 // pred_check_branch
          %270 = sbr.rel (%p268) target = $region36
        $region35: #{tpu_custom_call.1} parent=11 // pred_region
          _
        $region36: #{tpu_custom_call.1} parent=11 // pred_fallthru
          _
        // Predicated region
        $region37: #{tpu_custom_call.1} parent=11 // pred_check
          %p271 = pneg %p191
        $region38: #{tpu_custom_call.1} parent=11 // pred_check_branch
          %273 = sbr.rel (%p271) target = $region40
        $region39: #{tpu_custom_call.1} parent=11 // pred_region
          _
        $region40: #{tpu_custom_call.1} parent=11 // pred_fallthru
          _
        // Predicated region
        $region41: #{tpu_custom_call.1} parent=11 // pred_check
          %p274 = pneg %p212
        $region42: #{tpu_custom_call.1} parent=11 // pred_check_branch
          %276 = sbr.rel (%p274) target = $region44
        $region43: #{tpu_custom_call.1} parent=11 // pred_region
          _
        $region44: #{tpu_custom_call.1} parent=11 // pred_fallthru
          _
      $region12: #{tpu_custom_call.1} parent=5 // pred_fallthru
        _
      %p277 = scmp.lt.s32.totalorder %s18, 2
      // Predicated region
      $region45: #{tpu_custom_call.1} parent=5 // pred_check
        %p278 = pneg %p277
      $region46: #{tpu_custom_call.1} parent=5 // pred_check_branch
        %280 = sbr.rel (%p278) target = $region48
      $region47: #{tpu_custom_call.1} parent=5 // pred_region
        // Predicated region
        $region49: #{tpu_custom_call.1} parent=47 // pred_check
          %p281 = pneg %p38
        $region50: #{tpu_custom_call.1} parent=47 // pred_check_branch
          %283 = sbr.rel (%p281) target = $region52
        $region51: #{tpu_custom_call.1} parent=47 // pred_region
          %p284 = scmp.lt.s32.totalorder %s18, 1
          %s285 = scalar_select %p284, %s18, 1
          %s286 = smul.addr %s285, 32
          %s287 = smul.addr %s286, 4
          %s288 = scalar_lea.vmem %s0, %s287
        $region52: #{tpu_custom_call.1} parent=47 // pred_fallthru
          _
      $region48: #{tpu_custom_call.1} parent=5 // pred_fallthru
        _
      %p289 = scmp.le.s32.totalorder 1, %s18
      %p290 = scmp.lt.s32.totalorder %s18, 3
      %p291 = pnand %p289, %p290
      %p292 = pneg %p291
      // Predicated region
      $region53: #{tpu_custom_call.1} parent=5 // pred_check
        _
      $region54: #{tpu_custom_call.1} parent=5 // pred_check_branch
        %294 = sbr.rel (%p291) target = $region56
      $region55: #{tpu_custom_call.1} parent=5 // pred_region
        %s295 = ssub.s32 %s18, 1
        %p296 = scmp.lt.s32.totalorder %s23, 1
        %s297 = scalar_select %p296, %s23, 1
        %s298 = smul.addr %s297, 32
        %s299 = smul.addr %s298, 4
        %s300 = scalar_lea.vmem %s0, %s299
        %p301 = pneg %p44
        %p302 = pneg %p41
        %p303 = pneg %p65
        %p304 = pneg %p62
        %p305 = pneg %p86
        %p306 = pneg %p83
        %p307 = pneg %p107
        %p308 = pneg %p104
        %p309 = pneg %p128
        %p310 = pneg %p125
        %p311 = pneg %p149
        %p312 = pneg %p146
        %p313 = pneg %p170
        %p314 = pneg %p167
        %p315 = pneg %p191
        %p316 = pneg %p188
        %p317 = pneg %p212
        %p318 = pneg %p209
        %p319 = pneg %p238
        %p320 = pneg %p235
        %s321 = sand.u32 %s225, 1
        %s322 = scalar_lea.sflag [#allocation6], %s321
        %s323 = sand.u32 %s225, 1
        %s324 = smul.addr %s323, 256
        %s325 = scalar_lea.vmem [#allocation5], %s324
        %p326 = scmp.lt.s32.totalorder %s23, 1
        %s327 = scalar_select %p326, %s23, 1
        %s328 = smul.addr %s327, 32
        %s329 = smul.addr %s328, 4
        %s330 = scalar_lea.vmem %s0, %s329
        %v332 = vld [vmem:[%s330] sm:$0xf]
        %v333 = vld [vmem:[%s330 + $0x4] sm:$0xf]
        %v334 = vld [vmem:[%s330 + $0x8] sm:$0xf]
        %v335 = vld [vmem:[%s330 + $0xc] sm:$0xf]
        %v336 = vld [vmem:[%s330 + $0x10] sm:$0xf]
        %v337 = vld [vmem:[%s330 + $0x14] sm:$0xf]
        %v338 = vld [vmem:[%s330 + $0x18] sm:$0xf]
        %v339 = vld [vmem:[%s330 + $0x1c] sm:$0xf]
        %v340 = vld [vmem:[%s330 + $0x20] sm:$0xf]
        %v341 = vld [vmem:[%s330 + $0x24] sm:$0xf]
        %v342 = vld [vmem:[%s330 + $0x28] sm:$0xf]
        %v343 = vld [vmem:[%s330 + $0x2c] sm:$0xf]
        %v344 = vld [vmem:[%s330 + $0x30] sm:$0xf]
        %v345 = vld [vmem:[%s330 + $0x34] sm:$0xf]
        %v346 = vld [vmem:[%s330 + $0x38] sm:$0xf]
        %v347 = vld [vmem:[%s330 + $0x3c] sm:$0xf]
        %v348 = vld [vmem:[%s330 + $0x40] sm:$0xf]
        %v349 = vld [vmem:[%s330 + $0x44] sm:$0xf]
        %v350 = vld [vmem:[%s330 + $0x48] sm:$0xf]
        %v351 = vld [vmem:[%s330 + $0x4c] sm:$0xf]
        %v352 = vld [vmem:[%s330 + $0x50] sm:$0xf]
        %v353 = vld [vmem:[%s330 + $0x54] sm:$0xf]
        %v354 = vld [vmem:[%s330 + $0x58] sm:$0xf]
        %v355 = vld [vmem:[%s330 + $0x5c] sm:$0xf]
        %v356 = vld [vmem:[%s330 + $0x60] sm:$0xf]
        %v357 = vld [vmem:[%s330 + $0x64] sm:$0xf]
        %v358 = vld [vmem:[%s330 + $0x68] sm:$0xf]
        %v359 = vld [vmem:[%s330 + $0x6c] sm:$0xf]
        %v360 = vld [vmem:[%s330 + $0x70] sm:$0xf]
        %v361 = vld [vmem:[%s330 + $0x74] sm:$0xf]
        %v362 = vld [vmem:[%s330 + $0x78] sm:$0xf]
        %v363 = vld [vmem:[%s330 + $0x7c] sm:$0xf]
        %v364 = vld [vmem:[%s1] sm:$0x3]
        %v365 = vld [vmem:[%s2] sm:$0x1]
        %v367 = vlaneseq
        %v368 = vshrl.u32 %v367, 7
        %v369 = vsub.s32 0, %v368
        %v370 = vrot.slane %v365, %v369
        %v404 = vunpack.c.l.b16 %v332
        %v405 = vunpack.c.l.b16 %v333
        %v406 = vunpack.c.l.b16 %v334
        %v407 = vunpack.c.l.b16 %v335
        %v408 = vunpack.c.l.b16 %v336
        %v409 = vunpack.c.l.b16 %v337
        %v410 = vunpack.c.l.b16 %v338
        %v411 = vunpack.c.l.b16 %v339
        %v412 = vunpack.c.l.b16 %v340
        %v413 = vunpack.c.l.b16 %v341
        %v414 = vunpack.c.l.b16 %v342
        %v415 = vunpack.c.l.b16 %v343
        %v416 = vunpack.c.l.b16 %v344
        %v417 = vunpack.c.l.b16 %v345
        %v418 = vunpack.c.l.b16 %v346
        %v419 = vunpack.c.l.b16 %v347
        %v420 = vunpack.c.l.b16 %v348
        %v421 = vunpack.c.l.b16 %v349
        %v422 = vunpack.c.l.b16 %v350
        %v423 = vunpack.c.l.b16 %v351
        %v424 = vunpack.c.l.b16 %v352
        %v425 = vunpack.c.l.b16 %v353
        %v426 = vunpack.c.l.b16 %v354
        %v427 = vunpack.c.l.b16 %v355
        %v428 = vunpack.c.l.b16 %v356
        %v429 = vunpack.c.l.b16 %v357
        %v430 = vunpack.c.l.b16 %v358
        %v431 = vunpack.c.l.b16 %v359
        %v432 = vunpack.c.l.b16 %v360
        %v433 = vunpack.c.l.b16 %v361
        %v434 = vunpack.c.l.b16 %v362
        %v435 = vunpack.c.l.b16 %v363
        %v436 = vpack.c.b16 %v405, %v404
        %v437 = vpack.c.b16 %v407, %v406
        %v438 = vpack.c.b16 %v409, %v408
        %v439 = vpack.c.b16 %v411, %v410
        %v440 = vpack.c.b16 %v413, %v412
        %v441 = vpack.c.b16 %v415, %v414
        %v442 = vpack.c.b16 %v417, %v416
        %v443 = vpack.c.b16 %v419, %v418
        %v444 = vpack.c.b16 %v421, %v420
        %v445 = vpack.c.b16 %v423, %v422
        %v446 = vpack.c.b16 %v425, %v424
        %v447 = vpack.c.b16 %v427, %v426
        %v448 = vpack.c.b16 %v429, %v428
        %v449 = vpack.c.b16 %v431, %v430
        %v450 = vpack.c.b16 %v433, %v432
        %v451 = vpack.c.b16 %v435, %v434
        %vm452 = vcmask 31744
        %v454 = vsel %vm452, %v436, 0
        %v457 = vsel %vm452, %v437, 0
        %v460 = vsel %vm452, %v438, 0
        %v463 = vsel %vm452, %v439, 0
        %v466 = vsel %vm452, %v440, 0
        %v469 = vsel %vm452, %v441, 0
        %v472 = vsel %vm452, %v442, 0
        %v475 = vsel %vm452, %v443, 0
        %v478 = vsel %vm452, %v444, 0
        %v481 = vsel %vm452, %v445, 0
        %v484 = vsel %vm452, %v446, 0
        %v487 = vsel %vm452, %v447, 0
        %v490 = vsel %vm452, %v448, 0
        %v493 = vsel %vm452, %v449, 0
        %v496 = vsel %vm452, %v450, 0
        %v499 = vsel %vm452, %v451, 0
        %vm501 = vcmask 1041408
        %v503 = vsel %vm501, %v364, 0
        %505 = vmatprep.subr.bf16.mxu0 0
        %506 = vmatpush1.bf16.msra.mxu0 0
        %507 = vmatprep.subr.bf16.mxu0 0
        %508 = vmatpush1.bf16.msra.mxu0 0
        %509 = vmatprep.subr.bf16.mxu0 0
        %510 = vmatpush1.bf16.msra.mxu0 0
        %511 = vmatprep.subr.bf16.mxu0 0
        %512 = vmatpush1.bf16.msra.mxu0 0
        %513 = vmatprep.subr.bf16.mxu0 0
        %514 = vmatpush1.bf16.msra.mxu0 0
        %515 = vmatprep.subr.bf16.mxu0 0
        %516 = vmatpush1.bf16.msra.mxu0 0
        %517 = vmatprep.subr.bf16.mxu0 0
        %518 = vmatpush1.bf16.msra.mxu0 0
        %519 = vmatprep.subr.bf16.mxu0 0
        %520 = vmatpush1.bf16.msra.mxu0 %v503
        %521 = vmatprep.subr.bf16.mxu0 0
        %522 = vmatpush2.bf16.msra.mxu0 0
        %523 = vmatprep.subr.bf16.mxu0 0
        %524 = vmatpush2.bf16.msra.mxu0 0
        %525 = vmatprep.subr.bf16.mxu0 0
        %526 = vmatpush2.bf16.msra.mxu0 0
        %527 = vmatprep.subr.bf16.mxu0 0
        %528 = vmatpush2.bf16.msra.mxu0 0
        %529 = vmatprep.subr.bf16.mxu0 0
        %530 = vmatpush2.bf16.msra.mxu0 0
        %531 = vmatprep.subr.bf16.mxu0 0
        %532 = vmatpush2.bf16.msra.mxu0 0
        %533 = vmatprep.subr.bf16.mxu0 0
        %534 = vmatpush2.bf16.msra.mxu0 0
        %535 = vmatprep.subr.bf16.mxu0 0
        %536 = vmatpush2.bf16.msra.mxu0 0
        %537 = vmatprep.mubr.bf16.mxu0 0
        %538 = vmatmul.mubr.bf16.gmra.mxu0 %v454
        %v539 = vpop.f32.mrf.mxu0
        %v540 = vadd.f32 %v370, %v539
        %v541 = vpop.f32.mrf.mxu0
        %v542 = vpop.f32.mrf.mxu0
        %v543 = vadd.f32 %v370, %v542
        %v544 = vpop.f32.mrf.mxu0
        %545 = vmatprep.mubr.bf16.mxu0 0
        %546 = vmatmul.mubr.bf16.gmra.mxu0 %v457
        %v547 = vpop.f32.mrf.mxu0
        %v548 = vadd.f32 %v370, %v547
        %v549 = vpop.f32.mrf.mxu0
        %v550 = vpop.f32.mrf.mxu0
        %v551 = vadd.f32 %v370, %v550
        %v552 = vpop.f32.mrf.mxu0
        %553 = vmatprep.mubr.bf16.mxu0 0
        %554 = vmatmul.mubr.bf16.gmra.mxu0 %v460
        %v555 = vpop.f32.mrf.mxu0
        %v556 = vadd.f32 %v370, %v555
        %v557 = vpop.f32.mrf.mxu0
        %v558 = vpop.f32.mrf.mxu0
        %v559 = vadd.f32 %v370, %v558
        %v560 = vpop.f32.mrf.mxu0
        %561 = vmatprep.mubr.bf16.mxu0 0
        %562 = vmatmul.mubr.bf16.gmra.mxu0 %v463
        %v563 = vpop.f32.mrf.mxu0
        %v564 = vadd.f32 %v370, %v563
        %v565 = vpop.f32.mrf.mxu0
        %v566 = vpop.f32.mrf.mxu0
        %v567 = vadd.f32 %v370, %v566
        %v568 = vpop.f32.mrf.mxu0
        %569 = vmatprep.mubr.bf16.mxu0 0
        %570 = vmatmul.mubr.bf16.gmra.mxu0 %v466
        %v571 = vpop.f32.mrf.mxu0
        %v572 = vadd.f32 %v370, %v571
        %v573 = vpop.f32.mrf.mxu0
        %v574 = vpop.f32.mrf.mxu0
        %v575 = vadd.f32 %v370, %v574
        %v576 = vpop.f32.mrf.mxu0
        %577 = vmatprep.mubr.bf16.mxu0 0
        %578 = vmatmul.mubr.bf16.gmra.mxu0 %v469
        %v579 = vpop.f32.mrf.mxu0
        %v580 = vadd.f32 %v370, %v579
        %v581 = vpop.f32.mrf.mxu0
        %v582 = vpop.f32.mrf.mxu0
        %v583 = vadd.f32 %v370, %v582
        %v584 = vpop.f32.mrf.mxu0
        %585 = vmatprep.mubr.bf16.mxu0 0
        %586 = vmatmul.mubr.bf16.gmra.mxu0 %v472
        %v587 = vpop.f32.mrf.mxu0
        %v588 = vadd.f32 %v370, %v587
        %v589 = vpop.f32.mrf.mxu0
        %v590 = vpop.f32.mrf.mxu0
        %v591 = vadd.f32 %v370, %v590
        %v592 = vpop.f32.mrf.mxu0
        %593 = vmatprep.mubr.bf16.mxu0 0
        %594 = vmatmul.mubr.bf16.gmra.mxu0 %v475
        %v595 = vpop.f32.mrf.mxu0
        %v596 = vadd.f32 %v370, %v595
        %v597 = vpop.f32.mrf.mxu0
        %v598 = vpop.f32.mrf.mxu0
        %v599 = vadd.f32 %v370, %v598
        %v600 = vpop.f32.mrf.mxu0
        %601 = vmatprep.mubr.bf16.mxu0 0
        %602 = vmatmul.mubr.bf16.gmra.mxu0 %v478
        %v603 = vpop.f32.mrf.mxu0
        %v604 = vadd.f32 %v370, %v603
        %v605 = vpop.f32.mrf.mxu0
        %v606 = vpop.f32.mrf.mxu0
        %v607 = vadd.f32 %v370, %v606
        %v608 = vpop.f32.mrf.mxu0
        %609 = vmatprep.mubr.bf16.mxu0 0
        %610 = vmatmul.mubr.bf16.gmra.mxu0 %v481
        %v611 = vpop.f32.mrf.mxu0
        %v612 = vadd.f32 %v370, %v611
        %v613 = vpop.f32.mrf.mxu0
        %v614 = vpop.f32.mrf.mxu0
        %v615 = vadd.f32 %v370, %v614
        %v616 = vpop.f32.mrf.mxu0
        %617 = vmatprep.mubr.bf16.mxu0 0
        %618 = vmatmul.mubr.bf16.gmra.mxu0 %v484
        %v619 = vpop.f32.mrf.mxu0
        %v620 = vadd.f32 %v370, %v619
        %v621 = vpop.f32.mrf.mxu0
        %v622 = vpop.f32.mrf.mxu0
        %v623 = vadd.f32 %v370, %v622
        %v624 = vpop.f32.mrf.mxu0
        %625 = vmatprep.mubr.bf16.mxu0 0
        %626 = vmatmul.mubr.bf16.gmra.mxu0 %v487
        %v627 = vpop.f32.mrf.mxu0
        %v628 = vadd.f32 %v370, %v627
        %v629 = vpop.f32.mrf.mxu0
        %v630 = vpop.f32.mrf.mxu0
        %v631 = vadd.f32 %v370, %v630
        %v632 = vpop.f32.mrf.mxu0
        %633 = vmatprep.mubr.bf16.mxu0 0
        %634 = vmatmul.mubr.bf16.gmra.mxu0 %v490
        %v635 = vpop.f32.mrf.mxu0
        %v636 = vadd.f32 %v370, %v635
        %v637 = vpop.f32.mrf.mxu0
        %v638 = vpop.f32.mrf.mxu0
        %v639 = vadd.f32 %v370, %v638
        %v640 = vpop.f32.mrf.mxu0
        %641 = vmatprep.mubr.bf16.mxu0 0
        %642 = vmatmul.mubr.bf16.gmra.mxu0 %v493
        %v643 = vpop.f32.mrf.mxu0
        %v644 = vadd.f32 %v370, %v643
        %v645 = vpop.f32.mrf.mxu0
        %v646 = vpop.f32.mrf.mxu0
        %v647 = vadd.f32 %v370, %v646
        %v648 = vpop.f32.mrf.mxu0
        %649 = vmatprep.mubr.bf16.mxu0 0
        %650 = vmatmul.mubr.bf16.gmra.mxu0 %v496
        %v651 = vpop.f32.mrf.mxu0
        %v652 = vadd.f32 %v370, %v651
        %v653 = vpop.f32.mrf.mxu0
        %v654 = vpop.f32.mrf.mxu0
        %v655 = vadd.f32 %v370, %v654
        %v656 = vpop.f32.mrf.mxu0
        %657 = vmatprep.mubr.bf16.mxu0 0
        %658 = vmatmul.mubr.bf16.gmra.mxu0 %v499
        %v659 = vpop.f32.mrf.mxu0
        %v660 = vadd.f32 %v370, %v659
        %v661 = vpop.f32.mrf.mxu0
        %v662 = vpop.f32.mrf.mxu0
        %v663 = vadd.f32 %v370, %v662
        %v664 = vpop.f32.mrf.mxu0
        %665 = vdwg.mxu0
        %v666 = vmax.f32 %v540, 0.0
        %v667 = vmax.f32 %v543, 0.0
        %v668 = vmax.f32 %v548, 0.0
        %v669 = vmax.f32 %v551, 0.0
        %v670 = vmax.f32 %v556, 0.0
        %v671 = vmax.f32 %v559, 0.0
        %v672 = vmax.f32 %v564, 0.0
        %v673 = vmax.f32 %v567, 0.0
        %v674 = vmax.f32 %v572, 0.0
        %v675 = vmax.f32 %v575, 0.0
        %v676 = vmax.f32 %v580, 0.0
        %v677 = vmax.f32 %v583, 0.0
        %v678 = vmax.f32 %v588, 0.0
        %v679 = vmax.f32 %v591, 0.0
        %v680 = vmax.f32 %v596, 0.0
        %v681 = vmax.f32 %v599, 0.0
        %v682 = vmax.f32 %v604, 0.0
        %v683 = vmax.f32 %v607, 0.0
        %v684 = vmax.f32 %v612, 0.0
        %v685 = vmax.f32 %v615, 0.0
        %v686 = vmax.f32 %v620, 0.0
        %v687 = vmax.f32 %v623, 0.0
        %v688 = vmax.f32 %v628, 0.0
        %v689 = vmax.f32 %v631, 0.0
        %v690 = vmax.f32 %v636, 0.0
        %v691 = vmax.f32 %v639, 0.0
        %v692 = vmax.f32 %v644, 0.0
        %v693 = vmax.f32 %v647, 0.0
        %v694 = vmax.f32 %v652, 0.0
        %v695 = vmax.f32 %v655, 0.0
        %v696 = vmax.f32 %v660, 0.0
        %v697 = vmax.f32 %v663, 0.0
        %698 = vst.msk [vmem:[#allocation2] sm:$0xff] %vm452, 0.0
        %699 = vst.msk [vmem:[#allocation2 + $0x8] sm:$0xff] %vm452, 0.0
        %vm700 = vcmask 25600
        %701 = vst.msk [vmem:[#allocation2 + $0x10] sm:$0x3] %vm700, 0.0
        %s702 = scalar_lea.vmem [#allocation2], 408
        %703 = vst.msk [vmem:[%s702] sm:$0xff] %vm452, 0.0
        %704 = vst.msk [vmem:[%s702 + $0x8] sm:$0xff] %vm452, 0.0
        %705 = vst.msk [vmem:[%s702 + $0x10] sm:$0x3] %vm700, 0.0
        %vm706 = vcmask 24576
        %707 = vst.msk [vmem:[#allocation2] sm:$0x1] %vm706, 0.0
        %708 = vst.msk [vmem:[#allocation2 + $0x18] sm:$0x1] %vm706, 0.0
        %709 = vst.msk [vmem:[#allocation2 + $0x30] sm:$0x1] %vm706, 0.0
        %710 = vst.msk [vmem:[#allocation2 + $0x48] sm:$0x1] %vm706, 0.0
        %711 = vst.msk [vmem:[#allocation2 + $0x60] sm:$0x1] %vm706, 0.0
        %712 = vst.msk [vmem:[#allocation2 + $0x78] sm:$0x1] %vm706, 0.0
        %713 = vst.msk [vmem:[#allocation2 + $0x90] sm:$0x1] %vm706, 0.0
        %714 = vst.msk [vmem:[#allocation2 + $0xa8] sm:$0x1] %vm706, 0.0
        %715 = vst.msk [vmem:[#allocation2 + $0xc0] sm:$0x1] %vm706, 0.0
        %716 = vst.msk [vmem:[#allocation2 + $0xd8] sm:$0x1] %vm706, 0.0
        %717 = vst.msk [vmem:[#allocation2 + $0xf0] sm:$0x1] %vm706, 0.0
        %718 = vst.msk [vmem:[#allocation2 + $0x108] sm:$0x1] %vm706, 0.0
        %719 = vst.msk [vmem:[#allocation2 + $0x120] sm:$0x1] %vm706, 0.0
        %720 = vst.msk [vmem:[#allocation2 + $0x138] sm:$0x1] %vm706, 0.0
        %721 = vst.msk [vmem:[#allocation2 + $0x150] sm:$0x1] %vm706, 0.0
        %722 = vst.msk [vmem:[#allocation2 + $0x168] sm:$0x1] %vm706, 0.0
        %723 = vst.msk [vmem:[#allocation2 + $0x180] sm:$0x1] %vm706, 0.0
        %724 = vst.msk [vmem:[#allocation2 + $0x198] sm:$0x1] %vm706, 0.0
        %725 = vst.msk [vmem:[#allocation2 + $0x11] sm:$0x1] %vm706, 0.0
        %726 = vst.msk [vmem:[#allocation2 + $0x29] sm:$0x1] %vm706, 0.0
        %727 = vst.msk [vmem:[#allocation2 + $0x41] sm:$0x1] %vm706, 0.0
        %728 = vst.msk [vmem:[#allocation2 + $0x59] sm:$0x1] %vm706, 0.0
        %729 = vst.msk [vmem:[#allocation2 + $0x71] sm:$0x1] %vm706, 0.0
        %730 = vst.msk [vmem:[#allocation2 + $0x89] sm:$0x1] %vm706, 0.0
        %731 = vst.msk [vmem:[#allocation2 + $0xa1] sm:$0x1] %vm706, 0.0
        %732 = vst.msk [vmem:[#allocation2 + $0xb9] sm:$0x1] %vm706, 0.0
        %733 = vst.msk [vmem:[#allocation2 + $0xd1] sm:$0x1] %vm706, 0.0
        %734 = vst.msk [vmem:[#allocation2 + $0xe9] sm:$0x1] %vm706, 0.0
        %735 = vst.msk [vmem:[#allocation2 + $0x101] sm:$0x1] %vm706, 0.0
        %736 = vst.msk [vmem:[#allocation2 + $0x119] sm:$0x1] %vm706, 0.0
        %737 = vst.msk [vmem:[#allocation2 + $0x131] sm:$0x1] %vm706, 0.0
        %738 = vst.msk [vmem:[#allocation2 + $0x149] sm:$0x1] %vm706, 0.0
        %739 = vst.msk [vmem:[#allocation2 + $0x161] sm:$0x1] %vm706, 0.0
        %740 = vst.msk [vmem:[#allocation2 + $0x179] sm:$0x1] %vm706, 0.0
        %741 = vst.msk [vmem:[#allocation2 + $0x191] sm:$0x1] %vm706, 0.0
        %742 = vst.msk [vmem:[#allocation2 + $0x1a9] sm:$0x1] %vm706, 0.0
        %775 = vrot.lane.b32.xlu0 %v666, 120
        %v776 = vpop.permute.xlu0 %775
        %777 = vrot.lane.b32.xlu0 %v667, 120
        %v778 = vpop.permute.xlu0 %777
        %779 = vrot.lane.b32.xlu0 %v668, 120
        %v780 = vpop.permute.xlu0 %779
        %781 = vrot.lane.b32.xlu0 %v669, 120
        %v782 = vpop.permute.xlu0 %781
        %783 = vrot.lane.b32.xlu0 %v670, 120
        %v784 = vpop.permute.xlu0 %783
        %785 = vrot.lane.b32.xlu0 %v671, 120
        %v786 = vpop.permute.xlu0 %785
        %787 = vrot.lane.b32.xlu0 %v672, 120
        %v788 = vpop.permute.xlu0 %787
        %789 = vrot.lane.b32.xlu0 %v673, 120
        %v790 = vpop.permute.xlu0 %789
        %791 = vrot.lane.b32.xlu0 %v674, 120
        %v792 = vpop.permute.xlu0 %791
        %793 = vrot.lane.b32.xlu0 %v675, 120
        %v794 = vpop.permute.xlu0 %793
        %795 = vrot.lane.b32.xlu0 %v676, 120
        %v796 = vpop.permute.xlu0 %795
        %797 = vrot.lane.b32.xlu0 %v677, 120
        %v798 = vpop.permute.xlu0 %797
        %799 = vrot.lane.b32.xlu0 %v678, 120
        %v800 = vpop.permute.xlu0 %799
        %801 = vrot.lane.b32.xlu0 %v679, 120
        %v802 = vpop.permute.xlu0 %801
        %803 = vrot.lane.b32.xlu0 %v680, 120
        %v804 = vpop.permute.xlu0 %803
        %805 = vrot.lane.b32.xlu0 %v681, 120
        %v806 = vpop.permute.xlu0 %805
        %807 = vrot.lane.b32.xlu0 %v682, 120
        %v808 = vpop.permute.xlu0 %807
        %809 = vrot.lane.b32.xlu0 %v683, 120
        %v810 = vpop.permute.xlu0 %809
        %811 = vrot.lane.b32.xlu0 %v684, 120
        %v812 = vpop.permute.xlu0 %811
        %813 = vrot.lane.b32.xlu0 %v685, 120
        %v814 = vpop.permute.xlu0 %813
        %815 = vrot.lane.b32.xlu0 %v686, 120
        %v816 = vpop.permute.xlu0 %815
        %817 = vrot.lane.b32.xlu0 %v687, 120
        %v818 = vpop.permute.xlu0 %817
        %819 = vrot.lane.b32.xlu0 %v688, 120
        %v820 = vpop.permute.xlu0 %819
        %821 = vrot.lane.b32.xlu0 %v689, 120
        %v822 = vpop.permute.xlu0 %821
        %823 = vrot.lane.b32.xlu0 %v690, 120
        %v824 = vpop.permute.xlu0 %823
        %825 = vrot.lane.b32.xlu0 %v691, 120
        %v826 = vpop.permute.xlu0 %825
        %827 = vrot.lane.b32.xlu0 %v692, 120
        %v828 = vpop.permute.xlu0 %827
        %829 = vrot.lane.b32.xlu0 %v693, 120
        %v830 = vpop.permute.xlu0 %829
        %831 = vrot.lane.b32.xlu0 %v694, 120
        %v832 = vpop.permute.xlu0 %831
        %833 = vrot.lane.b32.xlu0 %v695, 120
        %v834 = vpop.permute.xlu0 %833
        %835 = vrot.lane.b32.xlu0 %v696, 120
        %v836 = vpop.permute.xlu0 %835
        %837 = vrot.lane.b32.xlu0 %v697, 120
        %v838 = vpop.permute.xlu0 %837
        %s871 = scalar_lea.vmem [#allocation2], 24
        %872 = vst.msk [vmem:[%s871 + $0x1] sm:$0xff] %vm452, %v776
        %873 = vst.msk [vmem:[%s871 + $0x9] sm:$0xff] %vm452, %v778
        %874 = vst.msk [vmem:[%s871 + $0x19] sm:$0xff] %vm452, %v780
        %875 = vst.msk [vmem:[%s871 + $0x21] sm:$0xff] %vm452, %v782
        %876 = vst.msk [vmem:[%s871 + $0x31] sm:$0xff] %vm452, %v784
        %877 = vst.msk [vmem:[%s871 + $0x39] sm:$0xff] %vm452, %v786
        %878 = vst.msk [vmem:[%s871 + $0x49] sm:$0xff] %vm452, %v788
        %879 = vst.msk [vmem:[%s871 + $0x51] sm:$0xff] %vm452, %v790
        %880 = vst.msk [vmem:[%s871 + $0x61] sm:$0xff] %vm452, %v792
        %881 = vst.msk [vmem:[%s871 + $0x69] sm:$0xff] %vm452, %v794
        %882 = vst.msk [vmem:[%s871 + $0x79] sm:$0xff] %vm452, %v796
        %883 = vst.msk [vmem:[%s871 + $0x81] sm:$0xff] %vm452, %v798
        %884 = vst.msk [vmem:[%s871 + $0x91] sm:$0xff] %vm452, %v800
        %885 = vst.msk [vmem:[%s871 + $0x99] sm:$0xff] %vm452, %v802
        %886 = vst.msk [vmem:[%s871 + $0xa9] sm:$0xff] %vm452, %v804
        %887 = vst.msk [vmem:[%s871 + $0xb1] sm:$0xff] %vm452, %v806
        %888 = vst.msk [vmem:[%s871 + $0xc1] sm:$0xff] %vm452, %v808
        %889 = vst.msk [vmem:[%s871 + $0xc9] sm:$0xff] %vm452, %v810
        %890 = vst.msk [vmem:[%s871 + $0xd9] sm:$0xff] %vm452, %v812
        %891 = vst.msk [vmem:[%s871 + $0xe1] sm:$0xff] %vm452, %v814
        %892 = vst.msk [vmem:[%s871 + $0xf1] sm:$0xff] %vm452, %v816
        %893 = vst.msk [vmem:[%s871 + $0xf9] sm:$0xff] %vm452, %v818
        %894 = vst.msk [vmem:[%s871 + $0x109] sm:$0xff] %vm452, %v820
        %895 = vst.msk [vmem:[%s871 + $0x111] sm:$0xff] %vm452, %v822
        %896 = vst.msk [vmem:[%s871 + $0x121] sm:$0xff] %vm452, %v824
        %897 = vst.msk [vmem:[%s871 + $0x129] sm:$0xff] %vm452, %v826
        %898 = vst.msk [vmem:[%s871 + $0x139] sm:$0xff] %vm452, %v828
        %899 = vst.msk [vmem:[%s871 + $0x141] sm:$0xff] %vm452, %v830
        %900 = vst.msk [vmem:[%s871 + $0x151] sm:$0xff] %vm452, %v832
        %901 = vst.msk [vmem:[%s871 + $0x159] sm:$0xff] %vm452, %v834
        %902 = vst.msk [vmem:[%s871 + $0x169] sm:$0xff] %vm452, %v836
        %903 = vst.msk [vmem:[%s871 + $0x171] sm:$0xff] %vm452, %v838
        %v904 = vld [vmem:[#allocation2] sm:$0xff]
        %v905 = vld [vmem:[#allocation2 + $0x8] sm:$0xff]
        %v906 = vld [vmem:[#allocation2 + $0x18] sm:$0xff]
        %v907 = vld [vmem:[#allocation2 + $0x20] sm:$0xff]
        %v908 = vld [vmem:[#allocation2 + $0x30] sm:$0xff]
        %v909 = vld [vmem:[#allocation2 + $0x38] sm:$0xff]
        %v910 = vld [vmem:[#allocation2 + $0x48] sm:$0xff]
        %v911 = vld [vmem:[#allocation2 + $0x50] sm:$0xff]
        %v912 = vld [vmem:[#allocation2 + $0x60] sm:$0xff]
        %v913 = vld [vmem:[#allocation2 + $0x68] sm:$0xff]
        %v914 = vld [vmem:[#allocation2 + $0x78] sm:$0xff]
        %v915 = vld [vmem:[#allocation2 + $0x80] sm:$0xff]
        %v916 = vld [vmem:[#allocation2 + $0x90] sm:$0xff]
        %v917 = vld [vmem:[#allocation2 + $0x98] sm:$0xff]
        %v918 = vld [vmem:[#allocation2 + $0xa8] sm:$0xff]
        %v919 = vld [vmem:[#allocation2 + $0xb0] sm:$0xff]
        %v920 = vld [vmem:[#allocation2 + $0xc0] sm:$0xff]
        %v921 = vld [vmem:[#allocation2 + $0xc8] sm:$0xff]
        %v922 = vld [vmem:[#allocation2 + $0xd8] sm:$0xff]
        %v923 = vld [vmem:[#allocation2 + $0xe0] sm:$0xff]
        %v924 = vld [vmem:[#allocation2 + $0xf0] sm:$0xff]
        %v925 = vld [vmem:[#allocation2 + $0xf8] sm:$0xff]
        %v926 = vld [vmem:[#allocation2 + $0x108] sm:$0xff]
        %v927 = vld [vmem:[#allocation2 + $0x110] sm:$0xff]
        %v928 = vld [vmem:[#allocation2 + $0x120] sm:$0xff]
        %v929 = vld [vmem:[#allocation2 + $0x128] sm:$0xff]
        %v930 = vld [vmem:[#allocation2 + $0x138] sm:$0xff]
        %v931 = vld [vmem:[#allocation2 + $0x140] sm:$0xff]
        %v932 = vld [vmem:[#allocation2 + $0x150] sm:$0xff]
        %v933 = vld [vmem:[#allocation2 + $0x158] sm:$0xff]
        %v934 = vld [vmem:[#allocation2 + $0x168] sm:$0xff]
        %v935 = vld [vmem:[#allocation2 + $0x170] sm:$0xff]
        %v936 = vld [vmem:[#allocation2 + $0x1] sm:$0xff]
        %v937 = vld [vmem:[#allocation2 + $0x9] sm:$0xff]
        %v938 = vld [vmem:[#allocation2 + $0x19] sm:$0xff]
        %v939 = vld [vmem:[#allocation2 + $0x21] sm:$0xff]
        %v940 = vld [vmem:[#allocation2 + $0x31] sm:$0xff]
        %v941 = vld [vmem:[#allocation2 + $0x39] sm:$0xff]
        %v942 = vld [vmem:[#allocation2 + $0x49] sm:$0xff]
        %v943 = vld [vmem:[#allocation2 + $0x51] sm:$0xff]
        %v944 = vld [vmem:[#allocation2 + $0x61] sm:$0xff]
        %v945 = vld [vmem:[#allocation2 + $0x69] sm:$0xff]
        %v946 = vld [vmem:[#allocation2 + $0x79] sm:$0xff]
        %v947 = vld [vmem:[#allocation2 + $0x81] sm:$0xff]
        %v948 = vld [vmem:[#allocation2 + $0x91] sm:$0xff]
        %v949 = vld [vmem:[#allocation2 + $0x99] sm:$0xff]
        %v950 = vld [vmem:[#allocation2 + $0xa9] sm:$0xff]
        %v951 = vld [vmem:[#allocation2 + $0xb1] sm:$0xff]
        %v952 = vld [vmem:[#allocation2 + $0xc1] sm:$0xff]
        %v953 = vld [vmem:[#allocation2 + $0xc9] sm:$0xff]
        %v954 = vld [vmem:[#allocation2 + $0xd9] sm:$0xff]
        %v955 = vld [vmem:[#allocation2 + $0xe1] sm:$0xff]
        %v956 = vld [vmem:[#allocation2 + $0xf1] sm:$0xff]
        %v957 = vld [vmem:[#allocation2 + $0xf9] sm:$0xff]
        %v958 = vld [vmem:[#allocation2 + $0x109] sm:$0xff]
        %v959 = vld [vmem:[#allocation2 + $0x111] sm:$0xff]
        %v960 = vld [vmem:[#allocation2 + $0x121] sm:$0xff]
        %v961 = vld [vmem:[#allocation2 + $0x129] sm:$0xff]
        %v962 = vld [vmem:[#allocation2 + $0x139] sm:$0xff]
        %v963 = vld [vmem:[#allocation2 + $0x141] sm:$0xff]
        %v964 = vld [vmem:[#allocation2 + $0x151] sm:$0xff]
        %v965 = vld [vmem:[#allocation2 + $0x159] sm:$0xff]
        %v966 = vld [vmem:[#allocation2 + $0x169] sm:$0xff]
        %v967 = vld [vmem:[#allocation2 + $0x171] sm:$0xff]
        %v968 = vld [vmem:[#allocation2 + $0x2] sm:$0xff]
        %v969 = vld [vmem:[#allocation2 + $0xa] sm:$0xff]
        %v970 = vld [vmem:[#allocation2 + $0x1a] sm:$0xff]
        %v971 = vld [vmem:[#allocation2 + $0x22] sm:$0xff]
        %v972 = vld [vmem:[#allocation2 + $0x32] sm:$0xff]
        %v973 = vld [vmem:[#allocation2 + $0x3a] sm:$0xff]
        %v974 = vld [vmem:[#allocation2 + $0x4a] sm:$0xff]
        %v975 = vld [vmem:[#allocation2 + $0x52] sm:$0xff]
        %v976 = vld [vmem:[#allocation2 + $0x62] sm:$0xff]
        %v977 = vld [vmem:[#allocation2 + $0x6a] sm:$0xff]
        %v978 = vld [vmem:[#allocation2 + $0x7a] sm:$0xff]
        %v979 = vld [vmem:[#allocation2 + $0x82] sm:$0xff]
        %v980 = vld [vmem:[#allocation2 + $0x92] sm:$0xff]
        %v981 = vld [vmem:[#allocation2 + $0x9a] sm:$0xff]
        %v982 = vld [vmem:[#allocation2 + $0xaa] sm:$0xff]
        %v983 = vld [vmem:[#allocation2 + $0xb2] sm:$0xff]
        %v984 = vld [vmem:[#allocation2 + $0xc2] sm:$0xff]
        %v985 = vld [vmem:[#allocation2 + $0xca] sm:$0xff]
        %v986 = vld [vmem:[#allocation2 + $0xda] sm:$0xff]
        %v987 = vld [vmem:[#allocation2 + $0xe2] sm:$0xff]
        %v988 = vld [vmem:[#allocation2 + $0xf2] sm:$0xff]
        %v989 = vld [vmem:[#allocation2 + $0xfa] sm:$0xff]
        %v990 = vld [vmem:[#allocation2 + $0x10a] sm:$0xff]
        %v991 = vld [vmem:[#allocation2 + $0x112] sm:$0xff]
        %v992 = vld [vmem:[#allocation2 + $0x122] sm:$0xff]
        %v993 = vld [vmem:[#allocation2 + $0x12a] sm:$0xff]
        %v994 = vld [vmem:[#allocation2 + $0x13a] sm:$0xff]
        %v995 = vld [vmem:[#allocation2 + $0x142] sm:$0xff]
        %v996 = vld [vmem:[#allocation2 + $0x152] sm:$0xff]
        %v997 = vld [vmem:[#allocation2 + $0x15a] sm:$0xff]
        %v998 = vld [vmem:[#allocation2 + $0x16a] sm:$0xff]
        %v999 = vld [vmem:[#allocation2 + $0x172] sm:$0xff]
        %v1000 = vld [vmem:[%s871] sm:$0xff]
        %v1001 = vld [vmem:[%s871 + $0x8] sm:$0xff]
        %v1002 = vld [vmem:[%s871 + $0x18] sm:$0xff]
        %v1003 = vld [vmem:[%s871 + $0x20] sm:$0xff]
        %v1004 = vld [vmem:[%s871 + $0x30] sm:$0xff]
        %v1005 = vld [vmem:[%s871 + $0x38] sm:$0xff]
        %v1006 = vld [vmem:[%s871 + $0x48] sm:$0xff]
        %v1007 = vld [vmem:[%s871 + $0x50] sm:$0xff]
        %v1008 = vld [vmem:[%s871 + $0x60] sm:$0xff]
        %v1009 = vld [vmem:[%s871 + $0x68] sm:$0xff]
        %v1010 = vld [vmem:[%s871 + $0x78] sm:$0xff]
        %v1011 = vld [vmem:[%s871 + $0x80] sm:$0xff]
        %v1012 = vld [vmem:[%s871 + $0x90] sm:$0xff]
        %v1013 = vld [vmem:[%s871 + $0x98] sm:$0xff]
        %v1014 = vld [vmem:[%s871 + $0xa8] sm:$0xff]
        %v1015 = vld [vmem:[%s871 + $0xb0] sm:$0xff]
        %v1016 = vld [vmem:[%s871 + $0xc0] sm:$0xff]
        %v1017 = vld [vmem:[%s871 + $0xc8] sm:$0xff]
        %v1018 = vld [vmem:[%s871 + $0xd8] sm:$0xff]
        %v1019 = vld [vmem:[%s871 + $0xe0] sm:$0xff]
        %v1020 = vld [vmem:[%s871 + $0xf0] sm:$0xff]
        %v1021 = vld [vmem:[%s871 + $0xf8] sm:$0xff]
        %v1022 = vld [vmem:[%s871 + $0x108] sm:$0xff]
        %v1023 = vld [vmem:[%s871 + $0x110] sm:$0xff]
        %v1024 = vld [vmem:[%s871 + $0x120] sm:$0xff]
        %v1025 = vld [vmem:[%s871 + $0x128] sm:$0xff]
        %v1026 = vld [vmem:[%s871 + $0x138] sm:$0xff]
        %v1027 = vld [vmem:[%s871 + $0x140] sm:$0xff]
        %v1028 = vld [vmem:[%s871 + $0x150] sm:$0xff]
        %v1029 = vld [vmem:[%s871 + $0x158] sm:$0xff]
        %v1030 = vld [vmem:[%s871 + $0x168] sm:$0xff]
        %v1031 = vld [vmem:[%s871 + $0x170] sm:$0xff]
        %v1032 = vld [vmem:[%s871 + $0x1] sm:$0xff]
        %v1033 = vld [vmem:[%s871 + $0x9] sm:$0xff]
        %v1034 = vld [vmem:[%s871 + $0x19] sm:$0xff]
        %v1035 = vld [vmem:[%s871 + $0x21] sm:$0xff]
        %v1036 = vld [vmem:[%s871 + $0x31] sm:$0xff]
        %v1037 = vld [vmem:[%s871 + $0x39] sm:$0xff]
        %v1038 = vld [vmem:[%s871 + $0x49] sm:$0xff]
        %v1039 = vld [vmem:[%s871 + $0x51] sm:$0xff]
        %v1040 = vld [vmem:[%s871 + $0x61] sm:$0xff]
        %v1041 = vld [vmem:[%s871 + $0x69] sm:$0xff]
        %v1042 = vld [vmem:[%s871 + $0x79] sm:$0xff]
        %v1043 = vld [vmem:[%s871 + $0x81] sm:$0xff]
        %v1044 = vld [vmem:[%s871 + $0x91] sm:$0xff]
        %v1045 = vld [vmem:[%s871 + $0x99] sm:$0xff]
        %v1046 = vld [vmem:[%s871 + $0xa9] sm:$0xff]
        %v1047 = vld [vmem:[%s871 + $0xb1] sm:$0xff]
        %v1048 = vld [vmem:[%s871 + $0xc1] sm:$0xff]
        %v1049 = vld [vmem:[%s871 + $0xc9] sm:$0xff]
        %v1050 = vld [vmem:[%s871 + $0xd9] sm:$0xff]
        %v1051 = vld [vmem:[%s871 + $0xe1] sm:$0xff]
        %v1052 = vld [vmem:[%s871 + $0xf1] sm:$0xff]
        %v1053 = vld [vmem:[%s871 + $0xf9] sm:$0xff]
        %v1054 = vld [vmem:[%s871 + $0x109] sm:$0xff]
        %v1055 = vld [vmem:[%s871 + $0x111] sm:$0xff]
        %v1056 = vld [vmem:[%s871 + $0x121] sm:$0xff]
        %v1057 = vld [vmem:[%s871 + $0x129] sm:$0xff]
        %v1058 = vld [vmem:[%s871 + $0x139] sm:$0xff]
        %v1059 = vld [vmem:[%s871 + $0x141] sm:$0xff]
        %v1060 = vld [vmem:[%s871 + $0x151] sm:$0xff]
        %v1061 = vld [vmem:[%s871 + $0x159] sm:$0xff]
        %v1062 = vld [vmem:[%s871 + $0x169] sm:$0xff]
        %v1063 = vld [vmem:[%s871 + $0x171] sm:$0xff]
        %v1064 = vld [vmem:[%s871 + $0x2] sm:$0xff]
        %v1065 = vld [vmem:[%s871 + $0xa] sm:$0xff]
        %v1066 = vld [vmem:[%s871 + $0x1a] sm:$0xff]
        %v1067 = vld [vmem:[%s871 + $0x22] sm:$0xff]
        %v1068 = vld [vmem:[%s871 + $0x32] sm:$0xff]
        %v1069 = vld [vmem:[%s871 + $0x3a] sm:$0xff]
        %v1070 = vld [vmem:[%s871 + $0x4a] sm:$0xff]
        %v1071 = vld [vmem:[%s871 + $0x52] sm:$0xff]
        %v1072 = vld [vmem:[%s871 + $0x62] sm:$0xff]
        %v1073 = vld [vmem:[%s871 + $0x6a] sm:$0xff]
        %v1074 = vld [vmem:[%s871 + $0x7a] sm:$0xff]
        %v1075 = vld [vmem:[%s871 + $0x82] sm:$0xff]
        %v1076 = vld [vmem:[%s871 + $0x92] sm:$0xff]
        %v1077 = vld [vmem:[%s871 + $0x9a] sm:$0xff]
        %v1078 = vld [vmem:[%s871 + $0xaa] sm:$0xff]
        %v1079 = vld [vmem:[%s871 + $0xb2] sm:$0xff]
        %v1080 = vld [vmem:[%s871 + $0xc2] sm:$0xff]
        %v1081 = vld [vmem:[%s871 + $0xca] sm:$0xff]
        %v1082 = vld [vmem:[%s871 + $0xda] sm:$0xff]
        %v1083 = vld [vmem:[%s871 + $0xe2] sm:$0xff]
        %v1084 = vld [vmem:[%s871 + $0xf2] sm:$0xff]
        %v1085 = vld [vmem:[%s871 + $0xfa] sm:$0xff]
        %v1086 = vld [vmem:[%s871 + $0x10a] sm:$0xff]
        %v1087 = vld [vmem:[%s871 + $0x112] sm:$0xff]
        %v1088 = vld [vmem:[%s871 + $0x122] sm:$0xff]
        %v1089 = vld [vmem:[%s871 + $0x12a] sm:$0xff]
        %v1090 = vld [vmem:[%s871 + $0x13a] sm:$0xff]
        %v1091 = vld [vmem:[%s871 + $0x142] sm:$0xff]
        %v1092 = vld [vmem:[%s871 + $0x152] sm:$0xff]
        %v1093 = vld [vmem:[%s871 + $0x15a] sm:$0xff]
        %v1094 = vld [vmem:[%s871 + $0x16a] sm:$0xff]
        %v1095 = vld [vmem:[%s871 + $0x172] sm:$0xff]
        %s1096 = scalar_lea.vmem [#allocation2], 48
        %v1097 = vld [vmem:[%s1096] sm:$0xff]
        %v1098 = vld [vmem:[%s1096 + $0x8] sm:$0xff]
        %v1099 = vld [vmem:[%s1096 + $0x18] sm:$0xff]
        %v1100 = vld [vmem:[%s1096 + $0x20] sm:$0xff]
        %v1101 = vld [vmem:[%s1096 + $0x30] sm:$0xff]
        %v1102 = vld [vmem:[%s1096 + $0x38] sm:$0xff]
        %v1103 = vld [vmem:[%s1096 + $0x48] sm:$0xff]
        %v1104 = vld [vmem:[%s1096 + $0x50] sm:$0xff]
        %v1105 = vld [vmem:[%s1096 + $0x60] sm:$0xff]
        %v1106 = vld [vmem:[%s1096 + $0x68] sm:$0xff]
        %v1107 = vld [vmem:[%s1096 + $0x78] sm:$0xff]
        %v1108 = vld [vmem:[%s1096 + $0x80] sm:$0xff]
        %v1109 = vld [vmem:[%s1096 + $0x90] sm:$0xff]
        %v1110 = vld [vmem:[%s1096 + $0x98] sm:$0xff]
        %v1111 = vld [vmem:[%s1096 + $0xa8] sm:$0xff]
        %v1112 = vld [vmem:[%s1096 + $0xb0] sm:$0xff]
        %v1113 = vld [vmem:[%s1096 + $0xc0] sm:$0xff]
        %v1114 = vld [vmem:[%s1096 + $0xc8] sm:$0xff]
        %v1115 = vld [vmem:[%s1096 + $0xd8] sm:$0xff]
        %v1116 = vld [vmem:[%s1096 + $0xe0] sm:$0xff]
        %v1117 = vld [vmem:[%s1096 + $0xf0] sm:$0xff]
        %v1118 = vld [vmem:[%s1096 + $0xf8] sm:$0xff]
        %v1119 = vld [vmem:[%s1096 + $0x108] sm:$0xff]
        %v1120 = vld [vmem:[%s1096 + $0x110] sm:$0xff]
        %v1121 = vld [vmem:[%s1096 + $0x120] sm:$0xff]
        %v1122 = vld [vmem:[%s1096 + $0x128] sm:$0xff]
        %v1123 = vld [vmem:[%s1096 + $0x138] sm:$0xff]
        %v1124 = vld [vmem:[%s1096 + $0x140] sm:$0xff]
        %v1125 = vld [vmem:[%s1096 + $0x150] sm:$0xff]
        %v1126 = vld [vmem:[%s1096 + $0x158] sm:$0xff]
        %v1127 = vld [vmem:[%s1096 + $0x168] sm:$0xff]
        %v1128 = vld [vmem:[%s1096 + $0x170] sm:$0xff]
        %v1129 = vld [vmem:[%s1096 + $0x1] sm:$0xff]
        %v1130 = vld [vmem:[%s1096 + $0x9] sm:$0xff]
        %v1131 = vld [vmem:[%s1096 + $0x19] sm:$0xff]
        %v1132 = vld [vmem:[%s1096 + $0x21] sm:$0xff]
        %v1133 = vld [vmem:[%s1096 + $0x31] sm:$0xff]
        %v1134 = vld [vmem:[%s1096 + $0x39] sm:$0xff]
        %v1135 = vld [vmem:[%s1096 + $0x49] sm:$0xff]
        %v1136 = vld [vmem:[%s1096 + $0x51] sm:$0xff]
        %v1137 = vld [vmem:[%s1096 + $0x61] sm:$0xff]
        %v1138 = vld [vmem:[%s1096 + $0x69] sm:$0xff]
        %v1139 = vld [vmem:[%s1096 + $0x79] sm:$0xff]
        %v1140 = vld [vmem:[%s1096 + $0x81] sm:$0xff]
        %v1141 = vld [vmem:[%s1096 + $0x91] sm:$0xff]
        %v1142 = vld [vmem:[%s1096 + $0x99] sm:$0xff]
        %v1143 = vld [vmem:[%s1096 + $0xa9] sm:$0xff]
        %v1144 = vld [vmem:[%s1096 + $0xb1] sm:$0xff]
        %v1145 = vld [vmem:[%s1096 + $0xc1] sm:$0xff]
        %v1146 = vld [vmem:[%s1096 + $0xc9] sm:$0xff]
        %v1147 = vld [vmem:[%s1096 + $0xd9] sm:$0xff]
        %v1148 = vld [vmem:[%s1096 + $0xe1] sm:$0xff]
        %v1149 = vld [vmem:[%s1096 + $0xf1] sm:$0xff]
        %v1150 = vld [vmem:[%s1096 + $0xf9] sm:$0xff]
        %v1151 = vld [vmem:[%s1096 + $0x109] sm:$0xff]
        %v1152 = vld [vmem:[%s1096 + $0x111] sm:$0xff]
        %v1153 = vld [vmem:[%s1096 + $0x121] sm:$0xff]
        %v1154 = vld [vmem:[%s1096 + $0x129] sm:$0xff]
        %v1155 = vld [vmem:[%s1096 + $0x139] sm:$0xff]
        %v1156 = vld [vmem:[%s1096 + $0x141] sm:$0xff]
        %v1157 = vld [vmem:[%s1096 + $0x151] sm:$0xff]
        %v1158 = vld [vmem:[%s1096 + $0x159] sm:$0xff]
        %v1159 = vld [vmem:[%s1096 + $0x169] sm:$0xff]
        %v1160 = vld [vmem:[%s1096 + $0x171] sm:$0xff]
        %v1161 = vld [vmem:[%s1096 + $0x2] sm:$0xff]
        %v1162 = vld [vmem:[%s1096 + $0xa] sm:$0xff]
        %v1163 = vld [vmem:[%s1096 + $0x1a] sm:$0xff]
        %v1164 = vld [vmem:[%s1096 + $0x22] sm:$0xff]
        %v1165 = vld [vmem:[%s1096 + $0x32] sm:$0xff]
        %v1166 = vld [vmem:[%s1096 + $0x3a] sm:$0xff]
        %v1167 = vld [vmem:[%s1096 + $0x4a] sm:$0xff]
        %v1168 = vld [vmem:[%s1096 + $0x52] sm:$0xff]
        %v1169 = vld [vmem:[%s1096 + $0x62] sm:$0xff]
        %v1170 = vld [vmem:[%s1096 + $0x6a] sm:$0xff]
        %v1171 = vld [vmem:[%s1096 + $0x7a] sm:$0xff]
        %v1172 = vld [vmem:[%s1096 + $0x82] sm:$0xff]
        %v1173 = vld [vmem:[%s1096 + $0x92] sm:$0xff]
        %v1174 = vld [vmem:[%s1096 + $0x9a] sm:$0xff]
        %v1175 = vld [vmem:[%s1096 + $0xaa] sm:$0xff]
        %v1176 = vld [vmem:[%s1096 + $0xb2] sm:$0xff]
        %v1177 = vld [vmem:[%s1096 + $0xc2] sm:$0xff]
        %v1178 = vld [vmem:[%s1096 + $0xca] sm:$0xff]
        %v1179 = vld [vmem:[%s1096 + $0xda] sm:$0xff]
        %v1180 = vld [vmem:[%s1096 + $0xe2] sm:$0xff]
        %v1181 = vld [vmem:[%s1096 + $0xf2] sm:$0xff]
        %v1182 = vld [vmem:[%s1096 + $0xfa] sm:$0xff]
        %v1183 = vld [vmem:[%s1096 + $0x10a] sm:$0xff]
        %v1184 = vld [vmem:[%s1096 + $0x112] sm:$0xff]
        %v1185 = vld [vmem:[%s1096 + $0x122] sm:$0xff]
        %v1186 = vld [vmem:[%s1096 + $0x12a] sm:$0xff]
        %v1187 = vld [vmem:[%s1096 + $0x13a] sm:$0xff]
        %v1188 = vld [vmem:[%s1096 + $0x142] sm:$0xff]
        %v1189 = vld [vmem:[%s1096 + $0x152] sm:$0xff]
        %v1190 = vld [vmem:[%s1096 + $0x15a] sm:$0xff]
        %v1191 = vld [vmem:[%s1096 + $0x16a] sm:$0xff]
        %v1192 = vld [vmem:[%s1096 + $0x172] sm:$0xff]
        %1225 = vrot.lane.b32.xlu0 %v936, 4
        %v1226 = vpop.permute.xlu0 %1225
        %1227 = vrot.lane.b32.xlu0 %v937, 4
        %v1228 = vpop.permute.xlu0 %1227
        %1229 = vrot.lane.b32.xlu0 %v938, 4
        %v1230 = vpop.permute.xlu0 %1229
        %1231 = vrot.lane.b32.xlu0 %v939, 4
        %v1232 = vpop.permute.xlu0 %1231
        %1233 = vrot.lane.b32.xlu0 %v940, 4
        %v1234 = vpop.permute.xlu0 %1233
        %1235 = vrot.lane.b32.xlu0 %v941, 4
        %v1236 = vpop.permute.xlu0 %1235
        %1237 = vrot.lane.b32.xlu0 %v942, 4
        %v1238 = vpop.permute.xlu0 %1237
        %1239 = vrot.lane.b32.xlu0 %v943, 4
        %v1240 = vpop.permute.xlu0 %1239
        %1241 = vrot.lane.b32.xlu0 %v944, 4
        %v1242 = vpop.permute.xlu0 %1241
        %1243 = vrot.lane.b32.xlu0 %v945, 4
        %v1244 = vpop.permute.xlu0 %1243
        %1245 = vrot.lane.b32.xlu0 %v946, 4
        %v1246 = vpop.permute.xlu0 %1245
        %1247 = vrot.lane.b32.xlu0 %v947, 4
        %v1248 = vpop.permute.xlu0 %1247
        %1249 = vrot.lane.b32.xlu0 %v948, 4
        %v1250 = vpop.permute.xlu0 %1249
        %1251 = vrot.lane.b32.xlu0 %v949, 4
        %v1252 = vpop.permute.xlu0 %1251
        %1253 = vrot.lane.b32.xlu0 %v950, 4
        %v1254 = vpop.permute.xlu0 %1253
        %1255 = vrot.lane.b32.xlu0 %v951, 4
        %v1256 = vpop.permute.xlu0 %1255
        %1257 = vrot.lane.b32.xlu0 %v952, 4
        %v1258 = vpop.permute.xlu0 %1257
        %1259 = vrot.lane.b32.xlu0 %v953, 4
        %v1260 = vpop.permute.xlu0 %1259
        %1261 = vrot.lane.b32.xlu0 %v954, 4
        %v1262 = vpop.permute.xlu0 %1261
        %1263 = vrot.lane.b32.xlu0 %v955, 4
        %v1264 = vpop.permute.xlu0 %1263
        %1265 = vrot.lane.b32.xlu0 %v956, 4
        %v1266 = vpop.permute.xlu0 %1265
        %1267 = vrot.lane.b32.xlu0 %v957, 4
        %v1268 = vpop.permute.xlu0 %1267
        %1269 = vrot.lane.b32.xlu0 %v958, 4
        %v1270 = vpop.permute.xlu0 %1269
        %1271 = vrot.lane.b32.xlu0 %v959, 4
        %v1272 = vpop.permute.xlu0 %1271
        %1273 = vrot.lane.b32.xlu0 %v960, 4
        %v1274 = vpop.permute.xlu0 %1273
        %1275 = vrot.lane.b32.xlu0 %v961, 4
        %v1276 = vpop.permute.xlu0 %1275
        %1277 = vrot.lane.b32.xlu0 %v962, 4
        %v1278 = vpop.permute.xlu0 %1277
        %1279 = vrot.lane.b32.xlu0 %v963, 4
        %v1280 = vpop.permute.xlu0 %1279
        %1281 = vrot.lane.b32.xlu0 %v964, 4
        %v1282 = vpop.permute.xlu0 %1281
        %1283 = vrot.lane.b32.xlu0 %v965, 4
        %v1284 = vpop.permute.xlu0 %1283
        %1285 = vrot.lane.b32.xlu0 %v966, 4
        %v1286 = vpop.permute.xlu0 %1285
        %1287 = vrot.lane.b32.xlu0 %v967, 4
        %v1288 = vpop.permute.xlu0 %1287
        %1353 = vrot.lane.b32.xlu0 %v968, 8
        %v1354 = vpop.permute.xlu0 %1353
        %1355 = vrot.lane.b32.xlu0 %v969, 8
        %v1356 = vpop.permute.xlu0 %1355
        %1357 = vrot.lane.b32.xlu0 %v970, 8
        %v1358 = vpop.permute.xlu0 %1357
        %1359 = vrot.lane.b32.xlu0 %v971, 8
        %v1360 = vpop.permute.xlu0 %1359
        %1361 = vrot.lane.b32.xlu0 %v972, 8
        %v1362 = vpop.permute.xlu0 %1361
        %1363 = vrot.lane.b32.xlu0 %v973, 8
        %v1364 = vpop.permute.xlu0 %1363
        %1365 = vrot.lane.b32.xlu0 %v974, 8
        %v1366 = vpop.permute.xlu0 %1365
        %1367 = vrot.lane.b32.xlu0 %v975, 8
        %v1368 = vpop.permute.xlu0 %1367
        %1369 = vrot.lane.b32.xlu0 %v976, 8
        %v1370 = vpop.permute.xlu0 %1369
        %1371 = vrot.lane.b32.xlu0 %v977, 8
        %v1372 = vpop.permute.xlu0 %1371
        %1373 = vrot.lane.b32.xlu0 %v978, 8
        %v1374 = vpop.permute.xlu0 %1373
        %1375 = vrot.lane.b32.xlu0 %v979, 8
        %v1376 = vpop.permute.xlu0 %1375
        %1377 = vrot.lane.b32.xlu0 %v980, 8
        %v1378 = vpop.permute.xlu0 %1377
        %1379 = vrot.lane.b32.xlu0 %v981, 8
        %v1380 = vpop.permute.xlu0 %1379
        %1381 = vrot.lane.b32.xlu0 %v982, 8
        %v1382 = vpop.permute.xlu0 %1381
        %1383 = vrot.lane.b32.xlu0 %v983, 8
        %v1384 = vpop.permute.xlu0 %1383
        %1385 = vrot.lane.b32.xlu0 %v984, 8
        %v1386 = vpop.permute.xlu0 %1385
        %1387 = vrot.lane.b32.xlu0 %v985, 8
        %v1388 = vpop.permute.xlu0 %1387
        %1389 = vrot.lane.b32.xlu0 %v986, 8
        %v1390 = vpop.permute.xlu0 %1389
        %1391 = vrot.lane.b32.xlu0 %v987, 8
        %v1392 = vpop.permute.xlu0 %1391
        %1393 = vrot.lane.b32.xlu0 %v988, 8
        %v1394 = vpop.permute.xlu0 %1393
        %1395 = vrot.lane.b32.xlu0 %v989, 8
        %v1396 = vpop.permute.xlu0 %1395
        %1397 = vrot.lane.b32.xlu0 %v990, 8
        %v1398 = vpop.permute.xlu0 %1397
        %1399 = vrot.lane.b32.xlu0 %v991, 8
        %v1400 = vpop.permute.xlu0 %1399
        %1401 = vrot.lane.b32.xlu0 %v992, 8
        %v1402 = vpop.permute.xlu0 %1401
        %1403 = vrot.lane.b32.xlu0 %v993, 8
        %v1404 = vpop.permute.xlu0 %1403
        %1405 = vrot.lane.b32.xlu0 %v994, 8
        %v1406 = vpop.permute.xlu0 %1405
        %1407 = vrot.lane.b32.xlu0 %v995, 8
        %v1408 = vpop.permute.xlu0 %1407
        %1409 = vrot.lane.b32.xlu0 %v996, 8
        %v1410 = vpop.permute.xlu0 %1409
        %1411 = vrot.lane.b32.xlu0 %v997, 8
        %v1412 = vpop.permute.xlu0 %1411
        %1413 = vrot.lane.b32.xlu0 %v998, 8
        %v1414 = vpop.permute.xlu0 %1413
        %1415 = vrot.lane.b32.xlu0 %v999, 8
        %v1416 = vpop.permute.xlu0 %1415
        %1481 = vrot.lane.b32.xlu0 %v1000, 12
        %v1482 = vpop.permute.xlu0 %1481
        %1483 = vrot.lane.b32.xlu0 %v1001, 12
        %v1484 = vpop.permute.xlu0 %1483
        %1485 = vrot.lane.b32.xlu0 %v1002, 12
        %v1486 = vpop.permute.xlu0 %1485
        %1487 = vrot.lane.b32.xlu0 %v1003, 12
        %v1488 = vpop.permute.xlu0 %1487
        %1489 = vrot.lane.b32.xlu0 %v1004, 12
        %v1490 = vpop.permute.xlu0 %1489
        %1491 = vrot.lane.b32.xlu0 %v1005, 12
        %v1492 = vpop.permute.xlu0 %1491
        %1493 = vrot.lane.b32.xlu0 %v1006, 12
        %v1494 = vpop.permute.xlu0 %1493
        %1495 = vrot.lane.b32.xlu0 %v1007, 12
        %v1496 = vpop.permute.xlu0 %1495
        %1497 = vrot.lane.b32.xlu0 %v1008, 12
        %v1498 = vpop.permute.xlu0 %1497
        %1499 = vrot.lane.b32.xlu0 %v1009, 12
        %v1500 = vpop.permute.xlu0 %1499
        %1501 = vrot.lane.b32.xlu0 %v1010, 12
        %v1502 = vpop.permute.xlu0 %1501
        %1503 = vrot.lane.b32.xlu0 %v1011, 12
        %v1504 = vpop.permute.xlu0 %1503
        %1505 = vrot.lane.b32.xlu0 %v1012, 12
        %v1506 = vpop.permute.xlu0 %1505
        %1507 = vrot.lane.b32.xlu0 %v1013, 12
        %v1508 = vpop.permute.xlu0 %1507
        %1509 = vrot.lane.b32.xlu0 %v1014, 12
        %v1510 = vpop.permute.xlu0 %1509
        %1511 = vrot.lane.b32.xlu0 %v1015, 12
        %v1512 = vpop.permute.xlu0 %1511
        %1513 = vrot.lane.b32.xlu0 %v1016, 12
        %v1514 = vpop.permute.xlu0 %1513
        %1515 = vrot.lane.b32.xlu0 %v1017, 12
        %v1516 = vpop.permute.xlu0 %1515
        %1517 = vrot.lane.b32.xlu0 %v1018, 12
        %v1518 = vpop.permute.xlu0 %1517
        %1519 = vrot.lane.b32.xlu0 %v1019, 12
        %v1520 = vpop.permute.xlu0 %1519
        %1521 = vrot.lane.b32.xlu0 %v1020, 12
        %v1522 = vpop.permute.xlu0 %1521
        %1523 = vrot.lane.b32.xlu0 %v1021, 12
        %v1524 = vpop.permute.xlu0 %1523
        %1525 = vrot.lane.b32.xlu0 %v1022, 12
        %v1526 = vpop.permute.xlu0 %1525
        %1527 = vrot.lane.b32.xlu0 %v1023, 12
        %v1528 = vpop.permute.xlu0 %1527
        %1529 = vrot.lane.b32.xlu0 %v1024, 12
        %v1530 = vpop.permute.xlu0 %1529
        %1531 = vrot.lane.b32.xlu0 %v1025, 12
        %v1532 = vpop.permute.xlu0 %1531
        %1533 = vrot.lane.b32.xlu0 %v1026, 12
        %v1534 = vpop.permute.xlu0 %1533
        %1535 = vrot.lane.b32.xlu0 %v1027, 12
        %v1536 = vpop.permute.xlu0 %1535
        %1537 = vrot.lane.b32.xlu0 %v1028, 12
        %v1538 = vpop.permute.xlu0 %1537
        %1539 = vrot.lane.b32.xlu0 %v1029, 12
        %v1540 = vpop.permute.xlu0 %1539
        %1541 = vrot.lane.b32.xlu0 %v1030, 12
        %v1542 = vpop.permute.xlu0 %1541
        %1543 = vrot.lane.b32.xlu0 %v1031, 12
        %v1544 = vpop.permute.xlu0 %1543
        %1609 = vrot.lane.b32.xlu0 %v1032, 16
        %v1610 = vpop.permute.xlu0 %1609
        %1611 = vrot.lane.b32.xlu0 %v1033, 16
        %v1612 = vpop.permute.xlu0 %1611
        %1613 = vrot.lane.b32.xlu0 %v1034, 16
        %v1614 = vpop.permute.xlu0 %1613
        %1615 = vrot.lane.b32.xlu0 %v1035, 16
        %v1616 = vpop.permute.xlu0 %1615
        %1617 = vrot.lane.b32.xlu0 %v1036, 16
        %v1618 = vpop.permute.xlu0 %1617
        %1619 = vrot.lane.b32.xlu0 %v1037, 16
        %v1620 = vpop.permute.xlu0 %1619
        %1621 = vrot.lane.b32.xlu0 %v1038, 16
        %v1622 = vpop.permute.xlu0 %1621
        %1623 = vrot.lane.b32.xlu0 %v1039, 16
        %v1624 = vpop.permute.xlu0 %1623
        %1625 = vrot.lane.b32.xlu0 %v1040, 16
        %v1626 = vpop.permute.xlu0 %1625
        %1627 = vrot.lane.b32.xlu0 %v1041, 16
        %v1628 = vpop.permute.xlu0 %1627
        %1629 = vrot.lane.b32.xlu0 %v1042, 16
        %v1630 = vpop.permute.xlu0 %1629
        %1631 = vrot.lane.b32.xlu0 %v1043, 16
        %v1632 = vpop.permute.xlu0 %1631
        %1633 = vrot.lane.b32.xlu0 %v1044, 16
        %v1634 = vpop.permute.xlu0 %1633
        %1635 = vrot.lane.b32.xlu0 %v1045, 16
        %v1636 = vpop.permute.xlu0 %1635
        %1637 = vrot.lane.b32.xlu0 %v1046, 16
        %v1638 = vpop.permute.xlu0 %1637
        %1639 = vrot.lane.b32.xlu0 %v1047, 16
        %v1640 = vpop.permute.xlu0 %1639
        %1641 = vrot.lane.b32.xlu0 %v1048, 16
        %v1642 = vpop.permute.xlu0 %1641
        %1643 = vrot.lane.b32.xlu0 %v1049, 16
        %v1644 = vpop.permute.xlu0 %1643
        %1645 = vrot.lane.b32.xlu0 %v1050, 16
        %v1646 = vpop.permute.xlu0 %1645
        %1647 = vrot.lane.b32.xlu0 %v1051, 16
        %v1648 = vpop.permute.xlu0 %1647
        %1649 = vrot.lane.b32.xlu0 %v1052, 16
        %v1650 = vpop.permute.xlu0 %1649
        %1651 = vrot.lane.b32.xlu0 %v1053, 16
        %v1652 = vpop.permute.xlu0 %1651
        %1653 = vrot.lane.b32.xlu0 %v1054, 16
        %v1654 = vpop.permute.xlu0 %1653
        %1655 = vrot.lane.b32.xlu0 %v1055, 16
        %v1656 = vpop.permute.xlu0 %1655
        %1657 = vrot.lane.b32.xlu0 %v1056, 16
        %v1658 = vpop.permute.xlu0 %1657
        %1659 = vrot.lane.b32.xlu0 %v1057, 16
        %v1660 = vpop.permute.xlu0 %1659
        %1661 = vrot.lane.b32.xlu0 %v1058, 16
        %v1662 = vpop.permute.xlu0 %1661
        %1663 = vrot.lane.b32.xlu0 %v1059, 16
        %v1664 = vpop.permute.xlu0 %1663
        %1665 = vrot.lane.b32.xlu0 %v1060, 16
        %v1666 = vpop.permute.xlu0 %1665
        %1667 = vrot.lane.b32.xlu0 %v1061, 16
        %v1668 = vpop.permute.xlu0 %1667
        %1669 = vrot.lane.b32.xlu0 %v1062, 16
        %v1670 = vpop.permute.xlu0 %1669
        %1671 = vrot.lane.b32.xlu0 %v1063, 16
        %v1672 = vpop.permute.xlu0 %1671
        %1737 = vrot.lane.b32.xlu0 %v1064, 20
        %v1738 = vpop.permute.xlu0 %1737
        %1739 = vrot.lane.b32.xlu0 %v1065, 20
        %v1740 = vpop.permute.xlu0 %1739
        %1741 = vrot.lane.b32.xlu0 %v1066, 20
        %v1742 = vpop.permute.xlu0 %1741
        %1743 = vrot.lane.b32.xlu0 %v1067, 20
        %v1744 = vpop.permute.xlu0 %1743
        %1745 = vrot.lane.b32.xlu0 %v1068, 20
        %v1746 = vpop.permute.xlu0 %1745
        %1747 = vrot.lane.b32.xlu0 %v1069, 20
        %v1748 = vpop.permute.xlu0 %1747
        %1749 = vrot.lane.b32.xlu0 %v1070, 20
        %v1750 = vpop.permute.xlu0 %1749
        %1751 = vrot.lane.b32.xlu0 %v1071, 20
        %v1752 = vpop.permute.xlu0 %1751
        %1753 = vrot.lane.b32.xlu0 %v1072, 20
        %v1754 = vpop.permute.xlu0 %1753
        %1755 = vrot.lane.b32.xlu0 %v1073, 20
        %v1756 = vpop.permute.xlu0 %1755
        %1757 = vrot.lane.b32.xlu0 %v1074, 20
        %v1758 = vpop.permute.xlu0 %1757
        %1759 = vrot.lane.b32.xlu0 %v1075, 20
        %v1760 = vpop.permute.xlu0 %1759
        %1761 = vrot.lane.b32.xlu0 %v1076, 20
        %v1762 = vpop.permute.xlu0 %1761
        %1763 = vrot.lane.b32.xlu0 %v1077, 20
        %v1764 = vpop.permute.xlu0 %1763
        %1765 = vrot.lane.b32.xlu0 %v1078, 20
        %v1766 = vpop.permute.xlu0 %1765
        %1767 = vrot.lane.b32.xlu0 %v1079, 20
        %v1768 = vpop.permute.xlu0 %1767
        %1769 = vrot.lane.b32.xlu0 %v1080, 20
        %v1770 = vpop.permute.xlu0 %1769
        %1771 = vrot.lane.b32.xlu0 %v1081, 20
        %v1772 = vpop.permute.xlu0 %1771
        %1773 = vrot.lane.b32.xlu0 %v1082, 20
        %v1774 = vpop.permute.xlu0 %1773
        %1775 = vrot.lane.b32.xlu0 %v1083, 20
        %v1776 = vpop.permute.xlu0 %1775
        %1777 = vrot.lane.b32.xlu0 %v1084, 20
        %v1778 = vpop.permute.xlu0 %1777
        %1779 = vrot.lane.b32.xlu0 %v1085, 20
        %v1780 = vpop.permute.xlu0 %1779
        %1781 = vrot.lane.b32.xlu0 %v1086, 20
        %v1782 = vpop.permute.xlu0 %1781
        %1783 = vrot.lane.b32.xlu0 %v1087, 20
        %v1784 = vpop.permute.xlu0 %1783
        %1785 = vrot.lane.b32.xlu0 %v1088, 20
        %v1786 = vpop.permute.xlu0 %1785
        %1787 = vrot.lane.b32.xlu0 %v1089, 20
        %v1788 = vpop.permute.xlu0 %1787
        %1789 = vrot.lane.b32.xlu0 %v1090, 20
        %v1790 = vpop.permute.xlu0 %1789
        %1791 = vrot.lane.b32.xlu0 %v1091, 20
        %v1792 = vpop.permute.xlu0 %1791
        %1793 = vrot.lane.b32.xlu0 %v1092, 20
        %v1794 = vpop.permute.xlu0 %1793
        %1795 = vrot.lane.b32.xlu0 %v1093, 20
        %v1796 = vpop.permute.xlu0 %1795
        %1797 = vrot.lane.b32.xlu0 %v1094, 20
        %v1798 = vpop.permute.xlu0 %1797
        %1799 = vrot.lane.b32.xlu0 %v1095, 20
        %v1800 = vpop.permute.xlu0 %1799
        %1865 = vrot.lane.b32.xlu0 %v1097, 24
        %v1866 = vpop.permute.xlu0 %1865
        %1867 = vrot.lane.b32.xlu0 %v1098, 24
        %v1868 = vpop.permute.xlu0 %1867
        %1869 = vrot.lane.b32.xlu0 %v1099, 24
        %v1870 = vpop.permute.xlu0 %1869
        %1871 = vrot.lane.b32.xlu0 %v1100, 24
        %v1872 = vpop.permute.xlu0 %1871
        %1873 = vrot.lane.b32.xlu0 %v1101, 24
        %v1874 = vpop.permute.xlu0 %1873
        %1875 = vrot.lane.b32.xlu0 %v1102, 24
        %v1876 = vpop.permute.xlu0 %1875
        %1877 = vrot.lane.b32.xlu0 %v1103, 24
        %v1878 = vpop.permute.xlu0 %1877
        %1879 = vrot.lane.b32.xlu0 %v1104, 24
        %v1880 = vpop.permute.xlu0 %1879
        %1881 = vrot.lane.b32.xlu0 %v1105, 24
        %v1882 = vpop.permute.xlu0 %1881
        %1883 = vrot.lane.b32.xlu0 %v1106, 24
        %v1884 = vpop.permute.xlu0 %1883
        %1885 = vrot.lane.b32.xlu0 %v1107, 24
        %v1886 = vpop.permute.xlu0 %1885
        %1887 = vrot.lane.b32.xlu0 %v1108, 24
        %v1888 = vpop.permute.xlu0 %1887
        %1889 = vrot.lane.b32.xlu0 %v1109, 24
        %v1890 = vpop.permute.xlu0 %1889
        %1891 = vrot.lane.b32.xlu0 %v1110, 24
        %v1892 = vpop.permute.xlu0 %1891
        %1893 = vrot.lane.b32.xlu0 %v1111, 24
        %v1894 = vpop.permute.xlu0 %1893
        %1895 = vrot.lane.b32.xlu0 %v1112, 24
        %v1896 = vpop.permute.xlu0 %1895
        %1897 = vrot.lane.b32.xlu0 %v1113, 24
        %v1898 = vpop.permute.xlu0 %1897
        %1899 = vrot.lane.b32.xlu0 %v1114, 24
        %v1900 = vpop.permute.xlu0 %1899
        %1901 = vrot.lane.b32.xlu0 %v1115, 24
        %v1902 = vpop.permute.xlu0 %1901
        %1903 = vrot.lane.b32.xlu0 %v1116, 24
        %v1904 = vpop.permute.xlu0 %1903
        %1905 = vrot.lane.b32.xlu0 %v1117, 24
        %v1906 = vpop.permute.xlu0 %1905
        %1907 = vrot.lane.b32.xlu0 %v1118, 24
        %v1908 = vpop.permute.xlu0 %1907
        %1909 = vrot.lane.b32.xlu0 %v1119, 24
        %v1910 = vpop.permute.xlu0 %1909
        %1911 = vrot.lane.b32.xlu0 %v1120, 24
        %v1912 = vpop.permute.xlu0 %1911
        %1913 = vrot.lane.b32.xlu0 %v1121, 24
        %v1914 = vpop.permute.xlu0 %1913
        %1915 = vrot.lane.b32.xlu0 %v1122, 24
        %v1916 = vpop.permute.xlu0 %1915
        %1917 = vrot.lane.b32.xlu0 %v1123, 24
        %v1918 = vpop.permute.xlu0 %1917
        %1919 = vrot.lane.b32.xlu0 %v1124, 24
        %v1920 = vpop.permute.xlu0 %1919
        %1921 = vrot.lane.b32.xlu0 %v1125, 24
        %v1922 = vpop.permute.xlu0 %1921
        %1923 = vrot.lane.b32.xlu0 %v1126, 24
        %v1924 = vpop.permute.xlu0 %1923
        %1925 = vrot.lane.b32.xlu0 %v1127, 24
        %v1926 = vpop.permute.xlu0 %1925
        %1927 = vrot.lane.b32.xlu0 %v1128, 24
        %v1928 = vpop.permute.xlu0 %1927
        %1993 = vrot.lane.b32.xlu0 %v1129, 28
        %v1994 = vpop.permute.xlu0 %1993
        %1995 = vrot.lane.b32.xlu0 %v1130, 28
        %v1996 = vpop.permute.xlu0 %1995
        %1997 = vrot.lane.b32.xlu0 %v1131, 28
        %v1998 = vpop.permute.xlu0 %1997
        %1999 = vrot.lane.b32.xlu0 %v1132, 28
        %v2000 = vpop.permute.xlu0 %1999
        %2001 = vrot.lane.b32.xlu0 %v1133, 28
        %v2002 = vpop.permute.xlu0 %2001
        %2003 = vrot.lane.b32.xlu0 %v1134, 28
        %v2004 = vpop.permute.xlu0 %2003
        %2005 = vrot.lane.b32.xlu0 %v1135, 28
        %v2006 = vpop.permute.xlu0 %2005
        %2007 = vrot.lane.b32.xlu0 %v1136, 28
        %v2008 = vpop.permute.xlu0 %2007
        %2009 = vrot.lane.b32.xlu0 %v1137, 28
        %v2010 = vpop.permute.xlu0 %2009
        %2011 = vrot.lane.b32.xlu0 %v1138, 28
        %v2012 = vpop.permute.xlu0 %2011
        %2013 = vrot.lane.b32.xlu0 %v1139, 28
        %v2014 = vpop.permute.xlu0 %2013
        %2015 = vrot.lane.b32.xlu0 %v1140, 28
        %v2016 = vpop.permute.xlu0 %2015
        %2017 = vrot.lane.b32.xlu0 %v1141, 28
        %v2018 = vpop.permute.xlu0 %2017
        %2019 = vrot.lane.b32.xlu0 %v1142, 28
        %v2020 = vpop.permute.xlu0 %2019
        %2021 = vrot.lane.b32.xlu0 %v1143, 28
        %v2022 = vpop.permute.xlu0 %2021
        %2023 = vrot.lane.b32.xlu0 %v1144, 28
        %v2024 = vpop.permute.xlu0 %2023
        %2025 = vrot.lane.b32.xlu0 %v1145, 28
        %v2026 = vpop.permute.xlu0 %2025
        %2027 = vrot.lane.b32.xlu0 %v1146, 28
        %v2028 = vpop.permute.xlu0 %2027
        %2029 = vrot.lane.b32.xlu0 %v1147, 28
        %v2030 = vpop.permute.xlu0 %2029
        %2031 = vrot.lane.b32.xlu0 %v1148, 28
        %v2032 = vpop.permute.xlu0 %2031
        %2033 = vrot.lane.b32.xlu0 %v1149, 28
        %v2034 = vpop.permute.xlu0 %2033
        %2035 = vrot.lane.b32.xlu0 %v1150, 28
        %v2036 = vpop.permute.xlu0 %2035
        %2037 = vrot.lane.b32.xlu0 %v1151, 28
        %v2038 = vpop.permute.xlu0 %2037
        %2039 = vrot.lane.b32.xlu0 %v1152, 28
        %v2040 = vpop.permute.xlu0 %2039
        %2041 = vrot.lane.b32.xlu0 %v1153, 28
        %v2042 = vpop.permute.xlu0 %2041
        %2043 = vrot.lane.b32.xlu0 %v1154, 28
        %v2044 = vpop.permute.xlu0 %2043
        %2045 = vrot.lane.b32.xlu0 %v1155, 28
        %v2046 = vpop.permute.xlu0 %2045
        %2047 = vrot.lane.b32.xlu0 %v1156, 28
        %v2048 = vpop.permute.xlu0 %2047
        %2049 = vrot.lane.b32.xlu0 %v1157, 28
        %v2050 = vpop.permute.xlu0 %2049
        %2051 = vrot.lane.b32.xlu0 %v1158, 28
        %v2052 = vpop.permute.xlu0 %2051
        %2053 = vrot.lane.b32.xlu0 %v1159, 28
        %v2054 = vpop.permute.xlu0 %2053
        %2055 = vrot.lane.b32.xlu0 %v1160, 28
        %v2056 = vpop.permute.xlu0 %2055
        %2121 = vrot.lane.b32.xlu0 %v1161, 32
        %v2122 = vpop.permute.xlu0 %2121
        %2123 = vrot.lane.b32.xlu0 %v1162, 32
        %v2124 = vpop.permute.xlu0 %2123
        %2125 = vrot.lane.b32.xlu0 %v1163, 32
        %v2126 = vpop.permute.xlu0 %2125
        %2127 = vrot.lane.b32.xlu0 %v1164, 32
        %v2128 = vpop.permute.xlu0 %2127
        %2129 = vrot.lane.b32.xlu0 %v1165, 32
        %v2130 = vpop.permute.xlu0 %2129
        %2131 = vrot.lane.b32.xlu0 %v1166, 32
        %v2132 = vpop.permute.xlu0 %2131
        %2133 = vrot.lane.b32.xlu0 %v1167, 32
        %v2134 = vpop.permute.xlu0 %2133
        %2135 = vrot.lane.b32.xlu0 %v1168, 32
        %v2136 = vpop.permute.xlu0 %2135
        %2137 = vrot.lane.b32.xlu0 %v1169, 32
        %v2138 = vpop.permute.xlu0 %2137
        %2139 = vrot.lane.b32.xlu0 %v1170, 32
        %v2140 = vpop.permute.xlu0 %2139
        %2141 = vrot.lane.b32.xlu0 %v1171, 32
        %v2142 = vpop.permute.xlu0 %2141
        %2143 = vrot.lane.b32.xlu0 %v1172, 32
        %v2144 = vpop.permute.xlu0 %2143
        %2145 = vrot.lane.b32.xlu0 %v1173, 32
        %v2146 = vpop.permute.xlu0 %2145
        %2147 = vrot.lane.b32.xlu0 %v1174, 32
        %v2148 = vpop.permute.xlu0 %2147
        %2149 = vrot.lane.b32.xlu0 %v1175, 32
        %v2150 = vpop.permute.xlu0 %2149
        %2151 = vrot.lane.b32.xlu0 %v1176, 32
        %v2152 = vpop.permute.xlu0 %2151
        %2153 = vrot.lane.b32.xlu0 %v1177, 32
        %v2154 = vpop.permute.xlu0 %2153
        %2155 = vrot.lane.b32.xlu0 %v1178, 32
        %v2156 = vpop.permute.xlu0 %2155
        %2157 = vrot.lane.b32.xlu0 %v1179, 32
        %v2158 = vpop.permute.xlu0 %2157
        %2159 = vrot.lane.b32.xlu0 %v1180, 32
        %v2160 = vpop.permute.xlu0 %2159
        %2161 = vrot.lane.b32.xlu0 %v1181, 32
        %v2162 = vpop.permute.xlu0 %2161
        %2163 = vrot.lane.b32.xlu0 %v1182, 32
        %v2164 = vpop.permute.xlu0 %2163
        %2165 = vrot.lane.b32.xlu0 %v1183, 32
        %v2166 = vpop.permute.xlu0 %2165
        %2167 = vrot.lane.b32.xlu0 %v1184, 32
        %v2168 = vpop.permute.xlu0 %2167
        %2169 = vrot.lane.b32.xlu0 %v1185, 32
        %v2170 = vpop.permute.xlu0 %2169
        %2171 = vrot.lane.b32.xlu0 %v1186, 32
        %v2172 = vpop.permute.xlu0 %2171
        %2173 = vrot.lane.b32.xlu0 %v1187, 32
        %v2174 = vpop.permute.xlu0 %2173
        %2175 = vrot.lane.b32.xlu0 %v1188, 32
        %v2176 = vpop.permute.xlu0 %2175
        %2177 = vrot.lane.b32.xlu0 %v1189, 32
        %v2178 = vpop.permute.xlu0 %2177
        %2179 = vrot.lane.b32.xlu0 %v1190, 32
        %v2180 = vpop.permute.xlu0 %2179
        %2181 = vrot.lane.b32.xlu0 %v1191, 32
        %v2182 = vpop.permute.xlu0 %2181
        %2183 = vrot.lane.b32.xlu0 %v1192, 32
        %v2184 = vpop.permute.xlu0 %2183
        %v2217 = vsel %vm452, %v904, %v1226
        %v2218 = vsel %vm452, %v905, %v1228
        %v2219 = vsel %vm452, %v906, %v1230
        %v2220 = vsel %vm452, %v907, %v1232
        %v2221 = vsel %vm452, %v908, %v1234
        %v2222 = vsel %vm452, %v909, %v1236
        %v2223 = vsel %vm452, %v910, %v1238
        %v2224 = vsel %vm452, %v911, %v1240
        %v2225 = vsel %vm452, %v912, %v1242
        %v2226 = vsel %vm452, %v913, %v1244
        %v2227 = vsel %vm452, %v914, %v1246
        %v2228 = vsel %vm452, %v915, %v1248
        %v2229 = vsel %vm452, %v916, %v1250
        %v2230 = vsel %vm452, %v917, %v1252
        %v2231 = vsel %vm452, %v918, %v1254
        %v2232 = vsel %vm452, %v919, %v1256
        %v2233 = vsel %vm452, %v920, %v1258
        %v2234 = vsel %vm452, %v921, %v1260
        %v2235 = vsel %vm452, %v922, %v1262
        %v2236 = vsel %vm452, %v923, %v1264
        %v2237 = vsel %vm452, %v924, %v1266
        %v2238 = vsel %vm452, %v925, %v1268
        %v2239 = vsel %vm452, %v926, %v1270
        %v2240 = vsel %vm452, %v927, %v1272
        %v2241 = vsel %vm452, %v928, %v1274
        %v2242 = vsel %vm452, %v929, %v1276
        %v2243 = vsel %vm452, %v930, %v1278
        %v2244 = vsel %vm452, %v931, %v1280
        %v2245 = vsel %vm452, %v932, %v1282
        %v2246 = vsel %vm452, %v933, %v1284
        %v2247 = vsel %vm452, %v934, %v1286
        %v2248 = vsel %vm452, %v935, %v1288
        %vm2249 = vcmask 64512
        %v2250 = vsel %vm2249, %v2217, %v1354
        %v2251 = vsel %vm2249, %v2218, %v1356
        %v2252 = vsel %vm2249, %v2219, %v1358
        %v2253 = vsel %vm2249, %v2220, %v1360
        %v2254 = vsel %vm2249, %v2221, %v1362
        %v2255 = vsel %vm2249, %v2222, %v1364
        %v2256 = vsel %vm2249, %v2223, %v1366
        %v2257 = vsel %vm2249, %v2224, %v1368
        %v2258 = vsel %vm2249, %v2225, %v1370
        %v2259 = vsel %vm2249, %v2226, %v1372
        %v2260 = vsel %vm2249, %v2227, %v1374
        %v2261 = vsel %vm2249, %v2228, %v1376
        %v2262 = vsel %vm2249, %v2229, %v1378
        %v2263 = vsel %vm2249, %v2230, %v1380
        %v2264 = vsel %vm2249, %v2231, %v1382
        %v2265 = vsel %vm2249, %v2232, %v1384
        %v2266 = vsel %vm2249, %v2233, %v1386
        %v2267 = vsel %vm2249, %v2234, %v1388
        %v2268 = vsel %vm2249, %v2235, %v1390
        %v2269 = vsel %vm2249, %v2236, %v1392
        %v2270 = vsel %vm2249, %v2237, %v1394
        %v2271 = vsel %vm2249, %v2238, %v1396
        %v2272 = vsel %vm2249, %v2239, %v1398
        %v2273 = vsel %vm2249, %v2240, %v1400
        %v2274 = vsel %vm2249, %v2241, %v1402
        %v2275 = vsel %vm2249, %v2242, %v1404
        %v2276 = vsel %vm2249, %v2243, %v1406
        %v2277 = vsel %vm2249, %v2244, %v1408
        %v2278 = vsel %vm2249, %v2245, %v1410
        %v2279 = vsel %vm2249, %v2246, %v1412
        %v2280 = vsel %vm2249, %v2247, %v1414
        %v2281 = vsel %vm2249, %v2248, %v1416
        %vm2282 = vcmask 97280
        %v2283 = vsel %vm2282, %v2250, %v1482
        %v2284 = vsel %vm2282, %v2251, %v1484
        %v2285 = vsel %vm2282, %v2252, %v1486
        %v2286 = vsel %vm2282, %v2253, %v1488
        %v2287 = vsel %vm2282, %v2254, %v1490
        %v2288 = vsel %vm2282, %v2255, %v1492
        %v2289 = vsel %vm2282, %v2256, %v1494
        %v2290 = vsel %vm2282, %v2257, %v1496
        %v2291 = vsel %vm2282, %v2258, %v1498
        %v2292 = vsel %vm2282, %v2259, %v1500
        %v2293 = vsel %vm2282, %v2260, %v1502
        %v2294 = vsel %vm2282, %v2261, %v1504
        %v2295 = vsel %vm2282, %v2262, %v1506
        %v2296 = vsel %vm2282, %v2263, %v1508
        %v2297 = vsel %vm2282, %v2264, %v1510
        %v2298 = vsel %vm2282, %v2265, %v1512
        %v2299 = vsel %vm2282, %v2266, %v1514
        %v2300 = vsel %vm2282, %v2267, %v1516
        %v2301 = vsel %vm2282, %v2268, %v1518
        %v2302 = vsel %vm2282, %v2269, %v1520
        %v2303 = vsel %vm2282, %v2270, %v1522
        %v2304 = vsel %vm2282, %v2271, %v1524
        %v2305 = vsel %vm2282, %v2272, %v1526
        %v2306 = vsel %vm2282, %v2273, %v1528
        %v2307 = vsel %vm2282, %v2274, %v1530
        %v2308 = vsel %vm2282, %v2275, %v1532
        %v2309 = vsel %vm2282, %v2276, %v1534
        %v2310 = vsel %vm2282, %v2277, %v1536
        %v2311 = vsel %vm2282, %v2278, %v1538
        %v2312 = vsel %vm2282, %v2279, %v1540
        %v2313 = vsel %vm2282, %v2280, %v1542
        %v2314 = vsel %vm2282, %v2281, %v1544
        %vm2315 = vcmask 130048
        %v2316 = vsel %vm2315, %v2283, %v1610
        %v2317 = vsel %vm2315, %v2284, %v1612
        %v2318 = vsel %vm2315, %v2285, %v1614
        %v2319 = vsel %vm2315, %v2286, %v1616
        %v2320 = vsel %vm2315, %v2287, %v1618
        %v2321 = vsel %vm2315, %v2288, %v1620
        %v2322 = vsel %vm2315, %v2289, %v1622
        %v2323 = vsel %vm2315, %v2290, %v1624
        %v2324 = vsel %vm2315, %v2291, %v1626
        %v2325 = vsel %vm2315, %v2292, %v1628
        %v2326 = vsel %vm2315, %v2293, %v1630
        %v2327 = vsel %vm2315, %v2294, %v1632
        %v2328 = vsel %vm2315, %v2295, %v1634
        %v2329 = vsel %vm2315, %v2296, %v1636
        %v2330 = vsel %vm2315, %v2297, %v1638
        %v2331 = vsel %vm2315, %v2298, %v1640
        %v2332 = vsel %vm2315, %v2299, %v1642
        %v2333 = vsel %vm2315, %v2300, %v1644
        %v2334 = vsel %vm2315, %v2301, %v1646
        %v2335 = vsel %vm2315, %v2302, %v1648
        %v2336 = vsel %vm2315, %v2303, %v1650
        %v2337 = vsel %vm2315, %v2304, %v1652
        %v2338 = vsel %vm2315, %v2305, %v1654
        %v2339 = vsel %vm2315, %v2306, %v1656
        %v2340 = vsel %vm2315, %v2307, %v1658
        %v2341 = vsel %vm2315, %v2308, %v1660
        %v2342 = vsel %vm2315, %v2309, %v1662
        %v2343 = vsel %vm2315, %v2310, %v1664
        %v2344 = vsel %vm2315, %v2311, %v1666
        %v2345 = vsel %vm2315, %v2312, %v1668
        %v2346 = vsel %vm2315, %v2313, %v1670
        %v2347 = vsel %vm2315, %v2314, %v1672
        %vm2348 = vcmask 162816
        %v2349 = vsel %vm2348, %v2316, %v1738
        %v2350 = vsel %vm2348, %v2317, %v1740
        %v2351 = vsel %vm2348, %v2318, %v1742
        %v2352 = vsel %vm2348, %v2319, %v1744
        %v2353 = vsel %vm2348, %v2320, %v1746
        %v2354 = vsel %vm2348, %v2321, %v1748
        %v2355 = vsel %vm2348, %v2322, %v1750
        %v2356 = vsel %vm2348, %v2323, %v1752
        %v2357 = vsel %vm2348, %v2324, %v1754
        %v2358 = vsel %vm2348, %v2325, %v1756
        %v2359 = vsel %vm2348, %v2326, %v1758
        %v2360 = vsel %vm2348, %v2327, %v1760
        %v2361 = vsel %vm2348, %v2328, %v1762
        %v2362 = vsel %vm2348, %v2329, %v1764
        %v2363 = vsel %vm2348, %v2330, %v1766
        %v2364 = vsel %vm2348, %v2331, %v1768
        %v2365 = vsel %vm2348, %v2332, %v1770
        %v2366 = vsel %vm2348, %v2333, %v1772
        %v2367 = vsel %vm2348, %v2334, %v1774
        %v2368 = vsel %vm2348, %v2335, %v1776
        %v2369 = vsel %vm2348, %v2336, %v1778
        %v2370 = vsel %vm2348, %v2337, %v1780
        %v2371 = vsel %vm2348, %v2338, %v1782
        %v2372 = vsel %vm2348, %v2339, %v1784
        %v2373 = vsel %vm2348, %v2340, %v1786
        %v2374 = vsel %vm2348, %v2341, %v1788
        %v2375 = vsel %vm2348, %v2342, %v1790
        %v2376 = vsel %vm2348, %v2343, %v1792
        %v2377 = vsel %vm2348, %v2344, %v1794
        %v2378 = vsel %vm2348, %v2345, %v1796
        %v2379 = vsel %vm2348, %v2346, %v1798
        %v2380 = vsel %vm2348, %v2347, %v1800
        %vm2381 = vcmask 195584
        %v2382 = vsel %vm2381, %v2349, %v1866
        %v2383 = vsel %vm2381, %v2350, %v1868
        %v2384 = vsel %vm2381, %v2351, %v1870
        %v2385 = vsel %vm2381, %v2352, %v1872
        %v2386 = vsel %vm2381, %v2353, %v1874
        %v2387 = vsel %vm2381, %v2354, %v1876
        %v2388 = vsel %vm2381, %v2355, %v1878
        %v2389 = vsel %vm2381, %v2356, %v1880
        %v2390 = vsel %vm2381, %v2357, %v1882
        %v2391 = vsel %vm2381, %v2358, %v1884
        %v2392 = vsel %vm2381, %v2359, %v1886
        %v2393 = vsel %vm2381, %v2360, %v1888
        %v2394 = vsel %vm2381, %v2361, %v1890
        %v2395 = vsel %vm2381, %v2362, %v1892
        %v2396 = vsel %vm2381, %v2363, %v1894
        %v2397 = vsel %vm2381, %v2364, %v1896
        %v2398 = vsel %vm2381, %v2365, %v1898
        %v2399 = vsel %vm2381, %v2366, %v1900
        %v2400 = vsel %vm2381, %v2367, %v1902
        %v2401 = vsel %vm2381, %v2368, %v1904
        %v2402 = vsel %vm2381, %v2369, %v1906
        %v2403 = vsel %vm2381, %v2370, %v1908
        %v2404 = vsel %vm2381, %v2371, %v1910
        %v2405 = vsel %vm2381, %v2372, %v1912
        %v2406 = vsel %vm2381, %v2373, %v1914
        %v2407 = vsel %vm2381, %v2374, %v1916
        %v2408 = vsel %vm2381, %v2375, %v1918
        %v2409 = vsel %vm2381, %v2376, %v1920
        %v2410 = vsel %vm2381, %v2377, %v1922
        %v2411 = vsel %vm2381, %v2378, %v1924
        %v2412 = vsel %vm2381, %v2379, %v1926
        %v2413 = vsel %vm2381, %v2380, %v1928
        %vm2414 = vcmask 228352
        %v2415 = vsel %vm2414, %v2382, %v1994
        %v2416 = vsel %vm2414, %v2383, %v1996
        %v2417 = vsel %vm2414, %v2384, %v1998
        %v2418 = vsel %vm2414, %v2385, %v2000
        %v2419 = vsel %vm2414, %v2386, %v2002
        %v2420 = vsel %vm2414, %v2387, %v2004
        %v2421 = vsel %vm2414, %v2388, %v2006
        %v2422 = vsel %vm2414, %v2389, %v2008
        %v2423 = vsel %vm2414, %v2390, %v2010
        %v2424 = vsel %vm2414, %v2391, %v2012
        %v2425 = vsel %vm2414, %v2392, %v2014
        %v2426 = vsel %vm2414, %v2393, %v2016
        %v2427 = vsel %vm2414, %v2394, %v2018
        %v2428 = vsel %vm2414, %v2395, %v2020
        %v2429 = vsel %vm2414, %v2396, %v2022
        %v2430 = vsel %vm2414, %v2397, %v2024
        %v2431 = vsel %vm2414, %v2398, %v2026
        %v2432 = vsel %vm2414, %v2399, %v2028
        %v2433 = vsel %vm2414, %v2400, %v2030
        %v2434 = vsel %vm2414, %v2401, %v2032
        %v2435 = vsel %vm2414, %v2402, %v2034
        %v2436 = vsel %vm2414, %v2403, %v2036
        %v2437 = vsel %vm2414, %v2404, %v2038
        %v2438 = vsel %vm2414, %v2405, %v2040
        %v2439 = vsel %vm2414, %v2406, %v2042
        %v2440 = vsel %vm2414, %v2407, %v2044
        %v2441 = vsel %vm2414, %v2408, %v2046
        %v2442 = vsel %vm2414, %v2409, %v2048
        %v2443 = vsel %vm2414, %v2410, %v2050
        %v2444 = vsel %vm2414, %v2411, %v2052
        %v2445 = vsel %vm2414, %v2412, %v2054
        %v2446 = vsel %vm2414, %v2413, %v2056
        %vm2447 = vcmask 261120
        %v2448 = vsel %vm2447, %v2415, %v2122
        %v2449 = vsel %vm2447, %v2416, %v2124
        %v2450 = vsel %vm2447, %v2417, %v2126
        %v2451 = vsel %vm2447, %v2418, %v2128
        %v2452 = vsel %vm2447, %v2419, %v2130
        %v2453 = vsel %vm2447, %v2420, %v2132
        %v2454 = vsel %vm2447, %v2421, %v2134
        %v2455 = vsel %vm2447, %v2422, %v2136
        %v2456 = vsel %vm2447, %v2423, %v2138
        %v2457 = vsel %vm2447, %v2424, %v2140
        %v2458 = vsel %vm2447, %v2425, %v2142
        %v2459 = vsel %vm2447, %v2426, %v2144
        %v2460 = vsel %vm2447, %v2427, %v2146
        %v2461 = vsel %vm2447, %v2428, %v2148
        %v2462 = vsel %vm2447, %v2429, %v2150
        %v2463 = vsel %vm2447, %v2430, %v2152
        %v2464 = vsel %vm2447, %v2431, %v2154
        %v2465 = vsel %vm2447, %v2432, %v2156
        %v2466 = vsel %vm2447, %v2433, %v2158
        %v2467 = vsel %vm2447, %v2434, %v2160
        %v2468 = vsel %vm2447, %v2435, %v2162
        %v2469 = vsel %vm2447, %v2436, %v2164
        %v2470 = vsel %vm2447, %v2437, %v2166
        %v2471 = vsel %vm2447, %v2438, %v2168
        %v2472 = vsel %vm2447, %v2439, %v2170
        %v2473 = vsel %vm2447, %v2440, %v2172
        %v2474 = vsel %vm2447, %v2441, %v2174
        %v2475 = vsel %vm2447, %v2442, %v2176
        %v2476 = vsel %vm2447, %v2443, %v2178
        %v2477 = vsel %vm2447, %v2444, %v2180
        %v2478 = vsel %vm2447, %v2445, %v2182
        %v2479 = vsel %vm2447, %v2446, %v2184
        %v2480 = vpack.c.bf16 %v2449, %v2448
        %v2481 = vpack.c.bf16 %v2451, %v2450
        %v2482 = vpack.c.bf16 %v2453, %v2452
        %v2483 = vpack.c.bf16 %v2455, %v2454
        %v2484 = vpack.c.bf16 %v2457, %v2456
        %v2485 = vpack.c.bf16 %v2459, %v2458
        %v2486 = vpack.c.bf16 %v2461, %v2460
        %v2487 = vpack.c.bf16 %v2463, %v2462
        %v2488 = vpack.c.bf16 %v2465, %v2464
        %v2489 = vpack.c.bf16 %v2467, %v2466
        %v2490 = vpack.c.bf16 %v2469, %v2468
        %v2491 = vpack.c.bf16 %v2471, %v2470
        %v2492 = vpack.c.bf16 %v2473, %v2472
        %v2493 = vpack.c.bf16 %v2475, %v2474
        %v2494 = vpack.c.bf16 %v2477, %v2476
        %v2495 = vpack.c.bf16 %v2479, %v2478
        %v2496 = vld [vmem:[%s3] sm:$0xf]
        %v2497 = vld [vmem:[%s3 + $0x4] sm:$0xf]
        %v2498 = vld [vmem:[%s3 + $0x8] sm:$0xf]
        %v2499 = vld [vmem:[%s3 + $0xc] sm:$0xf]
        %v2500 = vld [vmem:[%s3 + $0x10] sm:$0x3]
        %v2501 = vld [vmem:[%s4] sm:$0x1]
        %v2503 = vlaneseq
        %v2504 = vshrl.u32 %v2503, 7
        %v2505 = vsub.s32 0, %v2504
        %v2506 = vrot.slane %v2501, %v2505
        %v2513 = vunpack.c.l.b16 %v2496
        %v2514 = vunpack.c.l.b16 %v2497
        %v2515 = vunpack.c.l.b16 %v2498
        %v2516 = vunpack.c.l.b16 %v2499
        %v2517 = vunpack.c.l.b16 %v2500
        %v2518 = vpack.c.b16 %v2514, %v2513
        %v2519 = vpack.c.b16 %v2516, %v2515
        %v2520 = vpack.c.b16 %v2517, %v2517
        %vm2523 = vcmask 293888
        %v2525 = vsel %vm2523, %v2480, 0
        %v2528 = vsel %vm2523, %v2481, 0
        %v2531 = vsel %vm2523, %v2482, 0
        %v2534 = vsel %vm2523, %v2483, 0
        %v2537 = vsel %vm2523, %v2484, 0
        %v2540 = vsel %vm2523, %v2485, 0
        %v2543 = vsel %vm2523, %v2486, 0
        %v2546 = vsel %vm2523, %v2487, 0
        %v2549 = vsel %vm2523, %v2488, 0
        %v2552 = vsel %vm2523, %v2489, 0
        %v2555 = vsel %vm2523, %v2490, 0
        %v2558 = vsel %vm2523, %v2491, 0
        %v2561 = vsel %vm2523, %v2492, 0
        %v2564 = vsel %vm2523, %v2493, 0
        %v2567 = vsel %vm2523, %v2494, 0
        %v2570 = vsel %vm2523, %v2495, 0
        %v2573 = vsel %vm501, %v2520, 0
        %2575 = vmatprep.subr.bf16.mxu0 0
        %2576 = vmatpush1.bf16.msra.mxu0 0
        %2577 = vmatprep.subr.bf16.mxu0 0
        %2578 = vmatpush1.bf16.msra.mxu0 0
        %2579 = vmatprep.subr.bf16.mxu0 0
        %2580 = vmatpush1.bf16.msra.mxu0 0
        %2581 = vmatprep.subr.bf16.mxu0 0
        %2582 = vmatpush1.bf16.msra.mxu0 0
        %2583 = vmatprep.subr.bf16.mxu0 0
        %2584 = vmatpush1.bf16.msra.mxu0 0
        %2585 = vmatprep.subr.bf16.mxu0 0
        %2586 = vmatpush1.bf16.msra.mxu0 %v2573
        %2587 = vmatprep.subr.bf16.mxu0 0
        %2588 = vmatpush1.bf16.msra.mxu0 %v2519
        %2589 = vmatprep.subr.bf16.mxu0 0
        %2590 = vmatpush1.bf16.msra.mxu0 %v2518
        %2591 = vmatprep.subr.bf16.mxu0 0
        %2592 = vmatpush2.bf16.msra.mxu0 0
        %2593 = vmatprep.subr.bf16.mxu0 0
        %2594 = vmatpush2.bf16.msra.mxu0 0
        %2595 = vmatprep.subr.bf16.mxu0 0
        %2596 = vmatpush2.bf16.msra.mxu0 0
        %2597 = vmatprep.subr.bf16.mxu0 0
        %2598 = vmatpush2.bf16.msra.mxu0 0
        %2599 = vmatprep.subr.bf16.mxu0 0
        %2600 = vmatpush2.bf16.msra.mxu0 0
        %2601 = vmatprep.subr.bf16.mxu0 0
        %2602 = vmatpush2.bf16.msra.mxu0 0
        %2603 = vmatprep.subr.bf16.mxu0 0
        %2604 = vmatpush2.bf16.msra.mxu0 0
        %2605 = vmatprep.subr.bf16.mxu0 0
        %2606 = vmatpush2.bf16.msra.mxu0 0
        %2607 = vmatprep.mubr.bf16.mxu0 0
        %2608 = vmatmul.mubr.bf16.gmra.mxu0 %v2525
        %v2609 = vpop.f32.mrf.mxu0
        %v2610 = vadd.f32 %v2506, %v2609
        %v2611 = vpop.f32.mrf.mxu0
        %v2612 = vpop.f32.mrf.mxu0
        %v2613 = vadd.f32 %v2506, %v2612
        %v2614 = vpop.f32.mrf.mxu0
        %2615 = vmatprep.mubr.bf16.mxu0 0
        %2616 = vmatmul.mubr.bf16.gmra.mxu0 %v2528
        %v2617 = vpop.f32.mrf.mxu0
        %v2618 = vadd.f32 %v2506, %v2617
        %v2619 = vpop.f32.mrf.mxu0
        %v2620 = vpop.f32.mrf.mxu0
        %v2621 = vadd.f32 %v2506, %v2620
        %v2622 = vpop.f32.mrf.mxu0
        %2623 = vmatprep.mubr.bf16.mxu0 0
        %2624 = vmatmul.mubr.bf16.gmra.mxu0 %v2531
        %v2625 = vpop.f32.mrf.mxu0
        %v2626 = vadd.f32 %v2506, %v2625
        %v2627 = vpop.f32.mrf.mxu0
        %v2628 = vpop.f32.mrf.mxu0
        %v2629 = vadd.f32 %v2506, %v2628
        %v2630 = vpop.f32.mrf.mxu0
        %2631 = vmatprep.mubr.bf16.mxu0 0
        %2632 = vmatmul.mubr.bf16.gmra.mxu0 %v2534
        %v2633 = vpop.f32.mrf.mxu0
        %v2634 = vadd.f32 %v2506, %v2633
        %v2635 = vpop.f32.mrf.mxu0
        %v2636 = vpop.f32.mrf.mxu0
        %v2637 = vadd.f32 %v2506, %v2636
        %v2638 = vpop.f32.mrf.mxu0
        %2639 = vmatprep.mubr.bf16.mxu0 0
        %2640 = vmatmul.mubr.bf16.gmra.mxu0 %v2537
        %v2641 = vpop.f32.mrf.mxu0
        %v2642 = vadd.f32 %v2506, %v2641
        %v2643 = vpop.f32.mrf.mxu0
        %v2644 = vpop.f32.mrf.mxu0
        %v2645 = vadd.f32 %v2506, %v2644
        %v2646 = vpop.f32.mrf.mxu0
        %2647 = vmatprep.mubr.bf16.mxu0 0
        %2648 = vmatmul.mubr.bf16.gmra.mxu0 %v2540
        %v2649 = vpop.f32.mrf.mxu0
        %v2650 = vadd.f32 %v2506, %v2649
        %v2651 = vpop.f32.mrf.mxu0
        %v2652 = vpop.f32.mrf.mxu0
        %v2653 = vadd.f32 %v2506, %v2652
        %v2654 = vpop.f32.mrf.mxu0
        %2655 = vmatprep.mubr.bf16.mxu0 0
        %2656 = vmatmul.mubr.bf16.gmra.mxu0 %v2543
        %v2657 = vpop.f32.mrf.mxu0
        %v2658 = vadd.f32 %v2506, %v2657
        %v2659 = vpop.f32.mrf.mxu0
        %v2660 = vpop.f32.mrf.mxu0
        %v2661 = vadd.f32 %v2506, %v2660
        %v2662 = vpop.f32.mrf.mxu0
        %2663 = vmatprep.mubr.bf16.mxu0 0
        %2664 = vmatmul.mubr.bf16.gmra.mxu0 %v2546
        %v2665 = vpop.f32.mrf.mxu0
        %v2666 = vadd.f32 %v2506, %v2665
        %v2667 = vpop.f32.mrf.mxu0
        %v2668 = vpop.f32.mrf.mxu0
        %v2669 = vadd.f32 %v2506, %v2668
        %v2670 = vpop.f32.mrf.mxu0
        %2671 = vmatprep.mubr.bf16.mxu0 0
        %2672 = vmatmul.mubr.bf16.gmra.mxu0 %v2549
        %v2673 = vpop.f32.mrf.mxu0
        %v2674 = vadd.f32 %v2506, %v2673
        %v2675 = vpop.f32.mrf.mxu0
        %v2676 = vpop.f32.mrf.mxu0
        %v2677 = vadd.f32 %v2506, %v2676
        %v2678 = vpop.f32.mrf.mxu0
        %2679 = vmatprep.mubr.bf16.mxu0 0
        %2680 = vmatmul.mubr.bf16.gmra.mxu0 %v2552
        %v2681 = vpop.f32.mrf.mxu0
        %v2682 = vadd.f32 %v2506, %v2681
        %v2683 = vpop.f32.mrf.mxu0
        %v2684 = vpop.f32.mrf.mxu0
        %v2685 = vadd.f32 %v2506, %v2684
        %v2686 = vpop.f32.mrf.mxu0
        %2687 = vmatprep.mubr.bf16.mxu0 0
        %2688 = vmatmul.mubr.bf16.gmra.mxu0 %v2555
        %v2689 = vpop.f32.mrf.mxu0
        %v2690 = vadd.f32 %v2506, %v2689
        %v2691 = vpop.f32.mrf.mxu0
        %v2692 = vpop.f32.mrf.mxu0
        %v2693 = vadd.f32 %v2506, %v2692
        %v2694 = vpop.f32.mrf.mxu0
        %2695 = vmatprep.mubr.bf16.mxu0 0
        %2696 = vmatmul.mubr.bf16.gmra.mxu0 %v2558
        %v2697 = vpop.f32.mrf.mxu0
        %v2698 = vadd.f32 %v2506, %v2697
        %v2699 = vpop.f32.mrf.mxu0
        %v2700 = vpop.f32.mrf.mxu0
        %v2701 = vadd.f32 %v2506, %v2700
        %v2702 = vpop.f32.mrf.mxu0
        %2703 = vmatprep.mubr.bf16.mxu0 0
        %2704 = vmatmul.mubr.bf16.gmra.mxu0 %v2561
        %v2705 = vpop.f32.mrf.mxu0
        %v2706 = vadd.f32 %v2506, %v2705
        %v2707 = vpop.f32.mrf.mxu0
        %v2708 = vpop.f32.mrf.mxu0
        %v2709 = vadd.f32 %v2506, %v2708
        %v2710 = vpop.f32.mrf.mxu0
        %2711 = vmatprep.mubr.bf16.mxu0 0
        %2712 = vmatmul.mubr.bf16.gmra.mxu0 %v2564
        %v2713 = vpop.f32.mrf.mxu0
        %v2714 = vadd.f32 %v2506, %v2713
        %v2715 = vpop.f32.mrf.mxu0
        %v2716 = vpop.f32.mrf.mxu0
        %v2717 = vadd.f32 %v2506, %v2716
        %v2718 = vpop.f32.mrf.mxu0
        %2719 = vmatprep.mubr.bf16.mxu0 0
        %2720 = vmatmul.mubr.bf16.gmra.mxu0 %v2567
        %v2721 = vpop.f32.mrf.mxu0
        %v2722 = vadd.f32 %v2506, %v2721
        %v2723 = vpop.f32.mrf.mxu0
        %v2724 = vpop.f32.mrf.mxu0
        %v2725 = vadd.f32 %v2506, %v2724
        %v2726 = vpop.f32.mrf.mxu0
        %2727 = vmatprep.mubr.bf16.mxu0 0
        %2728 = vmatmul.mubr.bf16.gmra.mxu0 %v2570
        %v2729 = vpop.f32.mrf.mxu0
        %v2730 = vadd.f32 %v2506, %v2729
        %v2731 = vpop.f32.mrf.mxu0
        %v2732 = vpop.f32.mrf.mxu0
        %v2733 = vadd.f32 %v2506, %v2732
        %v2734 = vpop.f32.mrf.mxu0
        %2735 = vdwg.mxu0
        %v2736 = vmax.f32 %v2610, 0.0
        %v2737 = vmax.f32 %v2613, 0.0
        %v2738 = vmax.f32 %v2618, 0.0
        %v2739 = vmax.f32 %v2621, 0.0
        %v2740 = vmax.f32 %v2626, 0.0
        %v2741 = vmax.f32 %v2629, 0.0
        %v2742 = vmax.f32 %v2634, 0.0
        %v2743 = vmax.f32 %v2637, 0.0
        %v2744 = vmax.f32 %v2642, 0.0
        %v2745 = vmax.f32 %v2645, 0.0
        %v2746 = vmax.f32 %v2650, 0.0
        %v2747 = vmax.f32 %v2653, 0.0
        %v2748 = vmax.f32 %v2658, 0.0
        %v2749 = vmax.f32 %v2661, 0.0
        %v2750 = vmax.f32 %v2666, 0.0
        %v2751 = vmax.f32 %v2669, 0.0
        %v2752 = vmax.f32 %v2674, 0.0
        %v2753 = vmax.f32 %v2677, 0.0
        %v2754 = vmax.f32 %v2682, 0.0
        %v2755 = vmax.f32 %v2685, 0.0
        %v2756 = vmax.f32 %v2690, 0.0
        %v2757 = vmax.f32 %v2693, 0.0
        %v2758 = vmax.f32 %v2698, 0.0
        %v2759 = vmax.f32 %v2701, 0.0
        %v2760 = vmax.f32 %v2706, 0.0
        %v2761 = vmax.f32 %v2709, 0.0
        %v2762 = vmax.f32 %v2714, 0.0
        %v2763 = vmax.f32 %v2717, 0.0
        %v2764 = vmax.f32 %v2722, 0.0
        %v2765 = vmax.f32 %v2725, 0.0
        %v2766 = vmax.f32 %v2730, 0.0
        %v2767 = vmax.f32 %v2733, 0.0
        %2768 = vst.msk [vmem:[#allocation3] sm:$0xff] %vm452, 0.0
        %2769 = vst.msk [vmem:[#allocation3 + $0x8] sm:$0xff] %vm452, 0.0
        %vm2770 = vcmask 27648
        %2771 = vst.msk [vmem:[#allocation3 + $0x10] sm:$0xf] %vm2770, 0.0
        %2772 = vst.msk [vmem:[#allocation3 + $0x18] sm:$0xff] %vm452, 0.0
        %2773 = vst.msk [vmem:[#allocation3 + $0x20] sm:$0xff] %vm452, 0.0
        %2774 = vst.msk [vmem:[#allocation3 + $0x28] sm:$0xf] %vm2770, 0.0
        %s2775 = scalar_lea.vmem [#allocation3], 432
        %2776 = vst.msk [vmem:[%s2775] sm:$0xff] %vm452, 0.0
        %2777 = vst.msk [vmem:[%s2775 + $0x8] sm:$0xff] %vm452, 0.0
        %2778 = vst.msk [vmem:[%s2775 + $0x10] sm:$0xf] %vm2770, 0.0
        %2779 = vst.msk [vmem:[%s2775 + $0x18] sm:$0xff] %vm452, 0.0
        %2780 = vst.msk [vmem:[%s2775 + $0x20] sm:$0xff] %vm452, 0.0
        %2781 = vst.msk [vmem:[%s2775 + $0x28] sm:$0xf] %vm2770, 0.0
        %2782 = vst.msk [vmem:[#allocation3] sm:$0x3] %vm700, 0.0
        %2783 = vst.msk [vmem:[#allocation3 + $0x18] sm:$0x3] %vm700, 0.0
        %2784 = vst.msk [vmem:[#allocation3 + $0x30] sm:$0x3] %vm700, 0.0
        %2785 = vst.msk [vmem:[#allocation3 + $0x48] sm:$0x3] %vm700, 0.0
        %2786 = vst.msk [vmem:[#allocation3 + $0x60] sm:$0x3] %vm700, 0.0
        %2787 = vst.msk [vmem:[#allocation3 + $0x78] sm:$0x3] %vm700, 0.0
        %2788 = vst.msk [vmem:[#allocation3 + $0x90] sm:$0x3] %vm700, 0.0
        %2789 = vst.msk [vmem:[#allocation3 + $0xa8] sm:$0x3] %vm700, 0.0
        %2790 = vst.msk [vmem:[#allocation3 + $0xc0] sm:$0x3] %vm700, 0.0
        %2791 = vst.msk [vmem:[#allocation3 + $0xd8] sm:$0x3] %vm700, 0.0
        %2792 = vst.msk [vmem:[#allocation3 + $0xf0] sm:$0x3] %vm700, 0.0
        %2793 = vst.msk [vmem:[#allocation3 + $0x108] sm:$0x3] %vm700, 0.0
        %2794 = vst.msk [vmem:[#allocation3 + $0x120] sm:$0x3] %vm700, 0.0
        %2795 = vst.msk [vmem:[#allocation3 + $0x138] sm:$0x3] %vm700, 0.0
        %2796 = vst.msk [vmem:[#allocation3 + $0x150] sm:$0x3] %vm700, 0.0
        %2797 = vst.msk [vmem:[#allocation3 + $0x168] sm:$0x3] %vm700, 0.0
        %2798 = vst.msk [vmem:[#allocation3 + $0x180] sm:$0x3] %vm700, 0.0
        %2799 = vst.msk [vmem:[#allocation3 + $0x198] sm:$0x3] %vm700, 0.0
        %2800 = vst.msk [vmem:[#allocation3 + $0x1b0] sm:$0x3] %vm700, 0.0
        %2801 = vst.msk [vmem:[#allocation3 + $0x1c8] sm:$0x3] %vm700, 0.0
        %2802 = vst.msk [vmem:[#allocation3 + $0x12] sm:$0x3] %vm700, 0.0
        %2803 = vst.msk [vmem:[#allocation3 + $0x2a] sm:$0x3] %vm700, 0.0
        %2804 = vst.msk [vmem:[#allocation3 + $0x42] sm:$0x3] %vm700, 0.0
        %2805 = vst.msk [vmem:[#allocation3 + $0x5a] sm:$0x3] %vm700, 0.0
        %2806 = vst.msk [vmem:[#allocation3 + $0x72] sm:$0x3] %vm700, 0.0
        %2807 = vst.msk [vmem:[#allocation3 + $0x8a] sm:$0x3] %vm700, 0.0
        %2808 = vst.msk [vmem:[#allocation3 + $0xa2] sm:$0x3] %vm700, 0.0
        %2809 = vst.msk [vmem:[#allocation3 + $0xba] sm:$0x3] %vm700, 0.0
        %2810 = vst.msk [vmem:[#allocation3 + $0xd2] sm:$0x3] %vm700, 0.0
        %2811 = vst.msk [vmem:[#allocation3 + $0xea] sm:$0x3] %vm700, 0.0
        %2812 = vst.msk [vmem:[#allocation3 + $0x102] sm:$0x3] %vm700, 0.0
        %2813 = vst.msk [vmem:[#allocation3 + $0x11a] sm:$0x3] %vm700, 0.0
        %2814 = vst.msk [vmem:[#allocation3 + $0x132] sm:$0x3] %vm700, 0.0
        %2815 = vst.msk [vmem:[#allocation3 + $0x14a] sm:$0x3] %vm700, 0.0
        %2816 = vst.msk [vmem:[#allocation3 + $0x162] sm:$0x3] %vm700, 0.0
        %2817 = vst.msk [vmem:[#allocation3 + $0x17a] sm:$0x3] %vm700, 0.0
        %2818 = vst.msk [vmem:[#allocation3 + $0x192] sm:$0x3] %vm700, 0.0
        %2819 = vst.msk [vmem:[#allocation3 + $0x1aa] sm:$0x3] %vm700, 0.0
        %2820 = vst.msk [vmem:[#allocation3 + $0x1c2] sm:$0x3] %vm700, 0.0
        %2821 = vst.msk [vmem:[#allocation3 + $0x1da] sm:$0x3] %vm700, 0.0
        %2822 = vrot.lane.b32.xlu0 %v666, 116
        %v2823 = vpop.permute.xlu0 %2822
        %2824 = vrot.lane.b32.xlu0 %v667, 116
        %v2825 = vpop.permute.xlu0 %2824
        %2826 = vrot.lane.b32.xlu0 %v668, 116
        %v2827 = vpop.permute.xlu0 %2826
        %2828 = vrot.lane.b32.xlu0 %v669, 116
        %v2829 = vpop.permute.xlu0 %2828
        %2830 = vrot.lane.b32.xlu0 %v670, 116
        %v2831 = vpop.permute.xlu0 %2830
        %2832 = vrot.lane.b32.xlu0 %v671, 116
        %v2833 = vpop.permute.xlu0 %2832
        %2834 = vrot.lane.b32.xlu0 %v672, 116
        %v2835 = vpop.permute.xlu0 %2834
        %2836 = vrot.lane.b32.xlu0 %v673, 116
        %v2837 = vpop.permute.xlu0 %2836
        %2838 = vrot.lane.b32.xlu0 %v674, 116
        %v2839 = vpop.permute.xlu0 %2838
        %2840 = vrot.lane.b32.xlu0 %v675, 116
        %v2841 = vpop.permute.xlu0 %2840
        %2842 = vrot.lane.b32.xlu0 %v676, 116
        %v2843 = vpop.permute.xlu0 %2842
        %2844 = vrot.lane.b32.xlu0 %v677, 116
        %v2845 = vpop.permute.xlu0 %2844
        %2846 = vrot.lane.b32.xlu0 %v678, 116
        %v2847 = vpop.permute.xlu0 %2846
        %2848 = vrot.lane.b32.xlu0 %v679, 116
        %v2849 = vpop.permute.xlu0 %2848
        %2850 = vrot.lane.b32.xlu0 %v680, 116
        %v2851 = vpop.permute.xlu0 %2850
        %2852 = vrot.lane.b32.xlu0 %v681, 116
        %v2853 = vpop.permute.xlu0 %2852
        %2854 = vrot.lane.b32.xlu0 %v682, 116
        %v2855 = vpop.permute.xlu0 %2854
        %2856 = vrot.lane.b32.xlu0 %v683, 116
        %v2857 = vpop.permute.xlu0 %2856
        %2858 = vrot.lane.b32.xlu0 %v684, 116
        %v2859 = vpop.permute.xlu0 %2858
        %2860 = vrot.lane.b32.xlu0 %v685, 116
        %v2861 = vpop.permute.xlu0 %2860
        %2862 = vrot.lane.b32.xlu0 %v686, 116
        %v2863 = vpop.permute.xlu0 %2862
        %2864 = vrot.lane.b32.xlu0 %v687, 116
        %v2865 = vpop.permute.xlu0 %2864
        %2866 = vrot.lane.b32.xlu0 %v688, 116
        %v2867 = vpop.permute.xlu0 %2866
        %2868 = vrot.lane.b32.xlu0 %v689, 116
        %v2869 = vpop.permute.xlu0 %2868
        %2870 = vrot.lane.b32.xlu0 %v690, 116
        %v2871 = vpop.permute.xlu0 %2870
        %2872 = vrot.lane.b32.xlu0 %v691, 116
        %v2873 = vpop.permute.xlu0 %2872
        %2874 = vrot.lane.b32.xlu0 %v692, 116
        %v2875 = vpop.permute.xlu0 %2874
        %2876 = vrot.lane.b32.xlu0 %v693, 116
        %v2877 = vpop.permute.xlu0 %2876
        %2878 = vrot.lane.b32.xlu0 %v694, 116
        %v2879 = vpop.permute.xlu0 %2878
        %2880 = vrot.lane.b32.xlu0 %v695, 116
        %v2881 = vpop.permute.xlu0 %2880
        %2882 = vrot.lane.b32.xlu0 %v696, 116
        %v2883 = vpop.permute.xlu0 %2882
        %2884 = vrot.lane.b32.xlu0 %v697, 116
        %v2885 = vpop.permute.xlu0 %2884
        %s2918 = scalar_lea.vmem [#allocation3], 48
        %2919 = vst.msk [vmem:[%s2918 + $0x2] sm:$0xff] %vm452, %v2823
        %2920 = vst.msk [vmem:[%s2918 + $0xa] sm:$0xff] %vm452, %v2825
        %2921 = vst.msk [vmem:[%s2918 + $0x1a] sm:$0xff] %vm452, %v2827
        %2922 = vst.msk [vmem:[%s2918 + $0x22] sm:$0xff] %vm452, %v2829
        %2923 = vst.msk [vmem:[%s2918 + $0x32] sm:$0xff] %vm452, %v2831
        %2924 = vst.msk [vmem:[%s2918 + $0x3a] sm:$0xff] %vm452, %v2833
        %2925 = vst.msk [vmem:[%s2918 + $0x4a] sm:$0xff] %vm452, %v2835
        %2926 = vst.msk [vmem:[%s2918 + $0x52] sm:$0xff] %vm452, %v2837
        %2927 = vst.msk [vmem:[%s2918 + $0x62] sm:$0xff] %vm452, %v2839
        %2928 = vst.msk [vmem:[%s2918 + $0x6a] sm:$0xff] %vm452, %v2841
        %2929 = vst.msk [vmem:[%s2918 + $0x7a] sm:$0xff] %vm452, %v2843
        %2930 = vst.msk [vmem:[%s2918 + $0x82] sm:$0xff] %vm452, %v2845
        %2931 = vst.msk [vmem:[%s2918 + $0x92] sm:$0xff] %vm452, %v2847
        %2932 = vst.msk [vmem:[%s2918 + $0x9a] sm:$0xff] %vm452, %v2849
        %2933 = vst.msk [vmem:[%s2918 + $0xaa] sm:$0xff] %vm452, %v2851
        %2934 = vst.msk [vmem:[%s2918 + $0xb2] sm:$0xff] %vm452, %v2853
        %2935 = vst.msk [vmem:[%s2918 + $0xc2] sm:$0xff] %vm452, %v2855
        %2936 = vst.msk [vmem:[%s2918 + $0xca] sm:$0xff] %vm452, %v2857
        %2937 = vst.msk [vmem:[%s2918 + $0xda] sm:$0xff] %vm452, %v2859
        %2938 = vst.msk [vmem:[%s2918 + $0xe2] sm:$0xff] %vm452, %v2861
        %2939 = vst.msk [vmem:[%s2918 + $0xf2] sm:$0xff] %vm452, %v2863
        %2940 = vst.msk [vmem:[%s2918 + $0xfa] sm:$0xff] %vm452, %v2865
        %2941 = vst.msk [vmem:[%s2918 + $0x10a] sm:$0xff] %vm452, %v2867
        %2942 = vst.msk [vmem:[%s2918 + $0x112] sm:$0xff] %vm452, %v2869
        %2943 = vst.msk [vmem:[%s2918 + $0x122] sm:$0xff] %vm452, %v2871
        %2944 = vst.msk [vmem:[%s2918 + $0x12a] sm:$0xff] %vm452, %v2873
        %2945 = vst.msk [vmem:[%s2918 + $0x13a] sm:$0xff] %vm452, %v2875
        %2946 = vst.msk [vmem:[%s2918 + $0x142] sm:$0xff] %vm452, %v2877
        %2947 = vst.msk [vmem:[%s2918 + $0x152] sm:$0xff] %vm452, %v2879
        %2948 = vst.msk [vmem:[%s2918 + $0x15a] sm:$0xff] %vm452, %v2881
        %2949 = vst.msk [vmem:[%s2918 + $0x16a] sm:$0xff] %vm452, %v2883
        %2950 = vst.msk [vmem:[%s2918 + $0x172] sm:$0xff] %vm452, %v2885
        %v2951 = vld [vmem:[#allocation3] sm:$0xff]
        %v2952 = vld [vmem:[#allocation3 + $0x8] sm:$0xff]
        %v2953 = vld [vmem:[#allocation3 + $0x18] sm:$0xff]
        %v2954 = vld [vmem:[#allocation3 + $0x20] sm:$0xff]
        %v2955 = vld [vmem:[#allocation3 + $0x30] sm:$0xff]
        %v2956 = vld [vmem:[#allocation3 + $0x38] sm:$0xff]
        %v2957 = vld [vmem:[#allocation3 + $0x48] sm:$0xff]
        %v2958 = vld [vmem:[#allocation3 + $0x50] sm:$0xff]
        %v2959 = vld [vmem:[#allocation3 + $0x60] sm:$0xff]
        %v2960 = vld [vmem:[#allocation3 + $0x68] sm:$0xff]
        %v2961 = vld [vmem:[#allocation3 + $0x78] sm:$0xff]
        %v2962 = vld [vmem:[#allocation3 + $0x80] sm:$0xff]
        %v2963 = vld [vmem:[#allocation3 + $0x90] sm:$0xff]
        %v2964 = vld [vmem:[#allocation3 + $0x98] sm:$0xff]
        %v2965 = vld [vmem:[#allocation3 + $0xa8] sm:$0xff]
        %v2966 = vld [vmem:[#allocation3 + $0xb0] sm:$0xff]
        %v2967 = vld [vmem:[#allocation3 + $0xc0] sm:$0xff]
        %v2968 = vld [vmem:[#allocation3 + $0xc8] sm:$0xff]
        %v2969 = vld [vmem:[#allocation3 + $0xd8] sm:$0xff]
        %v2970 = vld [vmem:[#allocation3 + $0xe0] sm:$0xff]
        %v2971 = vld [vmem:[#allocation3 + $0xf0] sm:$0xff]
        %v2972 = vld [vmem:[#allocation3 + $0xf8] sm:$0xff]
        %v2973 = vld [vmem:[#allocation3 + $0x108] sm:$0xff]
        %v2974 = vld [vmem:[#allocation3 + $0x110] sm:$0xff]
        %v2975 = vld [vmem:[#allocation3 + $0x120] sm:$0xff]
        %v2976 = vld [vmem:[#allocation3 + $0x128] sm:$0xff]
        %v2977 = vld [vmem:[#allocation3 + $0x138] sm:$0xff]
        %v2978 = vld [vmem:[#allocation3 + $0x140] sm:$0xff]
        %v2979 = vld [vmem:[#allocation3 + $0x150] sm:$0xff]
        %v2980 = vld [vmem:[#allocation3 + $0x158] sm:$0xff]
        %v2981 = vld [vmem:[#allocation3 + $0x168] sm:$0xff]
        %v2982 = vld [vmem:[#allocation3 + $0x170] sm:$0xff]
        %v2983 = vld [vmem:[#allocation3 + $0x1] sm:$0xff]
        %v2984 = vld [vmem:[#allocation3 + $0x9] sm:$0xff]
        %v2985 = vld [vmem:[#allocation3 + $0x19] sm:$0xff]
        %v2986 = vld [vmem:[#allocation3 + $0x21] sm:$0xff]
        %v2987 = vld [vmem:[#allocation3 + $0x31] sm:$0xff]
        %v2988 = vld [vmem:[#allocation3 + $0x39] sm:$0xff]
        %v2989 = vld [vmem:[#allocation3 + $0x49] sm:$0xff]
        %v2990 = vld [vmem:[#allocation3 + $0x51] sm:$0xff]
        %v2991 = vld [vmem:[#allocation3 + $0x61] sm:$0xff]
        %v2992 = vld [vmem:[#allocation3 + $0x69] sm:$0xff]
        %v2993 = vld [vmem:[#allocation3 + $0x79] sm:$0xff]
        %v2994 = vld [vmem:[#allocation3 + $0x81] sm:$0xff]
        %v2995 = vld [vmem:[#allocation3 + $0x91] sm:$0xff]
        %v2996 = vld [vmem:[#allocation3 + $0x99] sm:$0xff]
        %v2997 = vld [vmem:[#allocation3 + $0xa9] sm:$0xff]
        %v2998 = vld [vmem:[#allocation3 + $0xb1] sm:$0xff]
        %v2999 = vld [vmem:[#allocation3 + $0xc1] sm:$0xff]
        %v3000 = vld [vmem:[#allocation3 + $0xc9] sm:$0xff]
        %v3001 = vld [vmem:[#allocation3 + $0xd9] sm:$0xff]
        %v3002 = vld [vmem:[#allocation3 + $0xe1] sm:$0xff]
        %v3003 = vld [vmem:[#allocation3 + $0xf1] sm:$0xff]
        %v3004 = vld [vmem:[#allocation3 + $0xf9] sm:$0xff]
        %v3005 = vld [vmem:[#allocation3 + $0x109] sm:$0xff]
        %v3006 = vld [vmem:[#allocation3 + $0x111] sm:$0xff]
        %v3007 = vld [vmem:[#allocation3 + $0x121] sm:$0xff]
        %v3008 = vld [vmem:[#allocation3 + $0x129] sm:$0xff]
        %v3009 = vld [vmem:[#allocation3 + $0x139] sm:$0xff]
        %v3010 = vld [vmem:[#allocation3 + $0x141] sm:$0xff]
        %v3011 = vld [vmem:[#allocation3 + $0x151] sm:$0xff]
        %v3012 = vld [vmem:[#allocation3 + $0x159] sm:$0xff]
        %v3013 = vld [vmem:[#allocation3 + $0x169] sm:$0xff]
        %v3014 = vld [vmem:[#allocation3 + $0x171] sm:$0xff]
        %v3015 = vld [vmem:[#allocation3 + $0x2] sm:$0xff]
        %v3016 = vld [vmem:[#allocation3 + $0xa] sm:$0xff]
        %v3017 = vld [vmem:[#allocation3 + $0x1a] sm:$0xff]
        %v3018 = vld [vmem:[#allocation3 + $0x22] sm:$0xff]
        %v3019 = vld [vmem:[#allocation3 + $0x32] sm:$0xff]
        %v3020 = vld [vmem:[#allocation3 + $0x3a] sm:$0xff]
        %v3021 = vld [vmem:[#allocation3 + $0x4a] sm:$0xff]
        %v3022 = vld [vmem:[#allocation3 + $0x52] sm:$0xff]
        %v3023 = vld [vmem:[#allocation3 + $0x62] sm:$0xff]
        %v3024 = vld [vmem:[#allocation3 + $0x6a] sm:$0xff]
        %v3025 = vld [vmem:[#allocation3 + $0x7a] sm:$0xff]
        %v3026 = vld [vmem:[#allocation3 + $0x82] sm:$0xff]
        %v3027 = vld [vmem:[#allocation3 + $0x92] sm:$0xff]
        %v3028 = vld [vmem:[#allocation3 + $0x9a] sm:$0xff]
        %v3029 = vld [vmem:[#allocation3 + $0xaa] sm:$0xff]
        %v3030 = vld [vmem:[#allocation3 + $0xb2] sm:$0xff]
        %v3031 = vld [vmem:[#allocation3 + $0xc2] sm:$0xff]
        %v3032 = vld [vmem:[#allocation3 + $0xca] sm:$0xff]
        %v3033 = vld [vmem:[#allocation3 + $0xda] sm:$0xff]
        %v3034 = vld [vmem:[#allocation3 + $0xe2] sm:$0xff]
        %v3035 = vld [vmem:[#allocation3 + $0xf2] sm:$0xff]
        %v3036 = vld [vmem:[#allocation3 + $0xfa] sm:$0xff]
        %v3037 = vld [vmem:[#allocation3 + $0x10a] sm:$0xff]
        %v3038 = vld [vmem:[#allocation3 + $0x112] sm:$0xff]
        %v3039 = vld [vmem:[#allocation3 + $0x122] sm:$0xff]
        %v3040 = vld [vmem:[#allocation3 + $0x12a] sm:$0xff]
        %v3041 = vld [vmem:[#allocation3 + $0x13a] sm:$0xff]
        %v3042 = vld [vmem:[#allocation3 + $0x142] sm:$0xff]
        %v3043 = vld [vmem:[#allocation3 + $0x152] sm:$0xff]
        %v3044 = vld [vmem:[#allocation3 + $0x15a] sm:$0xff]
        %v3045 = vld [vmem:[#allocation3 + $0x16a] sm:$0xff]
        %v3046 = vld [vmem:[#allocation3 + $0x172] sm:$0xff]
        %v3047 = vld [vmem:[#allocation3 + $0x3] sm:$0xff]
        %v3048 = vld [vmem:[#allocation3 + $0xb] sm:$0xff]
        %v3049 = vld [vmem:[#allocation3 + $0x1b] sm:$0xff]
        %v3050 = vld [vmem:[#allocation3 + $0x23] sm:$0xff]
        %v3051 = vld [vmem:[#allocation3 + $0x33] sm:$0xff]
        %v3052 = vld [vmem:[#allocation3 + $0x3b] sm:$0xff]
        %v3053 = vld [vmem:[#allocation3 + $0x4b] sm:$0xff]
        %v3054 = vld [vmem:[#allocation3 + $0x53] sm:$0xff]
        %v3055 = vld [vmem:[#allocation3 + $0x63] sm:$0xff]
        %v3056 = vld [vmem:[#allocation3 + $0x6b] sm:$0xff]
        %v3057 = vld [vmem:[#allocation3 + $0x7b] sm:$0xff]
        %v3058 = vld [vmem:[#allocation3 + $0x83] sm:$0xff]
        %v3059 = vld [vmem:[#allocation3 + $0x93] sm:$0xff]
        %v3060 = vld [vmem:[#allocation3 + $0x9b] sm:$0xff]
        %v3061 = vld [vmem:[#allocation3 + $0xab] sm:$0xff]
        %v3062 = vld [vmem:[#allocation3 + $0xb3] sm:$0xff]
        %v3063 = vld [vmem:[#allocation3 + $0xc3] sm:$0xff]
        %v3064 = vld [vmem:[#allocation3 + $0xcb] sm:$0xff]
        %v3065 = vld [vmem:[#allocation3 + $0xdb] sm:$0xff]
        %v3066 = vld [vmem:[#allocation3 + $0xe3] sm:$0xff]
        %v3067 = vld [vmem:[#allocation3 + $0xf3] sm:$0xff]
        %v3068 = vld [vmem:[#allocation3 + $0xfb] sm:$0xff]
        %v3069 = vld [vmem:[#allocation3 + $0x10b] sm:$0xff]
        %v3070 = vld [vmem:[#allocation3 + $0x113] sm:$0xff]
        %v3071 = vld [vmem:[#allocation3 + $0x123] sm:$0xff]
        %v3072 = vld [vmem:[#allocation3 + $0x12b] sm:$0xff]
        %v3073 = vld [vmem:[#allocation3 + $0x13b] sm:$0xff]
        %v3074 = vld [vmem:[#allocation3 + $0x143] sm:$0xff]
        %v3075 = vld [vmem:[#allocation3 + $0x153] sm:$0xff]
        %v3076 = vld [vmem:[#allocation3 + $0x15b] sm:$0xff]
        %v3077 = vld [vmem:[#allocation3 + $0x16b] sm:$0xff]
        %v3078 = vld [vmem:[#allocation3 + $0x173] sm:$0xff]
        %v3079 = vld [vmem:[#allocation3 + $0x4] sm:$0xff]
        %v3080 = vld [vmem:[#allocation3 + $0xc] sm:$0xff]
        %v3081 = vld [vmem:[#allocation3 + $0x1c] sm:$0xff]
        %v3082 = vld [vmem:[#allocation3 + $0x24] sm:$0xff]
        %v3083 = vld [vmem:[#allocation3 + $0x34] sm:$0xff]
        %v3084 = vld [vmem:[#allocation3 + $0x3c] sm:$0xff]
        %v3085 = vld [vmem:[#allocation3 + $0x4c] sm:$0xff]
        %v3086 = vld [vmem:[#allocation3 + $0x54] sm:$0xff]
        %v3087 = vld [vmem:[#allocation3 + $0x64] sm:$0xff]
        %v3088 = vld [vmem:[#allocation3 + $0x6c] sm:$0xff]
        %v3089 = vld [vmem:[#allocation3 + $0x7c] sm:$0xff]
        %v3090 = vld [vmem:[#allocation3 + $0x84] sm:$0xff]
        %v3091 = vld [vmem:[#allocation3 + $0x94] sm:$0xff]
        %v3092 = vld [vmem:[#allocation3 + $0x9c] sm:$0xff]
        %v3093 = vld [vmem:[#allocation3 + $0xac] sm:$0xff]
        %v3094 = vld [vmem:[#allocation3 + $0xb4] sm:$0xff]
        %v3095 = vld [vmem:[#allocation3 + $0xc4] sm:$0xff]
        %v3096 = vld [vmem:[#allocation3 + $0xcc] sm:$0xff]
        %v3097 = vld [vmem:[#allocation3 + $0xdc] sm:$0xff]
        %v3098 = vld [vmem:[#allocation3 + $0xe4] sm:$0xff]
        %v3099 = vld [vmem:[#allocation3 + $0xf4] sm:$0xff]
        %v3100 = vld [vmem:[#allocation3 + $0xfc] sm:$0xff]
        %v3101 = vld [vmem:[#allocation3 + $0x10c] sm:$0xff]
        %v3102 = vld [vmem:[#allocation3 + $0x114] sm:$0xff]
        %v3103 = vld [vmem:[#allocation3 + $0x124] sm:$0xff]
        %v3104 = vld [vmem:[#allocation3 + $0x12c] sm:$0xff]
        %v3105 = vld [vmem:[#allocation3 + $0x13c] sm:$0xff]
        %v3106 = vld [vmem:[#allocation3 + $0x144] sm:$0xff]
        %v3107 = vld [vmem:[#allocation3 + $0x154] sm:$0xff]
        %v3108 = vld [vmem:[#allocation3 + $0x15c] sm:$0xff]
        %v3109 = vld [vmem:[#allocation3 + $0x16c] sm:$0xff]
        %v3110 = vld [vmem:[#allocation3 + $0x174] sm:$0xff]
        %s3111 = scalar_lea.vmem [#allocation3], 24
        %v3112 = vld [vmem:[%s3111] sm:$0xff]
        %v3113 = vld [vmem:[%s3111 + $0x8] sm:$0xff]
        %v3114 = vld [vmem:[%s3111 + $0x18] sm:$0xff]
        %v3115 = vld [vmem:[%s3111 + $0x20] sm:$0xff]
        %v3116 = vld [vmem:[%s3111 + $0x30] sm:$0xff]
        %v3117 = vld [vmem:[%s3111 + $0x38] sm:$0xff]
        %v3118 = vld [vmem:[%s3111 + $0x48] sm:$0xff]
        %v3119 = vld [vmem:[%s3111 + $0x50] sm:$0xff]
        %v3120 = vld [vmem:[%s3111 + $0x60] sm:$0xff]
        %v3121 = vld [vmem:[%s3111 + $0x68] sm:$0xff]
        %v3122 = vld [vmem:[%s3111 + $0x78] sm:$0xff]
        %v3123 = vld [vmem:[%s3111 + $0x80] sm:$0xff]
        %v3124 = vld [vmem:[%s3111 + $0x90] sm:$0xff]
        %v3125 = vld [vmem:[%s3111 + $0x98] sm:$0xff]
        %v3126 = vld [vmem:[%s3111 + $0xa8] sm:$0xff]
        %v3127 = vld [vmem:[%s3111 + $0xb0] sm:$0xff]
        %v3128 = vld [vmem:[%s3111 + $0xc0] sm:$0xff]
        %v3129 = vld [vmem:[%s3111 + $0xc8] sm:$0xff]
        %v3130 = vld [vmem:[%s3111 + $0xd8] sm:$0xff]
        %v3131 = vld [vmem:[%s3111 + $0xe0] sm:$0xff]
        %v3132 = vld [vmem:[%s3111 + $0xf0] sm:$0xff]
        %v3133 = vld [vmem:[%s3111 + $0xf8] sm:$0xff]
        %v3134 = vld [vmem:[%s3111 + $0x108] sm:$0xff]
        %v3135 = vld [vmem:[%s3111 + $0x110] sm:$0xff]
        %v3136 = vld [vmem:[%s3111 + $0x120] sm:$0xff]
        %v3137 = vld [vmem:[%s3111 + $0x128] sm:$0xff]
        %v3138 = vld [vmem:[%s3111 + $0x138] sm:$0xff]
        %v3139 = vld [vmem:[%s3111 + $0x140] sm:$0xff]
        %v3140 = vld [vmem:[%s3111 + $0x150] sm:$0xff]
        %v3141 = vld [vmem:[%s3111 + $0x158] sm:$0xff]
        %v3142 = vld [vmem:[%s3111 + $0x168] sm:$0xff]
        %v3143 = vld [vmem:[%s3111 + $0x170] sm:$0xff]
        %v3144 = vld [vmem:[%s3111 + $0x1] sm:$0xff]
        %v3145 = vld [vmem:[%s3111 + $0x9] sm:$0xff]
        %v3146 = vld [vmem:[%s3111 + $0x19] sm:$0xff]
        %v3147 = vld [vmem:[%s3111 + $0x21] sm:$0xff]
        %v3148 = vld [vmem:[%s3111 + $0x31] sm:$0xff]
        %v3149 = vld [vmem:[%s3111 + $0x39] sm:$0xff]
        %v3150 = vld [vmem:[%s3111 + $0x49] sm:$0xff]
        %v3151 = vld [vmem:[%s3111 + $0x51] sm:$0xff]
        %v3152 = vld [vmem:[%s3111 + $0x61] sm:$0xff]
        %v3153 = vld [vmem:[%s3111 + $0x69] sm:$0xff]
        %v3154 = vld [vmem:[%s3111 + $0x79] sm:$0xff]
        %v3155 = vld [vmem:[%s3111 + $0x81] sm:$0xff]
        %v3156 = vld [vmem:[%s3111 + $0x91] sm:$0xff]
        %v3157 = vld [vmem:[%s3111 + $0x99] sm:$0xff]
        %v3158 = vld [vmem:[%s3111 + $0xa9] sm:$0xff]
        %v3159 = vld [vmem:[%s3111 + $0xb1] sm:$0xff]
        %v3160 = vld [vmem:[%s3111 + $0xc1] sm:$0xff]
        %v3161 = vld [vmem:[%s3111 + $0xc9] sm:$0xff]
        %v3162 = vld [vmem:[%s3111 + $0xd9] sm:$0xff]
        %v3163 = vld [vmem:[%s3111 + $0xe1] sm:$0xff]
        %v3164 = vld [vmem:[%s3111 + $0xf1] sm:$0xff]
        %v3165 = vld [vmem:[%s3111 + $0xf9] sm:$0xff]
        %v3166 = vld [vmem:[%s3111 + $0x109] sm:$0xff]
        %v3167 = vld [vmem:[%s3111 + $0x111] sm:$0xff]
        %v3168 = vld [vmem:[%s3111 + $0x121] sm:$0xff]
        %v3169 = vld [vmem:[%s3111 + $0x129] sm:$0xff]
        %v3170 = vld [vmem:[%s3111 + $0x139] sm:$0xff]
        %v3171 = vld [vmem:[%s3111 + $0x141] sm:$0xff]
        %v3172 = vld [vmem:[%s3111 + $0x151] sm:$0xff]
        %v3173 = vld [vmem:[%s3111 + $0x159] sm:$0xff]
        %v3174 = vld [vmem:[%s3111 + $0x169] sm:$0xff]
        %v3175 = vld [vmem:[%s3111 + $0x171] sm:$0xff]
        %v3176 = vld [vmem:[%s3111 + $0x2] sm:$0xff]
        %v3177 = vld [vmem:[%s3111 + $0xa] sm:$0xff]
        %v3178 = vld [vmem:[%s3111 + $0x1a] sm:$0xff]
        %v3179 = vld [vmem:[%s3111 + $0x22] sm:$0xff]
        %v3180 = vld [vmem:[%s3111 + $0x32] sm:$0xff]
        %v3181 = vld [vmem:[%s3111 + $0x3a] sm:$0xff]
        %v3182 = vld [vmem:[%s3111 + $0x4a] sm:$0xff]
        %v3183 = vld [vmem:[%s3111 + $0x52] sm:$0xff]
        %v3184 = vld [vmem:[%s3111 + $0x62] sm:$0xff]
        %v3185 = vld [vmem:[%s3111 + $0x6a] sm:$0xff]
        %v3186 = vld [vmem:[%s3111 + $0x7a] sm:$0xff]
        %v3187 = vld [vmem:[%s3111 + $0x82] sm:$0xff]
        %v3188 = vld [vmem:[%s3111 + $0x92] sm:$0xff]
        %v3189 = vld [vmem:[%s3111 + $0x9a] sm:$0xff]
        %v3190 = vld [vmem:[%s3111 + $0xaa] sm:$0xff]
        %v3191 = vld [vmem:[%s3111 + $0xb2] sm:$0xff]
        %v3192 = vld [vmem:[%s3111 + $0xc2] sm:$0xff]
        %v3193 = vld [vmem:[%s3111 + $0xca] sm:$0xff]
        %v3194 = vld [vmem:[%s3111 + $0xda] sm:$0xff]
        %v3195 = vld [vmem:[%s3111 + $0xe2] sm:$0xff]
        %v3196 = vld [vmem:[%s3111 + $0xf2] sm:$0xff]
        %v3197 = vld [vmem:[%s3111 + $0xfa] sm:$0xff]
        %v3198 = vld [vmem:[%s3111 + $0x10a] sm:$0xff]
        %v3199 = vld [vmem:[%s3111 + $0x112] sm:$0xff]
        %v3200 = vld [vmem:[%s3111 + $0x122] sm:$0xff]
        %v3201 = vld [vmem:[%s3111 + $0x12a] sm:$0xff]
        %v3202 = vld [vmem:[%s3111 + $0x13a] sm:$0xff]
        %v3203 = vld [vmem:[%s3111 + $0x142] sm:$0xff]
        %v3204 = vld [vmem:[%s3111 + $0x152] sm:$0xff]
        %v3205 = vld [vmem:[%s3111 + $0x15a] sm:$0xff]
        %v3206 = vld [vmem:[%s3111 + $0x16a] sm:$0xff]
        %v3207 = vld [vmem:[%s3111 + $0x172] sm:$0xff]
        %v3208 = vld [vmem:[%s3111 + $0x3] sm:$0xff]
        %v3209 = vld [vmem:[%s3111 + $0xb] sm:$0xff]
        %v3210 = vld [vmem:[%s3111 + $0x1b] sm:$0xff]
        %v3211 = vld [vmem:[%s3111 + $0x23] sm:$0xff]
        %v3212 = vld [vmem:[%s3111 + $0x33] sm:$0xff]
        %v3213 = vld [vmem:[%s3111 + $0x3b] sm:$0xff]
        %v3214 = vld [vmem:[%s3111 + $0x4b] sm:$0xff]
        %v3215 = vld [vmem:[%s3111 + $0x53] sm:$0xff]
        %v3216 = vld [vmem:[%s3111 + $0x63] sm:$0xff]
        %v3217 = vld [vmem:[%s3111 + $0x6b] sm:$0xff]
        %v3218 = vld [vmem:[%s3111 + $0x7b] sm:$0xff]
        %v3219 = vld [vmem:[%s3111 + $0x83] sm:$0xff]
        %v3220 = vld [vmem:[%s3111 + $0x93] sm:$0xff]
        %v3221 = vld [vmem:[%s3111 + $0x9b] sm:$0xff]
        %v3222 = vld [vmem:[%s3111 + $0xab] sm:$0xff]
        %v3223 = vld [vmem:[%s3111 + $0xb3] sm:$0xff]
        %v3224 = vld [vmem:[%s3111 + $0xc3] sm:$0xff]
        %v3225 = vld [vmem:[%s3111 + $0xcb] sm:$0xff]
        %v3226 = vld [vmem:[%s3111 + $0xdb] sm:$0xff]
        %v3227 = vld [vmem:[%s3111 + $0xe3] sm:$0xff]
        %v3228 = vld [vmem:[%s3111 + $0xf3] sm:$0xff]
        %v3229 = vld [vmem:[%s3111 + $0xfb] sm:$0xff]
        %v3230 = vld [vmem:[%s3111 + $0x10b] sm:$0xff]
        %v3231 = vld [vmem:[%s3111 + $0x113] sm:$0xff]
        %v3232 = vld [vmem:[%s3111 + $0x123] sm:$0xff]
        %v3233 = vld [vmem:[%s3111 + $0x12b] sm:$0xff]
        %v3234 = vld [vmem:[%s3111 + $0x13b] sm:$0xff]
        %v3235 = vld [vmem:[%s3111 + $0x143] sm:$0xff]
        %v3236 = vld [vmem:[%s3111 + $0x153] sm:$0xff]
        %v3237 = vld [vmem:[%s3111 + $0x15b] sm:$0xff]
        %v3238 = vld [vmem:[%s3111 + $0x16b] sm:$0xff]
        %v3239 = vld [vmem:[%s3111 + $0x173] sm:$0xff]
        %v3240 = vld [vmem:[%s3111 + $0x4] sm:$0xff]
        %v3241 = vld [vmem:[%s3111 + $0xc] sm:$0xff]
        %v3242 = vld [vmem:[%s3111 + $0x1c] sm:$0xff]
        %v3243 = vld [vmem:[%s3111 + $0x24] sm:$0xff]
        %v3244 = vld [vmem:[%s3111 + $0x34] sm:$0xff]
        %v3245 = vld [vmem:[%s3111 + $0x3c] sm:$0xff]
        %v3246 = vld [vmem:[%s3111 + $0x4c] sm:$0xff]
        %v3247 = vld [vmem:[%s3111 + $0x54] sm:$0xff]
        %v3248 = vld [vmem:[%s3111 + $0x64] sm:$0xff]
        %v3249 = vld [vmem:[%s3111 + $0x6c] sm:$0xff]
        %v3250 = vld [vmem:[%s3111 + $0x7c] sm:$0xff]
        %v3251 = vld [vmem:[%s3111 + $0x84] sm:$0xff]
        %v3252 = vld [vmem:[%s3111 + $0x94] sm:$0xff]
        %v3253 = vld [vmem:[%s3111 + $0x9c] sm:$0xff]
        %v3254 = vld [vmem:[%s3111 + $0xac] sm:$0xff]
        %v3255 = vld [vmem:[%s3111 + $0xb4] sm:$0xff]
        %v3256 = vld [vmem:[%s3111 + $0xc4] sm:$0xff]
        %v3257 = vld [vmem:[%s3111 + $0xcc] sm:$0xff]
        %v3258 = vld [vmem:[%s3111 + $0xdc] sm:$0xff]
        %v3259 = vld [vmem:[%s3111 + $0xe4] sm:$0xff]
        %v3260 = vld [vmem:[%s3111 + $0xf4] sm:$0xff]
        %v3261 = vld [vmem:[%s3111 + $0xfc] sm:$0xff]
        %v3262 = vld [vmem:[%s3111 + $0x10c] sm:$0xff]
        %v3263 = vld [vmem:[%s3111 + $0x114] sm:$0xff]
        %v3264 = vld [vmem:[%s3111 + $0x124] sm:$0xff]
        %v3265 = vld [vmem:[%s3111 + $0x12c] sm:$0xff]
        %v3266 = vld [vmem:[%s3111 + $0x13c] sm:$0xff]
        %v3267 = vld [vmem:[%s3111 + $0x144] sm:$0xff]
        %v3268 = vld [vmem:[%s3111 + $0x154] sm:$0xff]
        %v3269 = vld [vmem:[%s3111 + $0x15c] sm:$0xff]
        %v3270 = vld [vmem:[%s3111 + $0x16c] sm:$0xff]
        %v3271 = vld [vmem:[%s3111 + $0x174] sm:$0xff]
        %v3272 = vld [vmem:[%s2918] sm:$0xff]
        %v3273 = vld [vmem:[%s2918 + $0x8] sm:$0xff]
        %v3274 = vld [vmem:[%s2918 + $0x18] sm:$0xff]
        %v3275 = vld [vmem:[%s2918 + $0x20] sm:$0xff]
        %v3276 = vld [vmem:[%s2918 + $0x30] sm:$0xff]
        %v3277 = vld [vmem:[%s2918 + $0x38] sm:$0xff]
        %v3278 = vld [vmem:[%s2918 + $0x48] sm:$0xff]
        %v3279 = vld [vmem:[%s2918 + $0x50] sm:$0xff]
        %v3280 = vld [vmem:[%s2918 + $0x60] sm:$0xff]
        %v3281 = vld [vmem:[%s2918 + $0x68] sm:$0xff]
        %v3282 = vld [vmem:[%s2918 + $0x78] sm:$0xff]
        %v3283 = vld [vmem:[%s2918 + $0x80] sm:$0xff]
        %v3284 = vld [vmem:[%s2918 + $0x90] sm:$0xff]
        %v3285 = vld [vmem:[%s2918 + $0x98] sm:$0xff]
        %v3286 = vld [vmem:[%s2918 + $0xa8] sm:$0xff]
        %v3287 = vld [vmem:[%s2918 + $0xb0] sm:$0xff]
        %v3288 = vld [vmem:[%s2918 + $0xc0] sm:$0xff]
        %v3289 = vld [vmem:[%s2918 + $0xc8] sm:$0xff]
        %v3290 = vld [vmem:[%s2918 + $0xd8] sm:$0xff]
        %v3291 = vld [vmem:[%s2918 + $0xe0] sm:$0xff]
        %v3292 = vld [vmem:[%s2918 + $0xf0] sm:$0xff]
        %v3293 = vld [vmem:[%s2918 + $0xf8] sm:$0xff]
        %v3294 = vld [vmem:[%s2918 + $0x108] sm:$0xff]
        %v3295 = vld [vmem:[%s2918 + $0x110] sm:$0xff]
        %v3296 = vld [vmem:[%s2918 + $0x120] sm:$0xff]
        %v3297 = vld [vmem:[%s2918 + $0x128] sm:$0xff]
        %v3298 = vld [vmem:[%s2918 + $0x138] sm:$0xff]
        %v3299 = vld [vmem:[%s2918 + $0x140] sm:$0xff]
        %v3300 = vld [vmem:[%s2918 + $0x150] sm:$0xff]
        %v3301 = vld [vmem:[%s2918 + $0x158] sm:$0xff]
        %v3302 = vld [vmem:[%s2918 + $0x168] sm:$0xff]
        %v3303 = vld [vmem:[%s2918 + $0x170] sm:$0xff]
        %v3304 = vld [vmem:[%s2918 + $0x1] sm:$0xff]
        %v3305 = vld [vmem:[%s2918 + $0x9] sm:$0xff]
        %v3306 = vld [vmem:[%s2918 + $0x19] sm:$0xff]
        %v3307 = vld [vmem:[%s2918 + $0x21] sm:$0xff]
        %v3308 = vld [vmem:[%s2918 + $0x31] sm:$0xff]
        %v3309 = vld [vmem:[%s2918 + $0x39] sm:$0xff]
        %v3310 = vld [vmem:[%s2918 + $0x49] sm:$0xff]
        %v3311 = vld [vmem:[%s2918 + $0x51] sm:$0xff]
        %v3312 = vld [vmem:[%s2918 + $0x61] sm:$0xff]
        %v3313 = vld [vmem:[%s2918 + $0x69] sm:$0xff]
        %v3314 = vld [vmem:[%s2918 + $0x79] sm:$0xff]
        %v3315 = vld [vmem:[%s2918 + $0x81] sm:$0xff]
        %v3316 = vld [vmem:[%s2918 + $0x91] sm:$0xff]
        %v3317 = vld [vmem:[%s2918 + $0x99] sm:$0xff]
        %v3318 = vld [vmem:[%s2918 + $0xa9] sm:$0xff]
        %v3319 = vld [vmem:[%s2918 + $0xb1] sm:$0xff]
        %v3320 = vld [vmem:[%s2918 + $0xc1] sm:$0xff]
        %v3321 = vld [vmem:[%s2918 + $0xc9] sm:$0xff]
        %v3322 = vld [vmem:[%s2918 + $0xd9] sm:$0xff]
        %v3323 = vld [vmem:[%s2918 + $0xe1] sm:$0xff]
        %v3324 = vld [vmem:[%s2918 + $0xf1] sm:$0xff]
        %v3325 = vld [vmem:[%s2918 + $0xf9] sm:$0xff]
        %v3326 = vld [vmem:[%s2918 + $0x109] sm:$0xff]
        %v3327 = vld [vmem:[%s2918 + $0x111] sm:$0xff]
        %v3328 = vld [vmem:[%s2918 + $0x121] sm:$0xff]
        %v3329 = vld [vmem:[%s2918 + $0x129] sm:$0xff]
        %v3330 = vld [vmem:[%s2918 + $0x139] sm:$0xff]
        %v3331 = vld [vmem:[%s2918 + $0x141] sm:$0xff]
        %v3332 = vld [vmem:[%s2918 + $0x151] sm:$0xff]
        %v3333 = vld [vmem:[%s2918 + $0x159] sm:$0xff]
        %v3334 = vld [vmem:[%s2918 + $0x169] sm:$0xff]
        %v3335 = vld [vmem:[%s2918 + $0x171] sm:$0xff]
        %v3336 = vld [vmem:[%s2918 + $0x2] sm:$0xff]
        %v3337 = vld [vmem:[%s2918 + $0xa] sm:$0xff]
        %v3338 = vld [vmem:[%s2918 + $0x1a] sm:$0xff]
        %v3339 = vld [vmem:[%s2918 + $0x22] sm:$0xff]
        %v3340 = vld [vmem:[%s2918 + $0x32] sm:$0xff]
        %v3341 = vld [vmem:[%s2918 + $0x3a] sm:$0xff]
        %v3342 = vld [vmem:[%s2918 + $0x4a] sm:$0xff]
        %v3343 = vld [vmem:[%s2918 + $0x52] sm:$0xff]
        %v3344 = vld [vmem:[%s2918 + $0x62] sm:$0xff]
        %v3345 = vld [vmem:[%s2918 + $0x6a] sm:$0xff]
        %v3346 = vld [vmem:[%s2918 + $0x7a] sm:$0xff]
        %v3347 = vld [vmem:[%s2918 + $0x82] sm:$0xff]
        %v3348 = vld [vmem:[%s2918 + $0x92] sm:$0xff]
        %v3349 = vld [vmem:[%s2918 + $0x9a] sm:$0xff]
        %v3350 = vld [vmem:[%s2918 + $0xaa] sm:$0xff]
        %v3351 = vld [vmem:[%s2918 + $0xb2] sm:$0xff]
        %v3352 = vld [vmem:[%s2918 + $0xc2] sm:$0xff]
        %v3353 = vld [vmem:[%s2918 + $0xca] sm:$0xff]
        %v3354 = vld [vmem:[%s2918 + $0xda] sm:$0xff]
        %v3355 = vld [vmem:[%s2918 + $0xe2] sm:$0xff]
        %v3356 = vld [vmem:[%s2918 + $0xf2] sm:$0xff]
        %v3357 = vld [vmem:[%s2918 + $0xfa] sm:$0xff]
        %v3358 = vld [vmem:[%s2918 + $0x10a] sm:$0xff]
        %v3359 = vld [vmem:[%s2918 + $0x112] sm:$0xff]
        %v3360 = vld [vmem:[%s2918 + $0x122] sm:$0xff]
        %v3361 = vld [vmem:[%s2918 + $0x12a] sm:$0xff]
        %v3362 = vld [vmem:[%s2918 + $0x13a] sm:$0xff]
        %v3363 = vld [vmem:[%s2918 + $0x142] sm:$0xff]
        %v3364 = vld [vmem:[%s2918 + $0x152] sm:$0xff]
        %v3365 = vld [vmem:[%s2918 + $0x15a] sm:$0xff]
        %v3366 = vld [vmem:[%s2918 + $0x16a] sm:$0xff]
        %v3367 = vld [vmem:[%s2918 + $0x172] sm:$0xff]
        %v3368 = vld [vmem:[%s2918 + $0x3] sm:$0xff]
        %v3369 = vld [vmem:[%s2918 + $0xb] sm:$0xff]
        %v3370 = vld [vmem:[%s2918 + $0x1b] sm:$0xff]
        %v3371 = vld [vmem:[%s2918 + $0x23] sm:$0xff]
        %v3372 = vld [vmem:[%s2918 + $0x33] sm:$0xff]
        %v3373 = vld [vmem:[%s2918 + $0x3b] sm:$0xff]
        %v3374 = vld [vmem:[%s2918 + $0x4b] sm:$0xff]
        %v3375 = vld [vmem:[%s2918 + $0x53] sm:$0xff]
        %v3376 = vld [vmem:[%s2918 + $0x63] sm:$0xff]
        %v3377 = vld [vmem:[%s2918 + $0x6b] sm:$0xff]
        %v3378 = vld [vmem:[%s2918 + $0x7b] sm:$0xff]
        %v3379 = vld [vmem:[%s2918 + $0x83] sm:$0xff]
        %v3380 = vld [vmem:[%s2918 + $0x93] sm:$0xff]
        %v3381 = vld [vmem:[%s2918 + $0x9b] sm:$0xff]
        %v3382 = vld [vmem:[%s2918 + $0xab] sm:$0xff]
        %v3383 = vld [vmem:[%s2918 + $0xb3] sm:$0xff]
        %v3384 = vld [vmem:[%s2918 + $0xc3] sm:$0xff]
        %v3385 = vld [vmem:[%s2918 + $0xcb] sm:$0xff]
        %v3386 = vld [vmem:[%s2918 + $0xdb] sm:$0xff]
        %v3387 = vld [vmem:[%s2918 + $0xe3] sm:$0xff]
        %v3388 = vld [vmem:[%s2918 + $0xf3] sm:$0xff]
        %v3389 = vld [vmem:[%s2918 + $0xfb] sm:$0xff]
        %v3390 = vld [vmem:[%s2918 + $0x10b] sm:$0xff]
        %v3391 = vld [vmem:[%s2918 + $0x113] sm:$0xff]
        %v3392 = vld [vmem:[%s2918 + $0x123] sm:$0xff]
        %v3393 = vld [vmem:[%s2918 + $0x12b] sm:$0xff]
        %v3394 = vld [vmem:[%s2918 + $0x13b] sm:$0xff]
        %v3395 = vld [vmem:[%s2918 + $0x143] sm:$0xff]
        %v3396 = vld [vmem:[%s2918 + $0x153] sm:$0xff]
        %v3397 = vld [vmem:[%s2918 + $0x15b] sm:$0xff]
        %v3398 = vld [vmem:[%s2918 + $0x16b] sm:$0xff]
        %v3399 = vld [vmem:[%s2918 + $0x173] sm:$0xff]
        %v3400 = vld [vmem:[%s2918 + $0x4] sm:$0xff]
        %v3401 = vld [vmem:[%s2918 + $0xc] sm:$0xff]
        %v3402 = vld [vmem:[%s2918 + $0x1c] sm:$0xff]
        %v3403 = vld [vmem:[%s2918 + $0x24] sm:$0xff]
        %v3404 = vld [vmem:[%s2918 + $0x34] sm:$0xff]
        %v3405 = vld [vmem:[%s2918 + $0x3c] sm:$0xff]
        %v3406 = vld [vmem:[%s2918 + $0x4c] sm:$0xff]
        %v3407 = vld [vmem:[%s2918 + $0x54] sm:$0xff]
        %v3408 = vld [vmem:[%s2918 + $0x64] sm:$0xff]
        %v3409 = vld [vmem:[%s2918 + $0x6c] sm:$0xff]
        %v3410 = vld [vmem:[%s2918 + $0x7c] sm:$0xff]
        %v3411 = vld [vmem:[%s2918 + $0x84] sm:$0xff]
        %v3412 = vld [vmem:[%s2918 + $0x94] sm:$0xff]
        %v3413 = vld [vmem:[%s2918 + $0x9c] sm:$0xff]
        %v3414 = vld [vmem:[%s2918 + $0xac] sm:$0xff]
        %v3415 = vld [vmem:[%s2918 + $0xb4] sm:$0xff]
        %v3416 = vld [vmem:[%s2918 + $0xc4] sm:$0xff]
        %v3417 = vld [vmem:[%s2918 + $0xcc] sm:$0xff]
        %v3418 = vld [vmem:[%s2918 + $0xdc] sm:$0xff]
        %v3419 = vld [vmem:[%s2918 + $0xe4] sm:$0xff]
        %v3420 = vld [vmem:[%s2918 + $0xf4] sm:$0xff]
        %v3421 = vld [vmem:[%s2918 + $0xfc] sm:$0xff]
        %v3422 = vld [vmem:[%s2918 + $0x10c] sm:$0xff]
        %v3423 = vld [vmem:[%s2918 + $0x114] sm:$0xff]
        %v3424 = vld [vmem:[%s2918 + $0x124] sm:$0xff]
        %v3425 = vld [vmem:[%s2918 + $0x12c] sm:$0xff]
        %v3426 = vld [vmem:[%s2918 + $0x13c] sm:$0xff]
        %v3427 = vld [vmem:[%s2918 + $0x144] sm:$0xff]
        %v3428 = vld [vmem:[%s2918 + $0x154] sm:$0xff]
        %v3429 = vld [vmem:[%s2918 + $0x15c] sm:$0xff]
        %v3430 = vld [vmem:[%s2918 + $0x16c] sm:$0xff]
        %v3431 = vld [vmem:[%s2918 + $0x174] sm:$0xff]
        %s3432 = scalar_lea.vmem [#allocation3], 72
        %v3433 = vld [vmem:[%s3432] sm:$0xff]
        %v3434 = vld [vmem:[%s3432 + $0x8] sm:$0xff]
        %v3435 = vld [vmem:[%s3432 + $0x18] sm:$0xff]
        %v3436 = vld [vmem:[%s3432 + $0x20] sm:$0xff]
        %v3437 = vld [vmem:[%s3432 + $0x30] sm:$0xff]
        %v3438 = vld [vmem:[%s3432 + $0x38] sm:$0xff]
        %v3439 = vld [vmem:[%s3432 + $0x48] sm:$0xff]
        %v3440 = vld [vmem:[%s3432 + $0x50] sm:$0xff]
        %v3441 = vld [vmem:[%s3432 + $0x60] sm:$0xff]
        %v3442 = vld [vmem:[%s3432 + $0x68] sm:$0xff]
        %v3443 = vld [vmem:[%s3432 + $0x78] sm:$0xff]
        %v3444 = vld [vmem:[%s3432 + $0x80] sm:$0xff]
        %v3445 = vld [vmem:[%s3432 + $0x90] sm:$0xff]
        %v3446 = vld [vmem:[%s3432 + $0x98] sm:$0xff]
        %v3447 = vld [vmem:[%s3432 + $0xa8] sm:$0xff]
        %v3448 = vld [vmem:[%s3432 + $0xb0] sm:$0xff]
        %v3449 = vld [vmem:[%s3432 + $0xc0] sm:$0xff]
        %v3450 = vld [vmem:[%s3432 + $0xc8] sm:$0xff]
        %v3451 = vld [vmem:[%s3432 + $0xd8] sm:$0xff]
        %v3452 = vld [vmem:[%s3432 + $0xe0] sm:$0xff]
        %v3453 = vld [vmem:[%s3432 + $0xf0] sm:$0xff]
        %v3454 = vld [vmem:[%s3432 + $0xf8] sm:$0xff]
        %v3455 = vld [vmem:[%s3432 + $0x108] sm:$0xff]
        %v3456 = vld [vmem:[%s3432 + $0x110] sm:$0xff]
        %v3457 = vld [vmem:[%s3432 + $0x120] sm:$0xff]
        %v3458 = vld [vmem:[%s3432 + $0x128] sm:$0xff]
        %v3459 = vld [vmem:[%s3432 + $0x138] sm:$0xff]
        %v3460 = vld [vmem:[%s3432 + $0x140] sm:$0xff]
        %v3461 = vld [vmem:[%s3432 + $0x150] sm:$0xff]
        %v3462 = vld [vmem:[%s3432 + $0x158] sm:$0xff]
        %v3463 = vld [vmem:[%s3432 + $0x168] sm:$0xff]
        %v3464 = vld [vmem:[%s3432 + $0x170] sm:$0xff]
        %v3465 = vld [vmem:[%s3432 + $0x1] sm:$0xff]
        %v3466 = vld [vmem:[%s3432 + $0x9] sm:$0xff]
        %v3467 = vld [vmem:[%s3432 + $0x19] sm:$0xff]
        %v3468 = vld [vmem:[%s3432 + $0x21] sm:$0xff]
        %v3469 = vld [vmem:[%s3432 + $0x31] sm:$0xff]
        %v3470 = vld [vmem:[%s3432 + $0x39] sm:$0xff]
        %v3471 = vld [vmem:[%s3432 + $0x49] sm:$0xff]
        %v3472 = vld [vmem:[%s3432 + $0x51] sm:$0xff]
        %v3473 = vld [vmem:[%s3432 + $0x61] sm:$0xff]
        %v3474 = vld [vmem:[%s3432 + $0x69] sm:$0xff]
        %v3475 = vld [vmem:[%s3432 + $0x79] sm:$0xff]
        %v3476 = vld [vmem:[%s3432 + $0x81] sm:$0xff]
        %v3477 = vld [vmem:[%s3432 + $0x91] sm:$0xff]
        %v3478 = vld [vmem:[%s3432 + $0x99] sm:$0xff]
        %v3479 = vld [vmem:[%s3432 + $0xa9] sm:$0xff]
        %v3480 = vld [vmem:[%s3432 + $0xb1] sm:$0xff]
        %v3481 = vld [vmem:[%s3432 + $0xc1] sm:$0xff]
        %v3482 = vld [vmem:[%s3432 + $0xc9] sm:$0xff]
        %v3483 = vld [vmem:[%s3432 + $0xd9] sm:$0xff]
        %v3484 = vld [vmem:[%s3432 + $0xe1] sm:$0xff]
        %v3485 = vld [vmem:[%s3432 + $0xf1] sm:$0xff]
        %v3486 = vld [vmem:[%s3432 + $0xf9] sm:$0xff]
        %v3487 = vld [vmem:[%s3432 + $0x109] sm:$0xff]
        %v3488 = vld [vmem:[%s3432 + $0x111] sm:$0xff]
        %v3489 = vld [vmem:[%s3432 + $0x121] sm:$0xff]
        %v3490 = vld [vmem:[%s3432 + $0x129] sm:$0xff]
        %v3491 = vld [vmem:[%s3432 + $0x139] sm:$0xff]
        %v3492 = vld [vmem:[%s3432 + $0x141] sm:$0xff]
        %v3493 = vld [vmem:[%s3432 + $0x151] sm:$0xff]
        %v3494 = vld [vmem:[%s3432 + $0x159] sm:$0xff]
        %v3495 = vld [vmem:[%s3432 + $0x169] sm:$0xff]
        %v3496 = vld [vmem:[%s3432 + $0x171] sm:$0xff]
        %v3497 = vld [vmem:[%s3432 + $0x2] sm:$0xff]
        %v3498 = vld [vmem:[%s3432 + $0xa] sm:$0xff]
        %v3499 = vld [vmem:[%s3432 + $0x1a] sm:$0xff]
        %v3500 = vld [vmem:[%s3432 + $0x22] sm:$0xff]
        %v3501 = vld [vmem:[%s3432 + $0x32] sm:$0xff]
        %v3502 = vld [vmem:[%s3432 + $0x3a] sm:$0xff]
        %v3503 = vld [vmem:[%s3432 + $0x4a] sm:$0xff]
        %v3504 = vld [vmem:[%s3432 + $0x52] sm:$0xff]
        %v3505 = vld [vmem:[%s3432 + $0x62] sm:$0xff]
        %v3506 = vld [vmem:[%s3432 + $0x6a] sm:$0xff]
        %v3507 = vld [vmem:[%s3432 + $0x7a] sm:$0xff]
        %v3508 = vld [vmem:[%s3432 + $0x82] sm:$0xff]
        %v3509 = vld [vmem:[%s3432 + $0x92] sm:$0xff]
        %v3510 = vld [vmem:[%s3432 + $0x9a] sm:$0xff]
        %v3511 = vld [vmem:[%s3432 + $0xaa] sm:$0xff]
        %v3512 = vld [vmem:[%s3432 + $0xb2] sm:$0xff]
        %v3513 = vld [vmem:[%s3432 + $0xc2] sm:$0xff]
        %v3514 = vld [vmem:[%s3432 + $0xca] sm:$0xff]
        %v3515 = vld [vmem:[%s3432 + $0xda] sm:$0xff]
        %v3516 = vld [vmem:[%s3432 + $0xe2] sm:$0xff]
        %v3517 = vld [vmem:[%s3432 + $0xf2] sm:$0xff]
        %v3518 = vld [vmem:[%s3432 + $0xfa] sm:$0xff]
        %v3519 = vld [vmem:[%s3432 + $0x10a] sm:$0xff]
        %v3520 = vld [vmem:[%s3432 + $0x112] sm:$0xff]
        %v3521 = vld [vmem:[%s3432 + $0x122] sm:$0xff]
        %v3522 = vld [vmem:[%s3432 + $0x12a] sm:$0xff]
        %v3523 = vld [vmem:[%s3432 + $0x13a] sm:$0xff]
        %v3524 = vld [vmem:[%s3432 + $0x142] sm:$0xff]
        %v3525 = vld [vmem:[%s3432 + $0x152] sm:$0xff]
        %v3526 = vld [vmem:[%s3432 + $0x15a] sm:$0xff]
        %v3527 = vld [vmem:[%s3432 + $0x16a] sm:$0xff]
        %v3528 = vld [vmem:[%s3432 + $0x172] sm:$0xff]
        %v3529 = vld [vmem:[%s3432 + $0x3] sm:$0xff]
        %v3530 = vld [vmem:[%s3432 + $0xb] sm:$0xff]
        %v3531 = vld [vmem:[%s3432 + $0x1b] sm:$0xff]
        %v3532 = vld [vmem:[%s3432 + $0x23] sm:$0xff]
        %v3533 = vld [vmem:[%s3432 + $0x33] sm:$0xff]
        %v3534 = vld [vmem:[%s3432 + $0x3b] sm:$0xff]
        %v3535 = vld [vmem:[%s3432 + $0x4b] sm:$0xff]
        %v3536 = vld [vmem:[%s3432 + $0x53] sm:$0xff]
        %v3537 = vld [vmem:[%s3432 + $0x63] sm:$0xff]
        %v3538 = vld [vmem:[%s3432 + $0x6b] sm:$0xff]
        %v3539 = vld [vmem:[%s3432 + $0x7b] sm:$0xff]
        %v3540 = vld [vmem:[%s3432 + $0x83] sm:$0xff]
        %v3541 = vld [vmem:[%s3432 + $0x93] sm:$0xff]
        %v3542 = vld [vmem:[%s3432 + $0x9b] sm:$0xff]
        %v3543 = vld [vmem:[%s3432 + $0xab] sm:$0xff]
        %v3544 = vld [vmem:[%s3432 + $0xb3] sm:$0xff]
        %v3545 = vld [vmem:[%s3432 + $0xc3] sm:$0xff]
        %v3546 = vld [vmem:[%s3432 + $0xcb] sm:$0xff]
        %v3547 = vld [vmem:[%s3432 + $0xdb] sm:$0xff]
        %v3548 = vld [vmem:[%s3432 + $0xe3] sm:$0xff]
        %v3549 = vld [vmem:[%s3432 + $0xf3] sm:$0xff]
        %v3550 = vld [vmem:[%s3432 + $0xfb] sm:$0xff]
        %v3551 = vld [vmem:[%s3432 + $0x10b] sm:$0xff]
        %v3552 = vld [vmem:[%s3432 + $0x113] sm:$0xff]
        %v3553 = vld [vmem:[%s3432 + $0x123] sm:$0xff]
        %v3554 = vld [vmem:[%s3432 + $0x12b] sm:$0xff]
        %v3555 = vld [vmem:[%s3432 + $0x13b] sm:$0xff]
        %v3556 = vld [vmem:[%s3432 + $0x143] sm:$0xff]
        %v3557 = vld [vmem:[%s3432 + $0x153] sm:$0xff]
        %v3558 = vld [vmem:[%s3432 + $0x15b] sm:$0xff]
        %v3559 = vld [vmem:[%s3432 + $0x16b] sm:$0xff]
        %v3560 = vld [vmem:[%s3432 + $0x173] sm:$0xff]
        %v3561 = vld [vmem:[%s3432 + $0x4] sm:$0xff]
        %v3562 = vld [vmem:[%s3432 + $0xc] sm:$0xff]
        %v3563 = vld [vmem:[%s3432 + $0x1c] sm:$0xff]
        %v3564 = vld [vmem:[%s3432 + $0x24] sm:$0xff]
        %v3565 = vld [vmem:[%s3432 + $0x34] sm:$0xff]
        %v3566 = vld [vmem:[%s3432 + $0x3c] sm:$0xff]
        %v3567 = vld [vmem:[%s3432 + $0x4c] sm:$0xff]
        %v3568 = vld [vmem:[%s3432 + $0x54] sm:$0xff]
        %v3569 = vld [vmem:[%s3432 + $0x64] sm:$0xff]
        %v3570 = vld [vmem:[%s3432 + $0x6c] sm:$0xff]
        %v3571 = vld [vmem:[%s3432 + $0x7c] sm:$0xff]
        %v3572 = vld [vmem:[%s3432 + $0x84] sm:$0xff]
        %v3573 = vld [vmem:[%s3432 + $0x94] sm:$0xff]
        %v3574 = vld [vmem:[%s3432 + $0x9c] sm:$0xff]
        %v3575 = vld [vmem:[%s3432 + $0xac] sm:$0xff]
        %v3576 = vld [vmem:[%s3432 + $0xb4] sm:$0xff]
        %v3577 = vld [vmem:[%s3432 + $0xc4] sm:$0xff]
        %v3578 = vld [vmem:[%s3432 + $0xcc] sm:$0xff]
        %v3579 = vld [vmem:[%s3432 + $0xdc] sm:$0xff]
        %v3580 = vld [vmem:[%s3432 + $0xe4] sm:$0xff]
        %v3581 = vld [vmem:[%s3432 + $0xf4] sm:$0xff]
        %v3582 = vld [vmem:[%s3432 + $0xfc] sm:$0xff]
        %v3583 = vld [vmem:[%s3432 + $0x10c] sm:$0xff]
        %v3584 = vld [vmem:[%s3432 + $0x114] sm:$0xff]
        %v3585 = vld [vmem:[%s3432 + $0x124] sm:$0xff]
        %v3586 = vld [vmem:[%s3432 + $0x12c] sm:$0xff]
        %v3587 = vld [vmem:[%s3432 + $0x13c] sm:$0xff]
        %v3588 = vld [vmem:[%s3432 + $0x144] sm:$0xff]
        %v3589 = vld [vmem:[%s3432 + $0x154] sm:$0xff]
        %v3590 = vld [vmem:[%s3432 + $0x15c] sm:$0xff]
        %v3591 = vld [vmem:[%s3432 + $0x16c] sm:$0xff]
        %v3592 = vld [vmem:[%s3432 + $0x174] sm:$0xff]
        %s3593 = scalar_lea.vmem [#allocation3], 96
        %v3594 = vld [vmem:[%s3593] sm:$0xff]
        %v3595 = vld [vmem:[%s3593 + $0x8] sm:$0xff]
        %v3596 = vld [vmem:[%s3593 + $0x18] sm:$0xff]
        %v3597 = vld [vmem:[%s3593 + $0x20] sm:$0xff]
        %v3598 = vld [vmem:[%s3593 + $0x30] sm:$0xff]
        %v3599 = vld [vmem:[%s3593 + $0x38] sm:$0xff]
        %v3600 = vld [vmem:[%s3593 + $0x48] sm:$0xff]
        %v3601 = vld [vmem:[%s3593 + $0x50] sm:$0xff]
        %v3602 = vld [vmem:[%s3593 + $0x60] sm:$0xff]
        %v3603 = vld [vmem:[%s3593 + $0x68] sm:$0xff]
        %v3604 = vld [vmem:[%s3593 + $0x78] sm:$0xff]
        %v3605 = vld [vmem:[%s3593 + $0x80] sm:$0xff]
        %v3606 = vld [vmem:[%s3593 + $0x90] sm:$0xff]
        %v3607 = vld [vmem:[%s3593 + $0x98] sm:$0xff]
        %v3608 = vld [vmem:[%s3593 + $0xa8] sm:$0xff]
        %v3609 = vld [vmem:[%s3593 + $0xb0] sm:$0xff]
        %v3610 = vld [vmem:[%s3593 + $0xc0] sm:$0xff]
        %v3611 = vld [vmem:[%s3593 + $0xc8] sm:$0xff]
        %v3612 = vld [vmem:[%s3593 + $0xd8] sm:$0xff]
        %v3613 = vld [vmem:[%s3593 + $0xe0] sm:$0xff]
        %v3614 = vld [vmem:[%s3593 + $0xf0] sm:$0xff]
        %v3615 = vld [vmem:[%s3593 + $0xf8] sm:$0xff]
        %v3616 = vld [vmem:[%s3593 + $0x108] sm:$0xff]
        %v3617 = vld [vmem:[%s3593 + $0x110] sm:$0xff]
        %v3618 = vld [vmem:[%s3593 + $0x120] sm:$0xff]
        %v3619 = vld [vmem:[%s3593 + $0x128] sm:$0xff]
        %v3620 = vld [vmem:[%s3593 + $0x138] sm:$0xff]
        %v3621 = vld [vmem:[%s3593 + $0x140] sm:$0xff]
        %v3622 = vld [vmem:[%s3593 + $0x150] sm:$0xff]
        %v3623 = vld [vmem:[%s3593 + $0x158] sm:$0xff]
        %v3624 = vld [vmem:[%s3593 + $0x168] sm:$0xff]
        %v3625 = vld [vmem:[%s3593 + $0x170] sm:$0xff]
        %v3626 = vld [vmem:[%s3593 + $0x1] sm:$0xff]
        %v3627 = vld [vmem:[%s3593 + $0x9] sm:$0xff]
        %v3628 = vld [vmem:[%s3593 + $0x19] sm:$0xff]
        %v3629 = vld [vmem:[%s3593 + $0x21] sm:$0xff]
        %v3630 = vld [vmem:[%s3593 + $0x31] sm:$0xff]
        %v3631 = vld [vmem:[%s3593 + $0x39] sm:$0xff]
        %v3632 = vld [vmem:[%s3593 + $0x49] sm:$0xff]
        %v3633 = vld [vmem:[%s3593 + $0x51] sm:$0xff]
        %v3634 = vld [vmem:[%s3593 + $0x61] sm:$0xff]
        %v3635 = vld [vmem:[%s3593 + $0x69] sm:$0xff]
        %v3636 = vld [vmem:[%s3593 + $0x79] sm:$0xff]
        %v3637 = vld [vmem:[%s3593 + $0x81] sm:$0xff]
        %v3638 = vld [vmem:[%s3593 + $0x91] sm:$0xff]
        %v3639 = vld [vmem:[%s3593 + $0x99] sm:$0xff]
        %v3640 = vld [vmem:[%s3593 + $0xa9] sm:$0xff]
        %v3641 = vld [vmem:[%s3593 + $0xb1] sm:$0xff]
        %v3642 = vld [vmem:[%s3593 + $0xc1] sm:$0xff]
        %v3643 = vld [vmem:[%s3593 + $0xc9] sm:$0xff]
        %v3644 = vld [vmem:[%s3593 + $0xd9] sm:$0xff]
        %v3645 = vld [vmem:[%s3593 + $0xe1] sm:$0xff]
        %v3646 = vld [vmem:[%s3593 + $0xf1] sm:$0xff]
        %v3647 = vld [vmem:[%s3593 + $0xf9] sm:$0xff]
        %v3648 = vld [vmem:[%s3593 + $0x109] sm:$0xff]
        %v3649 = vld [vmem:[%s3593 + $0x111] sm:$0xff]
        %v3650 = vld [vmem:[%s3593 + $0x121] sm:$0xff]
        %v3651 = vld [vmem:[%s3593 + $0x129] sm:$0xff]
        %v3652 = vld [vmem:[%s3593 + $0x139] sm:$0xff]
        %v3653 = vld [vmem:[%s3593 + $0x141] sm:$0xff]
        %v3654 = vld [vmem:[%s3593 + $0x151] sm:$0xff]
        %v3655 = vld [vmem:[%s3593 + $0x159] sm:$0xff]
        %v3656 = vld [vmem:[%s3593 + $0x169] sm:$0xff]
        %v3657 = vld [vmem:[%s3593 + $0x171] sm:$0xff]
        %v3658 = vld [vmem:[%s3593 + $0x2] sm:$0xff]
        %v3659 = vld [vmem:[%s3593 + $0xa] sm:$0xff]
        %v3660 = vld [vmem:[%s3593 + $0x1a] sm:$0xff]
        %v3661 = vld [vmem:[%s3593 + $0x22] sm:$0xff]
        %v3662 = vld [vmem:[%s3593 + $0x32] sm:$0xff]
        %v3663 = vld [vmem:[%s3593 + $0x3a] sm:$0xff]
        %v3664 = vld [vmem:[%s3593 + $0x4a] sm:$0xff]
        %v3665 = vld [vmem:[%s3593 + $0x52] sm:$0xff]
        %v3666 = vld [vmem:[%s3593 + $0x62] sm:$0xff]
        %v3667 = vld [vmem:[%s3593 + $0x6a] sm:$0xff]
        %v3668 = vld [vmem:[%s3593 + $0x7a] sm:$0xff]
        %v3669 = vld [vmem:[%s3593 + $0x82] sm:$0xff]
        %v3670 = vld [vmem:[%s3593 + $0x92] sm:$0xff]
        %v3671 = vld [vmem:[%s3593 + $0x9a] sm:$0xff]
        %v3672 = vld [vmem:[%s3593 + $0xaa] sm:$0xff]
        %v3673 = vld [vmem:[%s3593 + $0xb2] sm:$0xff]
        %v3674 = vld [vmem:[%s3593 + $0xc2] sm:$0xff]
        %v3675 = vld [vmem:[%s3593 + $0xca] sm:$0xff]
        %v3676 = vld [vmem:[%s3593 + $0xda] sm:$0xff]
        %v3677 = vld [vmem:[%s3593 + $0xe2] sm:$0xff]
        %v3678 = vld [vmem:[%s3593 + $0xf2] sm:$0xff]
        %v3679 = vld [vmem:[%s3593 + $0xfa] sm:$0xff]
        %v3680 = vld [vmem:[%s3593 + $0x10a] sm:$0xff]
        %v3681 = vld [vmem:[%s3593 + $0x112] sm:$0xff]
        %v3682 = vld [vmem:[%s3593 + $0x122] sm:$0xff]
        %v3683 = vld [vmem:[%s3593 + $0x12a] sm:$0xff]
        %v3684 = vld [vmem:[%s3593 + $0x13a] sm:$0xff]
        %v3685 = vld [vmem:[%s3593 + $0x142] sm:$0xff]
        %v3686 = vld [vmem:[%s3593 + $0x152] sm:$0xff]
        %v3687 = vld [vmem:[%s3593 + $0x15a] sm:$0xff]
        %v3688 = vld [vmem:[%s3593 + $0x16a] sm:$0xff]
        %v3689 = vld [vmem:[%s3593 + $0x172] sm:$0xff]
        %v3690 = vld [vmem:[%s3593 + $0x3] sm:$0xff]
        %v3691 = vld [vmem:[%s3593 + $0xb] sm:$0xff]
        %v3692 = vld [vmem:[%s3593 + $0x1b] sm:$0xff]
        %v3693 = vld [vmem:[%s3593 + $0x23] sm:$0xff]
        %v3694 = vld [vmem:[%s3593 + $0x33] sm:$0xff]
        %v3695 = vld [vmem:[%s3593 + $0x3b] sm:$0xff]
        %v3696 = vld [vmem:[%s3593 + $0x4b] sm:$0xff]
        %v3697 = vld [vmem:[%s3593 + $0x53] sm:$0xff]
        %v3698 = vld [vmem:[%s3593 + $0x63] sm:$0xff]
        %v3699 = vld [vmem:[%s3593 + $0x6b] sm:$0xff]
        %v3700 = vld [vmem:[%s3593 + $0x7b] sm:$0xff]
        %v3701 = vld [vmem:[%s3593 + $0x83] sm:$0xff]
        %v3702 = vld [vmem:[%s3593 + $0x93] sm:$0xff]
        %v3703 = vld [vmem:[%s3593 + $0x9b] sm:$0xff]
        %v3704 = vld [vmem:[%s3593 + $0xab] sm:$0xff]
        %v3705 = vld [vmem:[%s3593 + $0xb3] sm:$0xff]
        %v3706 = vld [vmem:[%s3593 + $0xc3] sm:$0xff]
        %v3707 = vld [vmem:[%s3593 + $0xcb] sm:$0xff]
        %v3708 = vld [vmem:[%s3593 + $0xdb] sm:$0xff]
        %v3709 = vld [vmem:[%s3593 + $0xe3] sm:$0xff]
        %v3710 = vld [vmem:[%s3593 + $0xf3] sm:$0xff]
        %v3711 = vld [vmem:[%s3593 + $0xfb] sm:$0xff]
        %v3712 = vld [vmem:[%s3593 + $0x10b] sm:$0xff]
        %v3713 = vld [vmem:[%s3593 + $0x113] sm:$0xff]
        %v3714 = vld [vmem:[%s3593 + $0x123] sm:$0xff]
        %v3715 = vld [vmem:[%s3593 + $0x12b] sm:$0xff]
        %v3716 = vld [vmem:[%s3593 + $0x13b] sm:$0xff]
        %v3717 = vld [vmem:[%s3593 + $0x143] sm:$0xff]
        %v3718 = vld [vmem:[%s3593 + $0x153] sm:$0xff]
        %v3719 = vld [vmem:[%s3593 + $0x15b] sm:$0xff]
        %v3720 = vld [vmem:[%s3593 + $0x16b] sm:$0xff]
        %v3721 = vld [vmem:[%s3593 + $0x173] sm:$0xff]
        %v3722 = vld [vmem:[%s3593 + $0x4] sm:$0xff]
        %v3723 = vld [vmem:[%s3593 + $0xc] sm:$0xff]
        %v3724 = vld [vmem:[%s3593 + $0x1c] sm:$0xff]
        %v3725 = vld [vmem:[%s3593 + $0x24] sm:$0xff]
        %v3726 = vld [vmem:[%s3593 + $0x34] sm:$0xff]
        %v3727 = vld [vmem:[%s3593 + $0x3c] sm:$0xff]
        %v3728 = vld [vmem:[%s3593 + $0x4c] sm:$0xff]
        %v3729 = vld [vmem:[%s3593 + $0x54] sm:$0xff]
        %v3730 = vld [vmem:[%s3593 + $0x64] sm:$0xff]
        %v3731 = vld [vmem:[%s3593 + $0x6c] sm:$0xff]
        %v3732 = vld [vmem:[%s3593 + $0x7c] sm:$0xff]
        %v3733 = vld [vmem:[%s3593 + $0x84] sm:$0xff]
        %v3734 = vld [vmem:[%s3593 + $0x94] sm:$0xff]
        %v3735 = vld [vmem:[%s3593 + $0x9c] sm:$0xff]
        %v3736 = vld [vmem:[%s3593 + $0xac] sm:$0xff]
        %v3737 = vld [vmem:[%s3593 + $0xb4] sm:$0xff]
        %v3738 = vld [vmem:[%s3593 + $0xc4] sm:$0xff]
        %v3739 = vld [vmem:[%s3593 + $0xcc] sm:$0xff]
        %v3740 = vld [vmem:[%s3593 + $0xdc] sm:$0xff]
        %v3741 = vld [vmem:[%s3593 + $0xe4] sm:$0xff]
        %v3742 = vld [vmem:[%s3593 + $0xf4] sm:$0xff]
        %v3743 = vld [vmem:[%s3593 + $0xfc] sm:$0xff]
        %v3744 = vld [vmem:[%s3593 + $0x10c] sm:$0xff]
        %v3745 = vld [vmem:[%s3593 + $0x114] sm:$0xff]
        %v3746 = vld [vmem:[%s3593 + $0x124] sm:$0xff]
        %v3747 = vld [vmem:[%s3593 + $0x12c] sm:$0xff]
        %v3748 = vld [vmem:[%s3593 + $0x13c] sm:$0xff]
        %v3749 = vld [vmem:[%s3593 + $0x144] sm:$0xff]
        %v3750 = vld [vmem:[%s3593 + $0x154] sm:$0xff]
        %v3751 = vld [vmem:[%s3593 + $0x15c] sm:$0xff]
        %v3752 = vld [vmem:[%s3593 + $0x16c] sm:$0xff]
        %v3753 = vld [vmem:[%s3593 + $0x174] sm:$0xff]
        %3786 = vrot.lane.b32.xlu0 %v2983, 4
        %v3787 = vpop.permute.xlu0 %3786
        %3788 = vrot.lane.b32.xlu0 %v2984, 4
        %v3789 = vpop.permute.xlu0 %3788
        %3790 = vrot.lane.b32.xlu0 %v2985, 4
        %v3791 = vpop.permute.xlu0 %3790
        %3792 = vrot.lane.b32.xlu0 %v2986, 4
        %v3793 = vpop.permute.xlu0 %3792
        %3794 = vrot.lane.b32.xlu0 %v2987, 4
        %v3795 = vpop.permute.xlu0 %3794
        %3796 = vrot.lane.b32.xlu0 %v2988, 4
        %v3797 = vpop.permute.xlu0 %3796
        %3798 = vrot.lane.b32.xlu0 %v2989, 4
        %v3799 = vpop.permute.xlu0 %3798
        %3800 = vrot.lane.b32.xlu0 %v2990, 4
        %v3801 = vpop.permute.xlu0 %3800
        %3802 = vrot.lane.b32.xlu0 %v2991, 4
        %v3803 = vpop.permute.xlu0 %3802
        %3804 = vrot.lane.b32.xlu0 %v2992, 4
        %v3805 = vpop.permute.xlu0 %3804
        %3806 = vrot.lane.b32.xlu0 %v2993, 4
        %v3807 = vpop.permute.xlu0 %3806
        %3808 = vrot.lane.b32.xlu0 %v2994, 4
        %v3809 = vpop.permute.xlu0 %3808
        %3810 = vrot.lane.b32.xlu0 %v2995, 4
        %v3811 = vpop.permute.xlu0 %3810
        %3812 = vrot.lane.b32.xlu0 %v2996, 4
        %v3813 = vpop.permute.xlu0 %3812
        %3814 = vrot.lane.b32.xlu0 %v2997, 4
        %v3815 = vpop.permute.xlu0 %3814
        %3816 = vrot.lane.b32.xlu0 %v2998, 4
        %v3817 = vpop.permute.xlu0 %3816
        %3818 = vrot.lane.b32.xlu0 %v2999, 4
        %v3819 = vpop.permute.xlu0 %3818
        %3820 = vrot.lane.b32.xlu0 %v3000, 4
        %v3821 = vpop.permute.xlu0 %3820
        %3822 = vrot.lane.b32.xlu0 %v3001, 4
        %v3823 = vpop.permute.xlu0 %3822
        %3824 = vrot.lane.b32.xlu0 %v3002, 4
        %v3825 = vpop.permute.xlu0 %3824
        %3826 = vrot.lane.b32.xlu0 %v3003, 4
        %v3827 = vpop.permute.xlu0 %3826
        %3828 = vrot.lane.b32.xlu0 %v3004, 4
        %v3829 = vpop.permute.xlu0 %3828
        %3830 = vrot.lane.b32.xlu0 %v3005, 4
        %v3831 = vpop.permute.xlu0 %3830
        %3832 = vrot.lane.b32.xlu0 %v3006, 4
        %v3833 = vpop.permute.xlu0 %3832
        %3834 = vrot.lane.b32.xlu0 %v3007, 4
        %v3835 = vpop.permute.xlu0 %3834
        %3836 = vrot.lane.b32.xlu0 %v3008, 4
        %v3837 = vpop.permute.xlu0 %3836
        %3838 = vrot.lane.b32.xlu0 %v3009, 4
        %v3839 = vpop.permute.xlu0 %3838
        %3840 = vrot.lane.b32.xlu0 %v3010, 4
        %v3841 = vpop.permute.xlu0 %3840
        %3842 = vrot.lane.b32.xlu0 %v3011, 4
        %v3843 = vpop.permute.xlu0 %3842
        %3844 = vrot.lane.b32.xlu0 %v3012, 4
        %v3845 = vpop.permute.xlu0 %3844
        %3846 = vrot.lane.b32.xlu0 %v3013, 4
        %v3847 = vpop.permute.xlu0 %3846
        %3848 = vrot.lane.b32.xlu0 %v3014, 4
        %v3849 = vpop.permute.xlu0 %3848
        %3914 = vrot.lane.b32.xlu0 %v3015, 8
        %v3915 = vpop.permute.xlu0 %3914
        %3916 = vrot.lane.b32.xlu0 %v3016, 8
        %v3917 = vpop.permute.xlu0 %3916
        %3918 = vrot.lane.b32.xlu0 %v3017, 8
        %v3919 = vpop.permute.xlu0 %3918
        %3920 = vrot.lane.b32.xlu0 %v3018, 8
        %v3921 = vpop.permute.xlu0 %3920
        %3922 = vrot.lane.b32.xlu0 %v3019, 8
        %v3923 = vpop.permute.xlu0 %3922
        %3924 = vrot.lane.b32.xlu0 %v3020, 8
        %v3925 = vpop.permute.xlu0 %3924
        %3926 = vrot.lane.b32.xlu0 %v3021, 8
        %v3927 = vpop.permute.xlu0 %3926
        %3928 = vrot.lane.b32.xlu0 %v3022, 8
        %v3929 = vpop.permute.xlu0 %3928
        %3930 = vrot.lane.b32.xlu0 %v3023, 8
        %v3931 = vpop.permute.xlu0 %3930
        %3932 = vrot.lane.b32.xlu0 %v3024, 8
        %v3933 = vpop.permute.xlu0 %3932
        %3934 = vrot.lane.b32.xlu0 %v3025, 8
        %v3935 = vpop.permute.xlu0 %3934
        %3936 = vrot.lane.b32.xlu0 %v3026, 8
        %v3937 = vpop.permute.xlu0 %3936
        %3938 = vrot.lane.b32.xlu0 %v3027, 8
        %v3939 = vpop.permute.xlu0 %3938
        %3940 = vrot.lane.b32.xlu0 %v3028, 8
        %v3941 = vpop.permute.xlu0 %3940
        %3942 = vrot.lane.b32.xlu0 %v3029, 8
        %v3943 = vpop.permute.xlu0 %3942
        %3944 = vrot.lane.b32.xlu0 %v3030, 8
        %v3945 = vpop.permute.xlu0 %3944
        %3946 = vrot.lane.b32.xlu0 %v3031, 8
        %v3947 = vpop.permute.xlu0 %3946
        %3948 = vrot.lane.b32.xlu0 %v3032, 8
        %v3949 = vpop.permute.xlu0 %3948
        %3950 = vrot.lane.b32.xlu0 %v3033, 8
        %v3951 = vpop.permute.xlu0 %3950
        %3952 = vrot.lane.b32.xlu0 %v3034, 8
        %v3953 = vpop.permute.xlu0 %3952
        %3954 = vrot.lane.b32.xlu0 %v3035, 8
        %v3955 = vpop.permute.xlu0 %3954
        %3956 = vrot.lane.b32.xlu0 %v3036, 8
        %v3957 = vpop.permute.xlu0 %3956
        %3958 = vrot.lane.b32.xlu0 %v3037, 8
        %v3959 = vpop.permute.xlu0 %3958
        %3960 = vrot.lane.b32.xlu0 %v3038, 8
        %v3961 = vpop.permute.xlu0 %3960
        %3962 = vrot.lane.b32.xlu0 %v3039, 8
        %v3963 = vpop.permute.xlu0 %3962
        %3964 = vrot.lane.b32.xlu0 %v3040, 8
        %v3965 = vpop.permute.xlu0 %3964
        %3966 = vrot.lane.b32.xlu0 %v3041, 8
        %v3967 = vpop.permute.xlu0 %3966
        %3968 = vrot.lane.b32.xlu0 %v3042, 8
        %v3969 = vpop.permute.xlu0 %3968
        %3970 = vrot.lane.b32.xlu0 %v3043, 8
        %v3971 = vpop.permute.xlu0 %3970
        %3972 = vrot.lane.b32.xlu0 %v3044, 8
        %v3973 = vpop.permute.xlu0 %3972
        %3974 = vrot.lane.b32.xlu0 %v3045, 8
        %v3975 = vpop.permute.xlu0 %3974
        %3976 = vrot.lane.b32.xlu0 %v3046, 8
        %v3977 = vpop.permute.xlu0 %3976
        %4042 = vrot.lane.b32.xlu0 %v3047, 12
        %v4043 = vpop.permute.xlu0 %4042
        %4044 = vrot.lane.b32.xlu0 %v3048, 12
        %v4045 = vpop.permute.xlu0 %4044
        %4046 = vrot.lane.b32.xlu0 %v3049, 12
        %v4047 = vpop.permute.xlu0 %4046
        %4048 = vrot.lane.b32.xlu0 %v3050, 12
        %v4049 = vpop.permute.xlu0 %4048
        %4050 = vrot.lane.b32.xlu0 %v3051, 12
        %v4051 = vpop.permute.xlu0 %4050
        %4052 = vrot.lane.b32.xlu0 %v3052, 12
        %v4053 = vpop.permute.xlu0 %4052
        %4054 = vrot.lane.b32.xlu0 %v3053, 12
        %v4055 = vpop.permute.xlu0 %4054
        %4056 = vrot.lane.b32.xlu0 %v3054, 12
        %v4057 = vpop.permute.xlu0 %4056
        %4058 = vrot.lane.b32.xlu0 %v3055, 12
        %v4059 = vpop.permute.xlu0 %4058
        %4060 = vrot.lane.b32.xlu0 %v3056, 12
        %v4061 = vpop.permute.xlu0 %4060
        %4062 = vrot.lane.b32.xlu0 %v3057, 12
        %v4063 = vpop.permute.xlu0 %4062
        %4064 = vrot.lane.b32.xlu0 %v3058, 12
        %v4065 = vpop.permute.xlu0 %4064
        %4066 = vrot.lane.b32.xlu0 %v3059, 12
        %v4067 = vpop.permute.xlu0 %4066
        %4068 = vrot.lane.b32.xlu0 %v3060, 12
        %v4069 = vpop.permute.xlu0 %4068
        %4070 = vrot.lane.b32.xlu0 %v3061, 12
        %v4071 = vpop.permute.xlu0 %4070
        %4072 = vrot.lane.b32.xlu0 %v3062, 12
        %v4073 = vpop.permute.xlu0 %4072
        %4074 = vrot.lane.b32.xlu0 %v3063, 12
        %v4075 = vpop.permute.xlu0 %4074
        %4076 = vrot.lane.b32.xlu0 %v3064, 12
        %v4077 = vpop.permute.xlu0 %4076
        %4078 = vrot.lane.b32.xlu0 %v3065, 12
        %v4079 = vpop.permute.xlu0 %4078
        %4080 = vrot.lane.b32.xlu0 %v3066, 12
        %v4081 = vpop.permute.xlu0 %4080
        %4082 = vrot.lane.b32.xlu0 %v3067, 12
        %v4083 = vpop.permute.xlu0 %4082
        %4084 = vrot.lane.b32.xlu0 %v3068, 12
        %v4085 = vpop.permute.xlu0 %4084
        %4086 = vrot.lane.b32.xlu0 %v3069, 12
        %v4087 = vpop.permute.xlu0 %4086
        %4088 = vrot.lane.b32.xlu0 %v3070, 12
        %v4089 = vpop.permute.xlu0 %4088
        %4090 = vrot.lane.b32.xlu0 %v3071, 12
        %v4091 = vpop.permute.xlu0 %4090
        %4092 = vrot.lane.b32.xlu0 %v3072, 12
        %v4093 = vpop.permute.xlu0 %4092
        %4094 = vrot.lane.b32.xlu0 %v3073, 12
        %v4095 = vpop.permute.xlu0 %4094
        %4096 = vrot.lane.b32.xlu0 %v3074, 12
        %v4097 = vpop.permute.xlu0 %4096
        %4098 = vrot.lane.b32.xlu0 %v3075, 12
        %v4099 = vpop.permute.xlu0 %4098
        %4100 = vrot.lane.b32.xlu0 %v3076, 12
        %v4101 = vpop.permute.xlu0 %4100
        %4102 = vrot.lane.b32.xlu0 %v3077, 12
        %v4103 = vpop.permute.xlu0 %4102
        %4104 = vrot.lane.b32.xlu0 %v3078, 12
        %v4105 = vpop.permute.xlu0 %4104
        %4170 = vrot.lane.b32.xlu0 %v3079, 16
        %v4171 = vpop.permute.xlu0 %4170
        %4172 = vrot.lane.b32.xlu0 %v3080, 16
        %v4173 = vpop.permute.xlu0 %4172
        %4174 = vrot.lane.b32.xlu0 %v3081, 16
        %v4175 = vpop.permute.xlu0 %4174
        %4176 = vrot.lane.b32.xlu0 %v3082, 16
        %v4177 = vpop.permute.xlu0 %4176
        %4178 = vrot.lane.b32.xlu0 %v3083, 16
        %v4179 = vpop.permute.xlu0 %4178
        %4180 = vrot.lane.b32.xlu0 %v3084, 16
        %v4181 = vpop.permute.xlu0 %4180
        %4182 = vrot.lane.b32.xlu0 %v3085, 16
        %v4183 = vpop.permute.xlu0 %4182
        %4184 = vrot.lane.b32.xlu0 %v3086, 16
        %v4185 = vpop.permute.xlu0 %4184
        %4186 = vrot.lane.b32.xlu0 %v3087, 16
        %v4187 = vpop.permute.xlu0 %4186
        %4188 = vrot.lane.b32.xlu0 %v3088, 16
        %v4189 = vpop.permute.xlu0 %4188
        %4190 = vrot.lane.b32.xlu0 %v3089, 16
        %v4191 = vpop.permute.xlu0 %4190
        %4192 = vrot.lane.b32.xlu0 %v3090, 16
        %v4193 = vpop.permute.xlu0 %4192
        %4194 = vrot.lane.b32.xlu0 %v3091, 16
        %v4195 = vpop.permute.xlu0 %4194
        %4196 = vrot.lane.b32.xlu0 %v3092, 16
        %v4197 = vpop.permute.xlu0 %4196
        %4198 = vrot.lane.b32.xlu0 %v3093, 16
        %v4199 = vpop.permute.xlu0 %4198
        %4200 = vrot.lane.b32.xlu0 %v3094, 16
        %v4201 = vpop.permute.xlu0 %4200
        %4202 = vrot.lane.b32.xlu0 %v3095, 16
        %v4203 = vpop.permute.xlu0 %4202
        %4204 = vrot.lane.b32.xlu0 %v3096, 16
        %v4205 = vpop.permute.xlu0 %4204
        %4206 = vrot.lane.b32.xlu0 %v3097, 16
        %v4207 = vpop.permute.xlu0 %4206
        %4208 = vrot.lane.b32.xlu0 %v3098, 16
        %v4209 = vpop.permute.xlu0 %4208
        %4210 = vrot.lane.b32.xlu0 %v3099, 16
        %v4211 = vpop.permute.xlu0 %4210
        %4212 = vrot.lane.b32.xlu0 %v3100, 16
        %v4213 = vpop.permute.xlu0 %4212
        %4214 = vrot.lane.b32.xlu0 %v3101, 16
        %v4215 = vpop.permute.xlu0 %4214
        %4216 = vrot.lane.b32.xlu0 %v3102, 16
        %v4217 = vpop.permute.xlu0 %4216
        %4218 = vrot.lane.b32.xlu0 %v3103, 16
        %v4219 = vpop.permute.xlu0 %4218
        %4220 = vrot.lane.b32.xlu0 %v3104, 16
        %v4221 = vpop.permute.xlu0 %4220
        %4222 = vrot.lane.b32.xlu0 %v3105, 16
        %v4223 = vpop.permute.xlu0 %4222
        %4224 = vrot.lane.b32.xlu0 %v3106, 16
        %v4225 = vpop.permute.xlu0 %4224
        %4226 = vrot.lane.b32.xlu0 %v3107, 16
        %v4227 = vpop.permute.xlu0 %4226
        %4228 = vrot.lane.b32.xlu0 %v3108, 16
        %v4229 = vpop.permute.xlu0 %4228
        %4230 = vrot.lane.b32.xlu0 %v3109, 16
        %v4231 = vpop.permute.xlu0 %4230
        %4232 = vrot.lane.b32.xlu0 %v3110, 16
        %v4233 = vpop.permute.xlu0 %4232
        %4298 = vrot.lane.b32.xlu0 %v3112, 20
        %v4299 = vpop.permute.xlu0 %4298
        %4300 = vrot.lane.b32.xlu0 %v3113, 20
        %v4301 = vpop.permute.xlu0 %4300
        %4302 = vrot.lane.b32.xlu0 %v3114, 20
        %v4303 = vpop.permute.xlu0 %4302
        %4304 = vrot.lane.b32.xlu0 %v3115, 20
        %v4305 = vpop.permute.xlu0 %4304
        %4306 = vrot.lane.b32.xlu0 %v3116, 20
        %v4307 = vpop.permute.xlu0 %4306
        %4308 = vrot.lane.b32.xlu0 %v3117, 20
        %v4309 = vpop.permute.xlu0 %4308
        %4310 = vrot.lane.b32.xlu0 %v3118, 20
        %v4311 = vpop.permute.xlu0 %4310
        %4312 = vrot.lane.b32.xlu0 %v3119, 20
        %v4313 = vpop.permute.xlu0 %4312
        %4314 = vrot.lane.b32.xlu0 %v3120, 20
        %v4315 = vpop.permute.xlu0 %4314
        %4316 = vrot.lane.b32.xlu0 %v3121, 20
        %v4317 = vpop.permute.xlu0 %4316
        %4318 = vrot.lane.b32.xlu0 %v3122, 20
        %v4319 = vpop.permute.xlu0 %4318
        %4320 = vrot.lane.b32.xlu0 %v3123, 20
        %v4321 = vpop.permute.xlu0 %4320
        %4322 = vrot.lane.b32.xlu0 %v3124, 20
        %v4323 = vpop.permute.xlu0 %4322
        %4324 = vrot.lane.b32.xlu0 %v3125, 20
        %v4325 = vpop.permute.xlu0 %4324
        %4326 = vrot.lane.b32.xlu0 %v3126, 20
        %v4327 = vpop.permute.xlu0 %4326
        %4328 = vrot.lane.b32.xlu0 %v3127, 20
        %v4329 = vpop.permute.xlu0 %4328
        %4330 = vrot.lane.b32.xlu0 %v3128, 20
        %v4331 = vpop.permute.xlu0 %4330
        %4332 = vrot.lane.b32.xlu0 %v3129, 20
        %v4333 = vpop.permute.xlu0 %4332
        %4334 = vrot.lane.b32.xlu0 %v3130, 20
        %v4335 = vpop.permute.xlu0 %4334
        %4336 = vrot.lane.b32.xlu0 %v3131, 20
        %v4337 = vpop.permute.xlu0 %4336
        %4338 = vrot.lane.b32.xlu0 %v3132, 20
        %v4339 = vpop.permute.xlu0 %4338
        %4340 = vrot.lane.b32.xlu0 %v3133, 20
        %v4341 = vpop.permute.xlu0 %4340
        %4342 = vrot.lane.b32.xlu0 %v3134, 20
        %v4343 = vpop.permute.xlu0 %4342
        %4344 = vrot.lane.b32.xlu0 %v3135, 20
        %v4345 = vpop.permute.xlu0 %4344
        %4346 = vrot.lane.b32.xlu0 %v3136, 20
        %v4347 = vpop.permute.xlu0 %4346
        %4348 = vrot.lane.b32.xlu0 %v3137, 20
        %v4349 = vpop.permute.xlu0 %4348
        %4350 = vrot.lane.b32.xlu0 %v3138, 20
        %v4351 = vpop.permute.xlu0 %4350
        %4352 = vrot.lane.b32.xlu0 %v3139, 20
        %v4353 = vpop.permute.xlu0 %4352
        %4354 = vrot.lane.b32.xlu0 %v3140, 20
        %v4355 = vpop.permute.xlu0 %4354
        %4356 = vrot.lane.b32.xlu0 %v3141, 20
        %v4357 = vpop.permute.xlu0 %4356
        %4358 = vrot.lane.b32.xlu0 %v3142, 20
        %v4359 = vpop.permute.xlu0 %4358
        %4360 = vrot.lane.b32.xlu0 %v3143, 20
        %v4361 = vpop.permute.xlu0 %4360
        %4426 = vrot.lane.b32.xlu0 %v3144, 24
        %v4427 = vpop.permute.xlu0 %4426
        %4428 = vrot.lane.b32.xlu0 %v3145, 24
        %v4429 = vpop.permute.xlu0 %4428
        %4430 = vrot.lane.b32.xlu0 %v3146, 24
        %v4431 = vpop.permute.xlu0 %4430
        %4432 = vrot.lane.b32.xlu0 %v3147, 24
        %v4433 = vpop.permute.xlu0 %4432
        %4434 = vrot.lane.b32.xlu0 %v3148, 24
        %v4435 = vpop.permute.xlu0 %4434
        %4436 = vrot.lane.b32.xlu0 %v3149, 24
        %v4437 = vpop.permute.xlu0 %4436
        %4438 = vrot.lane.b32.xlu0 %v3150, 24
        %v4439 = vpop.permute.xlu0 %4438
        %4440 = vrot.lane.b32.xlu0 %v3151, 24
        %v4441 = vpop.permute.xlu0 %4440
        %4442 = vrot.lane.b32.xlu0 %v3152, 24
        %v4443 = vpop.permute.xlu0 %4442
        %4444 = vrot.lane.b32.xlu0 %v3153, 24
        %v4445 = vpop.permute.xlu0 %4444
        %4446 = vrot.lane.b32.xlu0 %v3154, 24
        %v4447 = vpop.permute.xlu0 %4446
        %4448 = vrot.lane.b32.xlu0 %v3155, 24
        %v4449 = vpop.permute.xlu0 %4448
        %4450 = vrot.lane.b32.xlu0 %v3156, 24
        %v4451 = vpop.permute.xlu0 %4450
        %4452 = vrot.lane.b32.xlu0 %v3157, 24
        %v4453 = vpop.permute.xlu0 %4452
        %4454 = vrot.lane.b32.xlu0 %v3158, 24
        %v4455 = vpop.permute.xlu0 %4454
        %4456 = vrot.lane.b32.xlu0 %v3159, 24
        %v4457 = vpop.permute.xlu0 %4456
        %4458 = vrot.lane.b32.xlu0 %v3160, 24
        %v4459 = vpop.permute.xlu0 %4458
        %4460 = vrot.lane.b32.xlu0 %v3161, 24
        %v4461 = vpop.permute.xlu0 %4460
        %4462 = vrot.lane.b32.xlu0 %v3162, 24
        %v4463 = vpop.permute.xlu0 %4462
        %4464 = vrot.lane.b32.xlu0 %v3163, 24
        %v4465 = vpop.permute.xlu0 %4464
        %4466 = vrot.lane.b32.xlu0 %v3164, 24
        %v4467 = vpop.permute.xlu0 %4466
        %4468 = vrot.lane.b32.xlu0 %v3165, 24
        %v4469 = vpop.permute.xlu0 %4468
        %4470 = vrot.lane.b32.xlu0 %v3166, 24
        %v4471 = vpop.permute.xlu0 %4470
        %4472 = vrot.lane.b32.xlu0 %v3167, 24
        %v4473 = vpop.permute.xlu0 %4472
        %4474 = vrot.lane.b32.xlu0 %v3168, 24
        %v4475 = vpop.permute.xlu0 %4474
        %4476 = vrot.lane.b32.xlu0 %v3169, 24
        %v4477 = vpop.permute.xlu0 %4476
        %4478 = vrot.lane.b32.xlu0 %v3170, 24
        %v4479 = vpop.permute.xlu0 %4478
        %4480 = vrot.lane.b32.xlu0 %v3171, 24
        %v4481 = vpop.permute.xlu0 %4480
        %4482 = vrot.lane.b32.xlu0 %v3172, 24
        %v4483 = vpop.permute.xlu0 %4482
        %4484 = vrot.lane.b32.xlu0 %v3173, 24
        %v4485 = vpop.permute.xlu0 %4484
        %4486 = vrot.lane.b32.xlu0 %v3174, 24
        %v4487 = vpop.permute.xlu0 %4486
        %4488 = vrot.lane.b32.xlu0 %v3175, 24
        %v4489 = vpop.permute.xlu0 %4488
        %4554 = vrot.lane.b32.xlu0 %v3176, 28
        %v4555 = vpop.permute.xlu0 %4554
        %4556 = vrot.lane.b32.xlu0 %v3177, 28
        %v4557 = vpop.permute.xlu0 %4556
        %4558 = vrot.lane.b32.xlu0 %v3178, 28
        %v4559 = vpop.permute.xlu0 %4558
        %4560 = vrot.lane.b32.xlu0 %v3179, 28
        %v4561 = vpop.permute.xlu0 %4560
        %4562 = vrot.lane.b32.xlu0 %v3180, 28
        %v4563 = vpop.permute.xlu0 %4562
        %4564 = vrot.lane.b32.xlu0 %v3181, 28
        %v4565 = vpop.permute.xlu0 %4564
        %4566 = vrot.lane.b32.xlu0 %v3182, 28
        %v4567 = vpop.permute.xlu0 %4566
        %4568 = vrot.lane.b32.xlu0 %v3183, 28
        %v4569 = vpop.permute.xlu0 %4568
        %4570 = vrot.lane.b32.xlu0 %v3184, 28
        %v4571 = vpop.permute.xlu0 %4570
        %4572 = vrot.lane.b32.xlu0 %v3185, 28
        %v4573 = vpop.permute.xlu0 %4572
        %4574 = vrot.lane.b32.xlu0 %v3186, 28
        %v4575 = vpop.permute.xlu0 %4574
        %4576 = vrot.lane.b32.xlu0 %v3187, 28
        %v4577 = vpop.permute.xlu0 %4576
        %4578 = vrot.lane.b32.xlu0 %v3188, 28
        %v4579 = vpop.permute.xlu0 %4578
        %4580 = vrot.lane.b32.xlu0 %v3189, 28
        %v4581 = vpop.permute.xlu0 %4580
        %4582 = vrot.lane.b32.xlu0 %v3190, 28
        %v4583 = vpop.permute.xlu0 %4582
        %4584 = vrot.lane.b32.xlu0 %v3191, 28
        %v4585 = vpop.permute.xlu0 %4584
        %4586 = vrot.lane.b32.xlu0 %v3192, 28
        %v4587 = vpop.permute.xlu0 %4586
        %4588 = vrot.lane.b32.xlu0 %v3193, 28
        %v4589 = vpop.permute.xlu0 %4588
        %4590 = vrot.lane.b32.xlu0 %v3194, 28
        %v4591 = vpop.permute.xlu0 %4590
        %4592 = vrot.lane.b32.xlu0 %v3195, 28
        %v4593 = vpop.permute.xlu0 %4592
        %4594 = vrot.lane.b32.xlu0 %v3196, 28
        %v4595 = vpop.permute.xlu0 %4594
        %4596 = vrot.lane.b32.xlu0 %v3197, 28
        %v4597 = vpop.permute.xlu0 %4596
        %4598 = vrot.lane.b32.xlu0 %v3198, 28
        %v4599 = vpop.permute.xlu0 %4598
        %4600 = vrot.lane.b32.xlu0 %v3199, 28
        %v4601 = vpop.permute.xlu0 %4600
        %4602 = vrot.lane.b32.xlu0 %v3200, 28
        %v4603 = vpop.permute.xlu0 %4602
        %4604 = vrot.lane.b32.xlu0 %v3201, 28
        %v4605 = vpop.permute.xlu0 %4604
        %4606 = vrot.lane.b32.xlu0 %v3202, 28
        %v4607 = vpop.permute.xlu0 %4606
        %4608 = vrot.lane.b32.xlu0 %v3203, 28
        %v4609 = vpop.permute.xlu0 %4608
        %4610 = vrot.lane.b32.xlu0 %v3204, 28
        %v4611 = vpop.permute.xlu0 %4610
        %4612 = vrot.lane.b32.xlu0 %v3205, 28
        %v4613 = vpop.permute.xlu0 %4612
        %4614 = vrot.lane.b32.xlu0 %v3206, 28
        %v4615 = vpop.permute.xlu0 %4614
        %4616 = vrot.lane.b32.xlu0 %v3207, 28
        %v4617 = vpop.permute.xlu0 %4616
        %4682 = vrot.lane.b32.xlu0 %v3208, 32
        %v4683 = vpop.permute.xlu0 %4682
        %4684 = vrot.lane.b32.xlu0 %v3209, 32
        %v4685 = vpop.permute.xlu0 %4684
        %4686 = vrot.lane.b32.xlu0 %v3210, 32
        %v4687 = vpop.permute.xlu0 %4686
        %4688 = vrot.lane.b32.xlu0 %v3211, 32
        %v4689 = vpop.permute.xlu0 %4688
        %4690 = vrot.lane.b32.xlu0 %v3212, 32
        %v4691 = vpop.permute.xlu0 %4690
        %4692 = vrot.lane.b32.xlu0 %v3213, 32
        %v4693 = vpop.permute.xlu0 %4692
        %4694 = vrot.lane.b32.xlu0 %v3214, 32
        %v4695 = vpop.permute.xlu0 %4694
        %4696 = vrot.lane.b32.xlu0 %v3215, 32
        %v4697 = vpop.permute.xlu0 %4696
        %4698 = vrot.lane.b32.xlu0 %v3216, 32
        %v4699 = vpop.permute.xlu0 %4698
        %4700 = vrot.lane.b32.xlu0 %v3217, 32
        %v4701 = vpop.permute.xlu0 %4700
        %4702 = vrot.lane.b32.xlu0 %v3218, 32
        %v4703 = vpop.permute.xlu0 %4702
        %4704 = vrot.lane.b32.xlu0 %v3219, 32
        %v4705 = vpop.permute.xlu0 %4704
        %4706 = vrot.lane.b32.xlu0 %v3220, 32
        %v4707 = vpop.permute.xlu0 %4706
        %4708 = vrot.lane.b32.xlu0 %v3221, 32
        %v4709 = vpop.permute.xlu0 %4708
        %4710 = vrot.lane.b32.xlu0 %v3222, 32
        %v4711 = vpop.permute.xlu0 %4710
        %4712 = vrot.lane.b32.xlu0 %v3223, 32
        %v4713 = vpop.permute.xlu0 %4712
        %4714 = vrot.lane.b32.xlu0 %v3224, 32
        %v4715 = vpop.permute.xlu0 %4714
        %4716 = vrot.lane.b32.xlu0 %v3225, 32
        %v4717 = vpop.permute.xlu0 %4716
        %4718 = vrot.lane.b32.xlu0 %v3226, 32
        %v4719 = vpop.permute.xlu0 %4718
        %4720 = vrot.lane.b32.xlu0 %v3227, 32
        %v4721 = vpop.permute.xlu0 %4720
        %4722 = vrot.lane.b32.xlu0 %v3228, 32
        %v4723 = vpop.permute.xlu0 %4722
        %4724 = vrot.lane.b32.xlu0 %v3229, 32
        %v4725 = vpop.permute.xlu0 %4724
        %4726 = vrot.lane.b32.xlu0 %v3230, 32
        %v4727 = vpop.permute.xlu0 %4726
        %4728 = vrot.lane.b32.xlu0 %v3231, 32
        %v4729 = vpop.permute.xlu0 %4728
        %4730 = vrot.lane.b32.xlu0 %v3232, 32
        %v4731 = vpop.permute.xlu0 %4730
        %4732 = vrot.lane.b32.xlu0 %v3233, 32
        %v4733 = vpop.permute.xlu0 %4732
        %4734 = vrot.lane.b32.xlu0 %v3234, 32
        %v4735 = vpop.permute.xlu0 %4734
        %4736 = vrot.lane.b32.xlu0 %v3235, 32
        %v4737 = vpop.permute.xlu0 %4736
        %4738 = vrot.lane.b32.xlu0 %v3236, 32
        %v4739 = vpop.permute.xlu0 %4738
        %4740 = vrot.lane.b32.xlu0 %v3237, 32
        %v4741 = vpop.permute.xlu0 %4740
        %4742 = vrot.lane.b32.xlu0 %v3238, 32
        %v4743 = vpop.permute.xlu0 %4742
        %4744 = vrot.lane.b32.xlu0 %v3239, 32
        %v4745 = vpop.permute.xlu0 %4744
        %4810 = vrot.lane.b32.xlu0 %v3240, 36
        %v4811 = vpop.permute.xlu0 %4810
        %4812 = vrot.lane.b32.xlu0 %v3241, 36
        %v4813 = vpop.permute.xlu0 %4812
        %4814 = vrot.lane.b32.xlu0 %v3242, 36
        %v4815 = vpop.permute.xlu0 %4814
        %4816 = vrot.lane.b32.xlu0 %v3243, 36
        %v4817 = vpop.permute.xlu0 %4816
        %4818 = vrot.lane.b32.xlu0 %v3244, 36
        %v4819 = vpop.permute.xlu0 %4818
        %4820 = vrot.lane.b32.xlu0 %v3245, 36
        %v4821 = vpop.permute.xlu0 %4820
        %4822 = vrot.lane.b32.xlu0 %v3246, 36
        %v4823 = vpop.permute.xlu0 %4822
        %4824 = vrot.lane.b32.xlu0 %v3247, 36
        %v4825 = vpop.permute.xlu0 %4824
        %4826 = vrot.lane.b32.xlu0 %v3248, 36
        %v4827 = vpop.permute.xlu0 %4826
        %4828 = vrot.lane.b32.xlu0 %v3249, 36
        %v4829 = vpop.permute.xlu0 %4828
        %4830 = vrot.lane.b32.xlu0 %v3250, 36
        %v4831 = vpop.permute.xlu0 %4830
        %4832 = vrot.lane.b32.xlu0 %v3251, 36
        %v4833 = vpop.permute.xlu0 %4832
        %4834 = vrot.lane.b32.xlu0 %v3252, 36
        %v4835 = vpop.permute.xlu0 %4834
        %4836 = vrot.lane.b32.xlu0 %v3253, 36
        %v4837 = vpop.permute.xlu0 %4836
        %4838 = vrot.lane.b32.xlu0 %v3254, 36
        %v4839 = vpop.permute.xlu0 %4838
        %4840 = vrot.lane.b32.xlu0 %v3255, 36
        %v4841 = vpop.permute.xlu0 %4840
        %4842 = vrot.lane.b32.xlu0 %v3256, 36
        %v4843 = vpop.permute.xlu0 %4842
        %4844 = vrot.lane.b32.xlu0 %v3257, 36
        %v4845 = vpop.permute.xlu0 %4844
        %4846 = vrot.lane.b32.xlu0 %v3258, 36
        %v4847 = vpop.permute.xlu0 %4846
        %4848 = vrot.lane.b32.xlu0 %v3259, 36
        %v4849 = vpop.permute.xlu0 %4848
        %4850 = vrot.lane.b32.xlu0 %v3260, 36
        %v4851 = vpop.permute.xlu0 %4850
        %4852 = vrot.lane.b32.xlu0 %v3261, 36
        %v4853 = vpop.permute.xlu0 %4852
        %4854 = vrot.lane.b32.xlu0 %v3262, 36
        %v4855 = vpop.permute.xlu0 %4854
        %4856 = vrot.lane.b32.xlu0 %v3263, 36
        %v4857 = vpop.permute.xlu0 %4856
        %4858 = vrot.lane.b32.xlu0 %v3264, 36
        %v4859 = vpop.permute.xlu0 %4858
        %4860 = vrot.lane.b32.xlu0 %v3265, 36
        %v4861 = vpop.permute.xlu0 %4860
        %4862 = vrot.lane.b32.xlu0 %v3266, 36
        %v4863 = vpop.permute.xlu0 %4862
        %4864 = vrot.lane.b32.xlu0 %v3267, 36
        %v4865 = vpop.permute.xlu0 %4864
        %4866 = vrot.lane.b32.xlu0 %v3268, 36
        %v4867 = vpop.permute.xlu0 %4866
        %4868 = vrot.lane.b32.xlu0 %v3269, 36
        %v4869 = vpop.permute.xlu0 %4868
        %4870 = vrot.lane.b32.xlu0 %v3270, 36
        %v4871 = vpop.permute.xlu0 %4870
        %4872 = vrot.lane.b32.xlu0 %v3271, 36
        %v4873 = vpop.permute.xlu0 %4872
        %4938 = vrot.lane.b32.xlu0 %v3272, 40
        %v4939 = vpop.permute.xlu0 %4938
        %4940 = vrot.lane.b32.xlu0 %v3273, 40
        %v4941 = vpop.permute.xlu0 %4940
        %4942 = vrot.lane.b32.xlu0 %v3274, 40
        %v4943 = vpop.permute.xlu0 %4942
        %4944 = vrot.lane.b32.xlu0 %v3275, 40
        %v4945 = vpop.permute.xlu0 %4944
        %4946 = vrot.lane.b32.xlu0 %v3276, 40
        %v4947 = vpop.permute.xlu0 %4946
        %4948 = vrot.lane.b32.xlu0 %v3277, 40
        %v4949 = vpop.permute.xlu0 %4948
        %4950 = vrot.lane.b32.xlu0 %v3278, 40
        %v4951 = vpop.permute.xlu0 %4950
        %4952 = vrot.lane.b32.xlu0 %v3279, 40
        %v4953 = vpop.permute.xlu0 %4952
        %4954 = vrot.lane.b32.xlu0 %v3280, 40
        %v4955 = vpop.permute.xlu0 %4954
        %4956 = vrot.lane.b32.xlu0 %v3281, 40
        %v4957 = vpop.permute.xlu0 %4956
        %4958 = vrot.lane.b32.xlu0 %v3282, 40
        %v4959 = vpop.permute.xlu0 %4958
        %4960 = vrot.lane.b32.xlu0 %v3283, 40
        %v4961 = vpop.permute.xlu0 %4960
        %4962 = vrot.lane.b32.xlu0 %v3284, 40
        %v4963 = vpop.permute.xlu0 %4962
        %4964 = vrot.lane.b32.xlu0 %v3285, 40
        %v4965 = vpop.permute.xlu0 %4964
        %4966 = vrot.lane.b32.xlu0 %v3286, 40
        %v4967 = vpop.permute.xlu0 %4966
        %4968 = vrot.lane.b32.xlu0 %v3287, 40
        %v4969 = vpop.permute.xlu0 %4968
        %4970 = vrot.lane.b32.xlu0 %v3288, 40
        %v4971 = vpop.permute.xlu0 %4970
        %4972 = vrot.lane.b32.xlu0 %v3289, 40
        %v4973 = vpop.permute.xlu0 %4972
        %4974 = vrot.lane.b32.xlu0 %v3290, 40
        %v4975 = vpop.permute.xlu0 %4974
        %4976 = vrot.lane.b32.xlu0 %v3291, 40
        %v4977 = vpop.permute.xlu0 %4976
        %4978 = vrot.lane.b32.xlu0 %v3292, 40
        %v4979 = vpop.permute.xlu0 %4978
        %4980 = vrot.lane.b32.xlu0 %v3293, 40
        %v4981 = vpop.permute.xlu0 %4980
        %4982 = vrot.lane.b32.xlu0 %v3294, 40
        %v4983 = vpop.permute.xlu0 %4982
        %4984 = vrot.lane.b32.xlu0 %v3295, 40
        %v4985 = vpop.permute.xlu0 %4984
        %4986 = vrot.lane.b32.xlu0 %v3296, 40
        %v4987 = vpop.permute.xlu0 %4986
        %4988 = vrot.lane.b32.xlu0 %v3297, 40
        %v4989 = vpop.permute.xlu0 %4988
        %4990 = vrot.lane.b32.xlu0 %v3298, 40
        %v4991 = vpop.permute.xlu0 %4990
        %4992 = vrot.lane.b32.xlu0 %v3299, 40
        %v4993 = vpop.permute.xlu0 %4992
        %4994 = vrot.lane.b32.xlu0 %v3300, 40
        %v4995 = vpop.permute.xlu0 %4994
        %4996 = vrot.lane.b32.xlu0 %v3301, 40
        %v4997 = vpop.permute.xlu0 %4996
        %4998 = vrot.lane.b32.xlu0 %v3302, 40
        %v4999 = vpop.permute.xlu0 %4998
        %5000 = vrot.lane.b32.xlu0 %v3303, 40
        %v5001 = vpop.permute.xlu0 %5000
        %5066 = vrot.lane.b32.xlu0 %v3304, 44
        %v5067 = vpop.permute.xlu0 %5066
        %5068 = vrot.lane.b32.xlu0 %v3305, 44
        %v5069 = vpop.permute.xlu0 %5068
        %5070 = vrot.lane.b32.xlu0 %v3306, 44
        %v5071 = vpop.permute.xlu0 %5070
        %5072 = vrot.lane.b32.xlu0 %v3307, 44
        %v5073 = vpop.permute.xlu0 %5072
        %5074 = vrot.lane.b32.xlu0 %v3308, 44
        %v5075 = vpop.permute.xlu0 %5074
        %5076 = vrot.lane.b32.xlu0 %v3309, 44
        %v5077 = vpop.permute.xlu0 %5076
        %5078 = vrot.lane.b32.xlu0 %v3310, 44
        %v5079 = vpop.permute.xlu0 %5078
        %5080 = vrot.lane.b32.xlu0 %v3311, 44
        %v5081 = vpop.permute.xlu0 %5080
        %5082 = vrot.lane.b32.xlu0 %v3312, 44
        %v5083 = vpop.permute.xlu0 %5082
        %5084 = vrot.lane.b32.xlu0 %v3313, 44
        %v5085 = vpop.permute.xlu0 %5084
        %5086 = vrot.lane.b32.xlu0 %v3314, 44
        %v5087 = vpop.permute.xlu0 %5086
        %5088 = vrot.lane.b32.xlu0 %v3315, 44
        %v5089 = vpop.permute.xlu0 %5088
        %5090 = vrot.lane.b32.xlu0 %v3316, 44
        %v5091 = vpop.permute.xlu0 %5090
        %5092 = vrot.lane.b32.xlu0 %v3317, 44
        %v5093 = vpop.permute.xlu0 %5092
        %5094 = vrot.lane.b32.xlu0 %v3318, 44
        %v5095 = vpop.permute.xlu0 %5094
        %5096 = vrot.lane.b32.xlu0 %v3319, 44
        %v5097 = vpop.permute.xlu0 %5096
        %5098 = vrot.lane.b32.xlu0 %v3320, 44
        %v5099 = vpop.permute.xlu0 %5098
        %5100 = vrot.lane.b32.xlu0 %v3321, 44
        %v5101 = vpop.permute.xlu0 %5100
        %5102 = vrot.lane.b32.xlu0 %v3322, 44
        %v5103 = vpop.permute.xlu0 %5102
        %5104 = vrot.lane.b32.xlu0 %v3323, 44
        %v5105 = vpop.permute.xlu0 %5104
        %5106 = vrot.lane.b32.xlu0 %v3324, 44
        %v5107 = vpop.permute.xlu0 %5106
        %5108 = vrot.lane.b32.xlu0 %v3325, 44
        %v5109 = vpop.permute.xlu0 %5108
        %5110 = vrot.lane.b32.xlu0 %v3326, 44
        %v5111 = vpop.permute.xlu0 %5110
        %5112 = vrot.lane.b32.xlu0 %v3327, 44
        %v5113 = vpop.permute.xlu0 %5112
        %5114 = vrot.lane.b32.xlu0 %v3328, 44
        %v5115 = vpop.permute.xlu0 %5114
        %5116 = vrot.lane.b32.xlu0 %v3329, 44
        %v5117 = vpop.permute.xlu0 %5116
        %5118 = vrot.lane.b32.xlu0 %v3330, 44
        %v5119 = vpop.permute.xlu0 %5118
        %5120 = vrot.lane.b32.xlu0 %v3331, 44
        %v5121 = vpop.permute.xlu0 %5120
        %5122 = vrot.lane.b32.xlu0 %v3332, 44
        %v5123 = vpop.permute.xlu0 %5122
        %5124 = vrot.lane.b32.xlu0 %v3333, 44
        %v5125 = vpop.permute.xlu0 %5124
        %5126 = vrot.lane.b32.xlu0 %v3334, 44
        %v5127 = vpop.permute.xlu0 %5126
        %5128 = vrot.lane.b32.xlu0 %v3335, 44
        %v5129 = vpop.permute.xlu0 %5128
        %5194 = vrot.lane.b32.xlu0 %v3336, 48
        %v5195 = vpop.permute.xlu0 %5194
        %5196 = vrot.lane.b32.xlu0 %v3337, 48
        %v5197 = vpop.permute.xlu0 %5196
        %5198 = vrot.lane.b32.xlu0 %v3338, 48
        %v5199 = vpop.permute.xlu0 %5198
        %5200 = vrot.lane.b32.xlu0 %v3339, 48
        %v5201 = vpop.permute.xlu0 %5200
        %5202 = vrot.lane.b32.xlu0 %v3340, 48
        %v5203 = vpop.permute.xlu0 %5202
        %5204 = vrot.lane.b32.xlu0 %v3341, 48
        %v5205 = vpop.permute.xlu0 %5204
        %5206 = vrot.lane.b32.xlu0 %v3342, 48
        %v5207 = vpop.permute.xlu0 %5206
        %5208 = vrot.lane.b32.xlu0 %v3343, 48
        %v5209 = vpop.permute.xlu0 %5208
        %5210 = vrot.lane.b32.xlu0 %v3344, 48
        %v5211 = vpop.permute.xlu0 %5210
        %5212 = vrot.lane.b32.xlu0 %v3345, 48
        %v5213 = vpop.permute.xlu0 %5212
        %5214 = vrot.lane.b32.xlu0 %v3346, 48
        %v5215 = vpop.permute.xlu0 %5214
        %5216 = vrot.lane.b32.xlu0 %v3347, 48
        %v5217 = vpop.permute.xlu0 %5216
        %5218 = vrot.lane.b32.xlu0 %v3348, 48
        %v5219 = vpop.permute.xlu0 %5218
        %5220 = vrot.lane.b32.xlu0 %v3349, 48
        %v5221 = vpop.permute.xlu0 %5220
        %5222 = vrot.lane.b32.xlu0 %v3350, 48
        %v5223 = vpop.permute.xlu0 %5222
        %5224 = vrot.lane.b32.xlu0 %v3351, 48
        %v5225 = vpop.permute.xlu0 %5224
        %5226 = vrot.lane.b32.xlu0 %v3352, 48
        %v5227 = vpop.permute.xlu0 %5226
        %5228 = vrot.lane.b32.xlu0 %v3353, 48
        %v5229 = vpop.permute.xlu0 %5228
        %5230 = vrot.lane.b32.xlu0 %v3354, 48
        %v5231 = vpop.permute.xlu0 %5230
        %5232 = vrot.lane.b32.xlu0 %v3355, 48
        %v5233 = vpop.permute.xlu0 %5232
        %5234 = vrot.lane.b32.xlu0 %v3356, 48
        %v5235 = vpop.permute.xlu0 %5234
        %5236 = vrot.lane.b32.xlu0 %v3357, 48
        %v5237 = vpop.permute.xlu0 %5236
        %5238 = vrot.lane.b32.xlu0 %v3358, 48
        %v5239 = vpop.permute.xlu0 %5238
        %5240 = vrot.lane.b32.xlu0 %v3359, 48
        %v5241 = vpop.permute.xlu0 %5240
        %5242 = vrot.lane.b32.xlu0 %v3360, 48
        %v5243 = vpop.permute.xlu0 %5242
        %5244 = vrot.lane.b32.xlu0 %v3361, 48
        %v5245 = vpop.permute.xlu0 %5244
        %5246 = vrot.lane.b32.xlu0 %v3362, 48
        %v5247 = vpop.permute.xlu0 %5246
        %5248 = vrot.lane.b32.xlu0 %v3363, 48
        %v5249 = vpop.permute.xlu0 %5248
        %5250 = vrot.lane.b32.xlu0 %v3364, 48
        %v5251 = vpop.permute.xlu0 %5250
        %5252 = vrot.lane.b32.xlu0 %v3365, 48
        %v5253 = vpop.permute.xlu0 %5252
        %5254 = vrot.lane.b32.xlu0 %v3366, 48
        %v5255 = vpop.permute.xlu0 %5254
        %5256 = vrot.lane.b32.xlu0 %v3367, 48
        %v5257 = vpop.permute.xlu0 %5256
        %5322 = vrot.lane.b32.xlu0 %v3368, 52
        %v5323 = vpop.permute.xlu0 %5322
        %5324 = vrot.lane.b32.xlu0 %v3369, 52
        %v5325 = vpop.permute.xlu0 %5324
        %5326 = vrot.lane.b32.xlu0 %v3370, 52
        %v5327 = vpop.permute.xlu0 %5326
        %5328 = vrot.lane.b32.xlu0 %v3371, 52
        %v5329 = vpop.permute.xlu0 %5328
        %5330 = vrot.lane.b32.xlu0 %v3372, 52
        %v5331 = vpop.permute.xlu0 %5330
        %5332 = vrot.lane.b32.xlu0 %v3373, 52
        %v5333 = vpop.permute.xlu0 %5332
        %5334 = vrot.lane.b32.xlu0 %v3374, 52
        %v5335 = vpop.permute.xlu0 %5334
        %5336 = vrot.lane.b32.xlu0 %v3375, 52
        %v5337 = vpop.permute.xlu0 %5336
        %5338 = vrot.lane.b32.xlu0 %v3376, 52
        %v5339 = vpop.permute.xlu0 %5338
        %5340 = vrot.lane.b32.xlu0 %v3377, 52
        %v5341 = vpop.permute.xlu0 %5340
        %5342 = vrot.lane.b32.xlu0 %v3378, 52
        %v5343 = vpop.permute.xlu0 %5342
        %5344 = vrot.lane.b32.xlu0 %v3379, 52
        %v5345 = vpop.permute.xlu0 %5344
        %5346 = vrot.lane.b32.xlu0 %v3380, 52
        %v5347 = vpop.permute.xlu0 %5346
        %5348 = vrot.lane.b32.xlu0 %v3381, 52
        %v5349 = vpop.permute.xlu0 %5348
        %5350 = vrot.lane.b32.xlu0 %v3382, 52
        %v5351 = vpop.permute.xlu0 %5350
        %5352 = vrot.lane.b32.xlu0 %v3383, 52
        %v5353 = vpop.permute.xlu0 %5352
        %5354 = vrot.lane.b32.xlu0 %v3384, 52
        %v5355 = vpop.permute.xlu0 %5354
        %5356 = vrot.lane.b32.xlu0 %v3385, 52
        %v5357 = vpop.permute.xlu0 %5356
        %5358 = vrot.lane.b32.xlu0 %v3386, 52
        %v5359 = vpop.permute.xlu0 %5358
        %5360 = vrot.lane.b32.xlu0 %v3387, 52
        %v5361 = vpop.permute.xlu0 %5360
        %5362 = vrot.lane.b32.xlu0 %v3388, 52
        %v5363 = vpop.permute.xlu0 %5362
        %5364 = vrot.lane.b32.xlu0 %v3389, 52
        %v5365 = vpop.permute.xlu0 %5364
        %5366 = vrot.lane.b32.xlu0 %v3390, 52
        %v5367 = vpop.permute.xlu0 %5366
        %5368 = vrot.lane.b32.xlu0 %v3391, 52
        %v5369 = vpop.permute.xlu0 %5368
        %5370 = vrot.lane.b32.xlu0 %v3392, 52
        %v5371 = vpop.permute.xlu0 %5370
        %5372 = vrot.lane.b32.xlu0 %v3393, 52
        %v5373 = vpop.permute.xlu0 %5372
        %5374 = vrot.lane.b32.xlu0 %v3394, 52
        %v5375 = vpop.permute.xlu0 %5374
        %5376 = vrot.lane.b32.xlu0 %v3395, 52
        %v5377 = vpop.permute.xlu0 %5376
        %5378 = vrot.lane.b32.xlu0 %v3396, 52
        %v5379 = vpop.permute.xlu0 %5378
        %5380 = vrot.lane.b32.xlu0 %v3397, 52
        %v5381 = vpop.permute.xlu0 %5380
        %5382 = vrot.lane.b32.xlu0 %v3398, 52
        %v5383 = vpop.permute.xlu0 %5382
        %5384 = vrot.lane.b32.xlu0 %v3399, 52
        %v5385 = vpop.permute.xlu0 %5384
        %5450 = vrot.lane.b32.xlu0 %v3400, 56
        %v5451 = vpop.permute.xlu0 %5450
        %5452 = vrot.lane.b32.xlu0 %v3401, 56
        %v5453 = vpop.permute.xlu0 %5452
        %5454 = vrot.lane.b32.xlu0 %v3402, 56
        %v5455 = vpop.permute.xlu0 %5454
        %5456 = vrot.lane.b32.xlu0 %v3403, 56
        %v5457 = vpop.permute.xlu0 %5456
        %5458 = vrot.lane.b32.xlu0 %v3404, 56
        %v5459 = vpop.permute.xlu0 %5458
        %5460 = vrot.lane.b32.xlu0 %v3405, 56
        %v5461 = vpop.permute.xlu0 %5460
        %5462 = vrot.lane.b32.xlu0 %v3406, 56
        %v5463 = vpop.permute.xlu0 %5462
        %5464 = vrot.lane.b32.xlu0 %v3407, 56
        %v5465 = vpop.permute.xlu0 %5464
        %5466 = vrot.lane.b32.xlu0 %v3408, 56
        %v5467 = vpop.permute.xlu0 %5466
        %5468 = vrot.lane.b32.xlu0 %v3409, 56
        %v5469 = vpop.permute.xlu0 %5468
        %5470 = vrot.lane.b32.xlu0 %v3410, 56
        %v5471 = vpop.permute.xlu0 %5470
        %5472 = vrot.lane.b32.xlu0 %v3411, 56
        %v5473 = vpop.permute.xlu0 %5472
        %5474 = vrot.lane.b32.xlu0 %v3412, 56
        %v5475 = vpop.permute.xlu0 %5474
        %5476 = vrot.lane.b32.xlu0 %v3413, 56
        %v5477 = vpop.permute.xlu0 %5476
        %5478 = vrot.lane.b32.xlu0 %v3414, 56
        %v5479 = vpop.permute.xlu0 %5478
        %5480 = vrot.lane.b32.xlu0 %v3415, 56
        %v5481 = vpop.permute.xlu0 %5480
        %5482 = vrot.lane.b32.xlu0 %v3416, 56
        %v5483 = vpop.permute.xlu0 %5482
        %5484 = vrot.lane.b32.xlu0 %v3417, 56
        %v5485 = vpop.permute.xlu0 %5484
        %5486 = vrot.lane.b32.xlu0 %v3418, 56
        %v5487 = vpop.permute.xlu0 %5486
        %5488 = vrot.lane.b32.xlu0 %v3419, 56
        %v5489 = vpop.permute.xlu0 %5488
        %5490 = vrot.lane.b32.xlu0 %v3420, 56
        %v5491 = vpop.permute.xlu0 %5490
        %5492 = vrot.lane.b32.xlu0 %v3421, 56
        %v5493 = vpop.permute.xlu0 %5492
        %5494 = vrot.lane.b32.xlu0 %v3422, 56
        %v5495 = vpop.permute.xlu0 %5494
        %5496 = vrot.lane.b32.xlu0 %v3423, 56
        %v5497 = vpop.permute.xlu0 %5496
        %5498 = vrot.lane.b32.xlu0 %v3424, 56
        %v5499 = vpop.permute.xlu0 %5498
        %5500 = vrot.lane.b32.xlu0 %v3425, 56
        %v5501 = vpop.permute.xlu0 %5500
        %5502 = vrot.lane.b32.xlu0 %v3426, 56
        %v5503 = vpop.permute.xlu0 %5502
        %5504 = vrot.lane.b32.xlu0 %v3427, 56
        %v5505 = vpop.permute.xlu0 %5504
        %5506 = vrot.lane.b32.xlu0 %v3428, 56
        %v5507 = vpop.permute.xlu0 %5506
        %5508 = vrot.lane.b32.xlu0 %v3429, 56
        %v5509 = vpop.permute.xlu0 %5508
        %5510 = vrot.lane.b32.xlu0 %v3430, 56
        %v5511 = vpop.permute.xlu0 %5510
        %5512 = vrot.lane.b32.xlu0 %v3431, 56
        %v5513 = vpop.permute.xlu0 %5512
        %5578 = vrot.lane.b32.xlu0 %v3433, 60
        %v5579 = vpop.permute.xlu0 %5578
        %5580 = vrot.lane.b32.xlu0 %v3434, 60
        %v5581 = vpop.permute.xlu0 %5580
        %5582 = vrot.lane.b32.xlu0 %v3435, 60
        %v5583 = vpop.permute.xlu0 %5582
        %5584 = vrot.lane.b32.xlu0 %v3436, 60
        %v5585 = vpop.permute.xlu0 %5584
        %5586 = vrot.lane.b32.xlu0 %v3437, 60
        %v5587 = vpop.permute.xlu0 %5586
        %5588 = vrot.lane.b32.xlu0 %v3438, 60
        %v5589 = vpop.permute.xlu0 %5588
        %5590 = vrot.lane.b32.xlu0 %v3439, 60
        %v5591 = vpop.permute.xlu0 %5590
        %5592 = vrot.lane.b32.xlu0 %v3440, 60
        %v5593 = vpop.permute.xlu0 %5592
        %5594 = vrot.lane.b32.xlu0 %v3441, 60
        %v5595 = vpop.permute.xlu0 %5594
        %5596 = vrot.lane.b32.xlu0 %v3442, 60
        %v5597 = vpop.permute.xlu0 %5596
        %5598 = vrot.lane.b32.xlu0 %v3443, 60
        %v5599 = vpop.permute.xlu0 %5598
        %5600 = vrot.lane.b32.xlu0 %v3444, 60
        %v5601 = vpop.permute.xlu0 %5600
        %5602 = vrot.lane.b32.xlu0 %v3445, 60
        %v5603 = vpop.permute.xlu0 %5602
        %5604 = vrot.lane.b32.xlu0 %v3446, 60
        %v5605 = vpop.permute.xlu0 %5604
        %5606 = vrot.lane.b32.xlu0 %v3447, 60
        %v5607 = vpop.permute.xlu0 %5606
        %5608 = vrot.lane.b32.xlu0 %v3448, 60
        %v5609 = vpop.permute.xlu0 %5608
        %5610 = vrot.lane.b32.xlu0 %v3449, 60
        %v5611 = vpop.permute.xlu0 %5610
        %5612 = vrot.lane.b32.xlu0 %v3450, 60
        %v5613 = vpop.permute.xlu0 %5612
        %5614 = vrot.lane.b32.xlu0 %v3451, 60
        %v5615 = vpop.permute.xlu0 %5614
        %5616 = vrot.lane.b32.xlu0 %v3452, 60
        %v5617 = vpop.permute.xlu0 %5616
        %5618 = vrot.lane.b32.xlu0 %v3453, 60
        %v5619 = vpop.permute.xlu0 %5618
        %5620 = vrot.lane.b32.xlu0 %v3454, 60
        %v5621 = vpop.permute.xlu0 %5620
        %5622 = vrot.lane.b32.xlu0 %v3455, 60
        %v5623 = vpop.permute.xlu0 %5622
        %5624 = vrot.lane.b32.xlu0 %v3456, 60
        %v5625 = vpop.permute.xlu0 %5624
        %5626 = vrot.lane.b32.xlu0 %v3457, 60
        %v5627 = vpop.permute.xlu0 %5626
        %5628 = vrot.lane.b32.xlu0 %v3458, 60
        %v5629 = vpop.permute.xlu0 %5628
        %5630 = vrot.lane.b32.xlu0 %v3459, 60
        %v5631 = vpop.permute.xlu0 %5630
        %5632 = vrot.lane.b32.xlu0 %v3460, 60
        %v5633 = vpop.permute.xlu0 %5632
        %5634 = vrot.lane.b32.xlu0 %v3461, 60
        %v5635 = vpop.permute.xlu0 %5634
        %5636 = vrot.lane.b32.xlu0 %v3462, 60
        %v5637 = vpop.permute.xlu0 %5636
        %5638 = vrot.lane.b32.xlu0 %v3463, 60
        %v5639 = vpop.permute.xlu0 %5638
        %5640 = vrot.lane.b32.xlu0 %v3464, 60
        %v5641 = vpop.permute.xlu0 %5640
        %v5674 = vsel %vm452, %v2951, %v3787
        %v5675 = vsel %vm452, %v2952, %v3789
        %v5676 = vsel %vm452, %v2953, %v3791
        %v5677 = vsel %vm452, %v2954, %v3793
        %v5678 = vsel %vm452, %v2955, %v3795
        %v5679 = vsel %vm452, %v2956, %v3797
        %v5680 = vsel %vm452, %v2957, %v3799
        %v5681 = vsel %vm452, %v2958, %v3801
        %v5682 = vsel %vm452, %v2959, %v3803
        %v5683 = vsel %vm452, %v2960, %v3805
        %v5684 = vsel %vm452, %v2961, %v3807
        %v5685 = vsel %vm452, %v2962, %v3809
        %v5686 = vsel %vm452, %v2963, %v3811
        %v5687 = vsel %vm452, %v2964, %v3813
        %v5688 = vsel %vm452, %v2965, %v3815
        %v5689 = vsel %vm452, %v2966, %v3817
        %v5690 = vsel %vm452, %v2967, %v3819
        %v5691 = vsel %vm452, %v2968, %v3821
        %v5692 = vsel %vm452, %v2969, %v3823
        %v5693 = vsel %vm452, %v2970, %v3825
        %v5694 = vsel %vm452, %v2971, %v3827
        %v5695 = vsel %vm452, %v2972, %v3829
        %v5696 = vsel %vm452, %v2973, %v3831
        %v5697 = vsel %vm452, %v2974, %v3833
        %v5698 = vsel %vm452, %v2975, %v3835
        %v5699 = vsel %vm452, %v2976, %v3837
        %v5700 = vsel %vm452, %v2977, %v3839
        %v5701 = vsel %vm452, %v2978, %v3841
        %v5702 = vsel %vm452, %v2979, %v3843
        %v5703 = vsel %vm452, %v2980, %v3845
        %v5704 = vsel %vm452, %v2981, %v3847
        %v5705 = vsel %vm452, %v2982, %v3849
        %v5706 = vsel %vm2249, %v5674, %v3915
        %v5707 = vsel %vm2249, %v5675, %v3917
        %v5708 = vsel %vm2249, %v5676, %v3919
        %v5709 = vsel %vm2249, %v5677, %v3921
        %v5710 = vsel %vm2249, %v5678, %v3923
        %v5711 = vsel %vm2249, %v5679, %v3925
        %v5712 = vsel %vm2249, %v5680, %v3927
        %v5713 = vsel %vm2249, %v5681, %v3929
        %v5714 = vsel %vm2249, %v5682, %v3931
        %v5715 = vsel %vm2249, %v5683, %v3933
        %v5716 = vsel %vm2249, %v5684, %v3935
        %v5717 = vsel %vm2249, %v5685, %v3937
        %v5718 = vsel %vm2249, %v5686, %v3939
        %v5719 = vsel %vm2249, %v5687, %v3941
        %v5720 = vsel %vm2249, %v5688, %v3943
        %v5721 = vsel %vm2249, %v5689, %v3945
        %v5722 = vsel %vm2249, %v5690, %v3947
        %v5723 = vsel %vm2249, %v5691, %v3949
        %v5724 = vsel %vm2249, %v5692, %v3951
        %v5725 = vsel %vm2249, %v5693, %v3953
        %v5726 = vsel %vm2249, %v5694, %v3955
        %v5727 = vsel %vm2249, %v5695, %v3957
        %v5728 = vsel %vm2249, %v5696, %v3959
        %v5729 = vsel %vm2249, %v5697, %v3961
        %v5730 = vsel %vm2249, %v5698, %v3963
        %v5731 = vsel %vm2249, %v5699, %v3965
        %v5732 = vsel %vm2249, %v5700, %v3967
        %v5733 = vsel %vm2249, %v5701, %v3969
        %v5734 = vsel %vm2249, %v5702, %v3971
        %v5735 = vsel %vm2249, %v5703, %v3973
        %v5736 = vsel %vm2249, %v5704, %v3975
        %v5737 = vsel %vm2249, %v5705, %v3977
        %v5738 = vsel %vm2282, %v5706, %v4043
        %v5739 = vsel %vm2282, %v5707, %v4045
        %v5740 = vsel %vm2282, %v5708, %v4047
        %v5741 = vsel %vm2282, %v5709, %v4049
        %v5742 = vsel %vm2282, %v5710, %v4051
        %v5743 = vsel %vm2282, %v5711, %v4053
        %v5744 = vsel %vm2282, %v5712, %v4055
        %v5745 = vsel %vm2282, %v5713, %v4057
        %v5746 = vsel %vm2282, %v5714, %v4059
        %v5747 = vsel %vm2282, %v5715, %v4061
        %v5748 = vsel %vm2282, %v5716, %v4063
        %v5749 = vsel %vm2282, %v5717, %v4065
        %v5750 = vsel %vm2282, %v5718, %v4067
        %v5751 = vsel %vm2282, %v5719, %v4069
        %v5752 = vsel %vm2282, %v5720, %v4071
        %v5753 = vsel %vm2282, %v5721, %v4073
        %v5754 = vsel %vm2282, %v5722, %v4075
        %v5755 = vsel %vm2282, %v5723, %v4077
        %v5756 = vsel %vm2282, %v5724, %v4079
        %v5757 = vsel %vm2282, %v5725, %v4081
        %v5758 = vsel %vm2282, %v5726, %v4083
        %v5759 = vsel %vm2282, %v5727, %v4085
        %v5760 = vsel %vm2282, %v5728, %v4087
        %v5761 = vsel %vm2282, %v5729, %v4089
        %v5762 = vsel %vm2282, %v5730, %v4091
        %v5763 = vsel %vm2282, %v5731, %v4093
        %v5764 = vsel %vm2282, %v5732, %v4095
        %v5765 = vsel %vm2282, %v5733, %v4097
        %v5766 = vsel %vm2282, %v5734, %v4099
        %v5767 = vsel %vm2282, %v5735, %v4101
        %v5768 = vsel %vm2282, %v5736, %v4103
        %v5769 = vsel %vm2282, %v5737, %v4105
        %v5770 = vsel %vm2315, %v5738, %v4171
        %v5771 = vsel %vm2315, %v5739, %v4173
        %v5772 = vsel %vm2315, %v5740, %v4175
        %v5773 = vsel %vm2315, %v5741, %v4177
        %v5774 = vsel %vm2315, %v5742, %v4179
        %v5775 = vsel %vm2315, %v5743, %v4181
        %v5776 = vsel %vm2315, %v5744, %v4183
        %v5777 = vsel %vm2315, %v5745, %v4185
        %v5778 = vsel %vm2315, %v5746, %v4187
        %v5779 = vsel %vm2315, %v5747, %v4189
        %v5780 = vsel %vm2315, %v5748, %v4191
        %v5781 = vsel %vm2315, %v5749, %v4193
        %v5782 = vsel %vm2315, %v5750, %v4195
        %v5783 = vsel %vm2315, %v5751, %v4197
        %v5784 = vsel %vm2315, %v5752, %v4199
        %v5785 = vsel %vm2315, %v5753, %v4201
        %v5786 = vsel %vm2315, %v5754, %v4203
        %v5787 = vsel %vm2315, %v5755, %v4205
        %v5788 = vsel %vm2315, %v5756, %v4207
        %v5789 = vsel %vm2315, %v5757, %v4209
        %v5790 = vsel %vm2315, %v5758, %v4211
        %v5791 = vsel %vm2315, %v5759, %v4213
        %v5792 = vsel %vm2315, %v5760, %v4215
        %v5793 = vsel %vm2315, %v5761, %v4217
        %v5794 = vsel %vm2315, %v5762, %v4219
        %v5795 = vsel %vm2315, %v5763, %v4221
        %v5796 = vsel %vm2315, %v5764, %v4223
        %v5797 = vsel %vm2315, %v5765, %v4225
        %v5798 = vsel %vm2315, %v5766, %v4227
        %v5799 = vsel %vm2315, %v5767, %v4229
        %v5800 = vsel %vm2315, %v5768, %v4231
        %v5801 = vsel %vm2315, %v5769, %v4233
        %v5802 = vsel %vm2348, %v5770, %v4299
        %v5803 = vsel %vm2348, %v5771, %v4301
        %v5804 = vsel %vm2348, %v5772, %v4303
        %v5805 = vsel %vm2348, %v5773, %v4305
        %v5806 = vsel %vm2348, %v5774, %v4307
        %v5807 = vsel %vm2348, %v5775, %v4309
        %v5808 = vsel %vm2348, %v5776, %v4311
        %v5809 = vsel %vm2348, %v5777, %v4313
        %v5810 = vsel %vm2348, %v5778, %v4315
        %v5811 = vsel %vm2348, %v5779, %v4317
        %v5812 = vsel %vm2348, %v5780, %v4319
        %v5813 = vsel %vm2348, %v5781, %v4321
        %v5814 = vsel %vm2348, %v5782, %v4323
        %v5815 = vsel %vm2348, %v5783, %v4325
        %v5816 = vsel %vm2348, %v5784, %v4327
        %v5817 = vsel %vm2348, %v5785, %v4329
        %v5818 = vsel %vm2348, %v5786, %v4331
        %v5819 = vsel %vm2348, %v5787, %v4333
        %v5820 = vsel %vm2348, %v5788, %v4335
        %v5821 = vsel %vm2348, %v5789, %v4337
        %v5822 = vsel %vm2348, %v5790, %v4339
        %v5823 = vsel %vm2348, %v5791, %v4341
        %v5824 = vsel %vm2348, %v5792, %v4343
        %v5825 = vsel %vm2348, %v5793, %v4345
        %v5826 = vsel %vm2348, %v5794, %v4347
        %v5827 = vsel %vm2348, %v5795, %v4349
        %v5828 = vsel %vm2348, %v5796, %v4351
        %v5829 = vsel %vm2348, %v5797, %v4353
        %v5830 = vsel %vm2348, %v5798, %v4355
        %v5831 = vsel %vm2348, %v5799, %v4357
        %v5832 = vsel %vm2348, %v5800, %v4359
        %v5833 = vsel %vm2348, %v5801, %v4361
        %v5834 = vsel %vm2381, %v5802, %v4427
        %v5835 = vsel %vm2381, %v5803, %v4429
        %v5836 = vsel %vm2381, %v5804, %v4431
        %v5837 = vsel %vm2381, %v5805, %v4433
        %v5838 = vsel %vm2381, %v5806, %v4435
        %v5839 = vsel %vm2381, %v5807, %v4437
        %v5840 = vsel %vm2381, %v5808, %v4439
        %v5841 = vsel %vm2381, %v5809, %v4441
        %v5842 = vsel %vm2381, %v5810, %v4443
        %v5843 = vsel %vm2381, %v5811, %v4445
        %v5844 = vsel %vm2381, %v5812, %v4447
        %v5845 = vsel %vm2381, %v5813, %v4449
        %v5846 = vsel %vm2381, %v5814, %v4451
        %v5847 = vsel %vm2381, %v5815, %v4453
        %v5848 = vsel %vm2381, %v5816, %v4455
        %v5849 = vsel %vm2381, %v5817, %v4457
        %v5850 = vsel %vm2381, %v5818, %v4459
        %v5851 = vsel %vm2381, %v5819, %v4461
        %v5852 = vsel %vm2381, %v5820, %v4463
        %v5853 = vsel %vm2381, %v5821, %v4465
        %v5854 = vsel %vm2381, %v5822, %v4467
        %v5855 = vsel %vm2381, %v5823, %v4469
        %v5856 = vsel %vm2381, %v5824, %v4471
        %v5857 = vsel %vm2381, %v5825, %v4473
        %v5858 = vsel %vm2381, %v5826, %v4475
        %v5859 = vsel %vm2381, %v5827, %v4477
        %v5860 = vsel %vm2381, %v5828, %v4479
        %v5861 = vsel %vm2381, %v5829, %v4481
        %v5862 = vsel %vm2381, %v5830, %v4483
        %v5863 = vsel %vm2381, %v5831, %v4485
        %v5864 = vsel %vm2381, %v5832, %v4487
        %v5865 = vsel %vm2381, %v5833, %v4489
        %v5866 = vsel %vm2414, %v5834, %v4555
        %v5867 = vsel %vm2414, %v5835, %v4557
        %v5868 = vsel %vm2414, %v5836, %v4559
        %v5869 = vsel %vm2414, %v5837, %v4561
        %v5870 = vsel %vm2414, %v5838, %v4563
        %v5871 = vsel %vm2414, %v5839, %v4565
        %v5872 = vsel %vm2414, %v5840, %v4567
        %v5873 = vsel %vm2414, %v5841, %v4569
        %v5874 = vsel %vm2414, %v5842, %v4571
        %v5875 = vsel %vm2414, %v5843, %v4573
        %v5876 = vsel %vm2414, %v5844, %v4575
        %v5877 = vsel %vm2414, %v5845, %v4577
        %v5878 = vsel %vm2414, %v5846, %v4579
        %v5879 = vsel %vm2414, %v5847, %v4581
        %v5880 = vsel %vm2414, %v5848, %v4583
        %v5881 = vsel %vm2414, %v5849, %v4585
        %v5882 = vsel %vm2414, %v5850, %v4587
        %v5883 = vsel %vm2414, %v5851, %v4589
        %v5884 = vsel %vm2414, %v5852, %v4591
        %v5885 = vsel %vm2414, %v5853, %v4593
        %v5886 = vsel %vm2414, %v5854, %v4595
        %v5887 = vsel %vm2414, %v5855, %v4597
        %v5888 = vsel %vm2414, %v5856, %v4599
        %v5889 = vsel %vm2414, %v5857, %v4601
        %v5890 = vsel %vm2414, %v5858, %v4603
        %v5891 = vsel %vm2414, %v5859, %v4605
        %v5892 = vsel %vm2414, %v5860, %v4607
        %v5893 = vsel %vm2414, %v5861, %v4609
        %v5894 = vsel %vm2414, %v5862, %v4611
        %v5895 = vsel %vm2414, %v5863, %v4613
        %v5896 = vsel %vm2414, %v5864, %v4615
        %v5897 = vsel %vm2414, %v5865, %v4617
        %v5898 = vsel %vm2447, %v5866, %v4683
        %v5899 = vsel %vm2447, %v5867, %v4685
        %v5900 = vsel %vm2447, %v5868, %v4687
        %v5901 = vsel %vm2447, %v5869, %v4689
        %v5902 = vsel %vm2447, %v5870, %v4691
        %v5903 = vsel %vm2447, %v5871, %v4693
        %v5904 = vsel %vm2447, %v5872, %v4695
        %v5905 = vsel %vm2447, %v5873, %v4697
        %v5906 = vsel %vm2447, %v5874, %v4699
        %v5907 = vsel %vm2447, %v5875, %v4701
        %v5908 = vsel %vm2447, %v5876, %v4703
        %v5909 = vsel %vm2447, %v5877, %v4705
        %v5910 = vsel %vm2447, %v5878, %v4707
        %v5911 = vsel %vm2447, %v5879, %v4709
        %v5912 = vsel %vm2447, %v5880, %v4711
        %v5913 = vsel %vm2447, %v5881, %v4713
        %v5914 = vsel %vm2447, %v5882, %v4715
        %v5915 = vsel %vm2447, %v5883, %v4717
        %v5916 = vsel %vm2447, %v5884, %v4719
        %v5917 = vsel %vm2447, %v5885, %v4721
        %v5918 = vsel %vm2447, %v5886, %v4723
        %v5919 = vsel %vm2447, %v5887, %v4725
        %v5920 = vsel %vm2447, %v5888, %v4727
        %v5921 = vsel %vm2447, %v5889, %v4729
        %v5922 = vsel %vm2447, %v5890, %v4731
        %v5923 = vsel %vm2447, %v5891, %v4733
        %v5924 = vsel %vm2447, %v5892, %v4735
        %v5925 = vsel %vm2447, %v5893, %v4737
        %v5926 = vsel %vm2447, %v5894, %v4739
        %v5927 = vsel %vm2447, %v5895, %v4741
        %v5928 = vsel %vm2447, %v5896, %v4743
        %v5929 = vsel %vm2447, %v5897, %v4745
        %v5930 = vsel %vm2523, %v5898, %v4811
        %v5931 = vsel %vm2523, %v5899, %v4813
        %v5932 = vsel %vm2523, %v5900, %v4815
        %v5933 = vsel %vm2523, %v5901, %v4817
        %v5934 = vsel %vm2523, %v5902, %v4819
        %v5935 = vsel %vm2523, %v5903, %v4821
        %v5936 = vsel %vm2523, %v5904, %v4823
        %v5937 = vsel %vm2523, %v5905, %v4825
        %v5938 = vsel %vm2523, %v5906, %v4827
        %v5939 = vsel %vm2523, %v5907, %v4829
        %v5940 = vsel %vm2523, %v5908, %v4831
        %v5941 = vsel %vm2523, %v5909, %v4833
        %v5942 = vsel %vm2523, %v5910, %v4835
        %v5943 = vsel %vm2523, %v5911, %v4837
        %v5944 = vsel %vm2523, %v5912, %v4839
        %v5945 = vsel %vm2523, %v5913, %v4841
        %v5946 = vsel %vm2523, %v5914, %v4843
        %v5947 = vsel %vm2523, %v5915, %v4845
        %v5948 = vsel %vm2523, %v5916, %v4847
        %v5949 = vsel %vm2523, %v5917, %v4849
        %v5950 = vsel %vm2523, %v5918, %v4851
        %v5951 = vsel %vm2523, %v5919, %v4853
        %v5952 = vsel %vm2523, %v5920, %v4855
        %v5953 = vsel %vm2523, %v5921, %v4857
        %v5954 = vsel %vm2523, %v5922, %v4859
        %v5955 = vsel %vm2523, %v5923, %v4861
        %v5956 = vsel %vm2523, %v5924, %v4863
        %v5957 = vsel %vm2523, %v5925, %v4865
        %v5958 = vsel %vm2523, %v5926, %v4867
        %v5959 = vsel %vm2523, %v5927, %v4869
        %v5960 = vsel %vm2523, %v5928, %v4871
        %v5961 = vsel %vm2523, %v5929, %v4873
        %vm5962 = vcmask 326656
        %v5963 = vsel %vm5962, %v5930, %v4939
        %v5964 = vsel %vm5962, %v5931, %v4941
        %v5965 = vsel %vm5962, %v5932, %v4943
        %v5966 = vsel %vm5962, %v5933, %v4945
        %v5967 = vsel %vm5962, %v5934, %v4947
        %v5968 = vsel %vm5962, %v5935, %v4949
        %v5969 = vsel %vm5962, %v5936, %v4951
        %v5970 = vsel %vm5962, %v5937, %v4953
        %v5971 = vsel %vm5962, %v5938, %v4955
        %v5972 = vsel %vm5962, %v5939, %v4957
        %v5973 = vsel %vm5962, %v5940, %v4959
        %v5974 = vsel %vm5962, %v5941, %v4961
        %v5975 = vsel %vm5962, %v5942, %v4963
        %v5976 = vsel %vm5962, %v5943, %v4965
        %v5977 = vsel %vm5962, %v5944, %v4967
        %v5978 = vsel %vm5962, %v5945, %v4969
        %v5979 = vsel %vm5962, %v5946, %v4971
        %v5980 = vsel %vm5962, %v5947, %v4973
        %v5981 = vsel %vm5962, %v5948, %v4975
        %v5982 = vsel %vm5962, %v5949, %v4977
        %v5983 = vsel %vm5962, %v5950, %v4979
        %v5984 = vsel %vm5962, %v5951, %v4981
        %v5985 = vsel %vm5962, %v5952, %v4983
        %v5986 = vsel %vm5962, %v5953, %v4985
        %v5987 = vsel %vm5962, %v5954, %v4987
        %v5988 = vsel %vm5962, %v5955, %v4989
        %v5989 = vsel %vm5962, %v5956, %v4991
        %v5990 = vsel %vm5962, %v5957, %v4993
        %v5991 = vsel %vm5962, %v5958, %v4995
        %v5992 = vsel %vm5962, %v5959, %v4997
        %v5993 = vsel %vm5962, %v5960, %v4999
        %v5994 = vsel %vm5962, %v5961, %v5001
        %vm5995 = vcmask 359424
        %v5996 = vsel %vm5995, %v5963, %v5067
        %v5997 = vsel %vm5995, %v5964, %v5069
        %v5998 = vsel %vm5995, %v5965, %v5071
        %v5999 = vsel %vm5995, %v5966, %v5073
        %v6000 = vsel %vm5995, %v5967, %v5075
        %v6001 = vsel %vm5995, %v5968, %v5077
        %v6002 = vsel %vm5995, %v5969, %v5079
        %v6003 = vsel %vm5995, %v5970, %v5081
        %v6004 = vsel %vm5995, %v5971, %v5083
        %v6005 = vsel %vm5995, %v5972, %v5085
        %v6006 = vsel %vm5995, %v5973, %v5087
        %v6007 = vsel %vm5995, %v5974, %v5089
        %v6008 = vsel %vm5995, %v5975, %v5091
        %v6009 = vsel %vm5995, %v5976, %v5093
        %v6010 = vsel %vm5995, %v5977, %v5095
        %v6011 = vsel %vm5995, %v5978, %v5097
        %v6012 = vsel %vm5995, %v5979, %v5099
        %v6013 = vsel %vm5995, %v5980, %v5101
        %v6014 = vsel %vm5995, %v5981, %v5103
        %v6015 = vsel %vm5995, %v5982, %v5105
        %v6016 = vsel %vm5995, %v5983, %v5107
        %v6017 = vsel %vm5995, %v5984, %v5109
        %v6018 = vsel %vm5995, %v5985, %v5111
        %v6019 = vsel %vm5995, %v5986, %v5113
        %v6020 = vsel %vm5995, %v5987, %v5115
        %v6021 = vsel %vm5995, %v5988, %v5117
        %v6022 = vsel %vm5995, %v5989, %v5119
        %v6023 = vsel %vm5995, %v5990, %v5121
        %v6024 = vsel %vm5995, %v5991, %v5123
        %v6025 = vsel %vm5995, %v5992, %v5125
        %v6026 = vsel %vm5995, %v5993, %v5127
        %v6027 = vsel %vm5995, %v5994, %v5129
        %vm6028 = vcmask 392192
        %v6029 = vsel %vm6028, %v5996, %v5195
        %v6030 = vsel %vm6028, %v5997, %v5197
        %v6031 = vsel %vm6028, %v5998, %v5199
        %v6032 = vsel %vm6028, %v5999, %v5201
        %v6033 = vsel %vm6028, %v6000, %v5203
        %v6034 = vsel %vm6028, %v6001, %v5205
        %v6035 = vsel %vm6028, %v6002, %v5207
        %v6036 = vsel %vm6028, %v6003, %v5209
        %v6037 = vsel %vm6028, %v6004, %v5211
        %v6038 = vsel %vm6028, %v6005, %v5213
        %v6039 = vsel %vm6028, %v6006, %v5215
        %v6040 = vsel %vm6028, %v6007, %v5217
        %v6041 = vsel %vm6028, %v6008, %v5219
        %v6042 = vsel %vm6028, %v6009, %v5221
        %v6043 = vsel %vm6028, %v6010, %v5223
        %v6044 = vsel %vm6028, %v6011, %v5225
        %v6045 = vsel %vm6028, %v6012, %v5227
        %v6046 = vsel %vm6028, %v6013, %v5229
        %v6047 = vsel %vm6028, %v6014, %v5231
        %v6048 = vsel %vm6028, %v6015, %v5233
        %v6049 = vsel %vm6028, %v6016, %v5235
        %v6050 = vsel %vm6028, %v6017, %v5237
        %v6051 = vsel %vm6028, %v6018, %v5239
        %v6052 = vsel %vm6028, %v6019, %v5241
        %v6053 = vsel %vm6028, %v6020, %v5243
        %v6054 = vsel %vm6028, %v6021, %v5245
        %v6055 = vsel %vm6028, %v6022, %v5247
        %v6056 = vsel %vm6028, %v6023, %v5249
        %v6057 = vsel %vm6028, %v6024, %v5251
        %v6058 = vsel %vm6028, %v6025, %v5253
        %v6059 = vsel %vm6028, %v6026, %v5255
        %v6060 = vsel %vm6028, %v6027, %v5257
        %vm6061 = vcmask 424960
        %v6062 = vsel %vm6061, %v6029, %v5323
        %v6063 = vsel %vm6061, %v6030, %v5325
        %v6064 = vsel %vm6061, %v6031, %v5327
        %v6065 = vsel %vm6061, %v6032, %v5329
        %v6066 = vsel %vm6061, %v6033, %v5331
        %v6067 = vsel %vm6061, %v6034, %v5333
        %v6068 = vsel %vm6061, %v6035, %v5335
        %v6069 = vsel %vm6061, %v6036, %v5337
        %v6070 = vsel %vm6061, %v6037, %v5339
        %v6071 = vsel %vm6061, %v6038, %v5341
        %v6072 = vsel %vm6061, %v6039, %v5343
        %v6073 = vsel %vm6061, %v6040, %v5345
        %v6074 = vsel %vm6061, %v6041, %v5347
        %v6075 = vsel %vm6061, %v6042, %v5349
        %v6076 = vsel %vm6061, %v6043, %v5351
        %v6077 = vsel %vm6061, %v6044, %v5353
        %v6078 = vsel %vm6061, %v6045, %v5355
        %v6079 = vsel %vm6061, %v6046, %v5357
        %v6080 = vsel %vm6061, %v6047, %v5359
        %v6081 = vsel %vm6061, %v6048, %v5361
        %v6082 = vsel %vm6061, %v6049, %v5363
        %v6083 = vsel %vm6061, %v6050, %v5365
        %v6084 = vsel %vm6061, %v6051, %v5367
        %v6085 = vsel %vm6061, %v6052, %v5369
        %v6086 = vsel %vm6061, %v6053, %v5371
        %v6087 = vsel %vm6061, %v6054, %v5373
        %v6088 = vsel %vm6061, %v6055, %v5375
        %v6089 = vsel %vm6061, %v6056, %v5377
        %v6090 = vsel %vm6061, %v6057, %v5379
        %v6091 = vsel %vm6061, %v6058, %v5381
        %v6092 = vsel %vm6061, %v6059, %v5383
        %v6093 = vsel %vm6061, %v6060, %v5385
        %vm6094 = vcmask 457728
        %v6095 = vsel %vm6094, %v6062, %v5451
        %v6096 = vsel %vm6094, %v6063, %v5453
        %v6097 = vsel %vm6094, %v6064, %v5455
        %v6098 = vsel %vm6094, %v6065, %v5457
        %v6099 = vsel %vm6094, %v6066, %v5459
        %v6100 = vsel %vm6094, %v6067, %v5461
        %v6101 = vsel %vm6094, %v6068, %v5463
        %v6102 = vsel %vm6094, %v6069, %v5465
        %v6103 = vsel %vm6094, %v6070, %v5467
        %v6104 = vsel %vm6094, %v6071, %v5469
        %v6105 = vsel %vm6094, %v6072, %v5471
        %v6106 = vsel %vm6094, %v6073, %v5473
        %v6107 = vsel %vm6094, %v6074, %v5475
        %v6108 = vsel %vm6094, %v6075, %v5477
        %v6109 = vsel %vm6094, %v6076, %v5479
        %v6110 = vsel %vm6094, %v6077, %v5481
        %v6111 = vsel %vm6094, %v6078, %v5483
        %v6112 = vsel %vm6094, %v6079, %v5485
        %v6113 = vsel %vm6094, %v6080, %v5487
        %v6114 = vsel %vm6094, %v6081, %v5489
        %v6115 = vsel %vm6094, %v6082, %v5491
        %v6116 = vsel %vm6094, %v6083, %v5493
        %v6117 = vsel %vm6094, %v6084, %v5495
        %v6118 = vsel %vm6094, %v6085, %v5497
        %v6119 = vsel %vm6094, %v6086, %v5499
        %v6120 = vsel %vm6094, %v6087, %v5501
        %v6121 = vsel %vm6094, %v6088, %v5503
        %v6122 = vsel %vm6094, %v6089, %v5505
        %v6123 = vsel %vm6094, %v6090, %v5507
        %v6124 = vsel %vm6094, %v6091, %v5509
        %v6125 = vsel %vm6094, %v6092, %v5511
        %v6126 = vsel %vm6094, %v6093, %v5513
        %vm6127 = vcmask 490496
        %v6128 = vsel %vm6127, %v6095, %v5579
        %v6129 = vsel %vm6127, %v6096, %v5581
        %v6130 = vsel %vm6127, %v6097, %v5583
        %v6131 = vsel %vm6127, %v6098, %v5585
        %v6132 = vsel %vm6127, %v6099, %v5587
        %v6133 = vsel %vm6127, %v6100, %v5589
        %v6134 = vsel %vm6127, %v6101, %v5591
        %v6135 = vsel %vm6127, %v6102, %v5593
        %v6136 = vsel %vm6127, %v6103, %v5595
        %v6137 = vsel %vm6127, %v6104, %v5597
        %v6138 = vsel %vm6127, %v6105, %v5599
        %v6139 = vsel %vm6127, %v6106, %v5601
        %v6140 = vsel %vm6127, %v6107, %v5603
        %v6141 = vsel %vm6127, %v6108, %v5605
        %v6142 = vsel %vm6127, %v6109, %v5607
        %v6143 = vsel %vm6127, %v6110, %v5609
        %v6144 = vsel %vm6127, %v6111, %v5611
        %v6145 = vsel %vm6127, %v6112, %v5613
        %v6146 = vsel %vm6127, %v6113, %v5615
        %v6147 = vsel %vm6127, %v6114, %v5617
        %v6148 = vsel %vm6127, %v6115, %v5619
        %v6149 = vsel %vm6127, %v6116, %v5621
        %v6150 = vsel %vm6127, %v6117, %v5623
        %v6151 = vsel %vm6127, %v6118, %v5625
        %v6152 = vsel %vm6127, %v6119, %v5627
        %v6153 = vsel %vm6127, %v6120, %v5629
        %v6154 = vsel %vm6127, %v6121, %v5631
        %v6155 = vsel %vm6127, %v6122, %v5633
        %v6156 = vsel %vm6127, %v6123, %v5635
        %v6157 = vsel %vm6127, %v6124, %v5637
        %v6158 = vsel %vm6127, %v6125, %v5639
        %v6159 = vsel %vm6127, %v6126, %v5641
        %6192 = vrot.lane.b32.xlu0 %v3497, 4
        %v6193 = vpop.permute.xlu0 %6192
        %6194 = vrot.lane.b32.xlu0 %v3498, 4
        %v6195 = vpop.permute.xlu0 %6194
        %6196 = vrot.lane.b32.xlu0 %v3499, 4
        %v6197 = vpop.permute.xlu0 %6196
        %6198 = vrot.lane.b32.xlu0 %v3500, 4
        %v6199 = vpop.permute.xlu0 %6198
        %6200 = vrot.lane.b32.xlu0 %v3501, 4
        %v6201 = vpop.permute.xlu0 %6200
        %6202 = vrot.lane.b32.xlu0 %v3502, 4
        %v6203 = vpop.permute.xlu0 %6202
        %6204 = vrot.lane.b32.xlu0 %v3503, 4
        %v6205 = vpop.permute.xlu0 %6204
        %6206 = vrot.lane.b32.xlu0 %v3504, 4
        %v6207 = vpop.permute.xlu0 %6206
        %6208 = vrot.lane.b32.xlu0 %v3505, 4
        %v6209 = vpop.permute.xlu0 %6208
        %6210 = vrot.lane.b32.xlu0 %v3506, 4
        %v6211 = vpop.permute.xlu0 %6210
        %6212 = vrot.lane.b32.xlu0 %v3507, 4
        %v6213 = vpop.permute.xlu0 %6212
        %6214 = vrot.lane.b32.xlu0 %v3508, 4
        %v6215 = vpop.permute.xlu0 %6214
        %6216 = vrot.lane.b32.xlu0 %v3509, 4
        %v6217 = vpop.permute.xlu0 %6216
        %6218 = vrot.lane.b32.xlu0 %v3510, 4
        %v6219 = vpop.permute.xlu0 %6218
        %6220 = vrot.lane.b32.xlu0 %v3511, 4
        %v6221 = vpop.permute.xlu0 %6220
        %6222 = vrot.lane.b32.xlu0 %v3512, 4
        %v6223 = vpop.permute.xlu0 %6222
        %6224 = vrot.lane.b32.xlu0 %v3513, 4
        %v6225 = vpop.permute.xlu0 %6224
        %6226 = vrot.lane.b32.xlu0 %v3514, 4
        %v6227 = vpop.permute.xlu0 %6226
        %6228 = vrot.lane.b32.xlu0 %v3515, 4
        %v6229 = vpop.permute.xlu0 %6228
        %6230 = vrot.lane.b32.xlu0 %v3516, 4
        %v6231 = vpop.permute.xlu0 %6230
        %6232 = vrot.lane.b32.xlu0 %v3517, 4
        %v6233 = vpop.permute.xlu0 %6232
        %6234 = vrot.lane.b32.xlu0 %v3518, 4
        %v6235 = vpop.permute.xlu0 %6234
        %6236 = vrot.lane.b32.xlu0 %v3519, 4
        %v6237 = vpop.permute.xlu0 %6236
        %6238 = vrot.lane.b32.xlu0 %v3520, 4
        %v6239 = vpop.permute.xlu0 %6238
        %6240 = vrot.lane.b32.xlu0 %v3521, 4
        %v6241 = vpop.permute.xlu0 %6240
        %6242 = vrot.lane.b32.xlu0 %v3522, 4
        %v6243 = vpop.permute.xlu0 %6242
        %6244 = vrot.lane.b32.xlu0 %v3523, 4
        %v6245 = vpop.permute.xlu0 %6244
        %6246 = vrot.lane.b32.xlu0 %v3524, 4
        %v6247 = vpop.permute.xlu0 %6246
        %6248 = vrot.lane.b32.xlu0 %v3525, 4
        %v6249 = vpop.permute.xlu0 %6248
        %6250 = vrot.lane.b32.xlu0 %v3526, 4
        %v6251 = vpop.permute.xlu0 %6250
        %6252 = vrot.lane.b32.xlu0 %v3527, 4
        %v6253 = vpop.permute.xlu0 %6252
        %6254 = vrot.lane.b32.xlu0 %v3528, 4
        %v6255 = vpop.permute.xlu0 %6254
        %6320 = vrot.lane.b32.xlu0 %v3529, 8
        %v6321 = vpop.permute.xlu0 %6320
        %6322 = vrot.lane.b32.xlu0 %v3530, 8
        %v6323 = vpop.permute.xlu0 %6322
        %6324 = vrot.lane.b32.xlu0 %v3531, 8
        %v6325 = vpop.permute.xlu0 %6324
        %6326 = vrot.lane.b32.xlu0 %v3532, 8
        %v6327 = vpop.permute.xlu0 %6326
        %6328 = vrot.lane.b32.xlu0 %v3533, 8
        %v6329 = vpop.permute.xlu0 %6328
        %6330 = vrot.lane.b32.xlu0 %v3534, 8
        %v6331 = vpop.permute.xlu0 %6330
        %6332 = vrot.lane.b32.xlu0 %v3535, 8
        %v6333 = vpop.permute.xlu0 %6332
        %6334 = vrot.lane.b32.xlu0 %v3536, 8
        %v6335 = vpop.permute.xlu0 %6334
        %6336 = vrot.lane.b32.xlu0 %v3537, 8
        %v6337 = vpop.permute.xlu0 %6336
        %6338 = vrot.lane.b32.xlu0 %v3538, 8
        %v6339 = vpop.permute.xlu0 %6338
        %6340 = vrot.lane.b32.xlu0 %v3539, 8
        %v6341 = vpop.permute.xlu0 %6340
        %6342 = vrot.lane.b32.xlu0 %v3540, 8
        %v6343 = vpop.permute.xlu0 %6342
        %6344 = vrot.lane.b32.xlu0 %v3541, 8
        %v6345 = vpop.permute.xlu0 %6344
        %6346 = vrot.lane.b32.xlu0 %v3542, 8
        %v6347 = vpop.permute.xlu0 %6346
        %6348 = vrot.lane.b32.xlu0 %v3543, 8
        %v6349 = vpop.permute.xlu0 %6348
        %6350 = vrot.lane.b32.xlu0 %v3544, 8
        %v6351 = vpop.permute.xlu0 %6350
        %6352 = vrot.lane.b32.xlu0 %v3545, 8
        %v6353 = vpop.permute.xlu0 %6352
        %6354 = vrot.lane.b32.xlu0 %v3546, 8
        %v6355 = vpop.permute.xlu0 %6354
        %6356 = vrot.lane.b32.xlu0 %v3547, 8
        %v6357 = vpop.permute.xlu0 %6356
        %6358 = vrot.lane.b32.xlu0 %v3548, 8
        %v6359 = vpop.permute.xlu0 %6358
        %6360 = vrot.lane.b32.xlu0 %v3549, 8
        %v6361 = vpop.permute.xlu0 %6360
        %6362 = vrot.lane.b32.xlu0 %v3550, 8
        %v6363 = vpop.permute.xlu0 %6362
        %6364 = vrot.lane.b32.xlu0 %v3551, 8
        %v6365 = vpop.permute.xlu0 %6364
        %6366 = vrot.lane.b32.xlu0 %v3552, 8
        %v6367 = vpop.permute.xlu0 %6366
        %6368 = vrot.lane.b32.xlu0 %v3553, 8
        %v6369 = vpop.permute.xlu0 %6368
        %6370 = vrot.lane.b32.xlu0 %v3554, 8
        %v6371 = vpop.permute.xlu0 %6370
        %6372 = vrot.lane.b32.xlu0 %v3555, 8
        %v6373 = vpop.permute.xlu0 %6372
        %6374 = vrot.lane.b32.xlu0 %v3556, 8
        %v6375 = vpop.permute.xlu0 %6374
        %6376 = vrot.lane.b32.xlu0 %v3557, 8
        %v6377 = vpop.permute.xlu0 %6376
        %6378 = vrot.lane.b32.xlu0 %v3558, 8
        %v6379 = vpop.permute.xlu0 %6378
        %6380 = vrot.lane.b32.xlu0 %v3559, 8
        %v6381 = vpop.permute.xlu0 %6380
        %6382 = vrot.lane.b32.xlu0 %v3560, 8
        %v6383 = vpop.permute.xlu0 %6382
        %6448 = vrot.lane.b32.xlu0 %v3561, 12
        %v6449 = vpop.permute.xlu0 %6448
        %6450 = vrot.lane.b32.xlu0 %v3562, 12
        %v6451 = vpop.permute.xlu0 %6450
        %6452 = vrot.lane.b32.xlu0 %v3563, 12
        %v6453 = vpop.permute.xlu0 %6452
        %6454 = vrot.lane.b32.xlu0 %v3564, 12
        %v6455 = vpop.permute.xlu0 %6454
        %6456 = vrot.lane.b32.xlu0 %v3565, 12
        %v6457 = vpop.permute.xlu0 %6456
        %6458 = vrot.lane.b32.xlu0 %v3566, 12
        %v6459 = vpop.permute.xlu0 %6458
        %6460 = vrot.lane.b32.xlu0 %v3567, 12
        %v6461 = vpop.permute.xlu0 %6460
        %6462 = vrot.lane.b32.xlu0 %v3568, 12
        %v6463 = vpop.permute.xlu0 %6462
        %6464 = vrot.lane.b32.xlu0 %v3569, 12
        %v6465 = vpop.permute.xlu0 %6464
        %6466 = vrot.lane.b32.xlu0 %v3570, 12
        %v6467 = vpop.permute.xlu0 %6466
        %6468 = vrot.lane.b32.xlu0 %v3571, 12
        %v6469 = vpop.permute.xlu0 %6468
        %6470 = vrot.lane.b32.xlu0 %v3572, 12
        %v6471 = vpop.permute.xlu0 %6470
        %6472 = vrot.lane.b32.xlu0 %v3573, 12
        %v6473 = vpop.permute.xlu0 %6472
        %6474 = vrot.lane.b32.xlu0 %v3574, 12
        %v6475 = vpop.permute.xlu0 %6474
        %6476 = vrot.lane.b32.xlu0 %v3575, 12
        %v6477 = vpop.permute.xlu0 %6476
        %6478 = vrot.lane.b32.xlu0 %v3576, 12
        %v6479 = vpop.permute.xlu0 %6478
        %6480 = vrot.lane.b32.xlu0 %v3577, 12
        %v6481 = vpop.permute.xlu0 %6480
        %6482 = vrot.lane.b32.xlu0 %v3578, 12
        %v6483 = vpop.permute.xlu0 %6482
        %6484 = vrot.lane.b32.xlu0 %v3579, 12
        %v6485 = vpop.permute.xlu0 %6484
        %6486 = vrot.lane.b32.xlu0 %v3580, 12
        %v6487 = vpop.permute.xlu0 %6486
        %6488 = vrot.lane.b32.xlu0 %v3581, 12
        %v6489 = vpop.permute.xlu0 %6488
        %6490 = vrot.lane.b32.xlu0 %v3582, 12
        %v6491 = vpop.permute.xlu0 %6490
        %6492 = vrot.lane.b32.xlu0 %v3583, 12
        %v6493 = vpop.permute.xlu0 %6492
        %6494 = vrot.lane.b32.xlu0 %v3584, 12
        %v6495 = vpop.permute.xlu0 %6494
        %6496 = vrot.lane.b32.xlu0 %v3585, 12
        %v6497 = vpop.permute.xlu0 %6496
        %6498 = vrot.lane.b32.xlu0 %v3586, 12
        %v6499 = vpop.permute.xlu0 %6498
        %6500 = vrot.lane.b32.xlu0 %v3587, 12
        %v6501 = vpop.permute.xlu0 %6500
        %6502 = vrot.lane.b32.xlu0 %v3588, 12
        %v6503 = vpop.permute.xlu0 %6502
        %6504 = vrot.lane.b32.xlu0 %v3589, 12
        %v6505 = vpop.permute.xlu0 %6504
        %6506 = vrot.lane.b32.xlu0 %v3590, 12
        %v6507 = vpop.permute.xlu0 %6506
        %6508 = vrot.lane.b32.xlu0 %v3591, 12
        %v6509 = vpop.permute.xlu0 %6508
        %6510 = vrot.lane.b32.xlu0 %v3592, 12
        %v6511 = vpop.permute.xlu0 %6510
        %6576 = vrot.lane.b32.xlu0 %v3594, 16
        %v6577 = vpop.permute.xlu0 %6576
        %6578 = vrot.lane.b32.xlu0 %v3595, 16
        %v6579 = vpop.permute.xlu0 %6578
        %6580 = vrot.lane.b32.xlu0 %v3596, 16
        %v6581 = vpop.permute.xlu0 %6580
        %6582 = vrot.lane.b32.xlu0 %v3597, 16
        %v6583 = vpop.permute.xlu0 %6582
        %6584 = vrot.lane.b32.xlu0 %v3598, 16
        %v6585 = vpop.permute.xlu0 %6584
        %6586 = vrot.lane.b32.xlu0 %v3599, 16
        %v6587 = vpop.permute.xlu0 %6586
        %6588 = vrot.lane.b32.xlu0 %v3600, 16
        %v6589 = vpop.permute.xlu0 %6588
        %6590 = vrot.lane.b32.xlu0 %v3601, 16
        %v6591 = vpop.permute.xlu0 %6590
        %6592 = vrot.lane.b32.xlu0 %v3602, 16
        %v6593 = vpop.permute.xlu0 %6592
        %6594 = vrot.lane.b32.xlu0 %v3603, 16
        %v6595 = vpop.permute.xlu0 %6594
        %6596 = vrot.lane.b32.xlu0 %v3604, 16
        %v6597 = vpop.permute.xlu0 %6596
        %6598 = vrot.lane.b32.xlu0 %v3605, 16
        %v6599 = vpop.permute.xlu0 %6598
        %6600 = vrot.lane.b32.xlu0 %v3606, 16
        %v6601 = vpop.permute.xlu0 %6600
        %6602 = vrot.lane.b32.xlu0 %v3607, 16
        %v6603 = vpop.permute.xlu0 %6602
        %6604 = vrot.lane.b32.xlu0 %v3608, 16
        %v6605 = vpop.permute.xlu0 %6604
        %6606 = vrot.lane.b32.xlu0 %v3609, 16
        %v6607 = vpop.permute.xlu0 %6606
        %6608 = vrot.lane.b32.xlu0 %v3610, 16
        %v6609 = vpop.permute.xlu0 %6608
        %6610 = vrot.lane.b32.xlu0 %v3611, 16
        %v6611 = vpop.permute.xlu0 %6610
        %6612 = vrot.lane.b32.xlu0 %v3612, 16
        %v6613 = vpop.permute.xlu0 %6612
        %6614 = vrot.lane.b32.xlu0 %v3613, 16
        %v6615 = vpop.permute.xlu0 %6614
        %6616 = vrot.lane.b32.xlu0 %v3614, 16
        %v6617 = vpop.permute.xlu0 %6616
        %6618 = vrot.lane.b32.xlu0 %v3615, 16
        %v6619 = vpop.permute.xlu0 %6618
        %6620 = vrot.lane.b32.xlu0 %v3616, 16
        %v6621 = vpop.permute.xlu0 %6620
        %6622 = vrot.lane.b32.xlu0 %v3617, 16
        %v6623 = vpop.permute.xlu0 %6622
        %6624 = vrot.lane.b32.xlu0 %v3618, 16
        %v6625 = vpop.permute.xlu0 %6624
        %6626 = vrot.lane.b32.xlu0 %v3619, 16
        %v6627 = vpop.permute.xlu0 %6626
        %6628 = vrot.lane.b32.xlu0 %v3620, 16
        %v6629 = vpop.permute.xlu0 %6628
        %6630 = vrot.lane.b32.xlu0 %v3621, 16
        %v6631 = vpop.permute.xlu0 %6630
        %6632 = vrot.lane.b32.xlu0 %v3622, 16
        %v6633 = vpop.permute.xlu0 %6632
        %6634 = vrot.lane.b32.xlu0 %v3623, 16
        %v6635 = vpop.permute.xlu0 %6634
        %6636 = vrot.lane.b32.xlu0 %v3624, 16
        %v6637 = vpop.permute.xlu0 %6636
        %6638 = vrot.lane.b32.xlu0 %v3625, 16
        %v6639 = vpop.permute.xlu0 %6638
        %6704 = vrot.lane.b32.xlu0 %v3626, 20
        %v6705 = vpop.permute.xlu0 %6704
        %6706 = vrot.lane.b32.xlu0 %v3627, 20
        %v6707 = vpop.permute.xlu0 %6706
        %6708 = vrot.lane.b32.xlu0 %v3628, 20
        %v6709 = vpop.permute.xlu0 %6708
        %6710 = vrot.lane.b32.xlu0 %v3629, 20
        %v6711 = vpop.permute.xlu0 %6710
        %6712 = vrot.lane.b32.xlu0 %v3630, 20
        %v6713 = vpop.permute.xlu0 %6712
        %6714 = vrot.lane.b32.xlu0 %v3631, 20
        %v6715 = vpop.permute.xlu0 %6714
        %6716 = vrot.lane.b32.xlu0 %v3632, 20
        %v6717 = vpop.permute.xlu0 %6716
        %6718 = vrot.lane.b32.xlu0 %v3633, 20
        %v6719 = vpop.permute.xlu0 %6718
        %6720 = vrot.lane.b32.xlu0 %v3634, 20
        %v6721 = vpop.permute.xlu0 %6720
        %6722 = vrot.lane.b32.xlu0 %v3635, 20
        %v6723 = vpop.permute.xlu0 %6722
        %6724 = vrot.lane.b32.xlu0 %v3636, 20
        %v6725 = vpop.permute.xlu0 %6724
        %6726 = vrot.lane.b32.xlu0 %v3637, 20
        %v6727 = vpop.permute.xlu0 %6726
        %6728 = vrot.lane.b32.xlu0 %v3638, 20
        %v6729 = vpop.permute.xlu0 %6728
        %6730 = vrot.lane.b32.xlu0 %v3639, 20
        %v6731 = vpop.permute.xlu0 %6730
        %6732 = vrot.lane.b32.xlu0 %v3640, 20
        %v6733 = vpop.permute.xlu0 %6732
        %6734 = vrot.lane.b32.xlu0 %v3641, 20
        %v6735 = vpop.permute.xlu0 %6734
        %6736 = vrot.lane.b32.xlu0 %v3642, 20
        %v6737 = vpop.permute.xlu0 %6736
        %6738 = vrot.lane.b32.xlu0 %v3643, 20
        %v6739 = vpop.permute.xlu0 %6738
        %6740 = vrot.lane.b32.xlu0 %v3644, 20
        %v6741 = vpop.permute.xlu0 %6740
        %6742 = vrot.lane.b32.xlu0 %v3645, 20
        %v6743 = vpop.permute.xlu0 %6742
        %6744 = vrot.lane.b32.xlu0 %v3646, 20
        %v6745 = vpop.permute.xlu0 %6744
        %6746 = vrot.lane.b32.xlu0 %v3647, 20
        %v6747 = vpop.permute.xlu0 %6746
        %6748 = vrot.lane.b32.xlu0 %v3648, 20
        %v6749 = vpop.permute.xlu0 %6748
        %6750 = vrot.lane.b32.xlu0 %v3649, 20
        %v6751 = vpop.permute.xlu0 %6750
        %6752 = vrot.lane.b32.xlu0 %v3650, 20
        %v6753 = vpop.permute.xlu0 %6752
        %6754 = vrot.lane.b32.xlu0 %v3651, 20
        %v6755 = vpop.permute.xlu0 %6754
        %6756 = vrot.lane.b32.xlu0 %v3652, 20
        %v6757 = vpop.permute.xlu0 %6756
        %6758 = vrot.lane.b32.xlu0 %v3653, 20
        %v6759 = vpop.permute.xlu0 %6758
        %6760 = vrot.lane.b32.xlu0 %v3654, 20
        %v6761 = vpop.permute.xlu0 %6760
        %6762 = vrot.lane.b32.xlu0 %v3655, 20
        %v6763 = vpop.permute.xlu0 %6762
        %6764 = vrot.lane.b32.xlu0 %v3656, 20
        %v6765 = vpop.permute.xlu0 %6764
        %6766 = vrot.lane.b32.xlu0 %v3657, 20
        %v6767 = vpop.permute.xlu0 %6766
        %6832 = vrot.lane.b32.xlu0 %v3658, 24
        %v6833 = vpop.permute.xlu0 %6832
        %6834 = vrot.lane.b32.xlu0 %v3659, 24
        %v6835 = vpop.permute.xlu0 %6834
        %6836 = vrot.lane.b32.xlu0 %v3660, 24
        %v6837 = vpop.permute.xlu0 %6836
        %6838 = vrot.lane.b32.xlu0 %v3661, 24
        %v6839 = vpop.permute.xlu0 %6838
        %6840 = vrot.lane.b32.xlu0 %v3662, 24
        %v6841 = vpop.permute.xlu0 %6840
        %6842 = vrot.lane.b32.xlu0 %v3663, 24
        %v6843 = vpop.permute.xlu0 %6842
        %6844 = vrot.lane.b32.xlu0 %v3664, 24
        %v6845 = vpop.permute.xlu0 %6844
        %6846 = vrot.lane.b32.xlu0 %v3665, 24
        %v6847 = vpop.permute.xlu0 %6846
        %6848 = vrot.lane.b32.xlu0 %v3666, 24
        %v6849 = vpop.permute.xlu0 %6848
        %6850 = vrot.lane.b32.xlu0 %v3667, 24
        %v6851 = vpop.permute.xlu0 %6850
        %6852 = vrot.lane.b32.xlu0 %v3668, 24
        %v6853 = vpop.permute.xlu0 %6852
        %6854 = vrot.lane.b32.xlu0 %v3669, 24
        %v6855 = vpop.permute.xlu0 %6854
        %6856 = vrot.lane.b32.xlu0 %v3670, 24
        %v6857 = vpop.permute.xlu0 %6856
        %6858 = vrot.lane.b32.xlu0 %v3671, 24
        %v6859 = vpop.permute.xlu0 %6858
        %6860 = vrot.lane.b32.xlu0 %v3672, 24
        %v6861 = vpop.permute.xlu0 %6860
        %6862 = vrot.lane.b32.xlu0 %v3673, 24
        %v6863 = vpop.permute.xlu0 %6862
        %6864 = vrot.lane.b32.xlu0 %v3674, 24
        %v6865 = vpop.permute.xlu0 %6864
        %6866 = vrot.lane.b32.xlu0 %v3675, 24
        %v6867 = vpop.permute.xlu0 %6866
        %6868 = vrot.lane.b32.xlu0 %v3676, 24
        %v6869 = vpop.permute.xlu0 %6868
        %6870 = vrot.lane.b32.xlu0 %v3677, 24
        %v6871 = vpop.permute.xlu0 %6870
        %6872 = vrot.lane.b32.xlu0 %v3678, 24
        %v6873 = vpop.permute.xlu0 %6872
        %6874 = vrot.lane.b32.xlu0 %v3679, 24
        %v6875 = vpop.permute.xlu0 %6874
        %6876 = vrot.lane.b32.xlu0 %v3680, 24
        %v6877 = vpop.permute.xlu0 %6876
        %6878 = vrot.lane.b32.xlu0 %v3681, 24
        %v6879 = vpop.permute.xlu0 %6878
        %6880 = vrot.lane.b32.xlu0 %v3682, 24
        %v6881 = vpop.permute.xlu0 %6880
        %6882 = vrot.lane.b32.xlu0 %v3683, 24
        %v6883 = vpop.permute.xlu0 %6882
        %6884 = vrot.lane.b32.xlu0 %v3684, 24
        %v6885 = vpop.permute.xlu0 %6884
        %6886 = vrot.lane.b32.xlu0 %v3685, 24
        %v6887 = vpop.permute.xlu0 %6886
        %6888 = vrot.lane.b32.xlu0 %v3686, 24
        %v6889 = vpop.permute.xlu0 %6888
        %6890 = vrot.lane.b32.xlu0 %v3687, 24
        %v6891 = vpop.permute.xlu0 %6890
        %6892 = vrot.lane.b32.xlu0 %v3688, 24
        %v6893 = vpop.permute.xlu0 %6892
        %6894 = vrot.lane.b32.xlu0 %v3689, 24
        %v6895 = vpop.permute.xlu0 %6894
        %6960 = vrot.lane.b32.xlu0 %v3690, 28
        %v6961 = vpop.permute.xlu0 %6960
        %6962 = vrot.lane.b32.xlu0 %v3691, 28
        %v6963 = vpop.permute.xlu0 %6962
        %6964 = vrot.lane.b32.xlu0 %v3692, 28
        %v6965 = vpop.permute.xlu0 %6964
        %6966 = vrot.lane.b32.xlu0 %v3693, 28
        %v6967 = vpop.permute.xlu0 %6966
        %6968 = vrot.lane.b32.xlu0 %v3694, 28
        %v6969 = vpop.permute.xlu0 %6968
        %6970 = vrot.lane.b32.xlu0 %v3695, 28
        %v6971 = vpop.permute.xlu0 %6970
        %6972 = vrot.lane.b32.xlu0 %v3696, 28
        %v6973 = vpop.permute.xlu0 %6972
        %6974 = vrot.lane.b32.xlu0 %v3697, 28
        %v6975 = vpop.permute.xlu0 %6974
        %6976 = vrot.lane.b32.xlu0 %v3698, 28
        %v6977 = vpop.permute.xlu0 %6976
        %6978 = vrot.lane.b32.xlu0 %v3699, 28
        %v6979 = vpop.permute.xlu0 %6978
        %6980 = vrot.lane.b32.xlu0 %v3700, 28
        %v6981 = vpop.permute.xlu0 %6980
        %6982 = vrot.lane.b32.xlu0 %v3701, 28
        %v6983 = vpop.permute.xlu0 %6982
        %6984 = vrot.lane.b32.xlu0 %v3702, 28
        %v6985 = vpop.permute.xlu0 %6984
        %6986 = vrot.lane.b32.xlu0 %v3703, 28
        %v6987 = vpop.permute.xlu0 %6986
        %6988 = vrot.lane.b32.xlu0 %v3704, 28
        %v6989 = vpop.permute.xlu0 %6988
        %6990 = vrot.lane.b32.xlu0 %v3705, 28
        %v6991 = vpop.permute.xlu0 %6990
        %6992 = vrot.lane.b32.xlu0 %v3706, 28
        %v6993 = vpop.permute.xlu0 %6992
        %6994 = vrot.lane.b32.xlu0 %v3707, 28
        %v6995 = vpop.permute.xlu0 %6994
        %6996 = vrot.lane.b32.xlu0 %v3708, 28
        %v6997 = vpop.permute.xlu0 %6996
        %6998 = vrot.lane.b32.xlu0 %v3709, 28
        %v6999 = vpop.permute.xlu0 %6998
        %7000 = vrot.lane.b32.xlu0 %v3710, 28
        %v7001 = vpop.permute.xlu0 %7000
        %7002 = vrot.lane.b32.xlu0 %v3711, 28
        %v7003 = vpop.permute.xlu0 %7002
        %7004 = vrot.lane.b32.xlu0 %v3712, 28
        %v7005 = vpop.permute.xlu0 %7004
        %7006 = vrot.lane.b32.xlu0 %v3713, 28
        %v7007 = vpop.permute.xlu0 %7006
        %7008 = vrot.lane.b32.xlu0 %v3714, 28
        %v7009 = vpop.permute.xlu0 %7008
        %7010 = vrot.lane.b32.xlu0 %v3715, 28
        %v7011 = vpop.permute.xlu0 %7010
        %7012 = vrot.lane.b32.xlu0 %v3716, 28
        %v7013 = vpop.permute.xlu0 %7012
        %7014 = vrot.lane.b32.xlu0 %v3717, 28
        %v7015 = vpop.permute.xlu0 %7014
        %7016 = vrot.lane.b32.xlu0 %v3718, 28
        %v7017 = vpop.permute.xlu0 %7016
        %7018 = vrot.lane.b32.xlu0 %v3719, 28
        %v7019 = vpop.permute.xlu0 %7018
        %7020 = vrot.lane.b32.xlu0 %v3720, 28
        %v7021 = vpop.permute.xlu0 %7020
        %7022 = vrot.lane.b32.xlu0 %v3721, 28
        %v7023 = vpop.permute.xlu0 %7022
        %7088 = vrot.lane.b32.xlu0 %v3722, 32
        %v7089 = vpop.permute.xlu0 %7088
        %7090 = vrot.lane.b32.xlu0 %v3723, 32
        %v7091 = vpop.permute.xlu0 %7090
        %7092 = vrot.lane.b32.xlu0 %v3724, 32
        %v7093 = vpop.permute.xlu0 %7092
        %7094 = vrot.lane.b32.xlu0 %v3725, 32
        %v7095 = vpop.permute.xlu0 %7094
        %7096 = vrot.lane.b32.xlu0 %v3726, 32
        %v7097 = vpop.permute.xlu0 %7096
        %7098 = vrot.lane.b32.xlu0 %v3727, 32
        %v7099 = vpop.permute.xlu0 %7098
        %7100 = vrot.lane.b32.xlu0 %v3728, 32
        %v7101 = vpop.permute.xlu0 %7100
        %7102 = vrot.lane.b32.xlu0 %v3729, 32
        %v7103 = vpop.permute.xlu0 %7102
        %7104 = vrot.lane.b32.xlu0 %v3730, 32
        %v7105 = vpop.permute.xlu0 %7104
        %7106 = vrot.lane.b32.xlu0 %v3731, 32
        %v7107 = vpop.permute.xlu0 %7106
        %7108 = vrot.lane.b32.xlu0 %v3732, 32
        %v7109 = vpop.permute.xlu0 %7108
        %7110 = vrot.lane.b32.xlu0 %v3733, 32
        %v7111 = vpop.permute.xlu0 %7110
        %7112 = vrot.lane.b32.xlu0 %v3734, 32
        %v7113 = vpop.permute.xlu0 %7112
        %7114 = vrot.lane.b32.xlu0 %v3735, 32
        %v7115 = vpop.permute.xlu0 %7114
        %7116 = vrot.lane.b32.xlu0 %v3736, 32
        %v7117 = vpop.permute.xlu0 %7116
        %7118 = vrot.lane.b32.xlu0 %v3737, 32
        %v7119 = vpop.permute.xlu0 %7118
        %7120 = vrot.lane.b32.xlu0 %v3738, 32
        %v7121 = vpop.permute.xlu0 %7120
        %7122 = vrot.lane.b32.xlu0 %v3739, 32
        %v7123 = vpop.permute.xlu0 %7122
        %7124 = vrot.lane.b32.xlu0 %v3740, 32
        %v7125 = vpop.permute.xlu0 %7124
        %7126 = vrot.lane.b32.xlu0 %v3741, 32
        %v7127 = vpop.permute.xlu0 %7126
        %7128 = vrot.lane.b32.xlu0 %v3742, 32
        %v7129 = vpop.permute.xlu0 %7128
        %7130 = vrot.lane.b32.xlu0 %v3743, 32
        %v7131 = vpop.permute.xlu0 %7130
        %7132 = vrot.lane.b32.xlu0 %v3744, 32
        %v7133 = vpop.permute.xlu0 %7132
        %7134 = vrot.lane.b32.xlu0 %v3745, 32
        %v7135 = vpop.permute.xlu0 %7134
        %7136 = vrot.lane.b32.xlu0 %v3746, 32
        %v7137 = vpop.permute.xlu0 %7136
        %7138 = vrot.lane.b32.xlu0 %v3747, 32
        %v7139 = vpop.permute.xlu0 %7138
        %7140 = vrot.lane.b32.xlu0 %v3748, 32
        %v7141 = vpop.permute.xlu0 %7140
        %7142 = vrot.lane.b32.xlu0 %v3749, 32
        %v7143 = vpop.permute.xlu0 %7142
        %7144 = vrot.lane.b32.xlu0 %v3750, 32
        %v7145 = vpop.permute.xlu0 %7144
        %7146 = vrot.lane.b32.xlu0 %v3751, 32
        %v7147 = vpop.permute.xlu0 %7146
        %7148 = vrot.lane.b32.xlu0 %v3752, 32
        %v7149 = vpop.permute.xlu0 %7148
        %7150 = vrot.lane.b32.xlu0 %v3753, 32
        %v7151 = vpop.permute.xlu0 %7150
        %v7184 = vsel %vm452, %v3465, %v6193
        %v7185 = vsel %vm452, %v3466, %v6195
        %v7186 = vsel %vm452, %v3467, %v6197
        %v7187 = vsel %vm452, %v3468, %v6199
        %v7188 = vsel %vm452, %v3469, %v6201
        %v7189 = vsel %vm452, %v3470, %v6203
        %v7190 = vsel %vm452, %v3471, %v6205
        %v7191 = vsel %vm452, %v3472, %v6207
        %v7192 = vsel %vm452, %v3473, %v6209
        %v7193 = vsel %vm452, %v3474, %v6211
        %v7194 = vsel %vm452, %v3475, %v6213
        %v7195 = vsel %vm452, %v3476, %v6215
        %v7196 = vsel %vm452, %v3477, %v6217
        %v7197 = vsel %vm452, %v3478, %v6219
        %v7198 = vsel %vm452, %v3479, %v6221
        %v7199 = vsel %vm452, %v3480, %v6223
        %v7200 = vsel %vm452, %v3481, %v6225
        %v7201 = vsel %vm452, %v3482, %v6227
        %v7202 = vsel %vm452, %v3483, %v6229
        %v7203 = vsel %vm452, %v3484, %v6231
        %v7204 = vsel %vm452, %v3485, %v6233
        %v7205 = vsel %vm452, %v3486, %v6235
        %v7206 = vsel %vm452, %v3487, %v6237
        %v7207 = vsel %vm452, %v3488, %v6239
        %v7208 = vsel %vm452, %v3489, %v6241
        %v7209 = vsel %vm452, %v3490, %v6243
        %v7210 = vsel %vm452, %v3491, %v6245
        %v7211 = vsel %vm452, %v3492, %v6247
        %v7212 = vsel %vm452, %v3493, %v6249
        %v7213 = vsel %vm452, %v3494, %v6251
        %v7214 = vsel %vm452, %v3495, %v6253
        %v7215 = vsel %vm452, %v3496, %v6255
        %v7216 = vsel %vm2249, %v7184, %v6321
        %v7217 = vsel %vm2249, %v7185, %v6323
        %v7218 = vsel %vm2249, %v7186, %v6325
        %v7219 = vsel %vm2249, %v7187, %v6327
        %v7220 = vsel %vm2249, %v7188, %v6329
        %v7221 = vsel %vm2249, %v7189, %v6331
        %v7222 = vsel %vm2249, %v7190, %v6333
        %v7223 = vsel %vm2249, %v7191, %v6335
        %v7224 = vsel %vm2249, %v7192, %v6337
        %v7225 = vsel %vm2249, %v7193, %v6339
        %v7226 = vsel %vm2249, %v7194, %v6341
        %v7227 = vsel %vm2249, %v7195, %v6343
        %v7228 = vsel %vm2249, %v7196, %v6345
        %v7229 = vsel %vm2249, %v7197, %v6347
        %v7230 = vsel %vm2249, %v7198, %v6349
        %v7231 = vsel %vm2249, %v7199, %v6351
        %v7232 = vsel %vm2249, %v7200, %v6353
        %v7233 = vsel %vm2249, %v7201, %v6355
        %v7234 = vsel %vm2249, %v7202, %v6357
        %v7235 = vsel %vm2249, %v7203, %v6359
        %v7236 = vsel %vm2249, %v7204, %v6361
        %v7237 = vsel %vm2249, %v7205, %v6363
        %v7238 = vsel %vm2249, %v7206, %v6365
        %v7239 = vsel %vm2249, %v7207, %v6367
        %v7240 = vsel %vm2249, %v7208, %v6369
        %v7241 = vsel %vm2249, %v7209, %v6371
        %v7242 = vsel %vm2249, %v7210, %v6373
        %v7243 = vsel %vm2249, %v7211, %v6375
        %v7244 = vsel %vm2249, %v7212, %v6377
        %v7245 = vsel %vm2249, %v7213, %v6379
        %v7246 = vsel %vm2249, %v7214, %v6381
        %v7247 = vsel %vm2249, %v7215, %v6383
        %v7248 = vsel %vm2282, %v7216, %v6449
        %v7249 = vsel %vm2282, %v7217, %v6451
        %v7250 = vsel %vm2282, %v7218, %v6453
        %v7251 = vsel %vm2282, %v7219, %v6455
        %v7252 = vsel %vm2282, %v7220, %v6457
        %v7253 = vsel %vm2282, %v7221, %v6459
        %v7254 = vsel %vm2282, %v7222, %v6461
        %v7255 = vsel %vm2282, %v7223, %v6463
        %v7256 = vsel %vm2282, %v7224, %v6465
        %v7257 = vsel %vm2282, %v7225, %v6467
        %v7258 = vsel %vm2282, %v7226, %v6469
        %v7259 = vsel %vm2282, %v7227, %v6471
        %v7260 = vsel %vm2282, %v7228, %v6473
        %v7261 = vsel %vm2282, %v7229, %v6475
        %v7262 = vsel %vm2282, %v7230, %v6477
        %v7263 = vsel %vm2282, %v7231, %v6479
        %v7264 = vsel %vm2282, %v7232, %v6481
        %v7265 = vsel %vm2282, %v7233, %v6483
        %v7266 = vsel %vm2282, %v7234, %v6485
        %v7267 = vsel %vm2282, %v7235, %v6487
        %v7268 = vsel %vm2282, %v7236, %v6489
        %v7269 = vsel %vm2282, %v7237, %v6491
        %v7270 = vsel %vm2282, %v7238, %v6493
        %v7271 = vsel %vm2282, %v7239, %v6495
        %v7272 = vsel %vm2282, %v7240, %v6497
        %v7273 = vsel %vm2282, %v7241, %v6499
        %v7274 = vsel %vm2282, %v7242, %v6501
        %v7275 = vsel %vm2282, %v7243, %v6503
        %v7276 = vsel %vm2282, %v7244, %v6505
        %v7277 = vsel %vm2282, %v7245, %v6507
        %v7278 = vsel %vm2282, %v7246, %v6509
        %v7279 = vsel %vm2282, %v7247, %v6511
        %v7280 = vsel %vm2315, %v7248, %v6577
        %v7281 = vsel %vm2315, %v7249, %v6579
        %v7282 = vsel %vm2315, %v7250, %v6581
        %v7283 = vsel %vm2315, %v7251, %v6583
        %v7284 = vsel %vm2315, %v7252, %v6585
        %v7285 = vsel %vm2315, %v7253, %v6587
        %v7286 = vsel %vm2315, %v7254, %v6589
        %v7287 = vsel %vm2315, %v7255, %v6591
        %v7288 = vsel %vm2315, %v7256, %v6593
        %v7289 = vsel %vm2315, %v7257, %v6595
        %v7290 = vsel %vm2315, %v7258, %v6597
        %v7291 = vsel %vm2315, %v7259, %v6599
        %v7292 = vsel %vm2315, %v7260, %v6601
        %v7293 = vsel %vm2315, %v7261, %v6603
        %v7294 = vsel %vm2315, %v7262, %v6605
        %v7295 = vsel %vm2315, %v7263, %v6607
        %v7296 = vsel %vm2315, %v7264, %v6609
        %v7297 = vsel %vm2315, %v7265, %v6611
        %v7298 = vsel %vm2315, %v7266, %v6613
        %v7299 = vsel %vm2315, %v7267, %v6615
        %v7300 = vsel %vm2315, %v7268, %v6617
        %v7301 = vsel %vm2315, %v7269, %v6619
        %v7302 = vsel %vm2315, %v7270, %v6621
        %v7303 = vsel %vm2315, %v7271, %v6623
        %v7304 = vsel %vm2315, %v7272, %v6625
        %v7305 = vsel %vm2315, %v7273, %v6627
        %v7306 = vsel %vm2315, %v7274, %v6629
        %v7307 = vsel %vm2315, %v7275, %v6631
        %v7308 = vsel %vm2315, %v7276, %v6633
        %v7309 = vsel %vm2315, %v7277, %v6635
        %v7310 = vsel %vm2315, %v7278, %v6637
        %v7311 = vsel %vm2315, %v7279, %v6639
        %v7312 = vsel %vm2348, %v7280, %v6705
        %v7313 = vsel %vm2348, %v7281, %v6707
        %v7314 = vsel %vm2348, %v7282, %v6709
        %v7315 = vsel %vm2348, %v7283, %v6711
        %v7316 = vsel %vm2348, %v7284, %v6713
        %v7317 = vsel %vm2348, %v7285, %v6715
        %v7318 = vsel %vm2348, %v7286, %v6717
        %v7319 = vsel %vm2348, %v7287, %v6719
        %v7320 = vsel %vm2348, %v7288, %v6721
        %v7321 = vsel %vm2348, %v7289, %v6723
        %v7322 = vsel %vm2348, %v7290, %v6725
        %v7323 = vsel %vm2348, %v7291, %v6727
        %v7324 = vsel %vm2348, %v7292, %v6729
        %v7325 = vsel %vm2348, %v7293, %v6731
        %v7326 = vsel %vm2348, %v7294, %v6733
        %v7327 = vsel %vm2348, %v7295, %v6735
        %v7328 = vsel %vm2348, %v7296, %v6737
        %v7329 = vsel %vm2348, %v7297, %v6739
        %v7330 = vsel %vm2348, %v7298, %v6741
        %v7331 = vsel %vm2348, %v7299, %v6743
        %v7332 = vsel %vm2348, %v7300, %v6745
        %v7333 = vsel %vm2348, %v7301, %v6747
        %v7334 = vsel %vm2348, %v7302, %v6749
        %v7335 = vsel %vm2348, %v7303, %v6751
        %v7336 = vsel %vm2348, %v7304, %v6753
        %v7337 = vsel %vm2348, %v7305, %v6755
        %v7338 = vsel %vm2348, %v7306, %v6757
        %v7339 = vsel %vm2348, %v7307, %v6759
        %v7340 = vsel %vm2348, %v7308, %v6761
        %v7341 = vsel %vm2348, %v7309, %v6763
        %v7342 = vsel %vm2348, %v7310, %v6765
        %v7343 = vsel %vm2348, %v7311, %v6767
        %v7344 = vsel %vm2381, %v7312, %v6833
        %v7345 = vsel %vm2381, %v7313, %v6835
        %v7346 = vsel %vm2381, %v7314, %v6837
        %v7347 = vsel %vm2381, %v7315, %v6839
        %v7348 = vsel %vm2381, %v7316, %v6841
        %v7349 = vsel %vm2381, %v7317, %v6843
        %v7350 = vsel %vm2381, %v7318, %v6845
        %v7351 = vsel %vm2381, %v7319, %v6847
        %v7352 = vsel %vm2381, %v7320, %v6849
        %v7353 = vsel %vm2381, %v7321, %v6851
        %v7354 = vsel %vm2381, %v7322, %v6853
        %v7355 = vsel %vm2381, %v7323, %v6855
        %v7356 = vsel %vm2381, %v7324, %v6857
        %v7357 = vsel %vm2381, %v7325, %v6859
        %v7358 = vsel %vm2381, %v7326, %v6861
        %v7359 = vsel %vm2381, %v7327, %v6863
        %v7360 = vsel %vm2381, %v7328, %v6865
        %v7361 = vsel %vm2381, %v7329, %v6867
        %v7362 = vsel %vm2381, %v7330, %v6869
        %v7363 = vsel %vm2381, %v7331, %v6871
        %v7364 = vsel %vm2381, %v7332, %v6873
        %v7365 = vsel %vm2381, %v7333, %v6875
        %v7366 = vsel %vm2381, %v7334, %v6877
        %v7367 = vsel %vm2381, %v7335, %v6879
        %v7368 = vsel %vm2381, %v7336, %v6881
        %v7369 = vsel %vm2381, %v7337, %v6883
        %v7370 = vsel %vm2381, %v7338, %v6885
        %v7371 = vsel %vm2381, %v7339, %v6887
        %v7372 = vsel %vm2381, %v7340, %v6889
        %v7373 = vsel %vm2381, %v7341, %v6891
        %v7374 = vsel %vm2381, %v7342, %v6893
        %v7375 = vsel %vm2381, %v7343, %v6895
        %v7376 = vsel %vm2414, %v7344, %v6961
        %v7377 = vsel %vm2414, %v7345, %v6963
        %v7378 = vsel %vm2414, %v7346, %v6965
        %v7379 = vsel %vm2414, %v7347, %v6967
        %v7380 = vsel %vm2414, %v7348, %v6969
        %v7381 = vsel %vm2414, %v7349, %v6971
        %v7382 = vsel %vm2414, %v7350, %v6973
        %v7383 = vsel %vm2414, %v7351, %v6975
        %v7384 = vsel %vm2414, %v7352, %v6977
        %v7385 = vsel %vm2414, %v7353, %v6979
        %v7386 = vsel %vm2414, %v7354, %v6981
        %v7387 = vsel %vm2414, %v7355, %v6983
        %v7388 = vsel %vm2414, %v7356, %v6985
        %v7389 = vsel %vm2414, %v7357, %v6987
        %v7390 = vsel %vm2414, %v7358, %v6989
        %v7391 = vsel %vm2414, %v7359, %v6991
        %v7392 = vsel %vm2414, %v7360, %v6993
        %v7393 = vsel %vm2414, %v7361, %v6995
        %v7394 = vsel %vm2414, %v7362, %v6997
        %v7395 = vsel %vm2414, %v7363, %v6999
        %v7396 = vsel %vm2414, %v7364, %v7001
        %v7397 = vsel %vm2414, %v7365, %v7003
        %v7398 = vsel %vm2414, %v7366, %v7005
        %v7399 = vsel %vm2414, %v7367, %v7007
        %v7400 = vsel %vm2414, %v7368, %v7009
        %v7401 = vsel %vm2414, %v7369, %v7011
        %v7402 = vsel %vm2414, %v7370, %v7013
        %v7403 = vsel %vm2414, %v7371, %v7015
        %v7404 = vsel %vm2414, %v7372, %v7017
        %v7405 = vsel %vm2414, %v7373, %v7019
        %v7406 = vsel %vm2414, %v7374, %v7021
        %v7407 = vsel %vm2414, %v7375, %v7023
        %v7408 = vsel %vm2447, %v7376, %v7089
        %v7409 = vsel %vm2447, %v7377, %v7091
        %v7410 = vsel %vm2447, %v7378, %v7093
        %v7411 = vsel %vm2447, %v7379, %v7095
        %v7412 = vsel %vm2447, %v7380, %v7097
        %v7413 = vsel %vm2447, %v7381, %v7099
        %v7414 = vsel %vm2447, %v7382, %v7101
        %v7415 = vsel %vm2447, %v7383, %v7103
        %v7416 = vsel %vm2447, %v7384, %v7105
        %v7417 = vsel %vm2447, %v7385, %v7107
        %v7418 = vsel %vm2447, %v7386, %v7109
        %v7419 = vsel %vm2447, %v7387, %v7111
        %v7420 = vsel %vm2447, %v7388, %v7113
        %v7421 = vsel %vm2447, %v7389, %v7115
        %v7422 = vsel %vm2447, %v7390, %v7117
        %v7423 = vsel %vm2447, %v7391, %v7119
        %v7424 = vsel %vm2447, %v7392, %v7121
        %v7425 = vsel %vm2447, %v7393, %v7123
        %v7426 = vsel %vm2447, %v7394, %v7125
        %v7427 = vsel %vm2447, %v7395, %v7127
        %v7428 = vsel %vm2447, %v7396, %v7129
        %v7429 = vsel %vm2447, %v7397, %v7131
        %v7430 = vsel %vm2447, %v7398, %v7133
        %v7431 = vsel %vm2447, %v7399, %v7135
        %v7432 = vsel %vm2447, %v7400, %v7137
        %v7433 = vsel %vm2447, %v7401, %v7139
        %v7434 = vsel %vm2447, %v7402, %v7141
        %v7435 = vsel %vm2447, %v7403, %v7143
        %v7436 = vsel %vm2447, %v7404, %v7145
        %v7437 = vsel %vm2447, %v7405, %v7147
        %v7438 = vsel %vm2447, %v7406, %v7149
        %v7439 = vsel %vm2447, %v7407, %v7151
        %7472 = vrot.lane.b32.xlu0 %v7408, 64
        %v7473 = vpop.permute.xlu0 %7472
        %7474 = vrot.lane.b32.xlu0 %v7409, 64
        %v7475 = vpop.permute.xlu0 %7474
        %7476 = vrot.lane.b32.xlu0 %v7410, 64
        %v7477 = vpop.permute.xlu0 %7476
        %7478 = vrot.lane.b32.xlu0 %v7411, 64
        %v7479 = vpop.permute.xlu0 %7478
        %7480 = vrot.lane.b32.xlu0 %v7412, 64
        %v7481 = vpop.permute.xlu0 %7480
        %7482 = vrot.lane.b32.xlu0 %v7413, 64
        %v7483 = vpop.permute.xlu0 %7482
        %7484 = vrot.lane.b32.xlu0 %v7414, 64
        %v7485 = vpop.permute.xlu0 %7484
        %7486 = vrot.lane.b32.xlu0 %v7415, 64
        %v7487 = vpop.permute.xlu0 %7486
        %7488 = vrot.lane.b32.xlu0 %v7416, 64
        %v7489 = vpop.permute.xlu0 %7488
        %7490 = vrot.lane.b32.xlu0 %v7417, 64
        %v7491 = vpop.permute.xlu0 %7490
        %7492 = vrot.lane.b32.xlu0 %v7418, 64
        %v7493 = vpop.permute.xlu0 %7492
        %7494 = vrot.lane.b32.xlu0 %v7419, 64
        %v7495 = vpop.permute.xlu0 %7494
        %7496 = vrot.lane.b32.xlu0 %v7420, 64
        %v7497 = vpop.permute.xlu0 %7496
        %7498 = vrot.lane.b32.xlu0 %v7421, 64
        %v7499 = vpop.permute.xlu0 %7498
        %7500 = vrot.lane.b32.xlu0 %v7422, 64
        %v7501 = vpop.permute.xlu0 %7500
        %7502 = vrot.lane.b32.xlu0 %v7423, 64
        %v7503 = vpop.permute.xlu0 %7502
        %7504 = vrot.lane.b32.xlu0 %v7424, 64
        %v7505 = vpop.permute.xlu0 %7504
        %7506 = vrot.lane.b32.xlu0 %v7425, 64
        %v7507 = vpop.permute.xlu0 %7506
        %7508 = vrot.lane.b32.xlu0 %v7426, 64
        %v7509 = vpop.permute.xlu0 %7508
        %7510 = vrot.lane.b32.xlu0 %v7427, 64
        %v7511 = vpop.permute.xlu0 %7510
        %7512 = vrot.lane.b32.xlu0 %v7428, 64
        %v7513 = vpop.permute.xlu0 %7512
        %7514 = vrot.lane.b32.xlu0 %v7429, 64
        %v7515 = vpop.permute.xlu0 %7514
        %7516 = vrot.lane.b32.xlu0 %v7430, 64
        %v7517 = vpop.permute.xlu0 %7516
        %7518 = vrot.lane.b32.xlu0 %v7431, 64
        %v7519 = vpop.permute.xlu0 %7518
        %7520 = vrot.lane.b32.xlu0 %v7432, 64
        %v7521 = vpop.permute.xlu0 %7520
        %7522 = vrot.lane.b32.xlu0 %v7433, 64
        %v7523 = vpop.permute.xlu0 %7522
        %7524 = vrot.lane.b32.xlu0 %v7434, 64
        %v7525 = vpop.permute.xlu0 %7524
        %7526 = vrot.lane.b32.xlu0 %v7435, 64
        %v7527 = vpop.permute.xlu0 %7526
        %7528 = vrot.lane.b32.xlu0 %v7436, 64
        %v7529 = vpop.permute.xlu0 %7528
        %7530 = vrot.lane.b32.xlu0 %v7437, 64
        %v7531 = vpop.permute.xlu0 %7530
        %7532 = vrot.lane.b32.xlu0 %v7438, 64
        %v7533 = vpop.permute.xlu0 %7532
        %7534 = vrot.lane.b32.xlu0 %v7439, 64
        %v7535 = vpop.permute.xlu0 %7534
        %vm7568 = vcmask 523264
        %v7569 = vsel %vm7568, %v6128, %v7473
        %v7570 = vsel %vm7568, %v6129, %v7475
        %v7571 = vsel %vm7568, %v6130, %v7477
        %v7572 = vsel %vm7568, %v6131, %v7479
        %v7573 = vsel %vm7568, %v6132, %v7481
        %v7574 = vsel %vm7568, %v6133, %v7483
        %v7575 = vsel %vm7568, %v6134, %v7485
        %v7576 = vsel %vm7568, %v6135, %v7487
        %v7577 = vsel %vm7568, %v6136, %v7489
        %v7578 = vsel %vm7568, %v6137, %v7491
        %v7579 = vsel %vm7568, %v6138, %v7493
        %v7580 = vsel %vm7568, %v6139, %v7495
        %v7581 = vsel %vm7568, %v6140, %v7497
        %v7582 = vsel %vm7568, %v6141, %v7499
        %v7583 = vsel %vm7568, %v6142, %v7501
        %v7584 = vsel %vm7568, %v6143, %v7503
        %v7585 = vsel %vm7568, %v6144, %v7505
        %v7586 = vsel %vm7568, %v6145, %v7507
        %v7587 = vsel %vm7568, %v6146, %v7509
        %v7588 = vsel %vm7568, %v6147, %v7511
        %v7589 = vsel %vm7568, %v6148, %v7513
        %v7590 = vsel %vm7568, %v6149, %v7515
        %v7591 = vsel %vm7568, %v6150, %v7517
        %v7592 = vsel %vm7568, %v6151, %v7519
        %v7593 = vsel %vm7568, %v6152, %v7521
        %v7594 = vsel %vm7568, %v6153, %v7523
        %v7595 = vsel %vm7568, %v6154, %v7525
        %v7596 = vsel %vm7568, %v6155, %v7527
        %v7597 = vsel %vm7568, %v6156, %v7529
        %v7598 = vsel %vm7568, %v6157, %v7531
        %v7599 = vsel %vm7568, %v6158, %v7533
        %v7600 = vsel %vm7568, %v6159, %v7535
        %v7601 = vpack.c.bf16 %v7570, %v7569
        %v7602 = vpack.c.bf16 %v7572, %v7571
        %v7603 = vpack.c.bf16 %v7574, %v7573
        %v7604 = vpack.c.bf16 %v7576, %v7575
        %v7605 = vpack.c.bf16 %v7578, %v7577
        %v7606 = vpack.c.bf16 %v7580, %v7579
        %v7607 = vpack.c.bf16 %v7582, %v7581
        %v7608 = vpack.c.bf16 %v7584, %v7583
        %v7609 = vpack.c.bf16 %v7586, %v7585
        %v7610 = vpack.c.bf16 %v7588, %v7587
        %v7611 = vpack.c.bf16 %v7590, %v7589
        %v7612 = vpack.c.bf16 %v7592, %v7591
        %v7613 = vpack.c.bf16 %v7594, %v7593
        %v7614 = vpack.c.bf16 %v7596, %v7595
        %v7615 = vpack.c.bf16 %v7598, %v7597
        %v7616 = vpack.c.bf16 %v7600, %v7599
        %v7617 = vld [vmem:[%s5] sm:$0xf]
        %v7618 = vld [vmem:[%s5 + $0x4] sm:$0xf]
        %v7619 = vld [vmem:[%s5 + $0x8] sm:$0xf]
        %v7620 = vld [vmem:[%s5 + $0xc] sm:$0xf]
        %v7621 = vld [vmem:[%s5 + $0x10] sm:$0xf]
        %v7622 = vld [vmem:[%s5 + $0x14] sm:$0xf]
        %v7623 = vld [vmem:[%s5 + $0x18] sm:$0xf]
        %v7624 = vld [vmem:[%s5 + $0x1c] sm:$0xf]
        %v7625 = vld [vmem:[%s5 + $0x20] sm:$0xf]
        %v7626 = vld [vmem:[%s5 + $0x24] sm:$0xf]
        %v7627 = vld [vmem:[%s5 + $0x28] sm:$0xf]
        %v7628 = vld [vmem:[%s5 + $0x2c] sm:$0xf]
        %v7629 = vld [vmem:[%s5 + $0x30] sm:$0x3]
        %v7630 = vld [vmem:[%s6] sm:$0x1]
        %v7632 = vlaneseq
        %v7633 = vshrl.u32 %v7632, 7
        %v7634 = vsub.s32 0, %v7633
        %v7635 = vrot.slane %v7630, %v7634
        %v7650 = vunpack.c.l.b16 %v7617
        %v7651 = vunpack.c.l.b16 %v7618
        %v7652 = vunpack.c.l.b16 %v7619
        %v7653 = vunpack.c.l.b16 %v7620
        %v7654 = vunpack.c.l.b16 %v7621
        %v7655 = vunpack.c.l.b16 %v7622
        %v7656 = vunpack.c.l.b16 %v7623
        %v7657 = vunpack.c.l.b16 %v7624
        %v7658 = vunpack.c.l.b16 %v7625
        %v7659 = vunpack.c.l.b16 %v7626
        %v7660 = vunpack.c.l.b16 %v7627
        %v7661 = vunpack.c.l.b16 %v7628
        %v7662 = vunpack.c.l.b16 %v7629
        %v7663 = vpack.c.b16 %v7651, %v7650
        %v7664 = vpack.c.b16 %v7653, %v7652
        %v7665 = vpack.c.b16 %v7655, %v7654
        %v7666 = vpack.c.b16 %v7657, %v7656
        %v7667 = vpack.c.b16 %v7659, %v7658
        %v7668 = vpack.c.b16 %v7661, %v7660
        %v7669 = vpack.c.b16 %v7662, %v7662
        %vm7676 = vcmask 818176
        %v7678 = vsel %vm7676, %v7601, 0
        %v7681 = vsel %vm7676, %v7602, 0
        %v7684 = vsel %vm7676, %v7603, 0
        %v7687 = vsel %vm7676, %v7604, 0
        %v7690 = vsel %vm7676, %v7605, 0
        %v7693 = vsel %vm7676, %v7606, 0
        %v7696 = vsel %vm7676, %v7607, 0
        %v7699 = vsel %vm7676, %v7608, 0
        %v7702 = vsel %vm7676, %v7609, 0
        %v7705 = vsel %vm7676, %v7610, 0
        %v7708 = vsel %vm7676, %v7611, 0
        %v7711 = vsel %vm7676, %v7612, 0
        %v7714 = vsel %vm7676, %v7613, 0
        %v7717 = vsel %vm7676, %v7614, 0
        %v7720 = vsel %vm7676, %v7615, 0
        %v7723 = vsel %vm7676, %v7616, 0
        %v7726 = vsel %vm501, %v7669, 0
        %7728 = vmatprep.subr.bf16.mxu0 0
        %7729 = vmatpush1.bf16.msra.mxu0 0
        %7730 = vmatprep.subr.bf16.mxu0 0
        %7731 = vmatpush1.bf16.msra.mxu0 %v7726
        %7732 = vmatprep.subr.bf16.mxu0 0
        %7733 = vmatpush1.bf16.msra.mxu0 %v7668
        %7734 = vmatprep.subr.bf16.mxu0 0
        %7735 = vmatpush1.bf16.msra.mxu0 %v7667
        %7736 = vmatprep.subr.bf16.mxu0 0
        %7737 = vmatpush1.bf16.msra.mxu0 %v7666
        %7738 = vmatprep.subr.bf16.mxu0 0
        %7739 = vmatpush1.bf16.msra.mxu0 %v7665
        %7740 = vmatprep.subr.bf16.mxu0 0
        %7741 = vmatpush1.bf16.msra.mxu0 %v7664
        %7742 = vmatprep.subr.bf16.mxu0 0
        %7743 = vmatpush1.bf16.msra.mxu0 %v7663
        %7744 = vmatprep.subr.bf16.mxu0 0
        %7745 = vmatpush2.bf16.msra.mxu0 0
        %7746 = vmatprep.subr.bf16.mxu0 0
        %7747 = vmatpush2.bf16.msra.mxu0 0
        %7748 = vmatprep.subr.bf16.mxu0 0
        %7749 = vmatpush2.bf16.msra.mxu0 0
        %7750 = vmatprep.subr.bf16.mxu0 0
        %7751 = vmatpush2.bf16.msra.mxu0 0
        %7752 = vmatprep.subr.bf16.mxu0 0
        %7753 = vmatpush2.bf16.msra.mxu0 0
        %7754 = vmatprep.subr.bf16.mxu0 0
        %7755 = vmatpush2.bf16.msra.mxu0 0
        %7756 = vmatprep.subr.bf16.mxu0 0
        %7757 = vmatpush2.bf16.msra.mxu0 0
        %7758 = vmatprep.subr.bf16.mxu0 0
        %7759 = vmatpush2.bf16.msra.mxu0 0
        %7760 = vmatprep.mubr.bf16.mxu0 0
        %7761 = vmatmul.mubr.bf16.gmra.mxu0 %v7678
        %v7762 = vpop.f32.mrf.mxu0
        %v7763 = vadd.f32 %v7635, %v7762
        %v7764 = vpop.f32.mrf.mxu0
        %v7765 = vpop.f32.mrf.mxu0
        %v7766 = vadd.f32 %v7635, %v7765
        %v7767 = vpop.f32.mrf.mxu0
        %7768 = vmatprep.mubr.bf16.mxu0 0
        %7769 = vmatmul.mubr.bf16.gmra.mxu0 %v7681
        %v7770 = vpop.f32.mrf.mxu0
        %v7771 = vadd.f32 %v7635, %v7770
        %v7772 = vpop.f32.mrf.mxu0
        %v7773 = vpop.f32.mrf.mxu0
        %v7774 = vadd.f32 %v7635, %v7773
        %v7775 = vpop.f32.mrf.mxu0
        %7776 = vmatprep.mubr.bf16.mxu0 0
        %7777 = vmatmul.mubr.bf16.gmra.mxu0 %v7684
        %v7778 = vpop.f32.mrf.mxu0
        %v7779 = vadd.f32 %v7635, %v7778
        %v7780 = vpop.f32.mrf.mxu0
        %v7781 = vpop.f32.mrf.mxu0
        %v7782 = vadd.f32 %v7635, %v7781
        %v7783 = vpop.f32.mrf.mxu0
        %7784 = vmatprep.mubr.bf16.mxu0 0
        %7785 = vmatmul.mubr.bf16.gmra.mxu0 %v7687
        %v7786 = vpop.f32.mrf.mxu0
        %v7787 = vadd.f32 %v7635, %v7786
        %v7788 = vpop.f32.mrf.mxu0
        %v7789 = vpop.f32.mrf.mxu0
        %v7790 = vadd.f32 %v7635, %v7789
        %v7791 = vpop.f32.mrf.mxu0
        %7792 = vmatprep.mubr.bf16.mxu0 0
        %7793 = vmatmul.mubr.bf16.gmra.mxu0 %v7690
        %v7794 = vpop.f32.mrf.mxu0
        %v7795 = vadd.f32 %v7635, %v7794
        %v7796 = vpop.f32.mrf.mxu0
        %v7797 = vpop.f32.mrf.mxu0
        %v7798 = vadd.f32 %v7635, %v7797
        %v7799 = vpop.f32.mrf.mxu0
        %7800 = vmatprep.mubr.bf16.mxu0 0
        %7801 = vmatmul.mubr.bf16.gmra.mxu0 %v7693
        %v7802 = vpop.f32.mrf.mxu0
        %v7803 = vadd.f32 %v7635, %v7802
        %v7804 = vpop.f32.mrf.mxu0
        %v7805 = vpop.f32.mrf.mxu0
        %v7806 = vadd.f32 %v7635, %v7805
        %v7807 = vpop.f32.mrf.mxu0
        %7808 = vmatprep.mubr.bf16.mxu0 0
        %7809 = vmatmul.mubr.bf16.gmra.mxu0 %v7696
        %v7810 = vpop.f32.mrf.mxu0
        %v7811 = vadd.f32 %v7635, %v7810
        %v7812 = vpop.f32.mrf.mxu0
        %v7813 = vpop.f32.mrf.mxu0
        %v7814 = vadd.f32 %v7635, %v7813
        %v7815 = vpop.f32.mrf.mxu0
        %7816 = vmatprep.mubr.bf16.mxu0 0
        %7817 = vmatmul.mubr.bf16.gmra.mxu0 %v7699
        %v7818 = vpop.f32.mrf.mxu0
        %v7819 = vadd.f32 %v7635, %v7818
        %v7820 = vpop.f32.mrf.mxu0
        %v7821 = vpop.f32.mrf.mxu0
        %v7822 = vadd.f32 %v7635, %v7821
        %v7823 = vpop.f32.mrf.mxu0
        %7824 = vmatprep.mubr.bf16.mxu0 0
        %7825 = vmatmul.mubr.bf16.gmra.mxu0 %v7702
        %v7826 = vpop.f32.mrf.mxu0
        %v7827 = vadd.f32 %v7635, %v7826
        %v7828 = vpop.f32.mrf.mxu0
        %v7829 = vpop.f32.mrf.mxu0
        %v7830 = vadd.f32 %v7635, %v7829
        %v7831 = vpop.f32.mrf.mxu0
        %7832 = vmatprep.mubr.bf16.mxu0 0
        %7833 = vmatmul.mubr.bf16.gmra.mxu0 %v7705
        %v7834 = vpop.f32.mrf.mxu0
        %v7835 = vadd.f32 %v7635, %v7834
        %v7836 = vpop.f32.mrf.mxu0
        %v7837 = vpop.f32.mrf.mxu0
        %v7838 = vadd.f32 %v7635, %v7837
        %v7839 = vpop.f32.mrf.mxu0
        %7840 = vmatprep.mubr.bf16.mxu0 0
        %7841 = vmatmul.mubr.bf16.gmra.mxu0 %v7708
        %v7842 = vpop.f32.mrf.mxu0
        %v7843 = vadd.f32 %v7635, %v7842
        %v7844 = vpop.f32.mrf.mxu0
        %v7845 = vpop.f32.mrf.mxu0
        %v7846 = vadd.f32 %v7635, %v7845
        %v7847 = vpop.f32.mrf.mxu0
        %7848 = vmatprep.mubr.bf16.mxu0 0
        %7849 = vmatmul.mubr.bf16.gmra.mxu0 %v7711
        %v7850 = vpop.f32.mrf.mxu0
        %v7851 = vadd.f32 %v7635, %v7850
        %v7852 = vpop.f32.mrf.mxu0
        %v7853 = vpop.f32.mrf.mxu0
        %v7854 = vadd.f32 %v7635, %v7853
        %v7855 = vpop.f32.mrf.mxu0
        %7856 = vmatprep.mubr.bf16.mxu0 0
        %7857 = vmatmul.mubr.bf16.gmra.mxu0 %v7714
        %v7858 = vpop.f32.mrf.mxu0
        %v7859 = vadd.f32 %v7635, %v7858
        %v7860 = vpop.f32.mrf.mxu0
        %v7861 = vpop.f32.mrf.mxu0
        %v7862 = vadd.f32 %v7635, %v7861
        %v7863 = vpop.f32.mrf.mxu0
        %7864 = vmatprep.mubr.bf16.mxu0 0
        %7865 = vmatmul.mubr.bf16.gmra.mxu0 %v7717
        %v7866 = vpop.f32.mrf.mxu0
        %v7867 = vadd.f32 %v7635, %v7866
        %v7868 = vpop.f32.mrf.mxu0
        %v7869 = vpop.f32.mrf.mxu0
        %v7870 = vadd.f32 %v7635, %v7869
        %v7871 = vpop.f32.mrf.mxu0
        %7872 = vmatprep.mubr.bf16.mxu0 0
        %7873 = vmatmul.mubr.bf16.gmra.mxu0 %v7720
        %v7874 = vpop.f32.mrf.mxu0
        %v7875 = vadd.f32 %v7635, %v7874
        %v7876 = vpop.f32.mrf.mxu0
        %v7877 = vpop.f32.mrf.mxu0
        %v7878 = vadd.f32 %v7635, %v7877
        %v7879 = vpop.f32.mrf.mxu0
        %7880 = vmatprep.mubr.bf16.mxu0 0
        %7881 = vmatmul.mubr.bf16.gmra.mxu0 %v7723
        %v7882 = vpop.f32.mrf.mxu0
        %v7883 = vadd.f32 %v7635, %v7882
        %v7884 = vpop.f32.mrf.mxu0
        %v7885 = vpop.f32.mrf.mxu0
        %v7886 = vadd.f32 %v7635, %v7885
        %v7887 = vpop.f32.mrf.mxu0
        %7888 = vdwg.mxu0
        %v7889 = vmax.f32 %v7763, 0.0
        %v7890 = vmax.f32 %v7766, 0.0
        %v7891 = vmax.f32 %v7771, 0.0
        %v7892 = vmax.f32 %v7774, 0.0
        %v7893 = vmax.f32 %v7779, 0.0
        %v7894 = vmax.f32 %v7782, 0.0
        %v7895 = vmax.f32 %v7787, 0.0
        %v7896 = vmax.f32 %v7790, 0.0
        %v7897 = vmax.f32 %v7795, 0.0
        %v7898 = vmax.f32 %v7798, 0.0
        %v7899 = vmax.f32 %v7803, 0.0
        %v7900 = vmax.f32 %v7806, 0.0
        %v7901 = vmax.f32 %v7811, 0.0
        %v7902 = vmax.f32 %v7814, 0.0
        %v7903 = vmax.f32 %v7819, 0.0
        %v7904 = vmax.f32 %v7822, 0.0
        %v7905 = vmax.f32 %v7827, 0.0
        %v7906 = vmax.f32 %v7830, 0.0
        %v7907 = vmax.f32 %v7835, 0.0
        %v7908 = vmax.f32 %v7838, 0.0
        %v7909 = vmax.f32 %v7843, 0.0
        %v7910 = vmax.f32 %v7846, 0.0
        %v7911 = vmax.f32 %v7851, 0.0
        %v7912 = vmax.f32 %v7854, 0.0
        %v7913 = vmax.f32 %v7859, 0.0
        %v7914 = vmax.f32 %v7862, 0.0
        %v7915 = vmax.f32 %v7867, 0.0
        %v7916 = vmax.f32 %v7870, 0.0
        %v7917 = vmax.f32 %v7875, 0.0
        %v7918 = vmax.f32 %v7878, 0.0
        %v7919 = vmax.f32 %v7883, 0.0
        %v7920 = vmax.f32 %v7886, 0.0
        %7921 = vst.msk [vmem:[#allocation4] sm:$0xff] %vm452, -inf
        %7922 = vst.msk [vmem:[#allocation4 + $0x8] sm:$0xff] %vm452, -inf
        %7923 = vst.msk [vmem:[#allocation4 + $0x10] sm:$0x3] %vm700, -inf
        %s7924 = scalar_lea.vmem [#allocation4], 408
        %7925 = vst.msk [vmem:[%s7924] sm:$0xff] %vm452, -inf
        %7926 = vst.msk [vmem:[%s7924 + $0x8] sm:$0xff] %vm452, -inf
        %7927 = vst.msk [vmem:[%s7924 + $0x10] sm:$0x3] %vm700, -inf
        %7928 = vst.msk [vmem:[#allocation4] sm:$0x1] %vm706, -inf
        %7929 = vst.msk [vmem:[#allocation4 + $0x18] sm:$0x1] %vm706, -inf
        %7930 = vst.msk [vmem:[#allocation4 + $0x30] sm:$0x1] %vm706, -inf
        %7931 = vst.msk [vmem:[#allocation4 + $0x48] sm:$0x1] %vm706, -inf
        %7932 = vst.msk [vmem:[#allocation4 + $0x60] sm:$0x1] %vm706, -inf
        %7933 = vst.msk [vmem:[#allocation4 + $0x78] sm:$0x1] %vm706, -inf
        %7934 = vst.msk [vmem:[#allocation4 + $0x90] sm:$0x1] %vm706, -inf
        %7935 = vst.msk [vmem:[#allocation4 + $0xa8] sm:$0x1] %vm706, -inf
        %7936 = vst.msk [vmem:[#allocation4 + $0xc0] sm:$0x1] %vm706, -inf
        %7937 = vst.msk [vmem:[#allocation4 + $0xd8] sm:$0x1] %vm706, -inf
        %7938 = vst.msk [vmem:[#allocation4 + $0xf0] sm:$0x1] %vm706, -inf
        %7939 = vst.msk [vmem:[#allocation4 + $0x108] sm:$0x1] %vm706, -inf
        %7940 = vst.msk [vmem:[#allocation4 + $0x120] sm:$0x1] %vm706, -inf
        %7941 = vst.msk [vmem:[#allocation4 + $0x138] sm:$0x1] %vm706, -inf
        %7942 = vst.msk [vmem:[#allocation4 + $0x150] sm:$0x1] %vm706, -inf
        %7943 = vst.msk [vmem:[#allocation4 + $0x168] sm:$0x1] %vm706, -inf
        %7944 = vst.msk [vmem:[#allocation4 + $0x180] sm:$0x1] %vm706, -inf
        %7945 = vst.msk [vmem:[#allocation4 + $0x198] sm:$0x1] %vm706, -inf
        %7946 = vst.msk [vmem:[#allocation4 + $0x11] sm:$0x1] %vm706, -inf
        %7947 = vst.msk [vmem:[#allocation4 + $0x29] sm:$0x1] %vm706, -inf
        %7948 = vst.msk [vmem:[#allocation4 + $0x41] sm:$0x1] %vm706, -inf
        %7949 = vst.msk [vmem:[#allocation4 + $0x59] sm:$0x1] %vm706, -inf
        %7950 = vst.msk [vmem:[#allocation4 + $0x71] sm:$0x1] %vm706, -inf
        %7951 = vst.msk [vmem:[#allocation4 + $0x89] sm:$0x1] %vm706, -inf
        %7952 = vst.msk [vmem:[#allocation4 + $0xa1] sm:$0x1] %vm706, -inf
        %7953 = vst.msk [vmem:[#allocation4 + $0xb9] sm:$0x1] %vm706, -inf
        %7954 = vst.msk [vmem:[#allocation4 + $0xd1] sm:$0x1] %vm706, -inf
        %7955 = vst.msk [vmem:[#allocation4 + $0xe9] sm:$0x1] %vm706, -inf
        %7956 = vst.msk [vmem:[#allocation4 + $0x101] sm:$0x1] %vm706, -inf
        %7957 = vst.msk [vmem:[#allocation4 + $0x119] sm:$0x1] %vm706, -inf
        %7958 = vst.msk [vmem:[#allocation4 + $0x131] sm:$0x1] %vm706, -inf
        %7959 = vst.msk [vmem:[#allocation4 + $0x149] sm:$0x1] %vm706, -inf
        %7960 = vst.msk [vmem:[#allocation4 + $0x161] sm:$0x1] %vm706, -inf
        %7961 = vst.msk [vmem:[#allocation4 + $0x179] sm:$0x1] %vm706, -inf
        %7962 = vst.msk [vmem:[#allocation4 + $0x191] sm:$0x1] %vm706, -inf
        %7963 = vst.msk [vmem:[#allocation4 + $0x1a9] sm:$0x1] %vm706, -inf
        %v7964 = vunpack.c.l.bf16 %v332
        %v7965 = vunpack.c.l.bf16 %v333
        %v7966 = vunpack.c.l.bf16 %v334
        %v7967 = vunpack.c.l.bf16 %v335
        %v7968 = vunpack.c.l.bf16 %v336
        %v7969 = vunpack.c.l.bf16 %v337
        %v7970 = vunpack.c.l.bf16 %v338
        %v7971 = vunpack.c.l.bf16 %v339
        %v7972 = vunpack.c.l.bf16 %v340
        %v7973 = vunpack.c.l.bf16 %v341
        %v7974 = vunpack.c.l.bf16 %v342
        %v7975 = vunpack.c.l.bf16 %v343
        %v7976 = vunpack.c.l.bf16 %v344
        %v7977 = vunpack.c.l.bf16 %v345
        %v7978 = vunpack.c.l.bf16 %v346
        %v7979 = vunpack.c.l.bf16 %v347
        %v7980 = vunpack.c.l.bf16 %v348
        %v7981 = vunpack.c.l.bf16 %v349
        %v7982 = vunpack.c.l.bf16 %v350
        %v7983 = vunpack.c.l.bf16 %v351
        %v7984 = vunpack.c.l.bf16 %v352
        %v7985 = vunpack.c.l.bf16 %v353
        %v7986 = vunpack.c.l.bf16 %v354
        %v7987 = vunpack.c.l.bf16 %v355
        %v7988 = vunpack.c.l.bf16 %v356
        %v7989 = vunpack.c.l.bf16 %v357
        %v7990 = vunpack.c.l.bf16 %v358
        %v7991 = vunpack.c.l.bf16 %v359
        %v7992 = vunpack.c.l.bf16 %v360
        %v7993 = vunpack.c.l.bf16 %v361
        %v7994 = vunpack.c.l.bf16 %v362
        %v7995 = vunpack.c.l.bf16 %v363
        %s7996 = scalar_lea.vmem [#allocation4], 24
        %7997 = vst.msk [vmem:[%s7996 + $0x1] sm:$0xff] %vm452, %v7964
        %7998 = vst.msk [vmem:[%s7996 + $0x9] sm:$0xff] %vm452, %v7965
        %7999 = vst.msk [vmem:[%s7996 + $0x19] sm:$0xff] %vm452, %v7966
        %8000 = vst.msk [vmem:[%s7996 + $0x21] sm:$0xff] %vm452, %v7967
        %8001 = vst.msk [vmem:[%s7996 + $0x31] sm:$0xff] %vm452, %v7968
        %8002 = vst.msk [vmem:[%s7996 + $0x39] sm:$0xff] %vm452, %v7969
        %8003 = vst.msk [vmem:[%s7996 + $0x49] sm:$0xff] %vm452, %v7970
        %8004 = vst.msk [vmem:[%s7996 + $0x51] sm:$0xff] %vm452, %v7971
        %8005 = vst.msk [vmem:[%s7996 + $0x61] sm:$0xff] %vm452, %v7972
        %8006 = vst.msk [vmem:[%s7996 + $0x69] sm:$0xff] %vm452, %v7973
        %8007 = vst.msk [vmem:[%s7996 + $0x79] sm:$0xff] %vm452, %v7974
        %8008 = vst.msk [vmem:[%s7996 + $0x81] sm:$0xff] %vm452, %v7975
        %8009 = vst.msk [vmem:[%s7996 + $0x91] sm:$0xff] %vm452, %v7976
        %8010 = vst.msk [vmem:[%s7996 + $0x99] sm:$0xff] %vm452, %v7977
        %8011 = vst.msk [vmem:[%s7996 + $0xa9] sm:$0xff] %vm452, %v7978
        %8012 = vst.msk [vmem:[%s7996 + $0xb1] sm:$0xff] %vm452, %v7979
        %8013 = vst.msk [vmem:[%s7996 + $0xc1] sm:$0xff] %vm452, %v7980
        %8014 = vst.msk [vmem:[%s7996 + $0xc9] sm:$0xff] %vm452, %v7981
        %8015 = vst.msk [vmem:[%s7996 + $0xd9] sm:$0xff] %vm452, %v7982
        %8016 = vst.msk [vmem:[%s7996 + $0xe1] sm:$0xff] %vm452, %v7983
        %8017 = vst.msk [vmem:[%s7996 + $0xf1] sm:$0xff] %vm452, %v7984
        %8018 = vst.msk [vmem:[%s7996 + $0xf9] sm:$0xff] %vm452, %v7985
        %8019 = vst.msk [vmem:[%s7996 + $0x109] sm:$0xff] %vm452, %v7986
        %8020 = vst.msk [vmem:[%s7996 + $0x111] sm:$0xff] %vm452, %v7987
        %8021 = vst.msk [vmem:[%s7996 + $0x121] sm:$0xff] %vm452, %v7988
        %8022 = vst.msk [vmem:[%s7996 + $0x129] sm:$0xff] %vm452, %v7989
        %8023 = vst.msk [vmem:[%s7996 + $0x139] sm:$0xff] %vm452, %v7990
        %8024 = vst.msk [vmem:[%s7996 + $0x141] sm:$0xff] %vm452, %v7991
        %8025 = vst.msk [vmem:[%s7996 + $0x151] sm:$0xff] %vm452, %v7992
        %8026 = vst.msk [vmem:[%s7996 + $0x159] sm:$0xff] %vm452, %v7993
        %8027 = vst.msk [vmem:[%s7996 + $0x169] sm:$0xff] %vm452, %v7994
        %8028 = vst.msk [vmem:[%s7996 + $0x171] sm:$0xff] %vm452, %v7995
        %v8029 = vld [vmem:[#allocation4] sm:$0xff]
        %v8030 = vld [vmem:[#allocation4 + $0x8] sm:$0xff]
        %v8031 = vld [vmem:[#allocation4 + $0x18] sm:$0xff]
        %v8032 = vld [vmem:[#allocation4 + $0x20] sm:$0xff]
        %v8033 = vld [vmem:[#allocation4 + $0x30] sm:$0xff]
        %v8034 = vld [vmem:[#allocation4 + $0x38] sm:$0xff]
        %v8035 = vld [vmem:[#allocation4 + $0x48] sm:$0xff]
        %v8036 = vld [vmem:[#allocation4 + $0x50] sm:$0xff]
        %v8037 = vld [vmem:[#allocation4 + $0x60] sm:$0xff]
        %v8038 = vld [vmem:[#allocation4 + $0x68] sm:$0xff]
        %v8039 = vld [vmem:[#allocation4 + $0x78] sm:$0xff]
        %v8040 = vld [vmem:[#allocation4 + $0x80] sm:$0xff]
        %v8041 = vld [vmem:[#allocation4 + $0x90] sm:$0xff]
        %v8042 = vld [vmem:[#allocation4 + $0x98] sm:$0xff]
        %v8043 = vld [vmem:[#allocation4 + $0xa8] sm:$0xff]
        %v8044 = vld [vmem:[#allocation4 + $0xb0] sm:$0xff]
        %v8045 = vld [vmem:[#allocation4 + $0xc0] sm:$0xff]
        %v8046 = vld [vmem:[#allocation4 + $0xc8] sm:$0xff]
        %v8047 = vld [vmem:[#allocation4 + $0xd8] sm:$0xff]
        %v8048 = vld [vmem:[#allocation4 + $0xe0] sm:$0xff]
        %v8049 = vld [vmem:[#allocation4 + $0xf0] sm:$0xff]
        %v8050 = vld [vmem:[#allocation4 + $0xf8] sm:$0xff]
        %v8051 = vld [vmem:[#allocation4 + $0x108] sm:$0xff]
        %v8052 = vld [vmem:[#allocation4 + $0x110] sm:$0xff]
        %v8053 = vld [vmem:[#allocation4 + $0x120] sm:$0xff]
        %v8054 = vld [vmem:[#allocation4 + $0x128] sm:$0xff]
        %v8055 = vld [vmem:[#allocation4 + $0x138] sm:$0xff]
        %v8056 = vld [vmem:[#allocation4 + $0x140] sm:$0xff]
        %v8057 = vld [vmem:[#allocation4 + $0x150] sm:$0xff]
        %v8058 = vld [vmem:[#allocation4 + $0x158] sm:$0xff]
        %v8059 = vld [vmem:[#allocation4 + $0x168] sm:$0xff]
        %v8060 = vld [vmem:[#allocation4 + $0x170] sm:$0xff]
        %v8061 = vld [vmem:[#allocation4 + $0x180] sm:$0xff]
        %v8062 = vld [vmem:[#allocation4 + $0x188] sm:$0xff]
        %v8063 = vld [vmem:[#allocation4 + $0x198] sm:$0xff]
        %v8064 = vld [vmem:[#allocation4 + $0x1a0] sm:$0xff]
        %v8065 = vld [vmem:[#allocation4 + $0x1] sm:$0xff]
        %v8066 = vld [vmem:[#allocation4 + $0x9] sm:$0xff]
        %v8067 = vld [vmem:[#allocation4 + $0x19] sm:$0xff]
        %v8068 = vld [vmem:[#allocation4 + $0x21] sm:$0xff]
        %v8069 = vld [vmem:[#allocation4 + $0x31] sm:$0xff]
        %v8070 = vld [vmem:[#allocation4 + $0x39] sm:$0xff]
        %v8071 = vld [vmem:[#allocation4 + $0x49] sm:$0xff]
        %v8072 = vld [vmem:[#allocation4 + $0x51] sm:$0xff]
        %v8073 = vld [vmem:[#allocation4 + $0x61] sm:$0xff]
        %v8074 = vld [vmem:[#allocation4 + $0x69] sm:$0xff]
        %v8075 = vld [vmem:[#allocation4 + $0x79] sm:$0xff]
        %v8076 = vld [vmem:[#allocation4 + $0x81] sm:$0xff]
        %v8077 = vld [vmem:[#allocation4 + $0x91] sm:$0xff]
        %v8078 = vld [vmem:[#allocation4 + $0x99] sm:$0xff]
        %v8079 = vld [vmem:[#allocation4 + $0xa9] sm:$0xff]
        %v8080 = vld [vmem:[#allocation4 + $0xb1] sm:$0xff]
        %v8081 = vld [vmem:[#allocation4 + $0xc1] sm:$0xff]
        %v8082 = vld [vmem:[#allocation4 + $0xc9] sm:$0xff]
        %v8083 = vld [vmem:[#allocation4 + $0xd9] sm:$0xff]
        %v8084 = vld [vmem:[#allocation4 + $0xe1] sm:$0xff]
        %v8085 = vld [vmem:[#allocation4 + $0xf1] sm:$0xff]
        %v8086 = vld [vmem:[#allocation4 + $0xf9] sm:$0xff]
        %v8087 = vld [vmem:[#allocation4 + $0x109] sm:$0xff]
        %v8088 = vld [vmem:[#allocation4 + $0x111] sm:$0xff]
        %v8089 = vld [vmem:[#allocation4 + $0x121] sm:$0xff]
        %v8090 = vld [vmem:[#allocation4 + $0x129] sm:$0xff]
        %v8091 = vld [vmem:[#allocation4 + $0x139] sm:$0xff]
        %v8092 = vld [vmem:[#allocation4 + $0x141] sm:$0xff]
        %v8093 = vld [vmem:[#allocation4 + $0x151] sm:$0xff]
        %v8094 = vld [vmem:[#allocation4 + $0x159] sm:$0xff]
        %v8095 = vld [vmem:[#allocation4 + $0x169] sm:$0xff]
        %v8096 = vld [vmem:[#allocation4 + $0x171] sm:$0xff]
        %v8097 = vld [vmem:[#allocation4 + $0x181] sm:$0xff]
        %v8098 = vld [vmem:[#allocation4 + $0x189] sm:$0xff]
        %v8099 = vld [vmem:[#allocation4 + $0x199] sm:$0xff]
        %v8100 = vld [vmem:[#allocation4 + $0x1a1] sm:$0xff]
        %v8101 = vmax.f32 %v8029, %v8065
        %v8102 = vmax.f32 %v8030, %v8066
        %v8103 = vmax.f32 %v8031, %v8067
        %v8104 = vmax.f32 %v8032, %v8068
        %v8105 = vmax.f32 %v8033, %v8069
        %v8106 = vmax.f32 %v8034, %v8070
        %v8107 = vmax.f32 %v8035, %v8071
        %v8108 = vmax.f32 %v8036, %v8072
        %v8109 = vmax.f32 %v8037, %v8073
        %v8110 = vmax.f32 %v8038, %v8074
        %v8111 = vmax.f32 %v8039, %v8075
        %v8112 = vmax.f32 %v8040, %v8076
        %v8113 = vmax.f32 %v8041, %v8077
        %v8114 = vmax.f32 %v8042, %v8078
        %v8115 = vmax.f32 %v8043, %v8079
        %v8116 = vmax.f32 %v8044, %v8080
        %v8117 = vmax.f32 %v8045, %v8081
        %v8118 = vmax.f32 %v8046, %v8082
        %v8119 = vmax.f32 %v8047, %v8083
        %v8120 = vmax.f32 %v8048, %v8084
        %v8121 = vmax.f32 %v8049, %v8085
        %v8122 = vmax.f32 %v8050, %v8086
        %v8123 = vmax.f32 %v8051, %v8087
        %v8124 = vmax.f32 %v8052, %v8088
        %v8125 = vmax.f32 %v8053, %v8089
        %v8126 = vmax.f32 %v8054, %v8090
        %v8127 = vmax.f32 %v8055, %v8091
        %v8128 = vmax.f32 %v8056, %v8092
        %v8129 = vmax.f32 %v8057, %v8093
        %v8130 = vmax.f32 %v8058, %v8094
        %v8131 = vmax.f32 %v8059, %v8095
        %v8132 = vmax.f32 %v8060, %v8096
        %v8133 = vmax.f32 %v8061, %v8097
        %v8134 = vmax.f32 %v8062, %v8098
        %v8135 = vmax.f32 %v8063, %v8099
        %v8136 = vmax.f32 %v8064, %v8100
        %v8137 = vld [vmem:[#allocation4 + $0x2] sm:$0xff]
        %v8138 = vld [vmem:[#allocation4 + $0xa] sm:$0xff]
        %v8139 = vld [vmem:[#allocation4 + $0x1a] sm:$0xff]
        %v8140 = vld [vmem:[#allocation4 + $0x22] sm:$0xff]
        %v8141 = vld [vmem:[#allocation4 + $0x32] sm:$0xff]
        %v8142 = vld [vmem:[#allocation4 + $0x3a] sm:$0xff]
        %v8143 = vld [vmem:[#allocation4 + $0x4a] sm:$0xff]
        %v8144 = vld [vmem:[#allocation4 + $0x52] sm:$0xff]
        %v8145 = vld [vmem:[#allocation4 + $0x62] sm:$0xff]
        %v8146 = vld [vmem:[#allocation4 + $0x6a] sm:$0xff]
        %v8147 = vld [vmem:[#allocation4 + $0x7a] sm:$0xff]
        %v8148 = vld [vmem:[#allocation4 + $0x82] sm:$0xff]
        %v8149 = vld [vmem:[#allocation4 + $0x92] sm:$0xff]
        %v8150 = vld [vmem:[#allocation4 + $0x9a] sm:$0xff]
        %v8151 = vld [vmem:[#allocation4 + $0xaa] sm:$0xff]
        %v8152 = vld [vmem:[#allocation4 + $0xb2] sm:$0xff]
        %v8153 = vld [vmem:[#allocation4 + $0xc2] sm:$0xff]
        %v8154 = vld [vmem:[#allocation4 + $0xca] sm:$0xff]
        %v8155 = vld [vmem:[#allocation4 + $0xda] sm:$0xff]
        %v8156 = vld [vmem:[#allocation4 + $0xe2] sm:$0xff]
        %v8157 = vld [vmem:[#allocation4 + $0xf2] sm:$0xff]
        %v8158 = vld [vmem:[#allocation4 + $0xfa] sm:$0xff]
        %v8159 = vld [vmem:[#allocation4 + $0x10a] sm:$0xff]
        %v8160 = vld [vmem:[#allocation4 + $0x112] sm:$0xff]
        %v8161 = vld [vmem:[#allocation4 + $0x122] sm:$0xff]
        %v8162 = vld [vmem:[#allocation4 + $0x12a] sm:$0xff]
        %v8163 = vld [vmem:[#allocation4 + $0x13a] sm:$0xff]
        %v8164 = vld [vmem:[#allocation4 + $0x142] sm:$0xff]
        %v8165 = vld [vmem:[#allocation4 + $0x152] sm:$0xff]
        %v8166 = vld [vmem:[#allocation4 + $0x15a] sm:$0xff]
        %v8167 = vld [vmem:[#allocation4 + $0x16a] sm:$0xff]
        %v8168 = vld [vmem:[#allocation4 + $0x172] sm:$0xff]
        %v8169 = vld [vmem:[#allocation4 + $0x182] sm:$0xff]
        %v8170 = vld [vmem:[#allocation4 + $0x18a] sm:$0xff]
        %v8171 = vld [vmem:[#allocation4 + $0x19a] sm:$0xff]
        %v8172 = vld [vmem:[#allocation4 + $0x1a2] sm:$0xff]
        %v8173 = vmax.f32 %v8101, %v8137
        %v8174 = vmax.f32 %v8102, %v8138
        %v8175 = vmax.f32 %v8103, %v8139
        %v8176 = vmax.f32 %v8104, %v8140
        %v8177 = vmax.f32 %v8105, %v8141
        %v8178 = vmax.f32 %v8106, %v8142
        %v8179 = vmax.f32 %v8107, %v8143
        %v8180 = vmax.f32 %v8108, %v8144
        %v8181 = vmax.f32 %v8109, %v8145
        %v8182 = vmax.f32 %v8110, %v8146
        %v8183 = vmax.f32 %v8111, %v8147
        %v8184 = vmax.f32 %v8112, %v8148
        %v8185 = vmax.f32 %v8113, %v8149
        %v8186 = vmax.f32 %v8114, %v8150
        %v8187 = vmax.f32 %v8115, %v8151
        %v8188 = vmax.f32 %v8116, %v8152
        %v8189 = vmax.f32 %v8117, %v8153
        %v8190 = vmax.f32 %v8118, %v8154
        %v8191 = vmax.f32 %v8119, %v8155
        %v8192 = vmax.f32 %v8120, %v8156
        %v8193 = vmax.f32 %v8121, %v8157
        %v8194 = vmax.f32 %v8122, %v8158
        %v8195 = vmax.f32 %v8123, %v8159
        %v8196 = vmax.f32 %v8124, %v8160
        %v8197 = vmax.f32 %v8125, %v8161
        %v8198 = vmax.f32 %v8126, %v8162
        %v8199 = vmax.f32 %v8127, %v8163
        %v8200 = vmax.f32 %v8128, %v8164
        %v8201 = vmax.f32 %v8129, %v8165
        %v8202 = vmax.f32 %v8130, %v8166
        %v8203 = vmax.f32 %v8131, %v8167
        %v8204 = vmax.f32 %v8132, %v8168
        %v8205 = vmax.f32 %v8133, %v8169
        %v8206 = vmax.f32 %v8134, %v8170
        %v8207 = vmax.f32 %v8135, %v8171
        %v8208 = vmax.f32 %v8136, %v8172
        %v8209 = vmax.f32 %v8173, %v8175
        %v8210 = vmax.f32 %v8174, %v8176
        %v8211 = vmax.f32 %v8175, %v8177
        %v8212 = vmax.f32 %v8176, %v8178
        %v8213 = vmax.f32 %v8177, %v8179
        %v8214 = vmax.f32 %v8178, %v8180
        %v8215 = vmax.f32 %v8179, %v8181
        %v8216 = vmax.f32 %v8180, %v8182
        %v8217 = vmax.f32 %v8181, %v8183
        %v8218 = vmax.f32 %v8182, %v8184
        %v8219 = vmax.f32 %v8183, %v8185
        %v8220 = vmax.f32 %v8184, %v8186
        %v8221 = vmax.f32 %v8185, %v8187
        %v8222 = vmax.f32 %v8186, %v8188
        %v8223 = vmax.f32 %v8187, %v8189
        %v8224 = vmax.f32 %v8188, %v8190
        %v8225 = vmax.f32 %v8189, %v8191
        %v8226 = vmax.f32 %v8190, %v8192
        %v8227 = vmax.f32 %v8191, %v8193
        %v8228 = vmax.f32 %v8192, %v8194
        %v8229 = vmax.f32 %v8193, %v8195
        %v8230 = vmax.f32 %v8194, %v8196
        %v8231 = vmax.f32 %v8195, %v8197
        %v8232 = vmax.f32 %v8196, %v8198
        %v8233 = vmax.f32 %v8197, %v8199
        %v8234 = vmax.f32 %v8198, %v8200
        %v8235 = vmax.f32 %v8199, %v8201
        %v8236 = vmax.f32 %v8200, %v8202
        %v8237 = vmax.f32 %v8201, %v8203
        %v8238 = vmax.f32 %v8202, %v8204
        %v8239 = vmax.f32 %v8203, %v8205
        %v8240 = vmax.f32 %v8204, %v8206
        %v8241 = vmax.f32 %v8209, %v8177
        %v8242 = vmax.f32 %v8210, %v8178
        %v8243 = vmax.f32 %v8211, %v8179
        %v8244 = vmax.f32 %v8212, %v8180
        %v8245 = vmax.f32 %v8213, %v8181
        %v8246 = vmax.f32 %v8214, %v8182
        %v8247 = vmax.f32 %v8215, %v8183
        %v8248 = vmax.f32 %v8216, %v8184
        %v8249 = vmax.f32 %v8217, %v8185
        %v8250 = vmax.f32 %v8218, %v8186
        %v8251 = vmax.f32 %v8219, %v8187
        %v8252 = vmax.f32 %v8220, %v8188
        %v8253 = vmax.f32 %v8221, %v8189
        %v8254 = vmax.f32 %v8222, %v8190
        %v8255 = vmax.f32 %v8223, %v8191
        %v8256 = vmax.f32 %v8224, %v8192
        %v8257 = vmax.f32 %v8225, %v8193
        %v8258 = vmax.f32 %v8226, %v8194
        %v8259 = vmax.f32 %v8227, %v8195
        %v8260 = vmax.f32 %v8228, %v8196
        %v8261 = vmax.f32 %v8229, %v8197
        %v8262 = vmax.f32 %v8230, %v8198
        %v8263 = vmax.f32 %v8231, %v8199
        %v8264 = vmax.f32 %v8232, %v8200
        %v8265 = vmax.f32 %v8233, %v8201
        %v8266 = vmax.f32 %v8234, %v8202
        %v8267 = vmax.f32 %v8235, %v8203
        %v8268 = vmax.f32 %v8236, %v8204
        %v8269 = vmax.f32 %v8237, %v8205
        %v8270 = vmax.f32 %v8238, %v8206
        %v8271 = vmax.f32 %v8239, %v8207
        %v8272 = vmax.f32 %v8240, %v8208
        %v8273 = vpack.c.bf16 %v8242, %v8241
        %v8274 = vpack.c.bf16 %v8244, %v8243
        %v8275 = vpack.c.bf16 %v8246, %v8245
        %v8276 = vpack.c.bf16 %v8248, %v8247
        %v8277 = vpack.c.bf16 %v8250, %v8249
        %v8278 = vpack.c.bf16 %v8252, %v8251
        %v8279 = vpack.c.bf16 %v8254, %v8253
        %v8280 = vpack.c.bf16 %v8256, %v8255
        %v8281 = vpack.c.bf16 %v8258, %v8257
        %v8282 = vpack.c.bf16 %v8260, %v8259
        %v8283 = vpack.c.bf16 %v8262, %v8261
        %v8284 = vpack.c.bf16 %v8264, %v8263
        %v8285 = vpack.c.bf16 %v8266, %v8265
        %v8286 = vpack.c.bf16 %v8268, %v8267
        %v8287 = vpack.c.bf16 %v8270, %v8269
        %v8288 = vpack.c.bf16 %v8272, %v8271
        %v8289 = vld [vmem:[%s7] sm:$0x3]
        %v8290 = vld [vmem:[%s8] sm:$0x1]
        %v8292 = vlaneseq
        %v8293 = vshrl.u32 %v8292, 7
        %v8294 = vsub.s32 0, %v8293
        %v8295 = vrot.slane %v8290, %v8294
        %v8298 = vsel %vm452, %v8273, 0
        %v8301 = vsel %vm452, %v8274, 0
        %v8304 = vsel %vm452, %v8275, 0
        %v8307 = vsel %vm452, %v8276, 0
        %v8310 = vsel %vm452, %v8277, 0
        %v8313 = vsel %vm452, %v8278, 0
        %v8316 = vsel %vm452, %v8279, 0
        %v8319 = vsel %vm452, %v8280, 0
        %v8322 = vsel %vm452, %v8281, 0
        %v8325 = vsel %vm452, %v8282, 0
        %v8328 = vsel %vm452, %v8283, 0
        %v8331 = vsel %vm452, %v8284, 0
        %v8334 = vsel %vm452, %v8285, 0
        %v8337 = vsel %vm452, %v8286, 0
        %v8340 = vsel %vm452, %v8287, 0
        %v8343 = vsel %vm452, %v8288, 0
        %v8346 = vsel %vm501, %v8289, 0
        %8348 = vmatprep.subr.bf16.mxu0 0
        %8349 = vmatpush1.bf16.msra.mxu0 0
        %8350 = vmatprep.subr.bf16.mxu0 0
        %8351 = vmatpush1.bf16.msra.mxu0 0
        %8352 = vmatprep.subr.bf16.mxu0 0
        %8353 = vmatpush1.bf16.msra.mxu0 0
        %8354 = vmatprep.subr.bf16.mxu0 0
        %8355 = vmatpush1.bf16.msra.mxu0 0
        %8356 = vmatprep.subr.bf16.mxu0 0
        %8357 = vmatpush1.bf16.msra.mxu0 0
        %8358 = vmatprep.subr.bf16.mxu0 0
        %8359 = vmatpush1.bf16.msra.mxu0 0
        %8360 = vmatprep.subr.bf16.mxu0 0
        %8361 = vmatpush1.bf16.msra.mxu0 0
        %8362 = vmatprep.subr.bf16.mxu0 0
        %8363 = vmatpush1.bf16.msra.mxu0 %v8346
        %8364 = vmatprep.subr.bf16.mxu0 0
        %8365 = vmatpush2.bf16.msra.mxu0 0
        %8366 = vmatprep.subr.bf16.mxu0 0
        %8367 = vmatpush2.bf16.msra.mxu0 0
        %8368 = vmatprep.subr.bf16.mxu0 0
        %8369 = vmatpush2.bf16.msra.mxu0 0
        %8370 = vmatprep.subr.bf16.mxu0 0
        %8371 = vmatpush2.bf16.msra.mxu0 0
        %8372 = vmatprep.subr.bf16.mxu0 0
        %8373 = vmatpush2.bf16.msra.mxu0 0
        %8374 = vmatprep.subr.bf16.mxu0 0
        %8375 = vmatpush2.bf16.msra.mxu0 0
        %8376 = vmatprep.subr.bf16.mxu0 0
        %8377 = vmatpush2.bf16.msra.mxu0 0
        %8378 = vmatprep.subr.bf16.mxu0 0
        %8379 = vmatpush2.bf16.msra.mxu0 0
        %8380 = vmatprep.mubr.bf16.mxu0 0
        %8381 = vmatmul.mubr.bf16.gmra.mxu0 %v8298
        %v8382 = vpop.f32.mrf.mxu0
        %v8383 = vadd.f32 %v8295, %v8382
        %v8384 = vpop.f32.mrf.mxu0
        %v8385 = vpop.f32.mrf.mxu0
        %v8386 = vadd.f32 %v8295, %v8385
        %v8387 = vpop.f32.mrf.mxu0
        %8388 = vmatprep.mubr.bf16.mxu0 0
        %8389 = vmatmul.mubr.bf16.gmra.mxu0 %v8301
        %v8390 = vpop.f32.mrf.mxu0
        %v8391 = vadd.f32 %v8295, %v8390
        %v8392 = vpop.f32.mrf.mxu0
        %v8393 = vpop.f32.mrf.mxu0
        %v8394 = vadd.f32 %v8295, %v8393
        %v8395 = vpop.f32.mrf.mxu0
        %8396 = vmatprep.mubr.bf16.mxu0 0
        %8397 = vmatmul.mubr.bf16.gmra.mxu0 %v8304
        %v8398 = vpop.f32.mrf.mxu0
        %v8399 = vadd.f32 %v8295, %v8398
        %v8400 = vpop.f32.mrf.mxu0
        %v8401 = vpop.f32.mrf.mxu0
        %v8402 = vadd.f32 %v8295, %v8401
        %v8403 = vpop.f32.mrf.mxu0
        %8404 = vmatprep.mubr.bf16.mxu0 0
        %8405 = vmatmul.mubr.bf16.gmra.mxu0 %v8307
        %v8406 = vpop.f32.mrf.mxu0
        %v8407 = vadd.f32 %v8295, %v8406
        %v8408 = vpop.f32.mrf.mxu0
        %v8409 = vpop.f32.mrf.mxu0
        %v8410 = vadd.f32 %v8295, %v8409
        %v8411 = vpop.f32.mrf.mxu0
        %8412 = vmatprep.mubr.bf16.mxu0 0
        %8413 = vmatmul.mubr.bf16.gmra.mxu0 %v8310
        %v8414 = vpop.f32.mrf.mxu0
        %v8415 = vadd.f32 %v8295, %v8414
        %v8416 = vpop.f32.mrf.mxu0
        %v8417 = vpop.f32.mrf.mxu0
        %v8418 = vadd.f32 %v8295, %v8417
        %v8419 = vpop.f32.mrf.mxu0
        %8420 = vmatprep.mubr.bf16.mxu0 0
        %8421 = vmatmul.mubr.bf16.gmra.mxu0 %v8313
        %v8422 = vpop.f32.mrf.mxu0
        %v8423 = vadd.f32 %v8295, %v8422
        %v8424 = vpop.f32.mrf.mxu0
        %v8425 = vpop.f32.mrf.mxu0
        %v8426 = vadd.f32 %v8295, %v8425
        %v8427 = vpop.f32.mrf.mxu0
        %8428 = vmatprep.mubr.bf16.mxu0 0
        %8429 = vmatmul.mubr.bf16.gmra.mxu0 %v8316
        %v8430 = vpop.f32.mrf.mxu0
        %v8431 = vadd.f32 %v8295, %v8430
        %v8432 = vpop.f32.mrf.mxu0
        %v8433 = vpop.f32.mrf.mxu0
        %v8434 = vadd.f32 %v8295, %v8433
        %v8435 = vpop.f32.mrf.mxu0
        %8436 = vmatprep.mubr.bf16.mxu0 0
        %8437 = vmatmul.mubr.bf16.gmra.mxu0 %v8319
        %v8438 = vpop.f32.mrf.mxu0
        %v8439 = vadd.f32 %v8295, %v8438
        %v8440 = vpop.f32.mrf.mxu0
        %v8441 = vpop.f32.mrf.mxu0
        %v8442 = vadd.f32 %v8295, %v8441
        %v8443 = vpop.f32.mrf.mxu0
        %8444 = vmatprep.mubr.bf16.mxu0 0
        %8445 = vmatmul.mubr.bf16.gmra.mxu0 %v8322
        %v8446 = vpop.f32.mrf.mxu0
        %v8447 = vadd.f32 %v8295, %v8446
        %v8448 = vpop.f32.mrf.mxu0
        %v8449 = vpop.f32.mrf.mxu0
        %v8450 = vadd.f32 %v8295, %v8449
        %v8451 = vpop.f32.mrf.mxu0
        %8452 = vmatprep.mubr.bf16.mxu0 0
        %8453 = vmatmul.mubr.bf16.gmra.mxu0 %v8325
        %v8454 = vpop.f32.mrf.mxu0
        %v8455 = vadd.f32 %v8295, %v8454
        %v8456 = vpop.f32.mrf.mxu0
        %v8457 = vpop.f32.mrf.mxu0
        %v8458 = vadd.f32 %v8295, %v8457
        %v8459 = vpop.f32.mrf.mxu0
        %8460 = vmatprep.mubr.bf16.mxu0 0
        %8461 = vmatmul.mubr.bf16.gmra.mxu0 %v8328
        %v8462 = vpop.f32.mrf.mxu0
        %v8463 = vadd.f32 %v8295, %v8462
        %v8464 = vpop.f32.mrf.mxu0
        %v8465 = vpop.f32.mrf.mxu0
        %v8466 = vadd.f32 %v8295, %v8465
        %v8467 = vpop.f32.mrf.mxu0
        %8468 = vmatprep.mubr.bf16.mxu0 0
        %8469 = vmatmul.mubr.bf16.gmra.mxu0 %v8331
        %v8470 = vpop.f32.mrf.mxu0
        %v8471 = vadd.f32 %v8295, %v8470
        %v8472 = vpop.f32.mrf.mxu0
        %v8473 = vpop.f32.mrf.mxu0
        %v8474 = vadd.f32 %v8295, %v8473
        %v8475 = vpop.f32.mrf.mxu0
        %8476 = vmatprep.mubr.bf16.mxu0 0
        %8477 = vmatmul.mubr.bf16.gmra.mxu0 %v8334
        %v8478 = vpop.f32.mrf.mxu0
        %v8479 = vadd.f32 %v8295, %v8478
        %v8480 = vpop.f32.mrf.mxu0
        %v8481 = vpop.f32.mrf.mxu0
        %v8482 = vadd.f32 %v8295, %v8481
        %v8483 = vpop.f32.mrf.mxu0
        %8484 = vmatprep.mubr.bf16.mxu0 0
        %8485 = vmatmul.mubr.bf16.gmra.mxu0 %v8337
        %v8486 = vpop.f32.mrf.mxu0
        %v8487 = vadd.f32 %v8295, %v8486
        %v8488 = vpop.f32.mrf.mxu0
        %v8489 = vpop.f32.mrf.mxu0
        %v8490 = vadd.f32 %v8295, %v8489
        %v8491 = vpop.f32.mrf.mxu0
        %8492 = vmatprep.mubr.bf16.mxu0 0
        %8493 = vmatmul.mubr.bf16.gmra.mxu0 %v8340
        %v8494 = vpop.f32.mrf.mxu0
        %v8495 = vadd.f32 %v8295, %v8494
        %v8496 = vpop.f32.mrf.mxu0
        %v8497 = vpop.f32.mrf.mxu0
        %v8498 = vadd.f32 %v8295, %v8497
        %v8499 = vpop.f32.mrf.mxu0
        %8500 = vmatprep.mubr.bf16.mxu0 0
        %8501 = vmatmul.mubr.bf16.gmra.mxu0 %v8343
        %v8502 = vpop.f32.mrf.mxu0
        %v8503 = vadd.f32 %v8295, %v8502
        %v8504 = vpop.f32.mrf.mxu0
        %v8505 = vpop.f32.mrf.mxu0
        %v8506 = vadd.f32 %v8295, %v8505
        %v8507 = vpop.f32.mrf.mxu0
        %8508 = vdwg.mxu0
        %v8509 = vmax.f32 %v8383, 0.0
        %v8510 = vmax.f32 %v8386, 0.0
        %v8511 = vmax.f32 %v8391, 0.0
        %v8512 = vmax.f32 %v8394, 0.0
        %v8513 = vmax.f32 %v8399, 0.0
        %v8514 = vmax.f32 %v8402, 0.0
        %v8515 = vmax.f32 %v8407, 0.0
        %v8516 = vmax.f32 %v8410, 0.0
        %v8517 = vmax.f32 %v8415, 0.0
        %v8518 = vmax.f32 %v8418, 0.0
        %v8519 = vmax.f32 %v8423, 0.0
        %v8520 = vmax.f32 %v8426, 0.0
        %v8521 = vmax.f32 %v8431, 0.0
        %v8522 = vmax.f32 %v8434, 0.0
        %v8523 = vmax.f32 %v8439, 0.0
        %v8524 = vmax.f32 %v8442, 0.0
        %v8525 = vmax.f32 %v8447, 0.0
        %v8526 = vmax.f32 %v8450, 0.0
        %v8527 = vmax.f32 %v8455, 0.0
        %v8528 = vmax.f32 %v8458, 0.0
        %v8529 = vmax.f32 %v8463, 0.0
        %v8530 = vmax.f32 %v8466, 0.0
        %v8531 = vmax.f32 %v8471, 0.0
        %v8532 = vmax.f32 %v8474, 0.0
        %v8533 = vmax.f32 %v8479, 0.0
        %v8534 = vmax.f32 %v8482, 0.0
        %v8535 = vmax.f32 %v8487, 0.0
        %v8536 = vmax.f32 %v8490, 0.0
        %v8537 = vmax.f32 %v8495, 0.0
        %v8538 = vmax.f32 %v8498, 0.0
        %v8539 = vmax.f32 %v8503, 0.0
        %v8540 = vmax.f32 %v8506, 0.0
        %8573 = vrot.lane.b32.xlu0 %v2736, 8
        %v8574 = vpop.permute.xlu0 %8573
        %8575 = vrot.lane.b32.xlu0 %v2737, 8
        %v8576 = vpop.permute.xlu0 %8575
        %8577 = vrot.lane.b32.xlu0 %v2738, 8
        %v8578 = vpop.permute.xlu0 %8577
        %8579 = vrot.lane.b32.xlu0 %v2739, 8
        %v8580 = vpop.permute.xlu0 %8579
        %8581 = vrot.lane.b32.xlu0 %v2740, 8
        %v8582 = vpop.permute.xlu0 %8581
        %8583 = vrot.lane.b32.xlu0 %v2741, 8
        %v8584 = vpop.permute.xlu0 %8583
        %8585 = vrot.lane.b32.xlu0 %v2742, 8
        %v8586 = vpop.permute.xlu0 %8585
        %8587 = vrot.lane.b32.xlu0 %v2743, 8
        %v8588 = vpop.permute.xlu0 %8587
        %8589 = vrot.lane.b32.xlu0 %v2744, 8
        %v8590 = vpop.permute.xlu0 %8589
        %8591 = vrot.lane.b32.xlu0 %v2745, 8
        %v8592 = vpop.permute.xlu0 %8591
        %8593 = vrot.lane.b32.xlu0 %v2746, 8
        %v8594 = vpop.permute.xlu0 %8593
        %8595 = vrot.lane.b32.xlu0 %v2747, 8
        %v8596 = vpop.permute.xlu0 %8595
        %8597 = vrot.lane.b32.xlu0 %v2748, 8
        %v8598 = vpop.permute.xlu0 %8597
        %8599 = vrot.lane.b32.xlu0 %v2749, 8
        %v8600 = vpop.permute.xlu0 %8599
        %8601 = vrot.lane.b32.xlu0 %v2750, 8
        %v8602 = vpop.permute.xlu0 %8601
        %8603 = vrot.lane.b32.xlu0 %v2751, 8
        %v8604 = vpop.permute.xlu0 %8603
        %8605 = vrot.lane.b32.xlu0 %v2752, 8
        %v8606 = vpop.permute.xlu0 %8605
        %8607 = vrot.lane.b32.xlu0 %v2753, 8
        %v8608 = vpop.permute.xlu0 %8607
        %8609 = vrot.lane.b32.xlu0 %v2754, 8
        %v8610 = vpop.permute.xlu0 %8609
        %8611 = vrot.lane.b32.xlu0 %v2755, 8
        %v8612 = vpop.permute.xlu0 %8611
        %8613 = vrot.lane.b32.xlu0 %v2756, 8
        %v8614 = vpop.permute.xlu0 %8613
        %8615 = vrot.lane.b32.xlu0 %v2757, 8
        %v8616 = vpop.permute.xlu0 %8615
        %8617 = vrot.lane.b32.xlu0 %v2758, 8
        %v8618 = vpop.permute.xlu0 %8617
        %8619 = vrot.lane.b32.xlu0 %v2759, 8
        %v8620 = vpop.permute.xlu0 %8619
        %8621 = vrot.lane.b32.xlu0 %v2760, 8
        %v8622 = vpop.permute.xlu0 %8621
        %8623 = vrot.lane.b32.xlu0 %v2761, 8
        %v8624 = vpop.permute.xlu0 %8623
        %8625 = vrot.lane.b32.xlu0 %v2762, 8
        %v8626 = vpop.permute.xlu0 %8625
        %8627 = vrot.lane.b32.xlu0 %v2763, 8
        %v8628 = vpop.permute.xlu0 %8627
        %8629 = vrot.lane.b32.xlu0 %v2764, 8
        %v8630 = vpop.permute.xlu0 %8629
        %8631 = vrot.lane.b32.xlu0 %v2765, 8
        %v8632 = vpop.permute.xlu0 %8631
        %8633 = vrot.lane.b32.xlu0 %v2766, 8
        %v8634 = vpop.permute.xlu0 %8633
        %8635 = vrot.lane.b32.xlu0 %v2767, 8
        %v8636 = vpop.permute.xlu0 %8635
        %8701 = vrot.lane.b32.xlu0 %v7889, 16
        %v8702 = vpop.permute.xlu0 %8701
        %8703 = vrot.lane.b32.xlu0 %v7890, 16
        %v8704 = vpop.permute.xlu0 %8703
        %8705 = vrot.lane.b32.xlu0 %v7891, 16
        %v8706 = vpop.permute.xlu0 %8705
        %8707 = vrot.lane.b32.xlu0 %v7892, 16
        %v8708 = vpop.permute.xlu0 %8707
        %8709 = vrot.lane.b32.xlu0 %v7893, 16
        %v8710 = vpop.permute.xlu0 %8709
        %8711 = vrot.lane.b32.xlu0 %v7894, 16
        %v8712 = vpop.permute.xlu0 %8711
        %8713 = vrot.lane.b32.xlu0 %v7895, 16
        %v8714 = vpop.permute.xlu0 %8713
        %8715 = vrot.lane.b32.xlu0 %v7896, 16
        %v8716 = vpop.permute.xlu0 %8715
        %8717 = vrot.lane.b32.xlu0 %v7897, 16
        %v8718 = vpop.permute.xlu0 %8717
        %8719 = vrot.lane.b32.xlu0 %v7898, 16
        %v8720 = vpop.permute.xlu0 %8719
        %8721 = vrot.lane.b32.xlu0 %v7899, 16
        %v8722 = vpop.permute.xlu0 %8721
        %8723 = vrot.lane.b32.xlu0 %v7900, 16
        %v8724 = vpop.permute.xlu0 %8723
        %8725 = vrot.lane.b32.xlu0 %v7901, 16
        %v8726 = vpop.permute.xlu0 %8725
        %8727 = vrot.lane.b32.xlu0 %v7902, 16
        %v8728 = vpop.permute.xlu0 %8727
        %8729 = vrot.lane.b32.xlu0 %v7903, 16
        %v8730 = vpop.permute.xlu0 %8729
        %8731 = vrot.lane.b32.xlu0 %v7904, 16
        %v8732 = vpop.permute.xlu0 %8731
        %8733 = vrot.lane.b32.xlu0 %v7905, 16
        %v8734 = vpop.permute.xlu0 %8733
        %8735 = vrot.lane.b32.xlu0 %v7906, 16
        %v8736 = vpop.permute.xlu0 %8735
        %8737 = vrot.lane.b32.xlu0 %v7907, 16
        %v8738 = vpop.permute.xlu0 %8737
        %8739 = vrot.lane.b32.xlu0 %v7908, 16
        %v8740 = vpop.permute.xlu0 %8739
        %8741 = vrot.lane.b32.xlu0 %v7909, 16
        %v8742 = vpop.permute.xlu0 %8741
        %8743 = vrot.lane.b32.xlu0 %v7910, 16
        %v8744 = vpop.permute.xlu0 %8743
        %8745 = vrot.lane.b32.xlu0 %v7911, 16
        %v8746 = vpop.permute.xlu0 %8745
        %8747 = vrot.lane.b32.xlu0 %v7912, 16
        %v8748 = vpop.permute.xlu0 %8747
        %8749 = vrot.lane.b32.xlu0 %v7913, 16
        %v8750 = vpop.permute.xlu0 %8749
        %8751 = vrot.lane.b32.xlu0 %v7914, 16
        %v8752 = vpop.permute.xlu0 %8751
        %8753 = vrot.lane.b32.xlu0 %v7915, 16
        %v8754 = vpop.permute.xlu0 %8753
        %8755 = vrot.lane.b32.xlu0 %v7916, 16
        %v8756 = vpop.permute.xlu0 %8755
        %8757 = vrot.lane.b32.xlu0 %v7917, 16
        %v8758 = vpop.permute.xlu0 %8757
        %8759 = vrot.lane.b32.xlu0 %v7918, 16
        %v8760 = vpop.permute.xlu0 %8759
        %8761 = vrot.lane.b32.xlu0 %v7919, 16
        %v8762 = vpop.permute.xlu0 %8761
        %8763 = vrot.lane.b32.xlu0 %v7920, 16
        %v8764 = vpop.permute.xlu0 %8763
        %8829 = vrot.lane.b32.xlu0 %v8509, 24
        %v8830 = vpop.permute.xlu0 %8829
        %8831 = vrot.lane.b32.xlu0 %v8510, 24
        %v8832 = vpop.permute.xlu0 %8831
        %8833 = vrot.lane.b32.xlu0 %v8511, 24
        %v8834 = vpop.permute.xlu0 %8833
        %8835 = vrot.lane.b32.xlu0 %v8512, 24
        %v8836 = vpop.permute.xlu0 %8835
        %8837 = vrot.lane.b32.xlu0 %v8513, 24
        %v8838 = vpop.permute.xlu0 %8837
        %8839 = vrot.lane.b32.xlu0 %v8514, 24
        %v8840 = vpop.permute.xlu0 %8839
        %8841 = vrot.lane.b32.xlu0 %v8515, 24
        %v8842 = vpop.permute.xlu0 %8841
        %8843 = vrot.lane.b32.xlu0 %v8516, 24
        %v8844 = vpop.permute.xlu0 %8843
        %8845 = vrot.lane.b32.xlu0 %v8517, 24
        %v8846 = vpop.permute.xlu0 %8845
        %8847 = vrot.lane.b32.xlu0 %v8518, 24
        %v8848 = vpop.permute.xlu0 %8847
        %8849 = vrot.lane.b32.xlu0 %v8519, 24
        %v8850 = vpop.permute.xlu0 %8849
        %8851 = vrot.lane.b32.xlu0 %v8520, 24
        %v8852 = vpop.permute.xlu0 %8851
        %8853 = vrot.lane.b32.xlu0 %v8521, 24
        %v8854 = vpop.permute.xlu0 %8853
        %8855 = vrot.lane.b32.xlu0 %v8522, 24
        %v8856 = vpop.permute.xlu0 %8855
        %8857 = vrot.lane.b32.xlu0 %v8523, 24
        %v8858 = vpop.permute.xlu0 %8857
        %8859 = vrot.lane.b32.xlu0 %v8524, 24
        %v8860 = vpop.permute.xlu0 %8859
        %8861 = vrot.lane.b32.xlu0 %v8525, 24
        %v8862 = vpop.permute.xlu0 %8861
        %8863 = vrot.lane.b32.xlu0 %v8526, 24
        %v8864 = vpop.permute.xlu0 %8863
        %8865 = vrot.lane.b32.xlu0 %v8527, 24
        %v8866 = vpop.permute.xlu0 %8865
        %8867 = vrot.lane.b32.xlu0 %v8528, 24
        %v8868 = vpop.permute.xlu0 %8867
        %8869 = vrot.lane.b32.xlu0 %v8529, 24
        %v8870 = vpop.permute.xlu0 %8869
        %8871 = vrot.lane.b32.xlu0 %v8530, 24
        %v8872 = vpop.permute.xlu0 %8871
        %8873 = vrot.lane.b32.xlu0 %v8531, 24
        %v8874 = vpop.permute.xlu0 %8873
        %8875 = vrot.lane.b32.xlu0 %v8532, 24
        %v8876 = vpop.permute.xlu0 %8875
        %8877 = vrot.lane.b32.xlu0 %v8533, 24
        %v8878 = vpop.permute.xlu0 %8877
        %8879 = vrot.lane.b32.xlu0 %v8534, 24
        %v8880 = vpop.permute.xlu0 %8879
        %8881 = vrot.lane.b32.xlu0 %v8535, 24
        %v8882 = vpop.permute.xlu0 %8881
        %8883 = vrot.lane.b32.xlu0 %v8536, 24
        %v8884 = vpop.permute.xlu0 %8883
        %8885 = vrot.lane.b32.xlu0 %v8537, 24
        %v8886 = vpop.permute.xlu0 %8885
        %8887 = vrot.lane.b32.xlu0 %v8538, 24
        %v8888 = vpop.permute.xlu0 %8887
        %8889 = vrot.lane.b32.xlu0 %v8539, 24
        %v8890 = vpop.permute.xlu0 %8889
        %8891 = vrot.lane.b32.xlu0 %v8540, 24
        %v8892 = vpop.permute.xlu0 %8891
        %v8925 = vsel %vm2249, %v666, %v8574
        %v8926 = vsel %vm2249, %v667, %v8576
        %v8927 = vsel %vm2249, %v668, %v8578
        %v8928 = vsel %vm2249, %v669, %v8580
        %v8929 = vsel %vm2249, %v670, %v8582
        %v8930 = vsel %vm2249, %v671, %v8584
        %v8931 = vsel %vm2249, %v672, %v8586
        %v8932 = vsel %vm2249, %v673, %v8588
        %v8933 = vsel %vm2249, %v674, %v8590
        %v8934 = vsel %vm2249, %v675, %v8592
        %v8935 = vsel %vm2249, %v676, %v8594
        %v8936 = vsel %vm2249, %v677, %v8596
        %v8937 = vsel %vm2249, %v678, %v8598
        %v8938 = vsel %vm2249, %v679, %v8600
        %v8939 = vsel %vm2249, %v680, %v8602
        %v8940 = vsel %vm2249, %v681, %v8604
        %v8941 = vsel %vm2249, %v682, %v8606
        %v8942 = vsel %vm2249, %v683, %v8608
        %v8943 = vsel %vm2249, %v684, %v8610
        %v8944 = vsel %vm2249, %v685, %v8612
        %v8945 = vsel %vm2249, %v686, %v8614
        %v8946 = vsel %vm2249, %v687, %v8616
        %v8947 = vsel %vm2249, %v688, %v8618
        %v8948 = vsel %vm2249, %v689, %v8620
        %v8949 = vsel %vm2249, %v690, %v8622
        %v8950 = vsel %vm2249, %v691, %v8624
        %v8951 = vsel %vm2249, %v692, %v8626
        %v8952 = vsel %vm2249, %v693, %v8628
        %v8953 = vsel %vm2249, %v694, %v8630
        %v8954 = vsel %vm2249, %v695, %v8632
        %v8955 = vsel %vm2249, %v696, %v8634
        %v8956 = vsel %vm2249, %v697, %v8636
        %v8957 = vsel %vm2315, %v8925, %v8702
        %v8958 = vsel %vm2315, %v8926, %v8704
        %v8959 = vsel %vm2315, %v8927, %v8706
        %v8960 = vsel %vm2315, %v8928, %v8708
        %v8961 = vsel %vm2315, %v8929, %v8710
        %v8962 = vsel %vm2315, %v8930, %v8712
        %v8963 = vsel %vm2315, %v8931, %v8714
        %v8964 = vsel %vm2315, %v8932, %v8716
        %v8965 = vsel %vm2315, %v8933, %v8718
        %v8966 = vsel %vm2315, %v8934, %v8720
        %v8967 = vsel %vm2315, %v8935, %v8722
        %v8968 = vsel %vm2315, %v8936, %v8724
        %v8969 = vsel %vm2315, %v8937, %v8726
        %v8970 = vsel %vm2315, %v8938, %v8728
        %v8971 = vsel %vm2315, %v8939, %v8730
        %v8972 = vsel %vm2315, %v8940, %v8732
        %v8973 = vsel %vm2315, %v8941, %v8734
        %v8974 = vsel %vm2315, %v8942, %v8736
        %v8975 = vsel %vm2315, %v8943, %v8738
        %v8976 = vsel %vm2315, %v8944, %v8740
        %v8977 = vsel %vm2315, %v8945, %v8742
        %v8978 = vsel %vm2315, %v8946, %v8744
        %v8979 = vsel %vm2315, %v8947, %v8746
        %v8980 = vsel %vm2315, %v8948, %v8748
        %v8981 = vsel %vm2315, %v8949, %v8750
        %v8982 = vsel %vm2315, %v8950, %v8752
        %v8983 = vsel %vm2315, %v8951, %v8754
        %v8984 = vsel %vm2315, %v8952, %v8756
        %v8985 = vsel %vm2315, %v8953, %v8758
        %v8986 = vsel %vm2315, %v8954, %v8760
        %v8987 = vsel %vm2315, %v8955, %v8762
        %v8988 = vsel %vm2315, %v8956, %v8764
        %v8989 = vsel %vm2381, %v8957, %v8830
        %v8990 = vsel %vm2381, %v8958, %v8832
        %v8991 = vsel %vm2381, %v8959, %v8834
        %v8992 = vsel %vm2381, %v8960, %v8836
        %v8993 = vsel %vm2381, %v8961, %v8838
        %v8994 = vsel %vm2381, %v8962, %v8840
        %v8995 = vsel %vm2381, %v8963, %v8842
        %v8996 = vsel %vm2381, %v8964, %v8844
        %v8997 = vsel %vm2381, %v8965, %v8846
        %v8998 = vsel %vm2381, %v8966, %v8848
        %v8999 = vsel %vm2381, %v8967, %v8850
        %v9000 = vsel %vm2381, %v8968, %v8852
        %v9001 = vsel %vm2381, %v8969, %v8854
        %v9002 = vsel %vm2381, %v8970, %v8856
        %v9003 = vsel %vm2381, %v8971, %v8858
        %v9004 = vsel %vm2381, %v8972, %v8860
        %v9005 = vsel %vm2381, %v8973, %v8862
        %v9006 = vsel %vm2381, %v8974, %v8864
        %v9007 = vsel %vm2381, %v8975, %v8866
        %v9008 = vsel %vm2381, %v8976, %v8868
        %v9009 = vsel %vm2381, %v8977, %v8870
        %v9010 = vsel %vm2381, %v8978, %v8872
        %v9011 = vsel %vm2381, %v8979, %v8874
        %v9012 = vsel %vm2381, %v8980, %v8876
        %v9013 = vsel %vm2381, %v8981, %v8878
        %v9014 = vsel %vm2381, %v8982, %v8880
        %v9015 = vsel %vm2381, %v8983, %v8882
        %v9016 = vsel %vm2381, %v8984, %v8884
        %v9017 = vsel %vm2381, %v8985, %v8886
        %v9018 = vsel %vm2381, %v8986, %v8888
        %v9019 = vsel %vm2381, %v8987, %v8890
        %v9020 = vsel %vm2381, %v8988, %v8892
        %9021 = vst.msk [vmem:[%s325] sm:$0xff] %vm2447, %v8989
        %9022 = vst.msk [vmem:[%s325 + $0x8] sm:$0xff] %vm2447, %v8990
        %9023 = vst.msk [vmem:[%s325 + $0x10] sm:$0xff] %vm2447, %v8991
        %9024 = vst.msk [vmem:[%s325 + $0x18] sm:$0xff] %vm2447, %v8992
        %9025 = vst.msk [vmem:[%s325 + $0x20] sm:$0xff] %vm2447, %v8993
        %9026 = vst.msk [vmem:[%s325 + $0x28] sm:$0xff] %vm2447, %v8994
        %9027 = vst.msk [vmem:[%s325 + $0x30] sm:$0xff] %vm2447, %v8995
        %9028 = vst.msk [vmem:[%s325 + $0x38] sm:$0xff] %vm2447, %v8996
        %9029 = vst.msk [vmem:[%s325 + $0x40] sm:$0xff] %vm2447, %v8997
        %9030 = vst.msk [vmem:[%s325 + $0x48] sm:$0xff] %vm2447, %v8998
        %9031 = vst.msk [vmem:[%s325 + $0x50] sm:$0xff] %vm2447, %v8999
        %9032 = vst.msk [vmem:[%s325 + $0x58] sm:$0xff] %vm2447, %v9000
        %9033 = vst.msk [vmem:[%s325 + $0x60] sm:$0xff] %vm2447, %v9001
        %9034 = vst.msk [vmem:[%s325 + $0x68] sm:$0xff] %vm2447, %v9002
        %9035 = vst.msk [vmem:[%s325 + $0x70] sm:$0xff] %vm2447, %v9003
        %9036 = vst.msk [vmem:[%s325 + $0x78] sm:$0xff] %vm2447, %v9004
        %9037 = vst.msk [vmem:[%s325 + $0x80] sm:$0xff] %vm2447, %v9005
        %9038 = vst.msk [vmem:[%s325 + $0x88] sm:$0xff] %vm2447, %v9006
        %9039 = vst.msk [vmem:[%s325 + $0x90] sm:$0xff] %vm2447, %v9007
        %9040 = vst.msk [vmem:[%s325 + $0x98] sm:$0xff] %vm2447, %v9008
        %9041 = vst.msk [vmem:[%s325 + $0xa0] sm:$0xff] %vm2447, %v9009
        %9042 = vst.msk [vmem:[%s325 + $0xa8] sm:$0xff] %vm2447, %v9010
        %9043 = vst.msk [vmem:[%s325 + $0xb0] sm:$0xff] %vm2447, %v9011
        %9044 = vst.msk [vmem:[%s325 + $0xb8] sm:$0xff] %vm2447, %v9012
        %9045 = vst.msk [vmem:[%s325 + $0xc0] sm:$0xff] %vm2447, %v9013
        %9046 = vst.msk [vmem:[%s325 + $0xc8] sm:$0xff] %vm2447, %v9014
        %9047 = vst.msk [vmem:[%s325 + $0xd0] sm:$0xff] %vm2447, %v9015
        %9048 = vst.msk [vmem:[%s325 + $0xd8] sm:$0xff] %vm2447, %v9016
        %9049 = vst.msk [vmem:[%s325 + $0xe0] sm:$0xff] %vm2447, %v9017
        %9050 = vst.msk [vmem:[%s325 + $0xe8] sm:$0xff] %vm2447, %v9018
        %9051 = vst.msk [vmem:[%s325 + $0xf0] sm:$0xff] %vm2447, %v9019
        %9052 = vst.msk [vmem:[%s325 + $0xf8] sm:$0xff] %vm2447, %v9020
        %s9053 = sand.u32 %s225, 1
        %s9054 = scalar_lea.sflag [#allocation6], %s9053
        %s9055 = sand.u32 %s225, 1
        %s9056 = smul.addr %s9055, 256
        %s9057 = scalar_lea.vmem [#allocation5], %s9056
        // Predicated region
        $region57: #{tpu_custom_call.1} parent=55 // pred_check
          %p9058 = pneg %p235
        $region58: #{tpu_custom_call.1} parent=55 // pred_check_branch
          %9060 = sbr.rel (%p9058) target = $region60
        $region59: #{tpu_custom_call.1} parent=55 // pred_region
          %s9062 = ssub.s32 4096, 4096
          %9063 = vsyncadd %s9054, %s9062
          %s9064 = smul.addr %s23, 32
          %s9065 = smul.addr %s9064, 128
          %s9066 = scalar_lea.hbm %s9, %s9065
          %s9067 = sshll.u32 %s9057, 4
          %s9068 = int_to_ptr.vmem [resolvable:$true] %s9067
          %9073 = dma.vmem_to_hbm [thread:$0]  %s9068, 4096, %s9066, %s9054, 128, 128, 8
        $region60: #{tpu_custom_call.1} parent=55 // pred_fallthru
          _
      $region56: #{tpu_custom_call.1} parent=5 // pred_fallthru
        _
      %p9074 = scmp.le.s32.totalorder 2, %s18
      // Predicated region
      $region61: #{tpu_custom_call.1} parent=5 // pred_check
        %p9075 = pneg %p9074
      $region62: #{tpu_custom_call.1} parent=5 // pred_check_branch
        %9077 = sbr.rel (%p9075) target = $region64
      $region63: #{tpu_custom_call.1} parent=5 // pred_region
        %s9078 = ssub.s32 %s18, 2
        // Predicated region
        $region65: #{tpu_custom_call.1} parent=63 // pred_check
          %p9079 = pneg %p241
        $region66: #{tpu_custom_call.1} parent=63 // pred_check_branch
          %9081 = sbr.rel (%p9079) target = $region68
        $region67: #{tpu_custom_call.1} parent=63 // pred_region
          %s9082 = sand.u32 %s226, 1
          %s9083 = scalar_lea.sflag [#allocation6], %s9082
          %s9084 = sand.u32 %s226, 1
          %s9085 = smul.addr %s9084, 256
          %s9086 = scalar_lea.vmem [#allocation5], %s9085
          %9087 = dma.done %s9083, 4096
        $region68: #{tpu_custom_call.1} parent=63 // pred_fallthru
          _
      $region64: #{tpu_custom_call.1} parent=5 // pred_fallthru
        _
    $region6: #{tpu_custom_call.1} parent=1 // loop_footer
      %s22 = sadd.s32 1, %s18
    $region7: #{tpu_custom_call.1} parent=1 // loop_footer_branch
      %17 = sbr.rel target = $region3
    $region8: #{tpu_custom_call.1} parent=1 // loop_exit
      _
    %9088 = vsyncpa [#allocation6], 1
    %s9089 = scalar_lea.sflag [#allocation6], 1
    %9090 = vsyncpa %s9089, 1

</llo_original>
